<compile_context>
chip_gen: v5e
topology: v5e:2x2
jax: 0.10.0
libtpu: 0.0.40
codegen_flags: <defaults>
</compile_context>

<pallas_src>
import functools

import jax
import jax.numpy as jnp
from jax.experimental import pallas as pl
from jax.experimental.pallas import tpu as pltpu


# ----------------------------------------------------------------------------
# Fused encoder-STACK kernel: grid axis = layer index, activation resident
# in the output block across layers (constant index_map -> VMEM-resident).
# ----------------------------------------------------------------------------
def encoder_stack_kernel(
    x_ref,
    ln1g_ref, ln1b_ref,
    wqkv_ref, bqkv_ref, wo_ref, bo_ref,
    ln2g_ref, ln2b_ref,
    w1_ref, b1_ref, w2_ref, b2_ref,
    o_ref,
    slab_ref,
    *, B, T, H, C, eps,
):
    l = pl.program_id(0)
    N, E = o_ref.shape                   # N = B*T
    Dc = E // C                          # per-channel width
    Dh = E // H                          # head width
    scale = Dh ** -0.5

    # First layer: seed the resident output block with the input slab.
    @pl.when(l == 0)
    def _():
        o_ref[...] = x_ref[...]

    x = o_ref[...]                       # f32 [N, E] activation carry

    # --- per-channel LayerNorm (vectorized over channels) --------------------
    def layer_norm(v, g, b):
        if C == 1:
            mean = jnp.mean(v, axis=-1, keepdims=True)
            var = jnp.mean((v - mean) ** 2, axis=-1, keepdims=True)
            nrm = (v - mean) * jax.lax.rsqrt(var + eps)
        else:
            v3 = v.reshape(N, C, Dc)     # Dc lane-aligned split
            mean = jnp.mean(v3, axis=-1, keepdims=True)
            var = jnp.mean((v3 - mean) ** 2, axis=-1, keepdims=True)
            nrm = ((v3 - mean) * jax.lax.rsqrt(var + eps)).reshape(N, E)
        return nrm * g + b

    # --- self-attention block -------------------------------------------------
    residual = x
    h = layer_norm(x, ln1g_ref[0], ln1b_ref[0])

    # Fused QKV projection: one [N,E] x [E,3E] matmul (bf16 operands, f32 acc).
    qkv = jnp.dot(h.astype(jnp.bfloat16), wqkv_ref[0],
                  preferred_element_type=jnp.float32) + bqkv_ref[0]
    q = qkv[:, :E] * scale
    k = qkv[:, E:2 * E]
    v = qkv[:, 2 * E:]

    # Per head: batched over B via einsum; results written into the VMEM slab.
    for hh in range(H):                              # static, small unroll
        sl = slice(hh * Dh, (hh + 1) * Dh)
        qh = q[:, sl].reshape(B, T, Dh).astype(jnp.bfloat16)
        kh = k[:, sl].reshape(B, T, Dh).astype(jnp.bfloat16)
        vh = v[:, sl].reshape(B, T, Dh).astype(jnp.bfloat16)
        s = jnp.einsum('bqd,bkd->bqk', qh, kh,
                       preferred_element_type=jnp.float32)          # [B,T,T] f32
        s = s - jnp.max(s, axis=-1, keepdims=True)
        p = jnp.exp(s)
        p = p * pl.reciprocal(jnp.sum(p, axis=-1, keepdims=True), approx=True)
        oh = jnp.einsum('bqk,bkd->bqd', p.astype(jnp.bfloat16), vh,
                        preferred_element_type=jnp.float32)          # [B,T,Dh]
        slab_ref[:, sl] = oh.reshape(N, Dh)

    attn = jnp.dot(slab_ref[...].astype(jnp.bfloat16), wo_ref[0],
                   preferred_element_type=jnp.float32) + bo_ref[0]

    x = attn + residual            # dropout == identity (eval mode)

    # --- feed-forward block ---------------------------------------------------
    residual = x
    h = layer_norm(x, ln2g_ref[0], ln2b_ref[0])

    # Per-channel FFN (C==1 -> single shared FFN); outputs written straight
    # into the reused VMEM slab (no concatenate).
    for c in range(C):                               # static, small unroll
        sl = slice(c * Dc, (c + 1) * Dc)
        hc = h[:, sl].astype(jnp.bfloat16)
        z = jnp.dot(hc, w1_ref[0, c], preferred_element_type=jnp.float32) + b1_ref[0, c]
        z = jax.nn.gelu(z)                           # activation_fn = "gelu"
        slab_ref[:, sl] = (
            jnp.dot(z.astype(jnp.bfloat16), w2_ref[0, c],
                    preferred_element_type=jnp.float32) + b2_ref[0, c])

    # Carry to the next layer; written back to HBM once after the last layer
    # (output block index is constant over the layer axis -> resident).
    o_ref[...] = slab_ref[...] + residual


# ----------------------------------------------------------------------------
# Wrapper: one pallas_call per homogeneous layer stack
# ----------------------------------------------------------------------------
def _layer_stacked_spec(shape):
    """BlockSpec selecting layer `l` from a (L, ...) stacked weight."""
    nd = len(shape)
    return pl.BlockSpec((1,) + tuple(shape[1:]),
                        lambda l, _nd=nd: (l,) + (0,) * (_nd - 1))


def encoder_stack_apply(x2d, p, *, B, T, num_heads, num_channels, eps=1e-5):
    N, E = x2d.shape
    L = p["wqkv"].shape[0]

    in_specs = [
        pl.BlockSpec((N, E), lambda l: (0, 0)),               # x (resident)
        _layer_stacked_spec(p["ln1_g"].shape), _layer_stacked_spec(p["ln1_b"].shape),
        _layer_stacked_spec(p["wqkv"].shape), _layer_stacked_spec(p["bqkv"].shape),
        _layer_stacked_spec(p["wo"].shape), _layer_stacked_spec(p["bo"].shape),
        _layer_stacked_spec(p["ln2_g"].shape), _layer_stacked_spec(p["ln2_b"].shape),
        _layer_stacked_spec(p["w1"].shape), _layer_stacked_spec(p["b1"].shape),
        _layer_stacked_spec(p["w2"].shape), _layer_stacked_spec(p["b2"].shape),
    ]

    kernel = functools.partial(
        encoder_stack_kernel, B=B, T=T, H=num_heads, C=num_channels, eps=eps)

    # NOTE: if B*T grows large, add a "parallel" grid axis over N with
    # 128/256-row tiles (engages the second TensorCore on v7x); at N=16 it is
    # moot and would only add per-step overhead.
    return pl.pallas_call(
        kernel,
        out_shape=jax.ShapeDtypeStruct((N, E), jnp.float32),
        grid=(L,),
        in_specs=in_specs,
        out_specs=pl.BlockSpec((N, E), lambda l: (0, 0)),
        scratch_shapes=[pltpu.VMEM((N, E), jnp.float32)],     # attn/ffn slab
        compiler_params=pltpu.CompilerParams(
            dimension_semantics=("arbitrary",),
            vmem_limit_bytes=32 * 1024 * 1024),
    )(x2d, p["ln1_g"], p["ln1_b"], p["wqkv"], p["bqkv"], p["wo"], p["bo"],
      p["ln2_g"], p["ln2_b"], p["w1"], p["b1"], p["w2"], p["b2"])


def encoder_forward(x, sep_stack, comb_stack, *, num_heads, num_channels):
    """Returns (out, aux_res) like the PyTorch Encoder.forward.

    aux_res is the activation after the last separate-channel layer, which is
    exactly the output of the SEP stack.
    """
    B, T, E = x.shape
    x2d = x.reshape(B * T, E)
    aux2d = encoder_stack_apply(x2d, sep_stack, B=B, T=T,
                                num_heads=num_heads, num_channels=num_channels)
    out2d = aux2d
    if comb_stack is not None:
        out2d = encoder_stack_apply(aux2d, comb_stack, B=B, T=T,
                                    num_heads=num_heads, num_channels=1)
    return out2d.reshape(B, T, E), aux2d.reshape(B, T, E)


# ----------------------------------------------------------------------------
# Deterministic parameter init (shapes from EncoderLayer.__init__)
# ----------------------------------------------------------------------------
def init_layer_params(key, embed_dim, num_channels, ffn_dim):
    E, C, F = embed_dim, num_channels, ffn_dim
    Dc = E // C
    ks = jax.random.split(key, 16)
    nrm = lambda k, shape, scale: scale * jax.random.normal(k, shape, jnp.float32)
    wq = nrm(ks[4], (E, E), E ** -0.5)
    wk = nrm(ks[6], (E, E), E ** -0.5)
    wv = nrm(ks[8], (E, E), E ** -0.5)
    bq = nrm(ks[5], (1, E), 0.02)
    bk = nrm(ks[7], (1, E), 0.02)
    bv = nrm(ks[9], (1, E), 0.02)
    return {
        "ln1_g": 1.0 + nrm(ks[0], (1, E), 0.1),
        "ln1_b": nrm(ks[1], (1, E), 0.1),
        "ln2_g": 1.0 + nrm(ks[2], (1, E), 0.1),
        "ln2_b": nrm(ks[3], (1, E), 0.1),
        # fused QKV weight in bf16 (HBM traffic halved; f32 accumulate in-kernel)
        "wqkv": jnp.concatenate([wq, wk, wv], axis=-1).astype(jnp.bfloat16),
        "bqkv": jnp.concatenate([bq, bk, bv], axis=-1),
        "wo": nrm(ks[10], (E, E), E ** -0.5).astype(jnp.bfloat16),
        "bo": nrm(ks[11], (1, E), 0.02),
        # per-channel FFN weights stacked along leading C axis (C=1 => shared FFN)
        "w1": nrm(ks[12], (C, Dc, F), Dc ** -0.5).astype(jnp.bfloat16),
        "b1": nrm(ks[13], (C, 1, F), 0.02),
        "w2": nrm(ks[14], (C, F, Dc), F ** -0.5).astype(jnp.bfloat16),
        "b2": nrm(ks[15], (C, 1, Dc), 0.02),
    }


def stack_layers(layer_params_list):
    """Stack a list of per-layer param dicts along a leading layer axis."""
    return jax.tree_util.tree_map(
        lambda *xs: jnp.stack(xs, axis=0), *layer_params_list)


# ----------------------------------------------------------------------------
if __name__ == "__main__":
    # Small, TPU-friendly configuration (all lane-axis dims multiples of 128).
    B, T = 2, 8                 # batch, sequence length
    NUM_CHANNELS = 4
    EMBED_DIM = 512             # sep_embed_dim == comb_embed_dim
    NUM_HEADS = 4
    SEP_FFN_DIM = 128
    COMB_FFN_DIM = 256
    SEP_DEPTH = 2
    COMB_DEPTH = 1

    key = jax.random.PRNGKey(0)
    key, xk = jax.random.split(key)
    x = jax.random.normal(xk, (B, T, EMBED_DIM), jnp.float32)

    sep_layers, comb_layers = [], []
    for _ in range(SEP_DEPTH):          # per-channel (separate) layers
        key, sub = jax.random.split(key)
        sep_layers.append(init_layer_params(sub, EMBED_DIM, NUM_CHANNELS, SEP_FFN_DIM))
    for _ in range(COMB_DEPTH):         # combined-channel layers
        key, sub = jax.random.split(key)
        comb_layers.append(init_layer_params(sub, EMBED_DIM, 1, COMB_FFN_DIM))

    sep_stack = stack_layers(sep_layers)
    comb_stack = stack_layers(comb_layers) if comb_layers else None

    out, aux_res = encoder_forward(
        x, sep_stack, comb_stack, num_heads=NUM_HEADS, num_channels=NUM_CHANNELS)

    jax.block_until_ready((out, aux_res))
    assert out.shape == (B, T, EMBED_DIM) and aux_res.shape == (B, T, EMBED_DIM)
    print("KERNEL_OK")
</pallas_src>

<mosaic_0001>
module attributes {stable_mosaic.version = 11 : i64} {
  func.func @encoder_stack_kernel(%arg0: i32, %arg1: memref<16x512xf32, #tpu.memory_space<vmem>>, %arg2: memref<1x1x512xf32, #tpu.memory_space<vmem>>, %arg3: memref<1x1x512xf32, #tpu.memory_space<vmem>>, %arg4: memref<1x512x1536xbf16, #tpu.memory_space<vmem>>, %arg5: memref<1x1x1536xf32, #tpu.memory_space<vmem>>, %arg6: memref<1x512x512xbf16, #tpu.memory_space<vmem>>, %arg7: memref<1x1x512xf32, #tpu.memory_space<vmem>>, %arg8: memref<1x1x512xf32, #tpu.memory_space<vmem>>, %arg9: memref<1x1x512xf32, #tpu.memory_space<vmem>>, %arg10: memref<1x4x128x128xbf16, #tpu.memory_space<vmem>>, %arg11: memref<1x4x1x128xf32, #tpu.memory_space<vmem>>, %arg12: memref<1x4x128x128xbf16, #tpu.memory_space<vmem>>, %arg13: memref<1x4x1x128xf32, #tpu.memory_space<vmem>>, %arg14: memref<16x512xf32, #tpu.memory_space<vmem>>, %arg15: memref<16x512xf32, #tpu.memory_space<vmem>>) attributes {dimension_semantics = [#tpu.dimension_semantics<arbitrary>], iteration_bounds = array<i64: 2>, scalar_prefetch = 0 : i64, scratch_operands = 1 : i64, tpu.core_type = #tpu.core_type<tc>, window_params = [{pipeline_mode = #tpu.pipeline_mode<synchronous>, transform_indices = @transform_0, window_bounds = array<i64: 16, 512>}, {transform_indices = @transform_1, window_bounds = array<i64: 1, 1, 512>}, {transform_indices = @transform_2, window_bounds = array<i64: 1, 1, 512>}, {transform_indices = @transform_3, window_bounds = array<i64: 1, 512, 1536>}, {transform_indices = @transform_4, window_bounds = array<i64: 1, 1, 1536>}, {transform_indices = @transform_5, window_bounds = array<i64: 1, 512, 512>}, {transform_indices = @transform_6, window_bounds = array<i64: 1, 1, 512>}, {transform_indices = @transform_7, window_bounds = array<i64: 1, 1, 512>}, {transform_indices = @transform_8, window_bounds = array<i64: 1, 1, 512>}, {transform_indices = @transform_9, window_bounds = array<i64: 1, 4, 128, 128>}, {transform_indices = @transform_10, window_bounds = array<i64: 1, 4, 1, 128>}, {transform_indices = @transform_11, window_bounds = array<i64: 1, 4, 128, 128>}, {transform_indices = @transform_12, window_bounds = array<i64: 1, 4, 1, 128>}, {pipeline_mode = #tpu.pipeline_mode<synchronous>, transform_indices = @transform_13, window_bounds = array<i64: 16, 512>}]} {
    %c0_i32 = arith.constant 0 : i32
    %0 = arith.cmpi eq, %arg0, %c0_i32 : i32
    %1 = arith.extui %0 : i1 to i32
    %c0_i32_0 = arith.constant 0 : i32
    %2 = arith.cmpi ne, %1, %c0_i32_0 : i32
    scf.if %2 {
      %c0_158 = arith.constant 0 : index
      %c0_159 = arith.constant 0 : index
      %306 = vector.load %arg1[%c0_158, %c0_159] : memref<16x512xf32, #tpu.memory_space<vmem>>, vector<16x512xf32>
      %c0_160 = arith.constant 0 : index
      %c0_161 = arith.constant 0 : index
      %307 = vector.load %arg14[%c0_160, %c0_161] : memref<16x512xf32, #tpu.memory_space<vmem>>, vector<16x512xf32>
      tpu.vector_store %arg14[%c0_160, %c0_161], %306 {strides = array<i32>} : memref<16x512xf32, #tpu.memory_space<vmem>>, vector<16x512xf32>,
    } else {
    }
    %c0 = arith.constant 0 : index
    %c0_1 = arith.constant 0 : index
    %3 = vector.load %arg14[%c0, %c0_1] : memref<16x512xf32, #tpu.memory_space<vmem>>, vector<16x512xf32>
    %c0_2 = arith.constant 0 : index
    %c0_3 = arith.constant 0 : index
    %c0_4 = arith.constant 0 : index
    %4 = vector.load %arg2[%c0_2, %c0_3, %c0_4] : memref<1x1x512xf32, #tpu.memory_space<vmem>>, vector<1x1x512xf32>
    %5 = vector.shape_cast %4 : vector<1x1x512xf32> to vector<1x512xf32>
    %c0_5 = arith.constant 0 : index
    %c0_6 = arith.constant 0 : index
    %c0_7 = arith.constant 0 : index
    %6 = vector.load %arg3[%c0_5, %c0_6, %c0_7] : memref<1x1x512xf32, #tpu.memory_space<vmem>>, vector<1x1x512xf32>
    %7 = vector.shape_cast %6 : vector<1x1x512xf32> to vector<1x512xf32>
    %8 = vector.shape_cast %3 : vector<16x512xf32> to vector<16x4x128xf32>
    %cst = arith.constant dense<0.000000e+00> : vector<16x4xf32>
    %9 = vector.multi_reduction <add>, %8, %cst [2] : vector<16x4x128xf32> to vector<16x4xf32>
    %10 = vector.shape_cast %9 : vector<16x4xf32> to vector<16x4x1xf32>
    %cst_8 = arith.constant 1.280000e+02 : f32
    %11 = vector.broadcast %cst_8 : f32 to vector<16x4x1xf32>
    %12 = arith.divf %10, %11 : vector<16x4x1xf32>
    %13 = vector.broadcast %12 : vector<16x4x1xf32> to vector<16x4x128xf32>
    %14 = arith.subf %8, %13 : vector<16x4x128xf32>
    %15 = arith.mulf %14, %14 : vector<16x4x128xf32>
    %cst_9 = arith.constant dense<0.000000e+00> : vector<16x4xf32>
    %16 = vector.multi_reduction <add>, %15, %cst_9 [2] : vector<16x4x128xf32> to vector<16x4xf32>
    %17 = vector.shape_cast %16 : vector<16x4xf32> to vector<16x4x1xf32>
    %cst_10 = arith.constant 1.280000e+02 : f32
    %18 = vector.broadcast %cst_10 : f32 to vector<16x4x1xf32>
    %19 = arith.divf %17, %18 : vector<16x4x1xf32>
    %20 = vector.broadcast %12 : vector<16x4x1xf32> to vector<16x4x128xf32>
    %21 = arith.subf %8, %20 : vector<16x4x128xf32>
    %cst_11 = arith.constant 9.99999974E-6 : f32
    %22 = vector.broadcast %cst_11 : f32 to vector<16x4x1xf32>
    %23 = arith.addf %19, %22 : vector<16x4x1xf32>
    %24 = math.rsqrt %23 : vector<16x4x1xf32>
    %25 = vector.broadcast %24 : vector<16x4x1xf32> to vector<16x4x128xf32>
    %26 = arith.mulf %21, %25 : vector<16x4x128xf32>
    %27 = vector.shape_cast %26 : vector<16x4x128xf32> to vector<16x512xf32>
    %28 = vector.broadcast %5 : vector<1x512xf32> to vector<16x512xf32>
    %29 = arith.mulf %27, %28 : vector<16x512xf32>
    %30 = vector.broadcast %7 : vector<1x512xf32> to vector<16x512xf32>
    %31 = arith.addf %29, %30 : vector<16x512xf32>
    %32 = arith.truncf %31 : vector<16x512xf32> to vector<16x512xbf16>
    %c0_12 = arith.constant 0 : index
    %c0_13 = arith.constant 0 : index
    %c0_14 = arith.constant 0 : index
    %33 = vector.load %arg4[%c0_12, %c0_13, %c0_14] : memref<1x512x1536xbf16, #tpu.memory_space<vmem>>, vector<1x512x1536xbf16>
    %34 = vector.shape_cast %33 : vector<1x512x1536xbf16> to vector<512x1536xbf16>
    %cst_15 = arith.constant dense<0.000000e+00> : vector<16x1536xf32>
    %35 = tpu.matmul %32, %34, %cst_15 {dimension_numbers = #tpu.dot_dimension_numbers<[1], [0], [0], [1], [0, 0, 1, 1], [], []>} : vector<16x512xbf16>, vector<512x1536xbf16>, vector<16x1536xf32> -> vector<16x1536xf32>
    %c0_16 = arith.constant 0 : index
    %c0_17 = arith.constant 0 : index
    %c0_18 = arith.constant 0 : index
    %36 = vector.load %arg5[%c0_16, %c0_17, %c0_18] : memref<1x1x1536xf32, #tpu.memory_space<vmem>>, vector<1x1x1536xf32>
    %37 = vector.shape_cast %36 : vector<1x1x1536xf32> to vector<1x1536xf32>
    %38 = vector.broadcast %37 : vector<1x1536xf32> to vector<16x1536xf32>
    %39 = arith.addf %35, %38 : vector<16x1536xf32>
    %40 = vector.extract_strided_slice %39 {offsets = [0, 0], sizes = [16, 512], strides = [1, 1]} : vector<16x1536xf32> to vector<16x512xf32>
    %cst_19 = arith.constant 0.0883883461 : f32
    %41 = vector.broadcast %cst_19 : f32 to vector<16x512xf32>
    %42 = arith.mulf %40, %41 : vector<16x512xf32>
    %43 = vector.extract_strided_slice %39 {offsets = [0, 512], sizes = [16, 512], strides = [1, 1]} : vector<16x1536xf32> to vector<16x512xf32>
    %44 = vector.extract_strided_slice %39 {offsets = [0, 1024], sizes = [16, 512], strides = [1, 1]} : vector<16x1536xf32> to vector<16x512xf32>
    %45 = vector.extract_strided_slice %42 {offsets = [0, 0], sizes = [16, 128], strides = [1, 1]} : vector<16x512xf32> to vector<16x128xf32>
    %46 = vector.shape_cast %45 : vector<16x128xf32> to vector<2x8x128xf32>
    %47 = arith.truncf %46 : vector<2x8x128xf32> to vector<2x8x128xbf16>
    %48 = vector.extract_strided_slice %43 {offsets = [0, 0], sizes = [16, 128], strides = [1, 1]} : vector<16x512xf32> to vector<16x128xf32>
    %49 = vector.shape_cast %48 : vector<16x128xf32> to vector<2x8x128xf32>
    %50 = arith.truncf %49 : vector<2x8x128xf32> to vector<2x8x128xbf16>
    %51 = vector.extract_strided_slice %44 {offsets = [0, 0], sizes = [16, 128], strides = [1, 1]} : vector<16x512xf32> to vector<16x128xf32>
    %52 = vector.shape_cast %51 : vector<16x128xf32> to vector<2x8x128xf32>
    %53 = arith.truncf %52 : vector<2x8x128xf32> to vector<2x8x128xbf16>
    "tpu.trace_start"() <{level = 10 : i32, message = "bqd,bkd->bqk"}> : () -> ()
    %cst_20 = arith.constant dense<0.000000e+00> : vector<2x8x8xf32>
    %54 = tpu.matmul %47, %50, %cst_20 {dimension_numbers = #tpu.dot_dimension_numbers<[2], [2], [1], [1], [0, 0, 0, 1, 1, 1], [0], [0]>} : vector<2x8x128xbf16>, vector<2x8x128xbf16>, vector<2x8x8xf32> -> vector<2x8x8xf32>
    "tpu.trace_stop"() : () -> ()
    %cst_21 = arith.constant dense<0xFF800000> : vector<2x8xf32>
    %55 = vector.multi_reduction <maximumf>, %54, %cst_21 [2] : vector<2x8x8xf32> to vector<2x8xf32>
    %56 = vector.shape_cast %55 : vector<2x8xf32> to vector<2x8x1xf32>
    %57 = vector.broadcast %56 : vector<2x8x1xf32> to vector<2x8x8xf32>
    %58 = arith.subf %54, %57 : vector<2x8x8xf32>
    %59 = math.exp %58 : vector<2x8x8xf32>
    %cst_22 = arith.constant dense<0.000000e+00> : vector<2x8xf32>
    %60 = vector.multi_reduction <add>, %59, %cst_22 [2] : vector<2x8x8xf32> to vector<2x8xf32>
    %61 = vector.shape_cast %60 : vector<2x8xf32> to vector<2x8x1xf32>
    %62 = tpu.reciprocal %61 {approx = true} : vector<2x8x1xf32> -> vector<2x8x1xf32>
    %63 = vector.broadcast %62 : vector<2x8x1xf32> to vector<2x8x8xf32>
    %64 = arith.mulf %59, %63 : vector<2x8x8xf32>
    %65 = arith.truncf %64 : vector<2x8x8xf32> to vector<2x8x8xbf16>
    "tpu.trace_start"() <{level = 10 : i32, message = "bqk,bkd->bqd"}> : () -> ()
    %cst_23 = arith.constant dense<0.000000e+00> : vector<2x8x128xf32>
    %66 = tpu.matmul %65, %53, %cst_23 {dimension_numbers = #tpu.dot_dimension_numbers<[2], [1], [1], [2], [0, 0, 0, 1, 1, 2], [0], [0]>} : vector<2x8x8xbf16>, vector<2x8x128xbf16>, vector<2x8x128xf32> -> vector<2x8x128xf32>
    "tpu.trace_stop"() : () -> ()
    %67 = vector.shape_cast %66 : vector<2x8x128xf32> to vector<16x128xf32>
    %c0_24 = arith.constant 0 : index
    %c0_25 = arith.constant 0 : index
    %68 = vector.load %arg15[%c0_24, %c0_25] : memref<16x512xf32, #tpu.memory_space<vmem>>, vector<16x128xf32>
    tpu.vector_store %arg15[%c0_24, %c0_25], %67 {strides = array<i32>} : memref<16x512xf32, #tpu.memory_space<vmem>>, vector<16x128xf32>,
    %69 = vector.extract_strided_slice %42 {offsets = [0, 128], sizes = [16, 128], strides = [1, 1]} : vector<16x512xf32> to vector<16x128xf32>
    %70 = vector.shape_cast %69 : vector<16x128xf32> to vector<2x8x128xf32>
    %71 = arith.truncf %70 : vector<2x8x128xf32> to vector<2x8x128xbf16>
    %72 = vector.extract_strided_slice %43 {offsets = [0, 128], sizes = [16, 128], strides = [1, 1]} : vector<16x512xf32> to vector<16x128xf32>
    %73 = vector.shape_cast %72 : vector<16x128xf32> to vector<2x8x128xf32>
    %74 = arith.truncf %73 : vector<2x8x128xf32> to vector<2x8x128xbf16>
    %75 = vector.extract_strided_slice %44 {offsets = [0, 128], sizes = [16, 128], strides = [1, 1]} : vector<16x512xf32> to vector<16x128xf32>
    %76 = vector.shape_cast %75 : vector<16x128xf32> to vector<2x8x128xf32>
    %77 = arith.truncf %76 : vector<2x8x128xf32> to vector<2x8x128xbf16>
    "tpu.trace_start"() <{level = 10 : i32, message = "bqd,bkd->bqk"}> : () -> ()
    %cst_26 = arith.constant dense<0.000000e+00> : vector<2x8x8xf32>
    %78 = tpu.matmul %71, %74, %cst_26 {dimension_numbers = #tpu.dot_dimension_numbers<[2], [2], [1], [1], [0, 0, 0, 1, 1, 1], [0], [0]>} : vector<2x8x128xbf16>, vector<2x8x128xbf16>, vector<2x8x8xf32> -> vector<2x8x8xf32>
    "tpu.trace_stop"() : () -> ()
    %cst_27 = arith.constant dense<0xFF800000> : vector<2x8xf32>
    %79 = vector.multi_reduction <maximumf>, %78, %cst_27 [2] : vector<2x8x8xf32> to vector<2x8xf32>
    %80 = vector.shape_cast %79 : vector<2x8xf32> to vector<2x8x1xf32>
    %81 = vector.broadcast %80 : vector<2x8x1xf32> to vector<2x8x8xf32>
    %82 = arith.subf %78, %81 : vector<2x8x8xf32>
    %83 = math.exp %82 : vector<2x8x8xf32>
    %cst_28 = arith.constant dense<0.000000e+00> : vector<2x8xf32>
    %84 = vector.multi_reduction <add>, %83, %cst_28 [2] : vector<2x8x8xf32> to vector<2x8xf32>
    %85 = vector.shape_cast %84 : vector<2x8xf32> to vector<2x8x1xf32>
    %86 = tpu.reciprocal %85 {approx = true} : vector<2x8x1xf32> -> vector<2x8x1xf32>
    %87 = vector.broadcast %86 : vector<2x8x1xf32> to vector<2x8x8xf32>
    %88 = arith.mulf %83, %87 : vector<2x8x8xf32>
    %89 = arith.truncf %88 : vector<2x8x8xf32> to vector<2x8x8xbf16>
    "tpu.trace_start"() <{level = 10 : i32, message = "bqk,bkd->bqd"}> : () -> ()
    %cst_29 = arith.constant dense<0.000000e+00> : vector<2x8x128xf32>
    %90 = tpu.matmul %89, %77, %cst_29 {dimension_numbers = #tpu.dot_dimension_numbers<[2], [1], [1], [2], [0, 0, 0, 1, 1, 2], [0], [0]>} : vector<2x8x8xbf16>, vector<2x8x128xbf16>, vector<2x8x128xf32> -> vector<2x8x128xf32>
    "tpu.trace_stop"() : () -> ()
    %91 = vector.shape_cast %90 : vector<2x8x128xf32> to vector<16x128xf32>
    %c0_30 = arith.constant 0 : index
    %c128 = arith.constant 128 : index
    %92 = vector.load %arg15[%c0_30, %c128] : memref<16x512xf32, #tpu.memory_space<vmem>>, vector<16x128xf32>
    tpu.vector_store %arg15[%c0_30, %c128], %91 {strides = array<i32>} : memref<16x512xf32, #tpu.memory_space<vmem>>, vector<16x128xf32>,
    %93 = vector.extract_strided_slice %42 {offsets = [0, 256], sizes = [16, 128], strides = [1, 1]} : vector<16x512xf32> to vector<16x128xf32>
    %94 = vector.shape_cast %93 : vector<16x128xf32> to vector<2x8x128xf32>
    %95 = arith.truncf %94 : vector<2x8x128xf32> to vector<2x8x128xbf16>
    %96 = vector.extract_strided_slice %43 {offsets = [0, 256], sizes = [16, 128], strides = [1, 1]} : vector<16x512xf32> to vector<16x128xf32>
    %97 = vector.shape_cast %96 : vector<16x128xf32> to vector<2x8x128xf32>
    %98 = arith.truncf %97 : vector<2x8x128xf32> to vector<2x8x128xbf16>
    %99 = vector.extract_strided_slice %44 {offsets = [0, 256], sizes = [16, 128], strides = [1, 1]} : vector<16x512xf32> to vector<16x128xf32>
    %100 = vector.shape_cast %99 : vector<16x128xf32> to vector<2x8x128xf32>
    %101 = arith.truncf %100 : vector<2x8x128xf32> to vector<2x8x128xbf16>
    "tpu.trace_start"() <{level = 10 : i32, message = "bqd,bkd->bqk"}> : () -> ()
    %cst_31 = arith.constant dense<0.000000e+00> : vector<2x8x8xf32>
    %102 = tpu.matmul %95, %98, %cst_31 {dimension_numbers = #tpu.dot_dimension_numbers<[2], [2], [1], [1], [0, 0, 0, 1, 1, 1], [0], [0]>} : vector<2x8x128xbf16>, vector<2x8x128xbf16>, vector<2x8x8xf32> -> vector<2x8x8xf32>
    "tpu.trace_stop"() : () -> ()
    %cst_32 = arith.constant dense<0xFF800000> : vector<2x8xf32>
    %103 = vector.multi_reduction <maximumf>, %102, %cst_32 [2] : vector<2x8x8xf32> to vector<2x8xf32>
    %104 = vector.shape_cast %103 : vector<2x8xf32> to vector<2x8x1xf32>
    %105 = vector.broadcast %104 : vector<2x8x1xf32> to vector<2x8x8xf32>
    %106 = arith.subf %102, %105 : vector<2x8x8xf32>
    %107 = math.exp %106 : vector<2x8x8xf32>
    %cst_33 = arith.constant dense<0.000000e+00> : vector<2x8xf32>
    %108 = vector.multi_reduction <add>, %107, %cst_33 [2] : vector<2x8x8xf32> to vector<2x8xf32>
    %109 = vector.shape_cast %108 : vector<2x8xf32> to vector<2x8x1xf32>
    %110 = tpu.reciprocal %109 {approx = true} : vector<2x8x1xf32> -> vector<2x8x1xf32>
    %111 = vector.broadcast %110 : vector<2x8x1xf32> to vector<2x8x8xf32>
    %112 = arith.mulf %107, %111 : vector<2x8x8xf32>
    %113 = arith.truncf %112 : vector<2x8x8xf32> to vector<2x8x8xbf16>
    "tpu.trace_start"() <{level = 10 : i32, message = "bqk,bkd->bqd"}> : () -> ()
    %cst_34 = arith.constant dense<0.000000e+00> : vector<2x8x128xf32>
    %114 = tpu.matmul %113, %101, %cst_34 {dimension_numbers = #tpu.dot_dimension_numbers<[2], [1], [1], [2], [0, 0, 0, 1, 1, 2], [0], [0]>} : vector<2x8x8xbf16>, vector<2x8x128xbf16>, vector<2x8x128xf32> -> vector<2x8x128xf32>
    "tpu.trace_stop"() : () -> ()
    %115 = vector.shape_cast %114 : vector<2x8x128xf32> to vector<16x128xf32>
    %c0_35 = arith.constant 0 : index
    %c256 = arith.constant 256 : index
    %116 = vector.load %arg15[%c0_35, %c256] : memref<16x512xf32, #tpu.memory_space<vmem>>, vector<16x128xf32>
    tpu.vector_store %arg15[%c0_35, %c256], %115 {strides = array<i32>} : memref<16x512xf32, #tpu.memory_space<vmem>>, vector<16x128xf32>,
    %117 = vector.extract_strided_slice %42 {offsets = [0, 384], sizes = [16, 128], strides = [1, 1]} : vector<16x512xf32> to vector<16x128xf32>
    %118 = vector.shape_cast %117 : vector<16x128xf32> to vector<2x8x128xf32>
    %119 = arith.truncf %118 : vector<2x8x128xf32> to vector<2x8x128xbf16>
    %120 = vector.extract_strided_slice %43 {offsets = [0, 384], sizes = [16, 128], strides = [1, 1]} : vector<16x512xf32> to vector<16x128xf32>
    %121 = vector.shape_cast %120 : vector<16x128xf32> to vector<2x8x128xf32>
    %122 = arith.truncf %121 : vector<2x8x128xf32> to vector<2x8x128xbf16>
    %123 = vector.extract_strided_slice %44 {offsets = [0, 384], sizes = [16, 128], strides = [1, 1]} : vector<16x512xf32> to vector<16x128xf32>
    %124 = vector.shape_cast %123 : vector<16x128xf32> to vector<2x8x128xf32>
    %125 = arith.truncf %124 : vector<2x8x128xf32> to vector<2x8x128xbf16>
    "tpu.trace_start"() <{level = 10 : i32, message = "bqd,bkd->bqk"}> : () -> ()
    %cst_36 = arith.constant dense<0.000000e+00> : vector<2x8x8xf32>
    %126 = tpu.matmul %119, %122, %cst_36 {dimension_numbers = #tpu.dot_dimension_numbers<[2], [2], [1], [1], [0, 0, 0, 1, 1, 1], [0], [0]>} : vector<2x8x128xbf16>, vector<2x8x128xbf16>, vector<2x8x8xf32> -> vector<2x8x8xf32>
    "tpu.trace_stop"() : () -> ()
    %cst_37 = arith.constant dense<0xFF800000> : vector<2x8xf32>
    %127 = vector.multi_reduction <maximumf>, %126, %cst_37 [2] : vector<2x8x8xf32> to vector<2x8xf32>
    %128 = vector.shape_cast %127 : vector<2x8xf32> to vector<2x8x1xf32>
    %129 = vector.broadcast %128 : vector<2x8x1xf32> to vector<2x8x8xf32>
    %130 = arith.subf %126, %129 : vector<2x8x8xf32>
    %131 = math.exp %130 : vector<2x8x8xf32>
    %cst_38 = arith.constant dense<0.000000e+00> : vector<2x8xf32>
    %132 = vector.multi_reduction <add>, %131, %cst_38 [2] : vector<2x8x8xf32> to vector<2x8xf32>
    %133 = vector.shape_cast %132 : vector<2x8xf32> to vector<2x8x1xf32>
    %134 = tpu.reciprocal %133 {approx = true} : vector<2x8x1xf32> -> vector<2x8x1xf32>
    %135 = vector.broadcast %134 : vector<2x8x1xf32> to vector<2x8x8xf32>
    %136 = arith.mulf %131, %135 : vector<2x8x8xf32>
    %137 = arith.truncf %136 : vector<2x8x8xf32> to vector<2x8x8xbf16>
    "tpu.trace_start"() <{level = 10 : i32, message = "bqk,bkd->bqd"}> : () -> ()
    %cst_39 = arith.constant dense<0.000000e+00> : vector<2x8x128xf32>
    %138 = tpu.matmul %137, %125, %cst_39 {dimension_numbers = #tpu.dot_dimension_numbers<[2], [1], [1], [2], [0, 0, 0, 1, 1, 2], [0], [0]>} : vector<2x8x8xbf16>, vector<2x8x128xbf16>, vector<2x8x128xf32> -> vector<2x8x128xf32>
    "tpu.trace_stop"() : () -> ()
    %139 = vector.shape_cast %138 : vector<2x8x128xf32> to vector<16x128xf32>
    %c0_40 = arith.constant 0 : index
    %c384 = arith.constant 384 : index
    %140 = vector.load %arg15[%c0_40, %c384] : memref<16x512xf32, #tpu.memory_space<vmem>>, vector<16x128xf32>
    tpu.vector_store %arg15[%c0_40, %c384], %139 {strides = array<i32>} : memref<16x512xf32, #tpu.memory_space<vmem>>, vector<16x128xf32>,
    %c0_41 = arith.constant 0 : index
    %c0_42 = arith.constant 0 : index
    %141 = vector.load %arg15[%c0_41, %c0_42] : memref<16x512xf32, #tpu.memory_space<vmem>>, vector<16x512xf32>
    %142 = arith.truncf %141 : vector<16x512xf32> to vector<16x512xbf16>
    %c0_43 = arith.constant 0 : index
    %c0_44 = arith.constant 0 : index
    %c0_45 = arith.constant 0 : index
    %143 = vector.load %arg6[%c0_43, %c0_44, %c0_45] : memref<1x512x512xbf16, #tpu.memory_space<vmem>>, vector<1x512x512xbf16>
    %144 = vector.shape_cast %143 : vector<1x512x512xbf16> to vector<512x512xbf16>
    %cst_46 = arith.constant dense<0.000000e+00> : vector<16x512xf32>
    %145 = tpu.matmul %142, %144, %cst_46 {dimension_numbers = #tpu.dot_dimension_numbers<[1], [0], [0], [1], [0, 0, 1, 1], [], []>} : vector<16x512xbf16>, vector<512x512xbf16>, vector<16x512xf32> -> vector<16x512xf32>
    %c0_47 = arith.constant 0 : index
    %c0_48 = arith.constant 0 : index
    %c0_49 = arith.constant 0 : index
    %146 = vector.load %arg7[%c0_47, %c0_48, %c0_49] : memref<1x1x512xf32, #tpu.memory_space<vmem>>, vector<1x1x512xf32>
    %147 = vector.shape_cast %146 : vector<1x1x512xf32> to vector<1x512xf32>
    %148 = vector.broadcast %147 : vector<1x512xf32> to vector<16x512xf32>
    %149 = arith.addf %145, %148 : vector<16x512xf32>
    %150 = arith.addf %149, %3 : vector<16x512xf32>
    %c0_50 = arith.constant 0 : index
    %c0_51 = arith.constant 0 : index
    %c0_52 = arith.constant 0 : index
    %151 = vector.load %arg8[%c0_50, %c0_51, %c0_52] : memref<1x1x512xf32, #tpu.memory_space<vmem>>, vector<1x1x512xf32>
    %152 = vector.shape_cast %151 : vector<1x1x512xf32> to vector<1x512xf32>
    %c0_53 = arith.constant 0 : index
    %c0_54 = arith.constant 0 : index
    %c0_55 = arith.constant 0 : index
    %153 = vector.load %arg9[%c0_53, %c0_54, %c0_55] : memref<1x1x512xf32, #tpu.memory_space<vmem>>, vector<1x1x512xf32>
    %154 = vector.shape_cast %153 : vector<1x1x512xf32> to vector<1x512xf32>
    %155 = vector.shape_cast %150 : vector<16x512xf32> to vector<16x4x128xf32>
    %cst_56 = arith.constant dense<0.000000e+00> : vector<16x4xf32>
    %156 = vector.multi_reduction <add>, %155, %cst_56 [2] : vector<16x4x128xf32> to vector<16x4xf32>
    %157 = vector.shape_cast %156 : vector<16x4xf32> to vector<16x4x1xf32>
    %cst_57 = arith.constant 1.280000e+02 : f32
    %158 = vector.broadcast %cst_57 : f32 to vector<16x4x1xf32>
    %159 = arith.divf %157, %158 : vector<16x4x1xf32>
    %160 = vector.broadcast %159 : vector<16x4x1xf32> to vector<16x4x128xf32>
    %161 = arith.subf %155, %160 : vector<16x4x128xf32>
    %162 = arith.mulf %161, %161 : vector<16x4x128xf32>
    %cst_58 = arith.constant dense<0.000000e+00> : vector<16x4xf32>
    %163 = vector.multi_reduction <add>, %162, %cst_58 [2] : vector<16x4x128xf32> to vector<16x4xf32>
    %164 = vector.shape_cast %163 : vector<16x4xf32> to vector<16x4x1xf32>
    %cst_59 = arith.constant 1.280000e+02 : f32
    %165 = vector.broadcast %cst_59 : f32 to vector<16x4x1xf32>
    %166 = arith.divf %164, %165 : vector<16x4x1xf32>
    %167 = vector.broadcast %159 : vector<16x4x1xf32> to vector<16x4x128xf32>
    %168 = arith.subf %155, %167 : vector<16x4x128xf32>
    %cst_60 = arith.constant 9.99999974E-6 : f32
    %169 = vector.broadcast %cst_60 : f32 to vector<16x4x1xf32>
    %170 = arith.addf %166, %169 : vector<16x4x1xf32>
    %171 = math.rsqrt %170 : vector<16x4x1xf32>
    %172 = vector.broadcast %171 : vector<16x4x1xf32> to vector<16x4x128xf32>
    %173 = arith.mulf %168, %172 : vector<16x4x128xf32>
    %174 = vector.shape_cast %173 : vector<16x4x128xf32> to vector<16x512xf32>
    %175 = vector.broadcast %152 : vector<1x512xf32> to vector<16x512xf32>
    %176 = arith.mulf %174, %175 : vector<16x512xf32>
    %177 = vector.broadcast %154 : vector<1x512xf32> to vector<16x512xf32>
    %178 = arith.addf %176, %177 : vector<16x512xf32>
    %179 = vector.extract_strided_slice %178 {offsets = [0, 0], sizes = [16, 128], strides = [1, 1]} : vector<16x512xf32> to vector<16x128xf32>
    %180 = arith.truncf %179 : vector<16x128xf32> to vector<16x128xbf16>
    %c0_61 = arith.constant 0 : index
    %c0_62 = arith.constant 0 : index
    %c0_63 = arith.constant 0 : index
    %c0_64 = arith.constant 0 : index
    %181 = vector.load %arg10[%c0_61, %c0_62, %c0_63, %c0_64] : memref<1x4x128x128xbf16, #tpu.memory_space<vmem>>, vector<1x1x128x128xbf16>
    %182 = vector.shape_cast %181 : vector<1x1x128x128xbf16> to vector<128x128xbf16>
    %cst_65 = arith.constant dense<0.000000e+00> : vector<16x128xf32>
    %183 = tpu.matmul %180, %182, %cst_65 {dimension_numbers = #tpu.dot_dimension_numbers<[1], [0], [0], [1], [0, 0, 1, 1], [], []>} : vector<16x128xbf16>, vector<128x128xbf16>, vector<16x128xf32> -> vector<16x128xf32>
    %c0_66 = arith.constant 0 : index
    %c0_67 = arith.constant 0 : index
    %c0_68 = arith.constant 0 : index
    %c0_69 = arith.constant 0 : index
    %184 = vector.load %arg11[%c0_66, %c0_67, %c0_68, %c0_69] : memref<1x4x1x128xf32, #tpu.memory_space<vmem>>, vector<1x1x1x128xf32>
    %185 = vector.shape_cast %184 : vector<1x1x1x128xf32> to vector<1x128xf32>
    %186 = vector.broadcast %185 : vector<1x128xf32> to vector<16x128xf32>
    %187 = arith.addf %183, %186 : vector<16x128xf32>
    %188 = arith.mulf %187, %187 : vector<16x128xf32>
    %189 = arith.mulf %187, %188 : vector<16x128xf32>
    %cst_70 = arith.constant 4.471500e-02 : f32
    %190 = vector.broadcast %cst_70 : f32 to vector<16x128xf32>
    %191 = arith.mulf %190, %189 : vector<16x128xf32>
    %192 = arith.addf %187, %191 : vector<16x128xf32>
    %cst_71 = arith.constant 0.797884583 : f32
    %193 = vector.broadcast %cst_71 : f32 to vector<16x128xf32>
    %194 = arith.mulf %193, %192 : vector<16x128xf32>
    %195 = math.tanh %194 : vector<16x128xf32>
    %cst_72 = arith.constant 1.000000e+00 : f32
    %196 = vector.broadcast %cst_72 : f32 to vector<16x128xf32>
    %197 = arith.addf %196, %195 : vector<16x128xf32>
    %cst_73 = arith.constant 5.000000e-01 : f32
    %198 = vector.broadcast %cst_73 : f32 to vector<16x128xf32>
    %199 = arith.mulf %198, %197 : vector<16x128xf32>
    %200 = arith.mulf %187, %199 : vector<16x128xf32>
    %201 = arith.truncf %200 : vector<16x128xf32> to vector<16x128xbf16>
    %c0_74 = arith.constant 0 : index
    %c0_75 = arith.constant 0 : index
    %c0_76 = arith.constant 0 : index
    %c0_77 = arith.constant 0 : index
    %202 = vector.load %arg12[%c0_74, %c0_75, %c0_76, %c0_77] : memref<1x4x128x128xbf16, #tpu.memory_space<vmem>>, vector<1x1x128x128xbf16>
    %203 = vector.shape_cast %202 : vector<1x1x128x128xbf16> to vector<128x128xbf16>
    %cst_78 = arith.constant dense<0.000000e+00> : vector<16x128xf32>
    %204 = tpu.matmul %201, %203, %cst_78 {dimension_numbers = #tpu.dot_dimension_numbers<[1], [0], [0], [1], [0, 0, 1, 1], [], []>} : vector<16x128xbf16>, vector<128x128xbf16>, vector<16x128xf32> -> vector<16x128xf32>
    %c0_79 = arith.constant 0 : index
    %c0_80 = arith.constant 0 : index
    %c0_81 = arith.constant 0 : index
    %c0_82 = arith.constant 0 : index
    %205 = vector.load %arg13[%c0_79, %c0_80, %c0_81, %c0_82] : memref<1x4x1x128xf32, #tpu.memory_space<vmem>>, vector<1x1x1x128xf32>
    %206 = vector.shape_cast %205 : vector<1x1x1x128xf32> to vector<1x128xf32>
    %207 = vector.broadcast %206 : vector<1x128xf32> to vector<16x128xf32>
    %208 = arith.addf %204, %207 : vector<16x128xf32>
    %c0_83 = arith.constant 0 : index
    %c0_84 = arith.constant 0 : index
    %209 = vector.load %arg15[%c0_83, %c0_84] : memref<16x512xf32, #tpu.memory_space<vmem>>, vector<16x128xf32>
    tpu.vector_store %arg15[%c0_83, %c0_84], %208 {strides = array<i32>} : memref<16x512xf32, #tpu.memory_space<vmem>>, vector<16x128xf32>,
    %210 = vector.extract_strided_slice %178 {offsets = [0, 128], sizes = [16, 128], strides = [1, 1]} : vector<16x512xf32> to vector<16x128xf32>
    %211 = arith.truncf %210 : vector<16x128xf32> to vector<16x128xbf16>
    %c0_85 = arith.constant 0 : index
    %c1 = arith.constant 1 : index
    %c0_86 = arith.constant 0 : index
    %c0_87 = arith.constant 0 : index
    %212 = vector.load %arg10[%c0_85, %c1, %c0_86, %c0_87] : memref<1x4x128x128xbf16, #tpu.memory_space<vmem>>, vector<1x1x128x128xbf16>
    %213 = vector.shape_cast %212 : vector<1x1x128x128xbf16> to vector<128x128xbf16>
    %cst_88 = arith.constant dense<0.000000e+00> : vector<16x128xf32>
    %214 = tpu.matmul %211, %213, %cst_88 {dimension_numbers = #tpu.dot_dimension_numbers<[1], [0], [0], [1], [0, 0, 1, 1], [], []>} : vector<16x128xbf16>, vector<128x128xbf16>, vector<16x128xf32> -> vector<16x128xf32>
    %c0_89 = arith.constant 0 : index
    %c1_90 = arith.constant 1 : index
    %c0_91 = arith.constant 0 : index
    %c0_92 = arith.constant 0 : index
    %215 = vector.load %arg11[%c0_89, %c1_90, %c0_91, %c0_92] : memref<1x4x1x128xf32, #tpu.memory_space<vmem>>, vector<1x1x1x128xf32>
    %216 = vector.shape_cast %215 : vector<1x1x1x128xf32> to vector<1x128xf32>
    %217 = vector.broadcast %216 : vector<1x128xf32> to vector<16x128xf32>
    %218 = arith.addf %214, %217 : vector<16x128xf32>
    %219 = arith.mulf %218, %218 : vector<16x128xf32>
    %220 = arith.mulf %218, %219 : vector<16x128xf32>
    %cst_93 = arith.constant 4.471500e-02 : f32
    %221 = vector.broadcast %cst_93 : f32 to vector<16x128xf32>
    %222 = arith.mulf %221, %220 : vector<16x128xf32>
    %223 = arith.addf %218, %222 : vector<16x128xf32>
    %cst_94 = arith.constant 0.797884583 : f32
    %224 = vector.broadcast %cst_94 : f32 to vector<16x128xf32>
    %225 = arith.mulf %224, %223 : vector<16x128xf32>
    %226 = math.tanh %225 : vector<16x128xf32>
    %cst_95 = arith.constant 1.000000e+00 : f32
    %227 = vector.broadcast %cst_95 : f32 to vector<16x128xf32>
    %228 = arith.addf %227, %226 : vector<16x128xf32>
    %cst_96 = arith.constant 5.000000e-01 : f32
    %229 = vector.broadcast %cst_96 : f32 to vector<16x128xf32>
    %230 = arith.mulf %229, %228 : vector<16x128xf32>
    %231 = arith.mulf %218, %230 : vector<16x128xf32>
    %232 = arith.truncf %231 : vector<16x128xf32> to vector<16x128xbf16>
    %c0_97 = arith.constant 0 : index
    %c1_98 = arith.constant 1 : index
    %c0_99 = arith.constant 0 : index
    %c0_100 = arith.constant 0 : index
    %233 = vector.load %arg12[%c0_97, %c1_98, %c0_99, %c0_100] : memref<1x4x128x128xbf16, #tpu.memory_space<vmem>>, vector<1x1x128x128xbf16>
    %234 = vector.shape_cast %233 : vector<1x1x128x128xbf16> to vector<128x128xbf16>
    %cst_101 = arith.constant dense<0.000000e+00> : vector<16x128xf32>
    %235 = tpu.matmul %232, %234, %cst_101 {dimension_numbers = #tpu.dot_dimension_numbers<[1], [0], [0], [1], [0, 0, 1, 1], [], []>} : vector<16x128xbf16>, vector<128x128xbf16>, vector<16x128xf32> -> vector<16x128xf32>
    %c0_102 = arith.constant 0 : index
    %c1_103 = arith.constant 1 : index
    %c0_104 = arith.constant 0 : index
    %c0_105 = arith.constant 0 : index
    %236 = vector.load %arg13[%c0_102, %c1_103, %c0_104, %c0_105] : memref<1x4x1x128xf32, #tpu.memory_space<vmem>>, vector<1x1x1x128xf32>
    %237 = vector.shape_cast %236 : vector<1x1x1x128xf32> to vector<1x128xf32>
    %238 = vector.broadcast %237 : vector<1x128xf32> to vector<16x128xf32>
    %239 = arith.addf %235, %238 : vector<16x128xf32>
    %c0_106 = arith.constant 0 : index
    %c128_107 = arith.constant 128 : index
    %240 = vector.load %arg15[%c0_106, %c128_107] : memref<16x512xf32, #tpu.memory_space<vmem>>, vector<16x128xf32>
    tpu.vector_store %arg15[%c0_106, %c128_107], %239 {strides = array<i32>} : memref<16x512xf32, #tpu.memory_space<vmem>>, vector<16x128xf32>,
    %241 = vector.extract_strided_slice %178 {offsets = [0, 256], sizes = [16, 128], strides = [1, 1]} : vector<16x512xf32> to vector<16x128xf32>
    %242 = arith.truncf %241 : vector<16x128xf32> to vector<16x128xbf16>
    %c0_108 = arith.constant 0 : index
    %c2 = arith.constant 2 : index
    %c0_109 = arith.constant 0 : index
    %c0_110 = arith.constant 0 : index
    %243 = vector.load %arg10[%c0_108, %c2, %c0_109, %c0_110] : memref<1x4x128x128xbf16, #tpu.memory_space<vmem>>, vector<1x1x128x128xbf16>
    %244 = vector.shape_cast %243 : vector<1x1x128x128xbf16> to vector<128x128xbf16>
    %cst_111 = arith.constant dense<0.000000e+00> : vector<16x128xf32>
    %245 = tpu.matmul %242, %244, %cst_111 {dimension_numbers = #tpu.dot_dimension_numbers<[1], [0], [0], [1], [0, 0, 1, 1], [], []>} : vector<16x128xbf16>, vector<128x128xbf16>, vector<16x128xf32> -> vector<16x128xf32>
    %c0_112 = arith.constant 0 : index
    %c2_113 = arith.constant 2 : index
    %c0_114 = arith.constant 0 : index
    %c0_115 = arith.constant 0 : index
    %246 = vector.load %arg11[%c0_112, %c2_113, %c0_114, %c0_115] : memref<1x4x1x128xf32, #tpu.memory_space<vmem>>, vector<1x1x1x128xf32>
    %247 = vector.shape_cast %246 : vector<1x1x1x128xf32> to vector<1x128xf32>
    %248 = vector.broadcast %247 : vector<1x128xf32> to vector<16x128xf32>
    %249 = arith.addf %245, %248 : vector<16x128xf32>
    %250 = arith.mulf %249, %249 : vector<16x128xf32>
    %251 = arith.mulf %249, %250 : vector<16x128xf32>
    %cst_116 = arith.constant 4.471500e-02 : f32
    %252 = vector.broadcast %cst_116 : f32 to vector<16x128xf32>
    %253 = arith.mulf %252, %251 : vector<16x128xf32>
    %254 = arith.addf %249, %253 : vector<16x128xf32>
    %cst_117 = arith.constant 0.797884583 : f32
    %255 = vector.broadcast %cst_117 : f32 to vector<16x128xf32>
    %256 = arith.mulf %255, %254 : vector<16x128xf32>
    %257 = math.tanh %256 : vector<16x128xf32>
    %cst_118 = arith.constant 1.000000e+00 : f32
    %258 = vector.broadcast %cst_118 : f32 to vector<16x128xf32>
    %259 = arith.addf %258, %257 : vector<16x128xf32>
    %cst_119 = arith.constant 5.000000e-01 : f32
    %260 = vector.broadcast %cst_119 : f32 to vector<16x128xf32>
    %261 = arith.mulf %260, %259 : vector<16x128xf32>
    %262 = arith.mulf %249, %261 : vector<16x128xf32>
    %263 = arith.truncf %262 : vector<16x128xf32> to vector<16x128xbf16>
    %c0_120 = arith.constant 0 : index
    %c2_121 = arith.constant 2 : index
    %c0_122 = arith.constant 0 : index
    %c0_123 = arith.constant 0 : index
    %264 = vector.load %arg12[%c0_120, %c2_121, %c0_122, %c0_123] : memref<1x4x128x128xbf16, #tpu.memory_space<vmem>>, vector<1x1x128x128xbf16>
    %265 = vector.shape_cast %264 : vector<1x1x128x128xbf16> to vector<128x128xbf16>
    %cst_124 = arith.constant dense<0.000000e+00> : vector<16x128xf32>
    %266 = tpu.matmul %263, %265, %cst_124 {dimension_numbers = #tpu.dot_dimension_numbers<[1], [0], [0], [1], [0, 0, 1, 1], [], []>} : vector<16x128xbf16>, vector<128x128xbf16>, vector<16x128xf32> -> vector<16x128xf32>
    %c0_125 = arith.constant 0 : index
    %c2_126 = arith.constant 2 : index
    %c0_127 = arith.constant 0 : index
    %c0_128 = arith.constant 0 : index
    %267 = vector.load %arg13[%c0_125, %c2_126, %c0_127, %c0_128] : memref<1x4x1x128xf32, #tpu.memory_space<vmem>>, vector<1x1x1x128xf32>
    %268 = vector.shape_cast %267 : vector<1x1x1x128xf32> to vector<1x128xf32>
    %269 = vector.broadcast %268 : vector<1x128xf32> to vector<16x128xf32>
    %270 = arith.addf %266, %269 : vector<16x128xf32>
    %c0_129 = arith.constant 0 : index
    %c256_130 = arith.constant 256 : index
    %271 = vector.load %arg15[%c0_129, %c256_130] : memref<16x512xf32, #tpu.memory_space<vmem>>, vector<16x128xf32>
    tpu.vector_store %arg15[%c0_129, %c256_130], %270 {strides = array<i32>} : memref<16x512xf32, #tpu.memory_space<vmem>>, vector<16x128xf32>,
    %272 = vector.extract_strided_slice %178 {offsets = [0, 384], sizes = [16, 128], strides = [1, 1]} : vector<16x512xf32> to vector<16x128xf32>
    %273 = arith.truncf %272 : vector<16x128xf32> to vector<16x128xbf16>
    %c0_131 = arith.constant 0 : index
    %c3 = arith.constant 3 : index
    %c0_132 = arith.constant 0 : index
    %c0_133 = arith.constant 0 : index
    %274 = vector.load %arg10[%c0_131, %c3, %c0_132, %c0_133] : memref<1x4x128x128xbf16, #tpu.memory_space<vmem>>, vector<1x1x128x128xbf16>
    %275 = vector.shape_cast %274 : vector<1x1x128x128xbf16> to vector<128x128xbf16>
    %cst_134 = arith.constant dense<0.000000e+00> : vector<16x128xf32>
    %276 = tpu.matmul %273, %275, %cst_134 {dimension_numbers = #tpu.dot_dimension_numbers<[1], [0], [0], [1], [0, 0, 1, 1], [], []>} : vector<16x128xbf16>, vector<128x128xbf16>, vector<16x128xf32> -> vector<16x128xf32>
    %c0_135 = arith.constant 0 : index
    %c3_136 = arith.constant 3 : index
    %c0_137 = arith.constant 0 : index
    %c0_138 = arith.constant 0 : index
    %277 = vector.load %arg11[%c0_135, %c3_136, %c0_137, %c0_138] : memref<1x4x1x128xf32, #tpu.memory_space<vmem>>, vector<1x1x1x128xf32>
    %278 = vector.shape_cast %277 : vector<1x1x1x128xf32> to vector<1x128xf32>
    %279 = vector.broadcast %278 : vector<1x128xf32> to vector<16x128xf32>
    %280 = arith.addf %276, %279 : vector<16x128xf32>
    %281 = arith.mulf %280, %280 : vector<16x128xf32>
    %282 = arith.mulf %280, %281 : vector<16x128xf32>
    %cst_139 = arith.constant 4.471500e-02 : f32
    %283 = vector.broadcast %cst_139 : f32 to vector<16x128xf32>
    %284 = arith.mulf %283, %282 : vector<16x128xf32>
    %285 = arith.addf %280, %284 : vector<16x128xf32>
    %cst_140 = arith.constant 0.797884583 : f32
    %286 = vector.broadcast %cst_140 : f32 to vector<16x128xf32>
    %287 = arith.mulf %286, %285 : vector<16x128xf32>
    %288 = math.tanh %287 : vector<16x128xf32>
    %cst_141 = arith.constant 1.000000e+00 : f32
    %289 = vector.broadcast %cst_141 : f32 to vector<16x128xf32>
    %290 = arith.addf %289, %288 : vector<16x128xf32>
    %cst_142 = arith.constant 5.000000e-01 : f32
    %291 = vector.broadcast %cst_142 : f32 to vector<16x128xf32>
    %292 = arith.mulf %291, %290 : vector<16x128xf32>
    %293 = arith.mulf %280, %292 : vector<16x128xf32>
    %294 = arith.truncf %293 : vector<16x128xf32> to vector<16x128xbf16>
    %c0_143 = arith.constant 0 : index
    %c3_144 = arith.constant 3 : index
    %c0_145 = arith.constant 0 : index
    %c0_146 = arith.constant 0 : index
    %295 = vector.load %arg12[%c0_143, %c3_144, %c0_145, %c0_146] : memref<1x4x128x128xbf16, #tpu.memory_space<vmem>>, vector<1x1x128x128xbf16>
    %296 = vector.shape_cast %295 : vector<1x1x128x128xbf16> to vector<128x128xbf16>
    %cst_147 = arith.constant dense<0.000000e+00> : vector<16x128xf32>
    %297 = tpu.matmul %294, %296, %cst_147 {dimension_numbers = #tpu.dot_dimension_numbers<[1], [0], [0], [1], [0, 0, 1, 1], [], []>} : vector<16x128xbf16>, vector<128x128xbf16>, vector<16x128xf32> -> vector<16x128xf32>
    %c0_148 = arith.constant 0 : index
    %c3_149 = arith.constant 3 : index
    %c0_150 = arith.constant 0 : index
    %c0_151 = arith.constant 0 : index
    %298 = vector.load %arg13[%c0_148, %c3_149, %c0_150, %c0_151] : memref<1x4x1x128xf32, #tpu.memory_space<vmem>>, vector<1x1x1x128xf32>
    %299 = vector.shape_cast %298 : vector<1x1x1x128xf32> to vector<1x128xf32>
    %300 = vector.broadcast %299 : vector<1x128xf32> to vector<16x128xf32>
    %301 = arith.addf %297, %300 : vector<16x128xf32>
    %c0_152 = arith.constant 0 : index
    %c384_153 = arith.constant 384 : index
    %302 = vector.load %arg15[%c0_152, %c384_153] : memref<16x512xf32, #tpu.memory_space<vmem>>, vector<16x128xf32>
    tpu.vector_store %arg15[%c0_152, %c384_153], %301 {strides = array<i32>} : memref<16x512xf32, #tpu.memory_space<vmem>>, vector<16x128xf32>,
    %c0_154 = arith.constant 0 : index
    %c0_155 = arith.constant 0 : index
    %303 = vector.load %arg15[%c0_154, %c0_155] : memref<16x512xf32, #tpu.memory_space<vmem>>, vector<16x512xf32>
    %304 = arith.addf %303, %150 : vector<16x512xf32>
    %c0_156 = arith.constant 0 : index
    %c0_157 = arith.constant 0 : index
    %305 = vector.load %arg14[%c0_156, %c0_157] : memref<16x512xf32, #tpu.memory_space<vmem>>, vector<16x512xf32>
    tpu.vector_store %arg14[%c0_156, %c0_157], %304 {strides = array<i32>} : memref<16x512xf32, #tpu.memory_space<vmem>>, vector<16x512xf32>,
    return
  }
  func.func @transform_0(%arg0: i32) -> (i32, i32) {
    %c0_i32 = arith.constant 0 : i32
    %c0_i32_0 = arith.constant 0 : i32
    %c0_i32_1 = arith.constant 0 : i32
    return %c0_i32, %c0_i32_0 : i32, i32
  }
  func.func @transform_1(%arg0: i32) -> (i32, i32, i32) {
    %c0_i32 = arith.constant 0 : i32
    %c0_i32_0 = arith.constant 0 : i32
    %c0_i32_1 = arith.constant 0 : i32
    return %arg0, %c0_i32, %c0_i32_0 : i32, i32, i32
  }
  func.func @transform_2(%arg0: i32) -> (i32, i32, i32) {
    %c0_i32 = arith.constant 0 : i32
    %c0_i32_0 = arith.constant 0 : i32
    %c0_i32_1 = arith.constant 0 : i32
    return %arg0, %c0_i32, %c0_i32_0 : i32, i32, i32
  }
  func.func @transform_3(%arg0: i32) -> (i32, i32, i32) {
    %c0_i32 = arith.constant 0 : i32
    %c0_i32_0 = arith.constant 0 : i32
    %c0_i32_1 = arith.constant 0 : i32
    return %arg0, %c0_i32, %c0_i32_0 : i32, i32, i32
  }
  func.func @transform_4(%arg0: i32) -> (i32, i32, i32) {
    %c0_i32 = arith.constant 0 : i32
    %c0_i32_0 = arith.constant 0 : i32
    %c0_i32_1 = arith.constant 0 : i32
    return %arg0, %c0_i32, %c0_i32_0 : i32, i32, i32
  }
  func.func @transform_5(%arg0: i32) -> (i32, i32, i32) {
    %c0_i32 = arith.constant 0 : i32
    %c0_i32_0 = arith.constant 0 : i32
    %c0_i32_1 = arith.constant 0 : i32
    return %arg0, %c0_i32, %c0_i32_0 : i32, i32, i32
  }
  func.func @transform_6(%arg0: i32) -> (i32, i32, i32) {
    %c0_i32 = arith.constant 0 : i32
    %c0_i32_0 = arith.constant 0 : i32
    %c0_i32_1 = arith.constant 0 : i32
    return %arg0, %c0_i32, %c0_i32_0 : i32, i32, i32
  }
  func.func @transform_7(%arg0: i32) -> (i32, i32, i32) {
    %c0_i32 = arith.constant 0 : i32
    %c0_i32_0 = arith.constant 0 : i32
    %c0_i32_1 = arith.constant 0 : i32
    return %arg0, %c0_i32, %c0_i32_0 : i32, i32, i32
  }
  func.func @transform_8(%arg0: i32) -> (i32, i32, i32) {
    %c0_i32 = arith.constant 0 : i32
    %c0_i32_0 = arith.constant 0 : i32
    %c0_i32_1 = arith.constant 0 : i32
    return %arg0, %c0_i32, %c0_i32_0 : i32, i32, i32
  }
  func.func @transform_9(%arg0: i32) -> (i32, i32, i32, i32) {
    %c0_i32 = arith.constant 0 : i32
    %c0_i32_0 = arith.constant 0 : i32
    %c0_i32_1 = arith.constant 0 : i32
    %c0_i32_2 = arith.constant 0 : i32
    return %arg0, %c0_i32, %c0_i32_0, %c0_i32_1 : i32, i32, i32, i32
  }
  func.func @transform_10(%arg0: i32) -> (i32, i32, i32, i32) {
    %c0_i32 = arith.constant 0 : i32
    %c0_i32_0 = arith.constant 0 : i32
    %c0_i32_1 = arith.constant 0 : i32
    %c0_i32_2 = arith.constant 0 : i32
    return %arg0, %c0_i32, %c0_i32_0, %c0_i32_1 : i32, i32, i32, i32
  }
  func.func @transform_11(%arg0: i32) -> (i32, i32, i32, i32) {
    %c0_i32 = arith.constant 0 : i32
    %c0_i32_0 = arith.constant 0 : i32
    %c0_i32_1 = arith.constant 0 : i32
    %c0_i32_2 = arith.constant 0 : i32
    return %arg0, %c0_i32, %c0_i32_0, %c0_i32_1 : i32, i32, i32, i32
  }
  func.func @transform_12(%arg0: i32) -> (i32, i32, i32, i32) {
    %c0_i32 = arith.constant 0 : i32
    %c0_i32_0 = arith.constant 0 : i32
    %c0_i32_1 = arith.constant 0 : i32
    %c0_i32_2 = arith.constant 0 : i32
    return %arg0, %c0_i32, %c0_i32_0, %c0_i32_1 : i32, i32, i32, i32
  }
  func.func @transform_13(%arg0: i32) -> (i32, i32) {
    %c0_i32 = arith.constant 0 : i32
    %c0_i32_0 = arith.constant 0 : i32
    %c0_i32_1 = arith.constant 0 : i32
    return %c0_i32, %c0_i32_0 : i32, i32
  }
}

</mosaic_0001>

<llo_original>
// kernel: tpu_custom_call.1
$region0: #{tpu_custom_call.1}
  #allocation0 [shape = 'u32[]', space=smem, size = 0x4, offset = 0x4, fixed_abs, tag = 'smem constant byte address 0x4 - core index']
  #allocation1 [shape = 'u32[72,128]{1,0:T(1,128)}', space=vmem, size = 0x9000, scoped, tag = 'internal scratch']
  #allocation2 [shape = 'f32[16,512]{1,0:T(8,128)}', space=vmem, size = 0x8000, scoped, tag = 'scratch operand']
  %s0 = inlined_call_operand.hbm [shape: f32[16,512], index: 0, kind: input, shape index: {}]
  %s1 = inlined_call_operand.hbm [shape: f32[2,1,512], index: 1, kind: input, shape index: {}]
  %s2 = inlined_call_operand.hbm [shape: f32[2,1,512], index: 2, kind: input, shape index: {}]
  %s3 = inlined_call_operand.hbm [shape: bf16[2,512,1536], index: 3, kind: input, shape index: {}]
  %s4 = inlined_call_operand.hbm [shape: f32[2,1,1536], index: 4, kind: input, shape index: {}]
  %s5 = inlined_call_operand.hbm [shape: bf16[2,512,512], index: 5, kind: input, shape index: {}]
  %s6 = inlined_call_operand.hbm [shape: f32[2,1,512], index: 6, kind: input, shape index: {}]
  %s7 = inlined_call_operand.hbm [shape: f32[2,1,512], index: 7, kind: input, shape index: {}]
  %s8 = inlined_call_operand.hbm [shape: f32[2,1,512], index: 8, kind: input, shape index: {}]
  %s9 = inlined_call_operand.hbm [shape: bf16[2,4,128,128], index: 9, kind: input, shape index: {}]
  %s10 = inlined_call_operand.hbm [shape: f32[2,4,1,128], index: 10, kind: input, shape index: {}]
  %s11 = inlined_call_operand.hbm [shape: bf16[2,4,128,128], index: 11, kind: input, shape index: {}]
  %s12 = inlined_call_operand.hbm [shape: f32[2,4,1,128], index: 12, kind: input, shape index: {}]
  %s13 = inlined_call_operand.hbm [shape: f32[16,512], index: 13, kind: output, shape index: {}]
  %s14 = sld [smem:[#allocation0]]
  $region141: #{tpu_custom_call.1} parent=0
    _
  %s16 = ssub.s32 1, %s14
  %s17 = scalar_select 0, %s16, %s14
  $region1: #{tpu_custom_call.1} parent=0
    #allocation3 [shape = 'u8[32768]{0}', space=vmem, size = 0x8000, scoped, tag = 'input window, operand 0, single buffered']
    #allocation4 [shape = 's32[2]{0}', space=sflag, size = 0x8, scoped, tag = 'scoped memory for tpu_custom_call.1']
    #allocation5 [shape = 's32[2]{0}', space=sflag, size = 0x8, scoped, tag = 'scoped memory for tpu_custom_call.1']
    #allocation6 [shape = 'u8[4096]{0}', space=vmem, size = 0x1000, scoped, tag = 'input window, operand 1']
    #allocation7 [shape = 's32[2]{0}', space=sflag, size = 0x8, scoped, tag = 'scoped memory for tpu_custom_call.1']
    #allocation8 [shape = 'u8[4096]{0}', space=vmem, size = 0x1000, scoped, tag = 'input window, operand 2']
    #allocation9 [shape = 'u8[3145728]{0}', space=vmem, size = 0x300000, scoped, tag = 'input window, operand 3']
    #allocation10 [shape = 's32[2]{0}', space=sflag, size = 0x8, scoped, tag = 'scoped memory for tpu_custom_call.1']
    #allocation11 [shape = 'u8[12288]{0}', space=vmem, size = 0x3000, scoped, tag = 'input window, operand 4']
    #allocation12 [shape = 'u8[1048576]{0}', space=vmem, size = 0x100000, scoped, tag = 'input window, operand 5']
    #allocation13 [shape = 's32[2]{0}', space=sflag, size = 0x8, scoped, tag = 'scoped memory for tpu_custom_call.1']
    #allocation14 [shape = 'u8[4096]{0}', space=vmem, size = 0x1000, scoped, tag = 'input window, operand 6']
    #allocation15 [shape = 'u8[4096]{0}', space=vmem, size = 0x1000, scoped, tag = 'input window, operand 7']
    #allocation16 [shape = 's32[2]{0}', space=sflag, size = 0x8, scoped, tag = 'scoped memory for tpu_custom_call.1']
    #allocation17 [shape = 'u8[4096]{0}', space=vmem, size = 0x1000, scoped, tag = 'input window, operand 8']
    #allocation18 [shape = 'u8[262144]{0}', space=vmem, size = 0x40000, scoped, tag = 'input window, operand 9']
    #allocation19 [shape = 's32[2]{0}', space=sflag, size = 0x8, scoped, tag = 'scoped memory for tpu_custom_call.1']
    #allocation20 [shape = 'u8[4096]{0}', space=vmem, size = 0x1000, scoped, tag = 'input window, operand 10']
    #allocation21 [shape = 'u8[262144]{0}', space=vmem, size = 0x40000, scoped, tag = 'input window, operand 11']
    #allocation22 [shape = 's32[2]{0}', space=sflag, size = 0x8, scoped, tag = 'scoped memory for tpu_custom_call.1']
    #allocation23 [shape = 'u8[4096]{0}', space=vmem, size = 0x1000, scoped, tag = 'input window, operand 12']
    #allocation24 [shape = 'u8[32768]{0}', space=vmem, size = 0x8000, scoped, tag = 'output window, operand 0, single buffered']
    %18 = vsyncpa [#allocation4], 0
    %19 = vsyncpa [#allocation7], 0
    %s20 = scalar_lea.sflag [#allocation7], 1
    %21 = vsyncpa %s20, 0
    %22 = vsyncpa [#allocation10], 0
    %s23 = scalar_lea.sflag [#allocation10], 1
    %24 = vsyncpa %s23, 0
    %25 = vsyncpa [#allocation13], 0
    %s26 = scalar_lea.sflag [#allocation13], 1
    %27 = vsyncpa %s26, 0
    %28 = vsyncpa [#allocation16], 0
    %s29 = scalar_lea.sflag [#allocation16], 1
    %30 = vsyncpa %s29, 0
    %31 = vsyncpa [#allocation19], 0
    %s32 = scalar_lea.sflag [#allocation19], 1
    %33 = vsyncpa %s32, 0
    %34 = vsyncpa [#allocation22], 0
    %s35 = scalar_lea.sflag [#allocation22], 1
    %36 = vsyncpa %s35, 0
    %37 = vsyncpa [#allocation5], 0
    loop: start=0, step=1, limit=4
    $region2: #{tpu_custom_call.1} parent=1 // loop_pre_header
      _
    $region3: #{tpu_custom_call.1} parent=1 // loop_header
      %s39 = sphi 0, %s43
      %p40 = scmp.ge.s32.totalorder %s39, 4
      %s47 = sphi 0, %s47
      %s49 = sphi 0, %s47
      %s50 = sphi 0, %s49
      %s64 = sphi 0, %s50
      %s70 = sphi 0, %s72
      %s73 = sphi 0, %s70
      %s74 = sphi 0, %s73
      %s90 = sphi 0, %s74
      %s96 = sphi 0, %s98
      %s99 = sphi 0, %s96
      %s100 = sphi 0, %s99
      %s116 = sphi 0, %s100
      %s122 = sphi 0, %s124
      %s125 = sphi 0, %s122
      %s126 = sphi 0, %s125
      %s142 = sphi 0, %s126
      %s148 = sphi 0, %s150
      %s151 = sphi 0, %s148
      %s152 = sphi 0, %s151
      %s168 = sphi 0, %s152
      %s174 = sphi 0, %s176
      %s177 = sphi 0, %s174
      %s178 = sphi 0, %s177
      %s194 = sphi 0, %s178
      %s200 = sphi 0, %s202
      %s203 = sphi 0, %s200
      %s204 = sphi 0, %s203
      %s220 = sphi 0, %s204
      %s226 = sphi 0, %s228
      %s229 = sphi 0, %s226
      %s230 = sphi 0, %s229
      %s246 = sphi 0, %s230
      %s252 = sphi 0, %s254
      %s255 = sphi 0, %s252
      %s256 = sphi 0, %s255
      %s272 = sphi 0, %s256
      %s278 = sphi 0, %s280
      %s281 = sphi 0, %s278
      %s282 = sphi 0, %s281
      %s298 = sphi 0, %s282
      %s304 = sphi 0, %s306
      %s307 = sphi 0, %s304
      %s308 = sphi 0, %s307
      %s324 = sphi 0, %s308
      %s330 = sphi 0, %s332
      %s333 = sphi 0, %s330
      %s334 = sphi 0, %s333
      %s350 = sphi 0, %s334
      %s356 = sphi 0, %s358
      %s359 = sphi 0, %s356
      %s360 = sphi 0, %s359
      %s376 = sphi 0, %s360
      %s380 = sphi 0, %s380
      %s382 = sphi 0, %s380
      %s383 = sphi 0, %s382
      %s397 = sphi 0, %s383
    $region4: #{tpu_custom_call.1} parent=1 // loop_header_branch
      %42 = sbr.rel (%p40) target = $region8
    $region5: #{tpu_custom_call.1} parent=1 // loop_body
      %s44 = ssub.s32 %s39, 1
      %s45 = ssub.s32 %s39, 2
      %s46 = sadd.s32 %s39, 1
      %s48 = sadd.s32 %s47, 1
      %p51 = scmp.eq.s32.totalorder %s39, 1
      %p52 = scmp.ne.s32.totalorder %s47, %s49
      %p53 = scmp.eq.s32.totalorder %s39, 0
      %p54 = por %p52, %p53
      %p55 = scmp.ne.s32.totalorder %s47, %s49
      %p56 = scmp.eq.s32.totalorder %s44, 1
      %p57 = por %p55, %p56
      %p58 = scmp.ne.s32.totalorder %s49, %s50
      %p59 = scmp.eq.s32.totalorder %s44, 0
      %p60 = por %p58, %p59
      %p61 = scmp.ne.s32.totalorder %s49, %s50
      %p62 = scmp.eq.s32.totalorder %s45, 1
      %p63 = por %p61, %p62
      %p65 = scmp.ne.s32.totalorder %s50, %s64
      %p66 = scmp.eq.s32.totalorder %s45, 0
      %p67 = por %p65, %p66
      %s68 = ssub.s32 %s39, %s46
      %p69 = scmp.eq.s32.totalorder %s68, 0
      %s71 = sadd.s32 %s70, 1
      %s72 = scalar_select %p69, %s70, %s71
      %p75 = pneg %p69
      %p76 = scmp.eq.s32.totalorder %s39, 1
      %p77 = por %p75, %p76
      %p78 = scmp.ne.s32.totalorder %s70, %s73
      %p79 = scmp.eq.s32.totalorder %s39, 0
      %p80 = por %p78, %p79
      %p81 = scmp.ne.s32.totalorder %s70, %s73
      %p82 = scmp.eq.s32.totalorder %s44, 1
      %p83 = por %p81, %p82
      %p84 = scmp.ne.s32.totalorder %s73, %s74
      %p85 = scmp.eq.s32.totalorder %s44, 0
      %p86 = por %p84, %p85
      %p87 = scmp.ne.s32.totalorder %s73, %s74
      %p88 = scmp.eq.s32.totalorder %s45, 1
      %p89 = por %p87, %p88
      %p91 = scmp.ne.s32.totalorder %s74, %s90
      %p92 = scmp.eq.s32.totalorder %s45, 0
      %p93 = por %p91, %p92
      %s94 = ssub.s32 %s39, %s46
      %p95 = scmp.eq.s32.totalorder %s94, 0
      %s97 = sadd.s32 %s96, 1
      %s98 = scalar_select %p95, %s96, %s97
      %p101 = pneg %p95
      %p102 = scmp.eq.s32.totalorder %s39, 1
      %p103 = por %p101, %p102
      %p104 = scmp.ne.s32.totalorder %s96, %s99
      %p105 = scmp.eq.s32.totalorder %s39, 0
      %p106 = por %p104, %p105
      %p107 = scmp.ne.s32.totalorder %s96, %s99
      %p108 = scmp.eq.s32.totalorder %s44, 1
      %p109 = por %p107, %p108
      %p110 = scmp.ne.s32.totalorder %s99, %s100
      %p111 = scmp.eq.s32.totalorder %s44, 0
      %p112 = por %p110, %p111
      %p113 = scmp.ne.s32.totalorder %s99, %s100
      %p114 = scmp.eq.s32.totalorder %s45, 1
      %p115 = por %p113, %p114
      %p117 = scmp.ne.s32.totalorder %s100, %s116
      %p118 = scmp.eq.s32.totalorder %s45, 0
      %p119 = por %p117, %p118
      %s120 = ssub.s32 %s39, %s46
      %p121 = scmp.eq.s32.totalorder %s120, 0
      %s123 = sadd.s32 %s122, 1
      %s124 = scalar_select %p121, %s122, %s123
      %p127 = pneg %p121
      %p128 = scmp.eq.s32.totalorder %s39, 1
      %p129 = por %p127, %p128
      %p130 = scmp.ne.s32.totalorder %s122, %s125
      %p131 = scmp.eq.s32.totalorder %s39, 0
      %p132 = por %p130, %p131
      %p133 = scmp.ne.s32.totalorder %s122, %s125
      %p134 = scmp.eq.s32.totalorder %s44, 1
      %p135 = por %p133, %p134
      %p136 = scmp.ne.s32.totalorder %s125, %s126
      %p137 = scmp.eq.s32.totalorder %s44, 0
      %p138 = por %p136, %p137
      %p139 = scmp.ne.s32.totalorder %s125, %s126
      %p140 = scmp.eq.s32.totalorder %s45, 1
      %p141 = por %p139, %p140
      %p143 = scmp.ne.s32.totalorder %s126, %s142
      %p144 = scmp.eq.s32.totalorder %s45, 0
      %p145 = por %p143, %p144
      %s146 = ssub.s32 %s39, %s46
      %p147 = scmp.eq.s32.totalorder %s146, 0
      %s149 = sadd.s32 %s148, 1
      %s150 = scalar_select %p147, %s148, %s149
      %p153 = pneg %p147
      %p154 = scmp.eq.s32.totalorder %s39, 1
      %p155 = por %p153, %p154
      %p156 = scmp.ne.s32.totalorder %s148, %s151
      %p157 = scmp.eq.s32.totalorder %s39, 0
      %p158 = por %p156, %p157
      %p159 = scmp.ne.s32.totalorder %s148, %s151
      %p160 = scmp.eq.s32.totalorder %s44, 1
      %p161 = por %p159, %p160
      %p162 = scmp.ne.s32.totalorder %s151, %s152
      %p163 = scmp.eq.s32.totalorder %s44, 0
      %p164 = por %p162, %p163
      %p165 = scmp.ne.s32.totalorder %s151, %s152
      %p166 = scmp.eq.s32.totalorder %s45, 1
      %p167 = por %p165, %p166
      %p169 = scmp.ne.s32.totalorder %s152, %s168
      %p170 = scmp.eq.s32.totalorder %s45, 0
      %p171 = por %p169, %p170
      %s172 = ssub.s32 %s39, %s46
      %p173 = scmp.eq.s32.totalorder %s172, 0
      %s175 = sadd.s32 %s174, 1
      %s176 = scalar_select %p173, %s174, %s175
      %p179 = pneg %p173
      %p180 = scmp.eq.s32.totalorder %s39, 1
      %p181 = por %p179, %p180
      %p182 = scmp.ne.s32.totalorder %s174, %s177
      %p183 = scmp.eq.s32.totalorder %s39, 0
      %p184 = por %p182, %p183
      %p185 = scmp.ne.s32.totalorder %s174, %s177
      %p186 = scmp.eq.s32.totalorder %s44, 1
      %p187 = por %p185, %p186
      %p188 = scmp.ne.s32.totalorder %s177, %s178
      %p189 = scmp.eq.s32.totalorder %s44, 0
      %p190 = por %p188, %p189
      %p191 = scmp.ne.s32.totalorder %s177, %s178
      %p192 = scmp.eq.s32.totalorder %s45, 1
      %p193 = por %p191, %p192
      %p195 = scmp.ne.s32.totalorder %s178, %s194
      %p196 = scmp.eq.s32.totalorder %s45, 0
      %p197 = por %p195, %p196
      %s198 = ssub.s32 %s39, %s46
      %p199 = scmp.eq.s32.totalorder %s198, 0
      %s201 = sadd.s32 %s200, 1
      %s202 = scalar_select %p199, %s200, %s201
      %p205 = pneg %p199
      %p206 = scmp.eq.s32.totalorder %s39, 1
      %p207 = por %p205, %p206
      %p208 = scmp.ne.s32.totalorder %s200, %s203
      %p209 = scmp.eq.s32.totalorder %s39, 0
      %p210 = por %p208, %p209
      %p211 = scmp.ne.s32.totalorder %s200, %s203
      %p212 = scmp.eq.s32.totalorder %s44, 1
      %p213 = por %p211, %p212
      %p214 = scmp.ne.s32.totalorder %s203, %s204
      %p215 = scmp.eq.s32.totalorder %s44, 0
      %p216 = por %p214, %p215
      %p217 = scmp.ne.s32.totalorder %s203, %s204
      %p218 = scmp.eq.s32.totalorder %s45, 1
      %p219 = por %p217, %p218
      %p221 = scmp.ne.s32.totalorder %s204, %s220
      %p222 = scmp.eq.s32.totalorder %s45, 0
      %p223 = por %p221, %p222
      %s224 = ssub.s32 %s39, %s46
      %p225 = scmp.eq.s32.totalorder %s224, 0
      %s227 = sadd.s32 %s226, 1
      %s228 = scalar_select %p225, %s226, %s227
      %p231 = pneg %p225
      %p232 = scmp.eq.s32.totalorder %s39, 1
      %p233 = por %p231, %p232
      %p234 = scmp.ne.s32.totalorder %s226, %s229
      %p235 = scmp.eq.s32.totalorder %s39, 0
      %p236 = por %p234, %p235
      %p237 = scmp.ne.s32.totalorder %s226, %s229
      %p238 = scmp.eq.s32.totalorder %s44, 1
      %p239 = por %p237, %p238
      %p240 = scmp.ne.s32.totalorder %s229, %s230
      %p241 = scmp.eq.s32.totalorder %s44, 0
      %p242 = por %p240, %p241
      %p243 = scmp.ne.s32.totalorder %s229, %s230
      %p244 = scmp.eq.s32.totalorder %s45, 1
      %p245 = por %p243, %p244
      %p247 = scmp.ne.s32.totalorder %s230, %s246
      %p248 = scmp.eq.s32.totalorder %s45, 0
      %p249 = por %p247, %p248
      %s250 = ssub.s32 %s39, %s46
      %p251 = scmp.eq.s32.totalorder %s250, 0
      %s253 = sadd.s32 %s252, 1
      %s254 = scalar_select %p251, %s252, %s253
      %p257 = pneg %p251
      %p258 = scmp.eq.s32.totalorder %s39, 1
      %p259 = por %p257, %p258
      %p260 = scmp.ne.s32.totalorder %s252, %s255
      %p261 = scmp.eq.s32.totalorder %s39, 0
      %p262 = por %p260, %p261
      %p263 = scmp.ne.s32.totalorder %s252, %s255
      %p264 = scmp.eq.s32.totalorder %s44, 1
      %p265 = por %p263, %p264
      %p266 = scmp.ne.s32.totalorder %s255, %s256
      %p267 = scmp.eq.s32.totalorder %s44, 0
      %p268 = por %p266, %p267
      %p269 = scmp.ne.s32.totalorder %s255, %s256
      %p270 = scmp.eq.s32.totalorder %s45, 1
      %p271 = por %p269, %p270
      %p273 = scmp.ne.s32.totalorder %s256, %s272
      %p274 = scmp.eq.s32.totalorder %s45, 0
      %p275 = por %p273, %p274
      %s276 = ssub.s32 %s39, %s46
      %p277 = scmp.eq.s32.totalorder %s276, 0
      %s279 = sadd.s32 %s278, 1
      %s280 = scalar_select %p277, %s278, %s279
      %p283 = pneg %p277
      %p284 = scmp.eq.s32.totalorder %s39, 1
      %p285 = por %p283, %p284
      %p286 = scmp.ne.s32.totalorder %s278, %s281
      %p287 = scmp.eq.s32.totalorder %s39, 0
      %p288 = por %p286, %p287
      %p289 = scmp.ne.s32.totalorder %s278, %s281
      %p290 = scmp.eq.s32.totalorder %s44, 1
      %p291 = por %p289, %p290
      %p292 = scmp.ne.s32.totalorder %s281, %s282
      %p293 = scmp.eq.s32.totalorder %s44, 0
      %p294 = por %p292, %p293
      %p295 = scmp.ne.s32.totalorder %s281, %s282
      %p296 = scmp.eq.s32.totalorder %s45, 1
      %p297 = por %p295, %p296
      %p299 = scmp.ne.s32.totalorder %s282, %s298
      %p300 = scmp.eq.s32.totalorder %s45, 0
      %p301 = por %p299, %p300
      %s302 = ssub.s32 %s39, %s46
      %p303 = scmp.eq.s32.totalorder %s302, 0
      %s305 = sadd.s32 %s304, 1
      %s306 = scalar_select %p303, %s304, %s305
      %p309 = pneg %p303
      %p310 = scmp.eq.s32.totalorder %s39, 1
      %p311 = por %p309, %p310
      %p312 = scmp.ne.s32.totalorder %s304, %s307
      %p313 = scmp.eq.s32.totalorder %s39, 0
      %p314 = por %p312, %p313
      %p315 = scmp.ne.s32.totalorder %s304, %s307
      %p316 = scmp.eq.s32.totalorder %s44, 1
      %p317 = por %p315, %p316
      %p318 = scmp.ne.s32.totalorder %s307, %s308
      %p319 = scmp.eq.s32.totalorder %s44, 0
      %p320 = por %p318, %p319
      %p321 = scmp.ne.s32.totalorder %s307, %s308
      %p322 = scmp.eq.s32.totalorder %s45, 1
      %p323 = por %p321, %p322
      %p325 = scmp.ne.s32.totalorder %s308, %s324
      %p326 = scmp.eq.s32.totalorder %s45, 0
      %p327 = por %p325, %p326
      %s328 = ssub.s32 %s39, %s46
      %p329 = scmp.eq.s32.totalorder %s328, 0
      %s331 = sadd.s32 %s330, 1
      %s332 = scalar_select %p329, %s330, %s331
      %p335 = pneg %p329
      %p336 = scmp.eq.s32.totalorder %s39, 1
      %p337 = por %p335, %p336
      %p338 = scmp.ne.s32.totalorder %s330, %s333
      %p339 = scmp.eq.s32.totalorder %s39, 0
      %p340 = por %p338, %p339
      %p341 = scmp.ne.s32.totalorder %s330, %s333
      %p342 = scmp.eq.s32.totalorder %s44, 1
      %p343 = por %p341, %p342
      %p344 = scmp.ne.s32.totalorder %s333, %s334
      %p345 = scmp.eq.s32.totalorder %s44, 0
      %p346 = por %p344, %p345
      %p347 = scmp.ne.s32.totalorder %s333, %s334
      %p348 = scmp.eq.s32.totalorder %s45, 1
      %p349 = por %p347, %p348
      %p351 = scmp.ne.s32.totalorder %s334, %s350
      %p352 = scmp.eq.s32.totalorder %s45, 0
      %p353 = por %p351, %p352
      %s354 = ssub.s32 %s39, %s46
      %p355 = scmp.eq.s32.totalorder %s354, 0
      %s357 = sadd.s32 %s356, 1
      %s358 = scalar_select %p355, %s356, %s357
      %p361 = pneg %p355
      %p362 = scmp.eq.s32.totalorder %s39, 1
      %p363 = por %p361, %p362
      %p364 = scmp.ne.s32.totalorder %s356, %s359
      %p365 = scmp.eq.s32.totalorder %s39, 0
      %p366 = por %p364, %p365
      %p367 = scmp.ne.s32.totalorder %s356, %s359
      %p368 = scmp.eq.s32.totalorder %s44, 1
      %p369 = por %p367, %p368
      %p370 = scmp.ne.s32.totalorder %s359, %s360
      %p371 = scmp.eq.s32.totalorder %s44, 0
      %p372 = por %p370, %p371
      %p373 = scmp.ne.s32.totalorder %s359, %s360
      %p374 = scmp.eq.s32.totalorder %s45, 1
      %p375 = por %p373, %p374
      %p377 = scmp.ne.s32.totalorder %s360, %s376
      %p378 = scmp.eq.s32.totalorder %s45, 0
      %p379 = por %p377, %p378
      %s381 = sadd.s32 %s380, 1
      %p384 = scmp.eq.s32.totalorder %s39, 1
      %p385 = scmp.ne.s32.totalorder %s380, %s382
      %p386 = scmp.eq.s32.totalorder %s39, 0
      %p387 = por %p385, %p386
      %p388 = scmp.ne.s32.totalorder %s380, %s382
      %p389 = scmp.eq.s32.totalorder %s44, 1
      %p390 = por %p388, %p389
      %p391 = scmp.ne.s32.totalorder %s382, %s383
      %p392 = scmp.eq.s32.totalorder %s44, 0
      %p393 = por %p391, %p392
      %p394 = scmp.ne.s32.totalorder %s382, %s383
      %p395 = scmp.eq.s32.totalorder %s45, 1
      %p396 = por %p394, %p395
      %p398 = scmp.ne.s32.totalorder %s383, %s397
      %p399 = scmp.eq.s32.totalorder %s45, 0
      %p400 = por %p398, %p399
      %p401 = scmp.le.s32.totalorder 1, %s39
      %p402 = scmp.lt.s32.totalorder %s39, 3
      %p403 = pnand %p401, %p402
      %p404 = pneg %p403
      // Predicated region
      $region9: #{tpu_custom_call.1} parent=5 // pred_check
        _
      $region10: #{tpu_custom_call.1} parent=5 // pred_check_branch
        %406 = sbr.rel (%p403) target = $region12
      $region11: #{tpu_custom_call.1} parent=5 // pred_region
        %s407 = ssub.s32 %s39, 1
        // Predicated region
        $region13: #{tpu_custom_call.1} parent=11 // pred_check
          %p408 = pneg %p60
        $region14: #{tpu_custom_call.1} parent=11 // pred_check_branch
          %410 = sbr.rel (%p408) target = $region16
        $region15: #{tpu_custom_call.1} parent=11 // pred_region
          %412 = vsyncadd [#allocation4], 0
          %s413 = sshll.u32 %s0, 4
          %s414 = int_to_ptr.hbm [resolvable:$true] %s413
          %s415 = sshll.u32 [#allocation3], 4
          %s416 = int_to_ptr.vmem [resolvable:$true] %s415
          %421 = dma.hbm_to_vmem [thread:$0]  %s414, 1024, %s416, [#allocation4], 512, 512, 32
        $region16: #{tpu_custom_call.1} parent=11 // pred_fallthru
          _
      $region12: #{tpu_custom_call.1} parent=5 // pred_fallthru
        _
      %p422 = scmp.lt.s32.totalorder %s39, 2
      // Predicated region
      $region17: #{tpu_custom_call.1} parent=5 // pred_check
        %p423 = pneg %p422
      $region18: #{tpu_custom_call.1} parent=5 // pred_check_branch
        %425 = sbr.rel (%p423) target = $region20
      $region19: #{tpu_custom_call.1} parent=5 // pred_region
        // Predicated region
        $region21: #{tpu_custom_call.1} parent=19 // pred_check
          %p426 = pneg %p80
        $region22: #{tpu_custom_call.1} parent=19 // pred_check_branch
          %428 = sbr.rel (%p426) target = $region24
        $region23: #{tpu_custom_call.1} parent=19 // pred_region
          %s429 = sand.u32 %s39, 1
          %s430 = scalar_lea.sflag [#allocation7], %s429
          %s431 = sand.u32 %s70, 1
          %s432 = smul.addr %s431, 4
          %s433 = scalar_lea.vmem [#allocation6], %s432
          %435 = vsyncadd %s430, 0
          %s436 = smul.addr %s39, 4
          %s437 = scalar_lea.hbm %s1, %s436
          %s439 = sshll.u32 %s437, 4
          %s440 = int_to_ptr.hbm [resolvable:$true] %s439
          %s441 = sshll.u32 %s433, 4
          %s442 = int_to_ptr.vmem [resolvable:$true] %s441
          %444 = dma.hbm_to_vmem [thread:$0]  %s440, 64, %s442, %s430
        $region24: #{tpu_custom_call.1} parent=19 // pred_fallthru
          _
        // Predicated region
        $region25: #{tpu_custom_call.1} parent=19 // pred_check
          %p445 = pneg %p106
        $region26: #{tpu_custom_call.1} parent=19 // pred_check_branch
          %447 = sbr.rel (%p445) target = $region28
        $region27: #{tpu_custom_call.1} parent=19 // pred_region
          %s448 = sand.u32 %s39, 1
          %s449 = scalar_lea.sflag [#allocation7], %s448
          %s450 = sand.u32 %s96, 1
          %s451 = smul.addr %s450, 4
          %s452 = scalar_lea.vmem [#allocation8], %s451
          %454 = vsyncadd %s449, 0
          %s455 = smul.addr %s39, 4
          %s456 = scalar_lea.hbm %s2, %s455
          %s458 = sshll.u32 %s456, 4
          %s459 = int_to_ptr.hbm [resolvable:$true] %s458
          %s460 = sshll.u32 %s452, 4
          %s461 = int_to_ptr.vmem [resolvable:$true] %s460
          %463 = dma.hbm_to_vmem [thread:$0]  %s459, 64, %s461, %s449
        $region28: #{tpu_custom_call.1} parent=19 // pred_fallthru
          _
        // Predicated region
        $region29: #{tpu_custom_call.1} parent=19 // pred_check
          %p464 = pneg %p132
        $region30: #{tpu_custom_call.1} parent=19 // pred_check_branch
          %466 = sbr.rel (%p464) target = $region32
        $region31: #{tpu_custom_call.1} parent=19 // pred_region
          %s467 = sand.u32 %s39, 1
          %s468 = scalar_lea.sflag [#allocation10], %s467
          %s469 = sand.u32 %s122, 1
          %s470 = smul.addr %s469, 3072
          %s471 = scalar_lea.vmem [#allocation9], %s470
          %473 = vsyncadd %s468, 0
          %s474 = smul.addr %s39, 768
          %s475 = smul.addr %s474, 4
          %s476 = scalar_lea.hbm %s3, %s475
          %s477 = sshll.u32 %s476, 4
          %s478 = int_to_ptr.hbm [resolvable:$true] %s477
          %s479 = sshll.u32 %s471, 4
          %s480 = int_to_ptr.vmem [resolvable:$true] %s479
          %485 = dma.hbm_to_vmem [thread:$0]  %s478, 49152, %s480, %s468, 768, 768, 48
        $region32: #{tpu_custom_call.1} parent=19 // pred_fallthru
          _
        // Predicated region
        $region33: #{tpu_custom_call.1} parent=19 // pred_check
          %p486 = pneg %p158
        $region34: #{tpu_custom_call.1} parent=19 // pred_check_branch
          %488 = sbr.rel (%p486) target = $region36
        $region35: #{tpu_custom_call.1} parent=19 // pred_region
          %s489 = sand.u32 %s39, 1
          %s490 = scalar_lea.sflag [#allocation10], %s489
          %s491 = sand.u32 %s148, 1
          %s492 = smul.addr %s491, 12
          %s493 = scalar_lea.vmem [#allocation11], %s492
          %495 = vsyncadd %s490, 0
          %s496 = smul.addr %s39, 12
          %s497 = scalar_lea.hbm %s4, %s496
          %s499 = sshll.u32 %s497, 4
          %s500 = int_to_ptr.hbm [resolvable:$true] %s499
          %s501 = sshll.u32 %s493, 4
          %s502 = int_to_ptr.vmem [resolvable:$true] %s501
          %504 = dma.hbm_to_vmem [thread:$0]  %s500, 192, %s502, %s490
        $region36: #{tpu_custom_call.1} parent=19 // pred_fallthru
          _
        // Predicated region
        $region37: #{tpu_custom_call.1} parent=19 // pred_check
          %p505 = pneg %p184
        $region38: #{tpu_custom_call.1} parent=19 // pred_check_branch
          %507 = sbr.rel (%p505) target = $region40
        $region39: #{tpu_custom_call.1} parent=19 // pred_region
          %s508 = sand.u32 %s39, 1
          %s509 = scalar_lea.sflag [#allocation13], %s508
          %s510 = sand.u32 %s174, 1
          %s511 = smul.addr %s510, 1024
          %s512 = scalar_lea.vmem [#allocation12], %s511
          %514 = vsyncadd %s509, 0
          %s515 = smul.addr %s39, 256
          %s516 = smul.addr %s515, 4
          %s517 = scalar_lea.hbm %s5, %s516
          %s518 = sshll.u32 %s517, 4
          %s519 = int_to_ptr.hbm [resolvable:$true] %s518
          %s520 = sshll.u32 %s512, 4
          %s521 = int_to_ptr.vmem [resolvable:$true] %s520
          %526 = dma.hbm_to_vmem [thread:$0]  %s519, 16384, %s521, %s509, 256, 256, 16
        $region40: #{tpu_custom_call.1} parent=19 // pred_fallthru
          _
        // Predicated region
        $region41: #{tpu_custom_call.1} parent=19 // pred_check
          %p527 = pneg %p210
        $region42: #{tpu_custom_call.1} parent=19 // pred_check_branch
          %529 = sbr.rel (%p527) target = $region44
        $region43: #{tpu_custom_call.1} parent=19 // pred_region
          %s530 = sand.u32 %s39, 1
          %s531 = scalar_lea.sflag [#allocation13], %s530
          %s532 = sand.u32 %s200, 1
          %s533 = smul.addr %s532, 4
          %s534 = scalar_lea.vmem [#allocation14], %s533
          %536 = vsyncadd %s531, 0
          %s537 = smul.addr %s39, 4
          %s538 = scalar_lea.hbm %s6, %s537
          %s540 = sshll.u32 %s538, 4
          %s541 = int_to_ptr.hbm [resolvable:$true] %s540
          %s542 = sshll.u32 %s534, 4
          %s543 = int_to_ptr.vmem [resolvable:$true] %s542
          %545 = dma.hbm_to_vmem [thread:$0]  %s541, 64, %s543, %s531
        $region44: #{tpu_custom_call.1} parent=19 // pred_fallthru
          _
        // Predicated region
        $region45: #{tpu_custom_call.1} parent=19 // pred_check
          %p546 = pneg %p236
        $region46: #{tpu_custom_call.1} parent=19 // pred_check_branch
          %548 = sbr.rel (%p546) target = $region48
        $region47: #{tpu_custom_call.1} parent=19 // pred_region
          %s549 = sand.u32 %s39, 1
          %s550 = scalar_lea.sflag [#allocation16], %s549
          %s551 = sand.u32 %s226, 1
          %s552 = smul.addr %s551, 4
          %s553 = scalar_lea.vmem [#allocation15], %s552
          %555 = vsyncadd %s550, 0
          %s556 = smul.addr %s39, 4
          %s557 = scalar_lea.hbm %s7, %s556
          %s559 = sshll.u32 %s557, 4
          %s560 = int_to_ptr.hbm [resolvable:$true] %s559
          %s561 = sshll.u32 %s553, 4
          %s562 = int_to_ptr.vmem [resolvable:$true] %s561
          %564 = dma.hbm_to_vmem [thread:$0]  %s560, 64, %s562, %s550
        $region48: #{tpu_custom_call.1} parent=19 // pred_fallthru
          _
        // Predicated region
        $region49: #{tpu_custom_call.1} parent=19 // pred_check
          %p565 = pneg %p262
        $region50: #{tpu_custom_call.1} parent=19 // pred_check_branch
          %567 = sbr.rel (%p565) target = $region52
        $region51: #{tpu_custom_call.1} parent=19 // pred_region
          %s568 = sand.u32 %s39, 1
          %s569 = scalar_lea.sflag [#allocation16], %s568
          %s570 = sand.u32 %s252, 1
          %s571 = smul.addr %s570, 4
          %s572 = scalar_lea.vmem [#allocation17], %s571
          %574 = vsyncadd %s569, 0
          %s575 = smul.addr %s39, 4
          %s576 = scalar_lea.hbm %s8, %s575
          %s578 = sshll.u32 %s576, 4
          %s579 = int_to_ptr.hbm [resolvable:$true] %s578
          %s580 = sshll.u32 %s572, 4
          %s581 = int_to_ptr.vmem [resolvable:$true] %s580
          %583 = dma.hbm_to_vmem [thread:$0]  %s579, 64, %s581, %s569
        $region52: #{tpu_custom_call.1} parent=19 // pred_fallthru
          _
        // Predicated region
        $region53: #{tpu_custom_call.1} parent=19 // pred_check
          %p584 = pneg %p288
        $region54: #{tpu_custom_call.1} parent=19 // pred_check_branch
          %586 = sbr.rel (%p584) target = $region56
        $region55: #{tpu_custom_call.1} parent=19 // pred_region
          %s587 = sand.u32 %s39, 1
          %s588 = scalar_lea.sflag [#allocation19], %s587
          %s589 = sand.u32 %s278, 1
          %s590 = smul.addr %s589, 256
          %s591 = scalar_lea.vmem [#allocation18], %s590
          %593 = vsyncadd %s588, 0
          %s594 = smul.addr %s39, 64
          %s595 = smul.addr %s594, 4
          %s596 = scalar_lea.hbm %s9, %s595
          %s597 = sshll.u32 %s596, 4
          %s598 = int_to_ptr.hbm [resolvable:$true] %s597
          %s599 = sshll.u32 %s591, 4
          %s600 = int_to_ptr.vmem [resolvable:$true] %s599
          %605 = dma.hbm_to_vmem [thread:$0]  %s598, 4096, %s600, %s588, 64, 64, 4
        $region56: #{tpu_custom_call.1} parent=19 // pred_fallthru
          _
        // Predicated region
        $region57: #{tpu_custom_call.1} parent=19 // pred_check
          %p606 = pneg %p314
        $region58: #{tpu_custom_call.1} parent=19 // pred_check_branch
          %608 = sbr.rel (%p606) target = $region60
        $region59: #{tpu_custom_call.1} parent=19 // pred_region
          %s609 = sand.u32 %s39, 1
          %s610 = scalar_lea.sflag [#allocation19], %s609
          %s611 = sand.u32 %s304, 1
          %s612 = smul.addr %s611, 4
          %s613 = scalar_lea.vmem [#allocation20], %s612
          %615 = vsyncadd %s610, 0
          %s616 = smul.addr %s39, 4
          %s617 = scalar_lea.hbm %s10, %s616
          %s618 = sshll.u32 %s617, 4
          %s619 = int_to_ptr.hbm [resolvable:$true] %s618
          %s620 = sshll.u32 %s613, 4
          %s621 = int_to_ptr.vmem [resolvable:$true] %s620
          %626 = dma.hbm_to_vmem [thread:$0]  %s619, 64, %s621, %s610, 16, 16, 1
        $region60: #{tpu_custom_call.1} parent=19 // pred_fallthru
          _
        // Predicated region
        $region61: #{tpu_custom_call.1} parent=19 // pred_check
          %p627 = pneg %p340
        $region62: #{tpu_custom_call.1} parent=19 // pred_check_branch
          %629 = sbr.rel (%p627) target = $region64
        $region63: #{tpu_custom_call.1} parent=19 // pred_region
          %s630 = sand.u32 %s39, 1
          %s631 = scalar_lea.sflag [#allocation22], %s630
          %s632 = sand.u32 %s330, 1
          %s633 = smul.addr %s632, 256
          %s634 = scalar_lea.vmem [#allocation21], %s633
          %636 = vsyncadd %s631, 0
          %s637 = smul.addr %s39, 64
          %s638 = smul.addr %s637, 4
          %s639 = scalar_lea.hbm %s11, %s638
          %s640 = sshll.u32 %s639, 4
          %s641 = int_to_ptr.hbm [resolvable:$true] %s640
          %s642 = sshll.u32 %s634, 4
          %s643 = int_to_ptr.vmem [resolvable:$true] %s642
          %648 = dma.hbm_to_vmem [thread:$0]  %s641, 4096, %s643, %s631, 64, 64, 4
        $region64: #{tpu_custom_call.1} parent=19 // pred_fallthru
          _
        // Predicated region
        $region65: #{tpu_custom_call.1} parent=19 // pred_check
          %p649 = pneg %p366
        $region66: #{tpu_custom_call.1} parent=19 // pred_check_branch
          %651 = sbr.rel (%p649) target = $region68
        $region67: #{tpu_custom_call.1} parent=19 // pred_region
          %s652 = sand.u32 %s39, 1
          %s653 = scalar_lea.sflag [#allocation22], %s652
          %s654 = sand.u32 %s356, 1
          %s655 = smul.addr %s654, 4
          %s656 = scalar_lea.vmem [#allocation23], %s655
          %658 = vsyncadd %s653, 0
          %s659 = smul.addr %s39, 4
          %s660 = scalar_lea.hbm %s12, %s659
          %s661 = sshll.u32 %s660, 4
          %s662 = int_to_ptr.hbm [resolvable:$true] %s661
          %s663 = sshll.u32 %s656, 4
          %s664 = int_to_ptr.vmem [resolvable:$true] %s663
          %669 = dma.hbm_to_vmem [thread:$0]  %s662, 64, %s664, %s653, 16, 16, 1
        $region68: #{tpu_custom_call.1} parent=19 // pred_fallthru
          _
      $region20: #{tpu_custom_call.1} parent=5 // pred_fallthru
        _
      %p670 = scmp.le.s32.totalorder 1, %s39
      %p671 = scmp.lt.s32.totalorder %s39, 3
      %p672 = pnand %p670, %p671
      %p673 = pneg %p672
      // Predicated region
      $region69: #{tpu_custom_call.1} parent=5 // pred_check
        _
      $region70: #{tpu_custom_call.1} parent=5 // pred_check_branch
        %675 = sbr.rel (%p672) target = $region72
      $region71: #{tpu_custom_call.1} parent=5 // pred_region
        %s676 = ssub.s32 %s39, 1
        // Predicated region
        $region73: #{tpu_custom_call.1} parent=71 // pred_check
          %p677 = pneg %p60
        $region74: #{tpu_custom_call.1} parent=71 // pred_check_branch
          %679 = sbr.rel (%p677) target = $region76
        $region75: #{tpu_custom_call.1} parent=71 // pred_region
          %681 = dma.done [#allocation4], 1024
        $region76: #{tpu_custom_call.1} parent=71 // pred_fallthru
          _
        %s682 = sand.u32 %s44, 1
        %s683 = scalar_lea.sflag [#allocation7], %s682
        %s684 = sand.u32 %s73, 1
        %s685 = smul.addr %s684, 4
        %s686 = scalar_lea.vmem [#allocation6], %s685
        // Predicated region
        $region77: #{tpu_custom_call.1} parent=71 // pred_check
          %p687 = pneg %p86
        $region78: #{tpu_custom_call.1} parent=71 // pred_check_branch
          %689 = sbr.rel (%p687) target = $region80
        $region79: #{tpu_custom_call.1} parent=71 // pred_region
          %691 = dma.done %s683, 64
        $region80: #{tpu_custom_call.1} parent=71 // pred_fallthru
          _
        %s692 = sand.u32 %s44, 1
        %s693 = scalar_lea.sflag [#allocation7], %s692
        %s694 = sand.u32 %s99, 1
        %s695 = smul.addr %s694, 4
        %s696 = scalar_lea.vmem [#allocation8], %s695
        // Predicated region
        $region81: #{tpu_custom_call.1} parent=71 // pred_check
          %p697 = pneg %p112
        $region82: #{tpu_custom_call.1} parent=71 // pred_check_branch
          %699 = sbr.rel (%p697) target = $region84
        $region83: #{tpu_custom_call.1} parent=71 // pred_region
          %701 = dma.done %s693, 64
        $region84: #{tpu_custom_call.1} parent=71 // pred_fallthru
          _
        %s702 = sand.u32 %s44, 1
        %s703 = scalar_lea.sflag [#allocation10], %s702
        %s704 = sand.u32 %s125, 1
        %s705 = smul.addr %s704, 3072
        %s706 = scalar_lea.vmem [#allocation9], %s705
        // Predicated region
        $region85: #{tpu_custom_call.1} parent=71 // pred_check
          %p707 = pneg %p138
        $region86: #{tpu_custom_call.1} parent=71 // pred_check_branch
          %709 = sbr.rel (%p707) target = $region88
        $region87: #{tpu_custom_call.1} parent=71 // pred_region
          %711 = dma.done %s703, 49152
        $region88: #{tpu_custom_call.1} parent=71 // pred_fallthru
          _
        %s712 = sand.u32 %s44, 1
        %s713 = scalar_lea.sflag [#allocation10], %s712
        %s714 = sand.u32 %s151, 1
        %s715 = smul.addr %s714, 12
        %s716 = scalar_lea.vmem [#allocation11], %s715
        // Predicated region
        $region89: #{tpu_custom_call.1} parent=71 // pred_check
          %p717 = pneg %p164
        $region90: #{tpu_custom_call.1} parent=71 // pred_check_branch
          %719 = sbr.rel (%p717) target = $region92
        $region91: #{tpu_custom_call.1} parent=71 // pred_region
          %721 = dma.done %s713, 192
        $region92: #{tpu_custom_call.1} parent=71 // pred_fallthru
          _
        %s722 = sand.u32 %s44, 1
        %s723 = scalar_lea.sflag [#allocation13], %s722
        %s724 = sand.u32 %s177, 1
        %s725 = smul.addr %s724, 1024
        %s726 = scalar_lea.vmem [#allocation12], %s725
        // Predicated region
        $region93: #{tpu_custom_call.1} parent=71 // pred_check
          %p727 = pneg %p190
        $region94: #{tpu_custom_call.1} parent=71 // pred_check_branch
          %729 = sbr.rel (%p727) target = $region96
        $region95: #{tpu_custom_call.1} parent=71 // pred_region
          %731 = dma.done %s723, 16384
        $region96: #{tpu_custom_call.1} parent=71 // pred_fallthru
          _
        %s732 = sand.u32 %s44, 1
        %s733 = scalar_lea.sflag [#allocation13], %s732
        %s734 = sand.u32 %s203, 1
        %s735 = smul.addr %s734, 4
        %s736 = scalar_lea.vmem [#allocation14], %s735
        // Predicated region
        $region97: #{tpu_custom_call.1} parent=71 // pred_check
          %p737 = pneg %p216
        $region98: #{tpu_custom_call.1} parent=71 // pred_check_branch
          %739 = sbr.rel (%p737) target = $region100
        $region99: #{tpu_custom_call.1} parent=71 // pred_region
          %741 = dma.done %s733, 64
        $region100: #{tpu_custom_call.1} parent=71 // pred_fallthru
          _
        %s742 = sand.u32 %s44, 1
        %s743 = scalar_lea.sflag [#allocation16], %s742
        %s744 = sand.u32 %s229, 1
        %s745 = smul.addr %s744, 4
        %s746 = scalar_lea.vmem [#allocation15], %s745
        // Predicated region
        $region101: #{tpu_custom_call.1} parent=71 // pred_check
          %p747 = pneg %p242
        $region102: #{tpu_custom_call.1} parent=71 // pred_check_branch
          %749 = sbr.rel (%p747) target = $region104
        $region103: #{tpu_custom_call.1} parent=71 // pred_region
          %751 = dma.done %s743, 64
        $region104: #{tpu_custom_call.1} parent=71 // pred_fallthru
          _
        %s752 = sand.u32 %s44, 1
        %s753 = scalar_lea.sflag [#allocation16], %s752
        %s754 = sand.u32 %s255, 1
        %s755 = smul.addr %s754, 4
        %s756 = scalar_lea.vmem [#allocation17], %s755
        // Predicated region
        $region105: #{tpu_custom_call.1} parent=71 // pred_check
          %p757 = pneg %p268
        $region106: #{tpu_custom_call.1} parent=71 // pred_check_branch
          %759 = sbr.rel (%p757) target = $region108
        $region107: #{tpu_custom_call.1} parent=71 // pred_region
          %761 = dma.done %s753, 64
        $region108: #{tpu_custom_call.1} parent=71 // pred_fallthru
          _
        %s762 = sand.u32 %s44, 1
        %s763 = scalar_lea.sflag [#allocation19], %s762
        %s764 = sand.u32 %s281, 1
        %s765 = smul.addr %s764, 256
        %s766 = scalar_lea.vmem [#allocation18], %s765
        // Predicated region
        $region109: #{tpu_custom_call.1} parent=71 // pred_check
          %p767 = pneg %p294
        $region110: #{tpu_custom_call.1} parent=71 // pred_check_branch
          %769 = sbr.rel (%p767) target = $region112
        $region111: #{tpu_custom_call.1} parent=71 // pred_region
          %771 = dma.done %s763, 4096
        $region112: #{tpu_custom_call.1} parent=71 // pred_fallthru
          _
        %s772 = sand.u32 %s44, 1
        %s773 = scalar_lea.sflag [#allocation19], %s772
        %s774 = sand.u32 %s307, 1
        %s775 = smul.addr %s774, 4
        %s776 = scalar_lea.vmem [#allocation20], %s775
        // Predicated region
        $region113: #{tpu_custom_call.1} parent=71 // pred_check
          %p777 = pneg %p320
        $region114: #{tpu_custom_call.1} parent=71 // pred_check_branch
          %779 = sbr.rel (%p777) target = $region116
        $region115: #{tpu_custom_call.1} parent=71 // pred_region
          %781 = dma.done %s773, 64
        $region116: #{tpu_custom_call.1} parent=71 // pred_fallthru
          _
        %s782 = sand.u32 %s44, 1
        %s783 = scalar_lea.sflag [#allocation22], %s782
        %s784 = sand.u32 %s333, 1
        %s785 = smul.addr %s784, 256
        %s786 = scalar_lea.vmem [#allocation21], %s785
        // Predicated region
        $region117: #{tpu_custom_call.1} parent=71 // pred_check
          %p787 = pneg %p346
        $region118: #{tpu_custom_call.1} parent=71 // pred_check_branch
          %789 = sbr.rel (%p787) target = $region120
        $region119: #{tpu_custom_call.1} parent=71 // pred_region
          %791 = dma.done %s783, 4096
        $region120: #{tpu_custom_call.1} parent=71 // pred_fallthru
          _
        %s792 = sand.u32 %s44, 1
        %s793 = scalar_lea.sflag [#allocation22], %s792
        %s794 = sand.u32 %s359, 1
        %s795 = smul.addr %s794, 4
        %s796 = scalar_lea.vmem [#allocation23], %s795
        // Predicated region
        $region121: #{tpu_custom_call.1} parent=71 // pred_check
          %p797 = pneg %p372
        $region122: #{tpu_custom_call.1} parent=71 // pred_check_branch
          %799 = sbr.rel (%p797) target = $region124
        $region123: #{tpu_custom_call.1} parent=71 // pred_region
          %801 = dma.done %s793, 64
        $region124: #{tpu_custom_call.1} parent=71 // pred_fallthru
          _
        %p802 = pneg %p60
        %p803 = pneg %p57
        %s804 = sand.u32 %s44, 1
        %s805 = scalar_lea.sflag [#allocation7], %s804
        %s806 = sand.u32 %s73, 1
        %s807 = smul.addr %s806, 4
        %s808 = scalar_lea.vmem [#allocation6], %s807
        %p809 = pneg %p86
        %p810 = pneg %p83
        %s811 = sand.u32 %s44, 1
        %s812 = scalar_lea.sflag [#allocation7], %s811
        %s813 = sand.u32 %s99, 1
        %s814 = smul.addr %s813, 4
        %s815 = scalar_lea.vmem [#allocation8], %s814
        %p816 = pneg %p112
        %p817 = pneg %p109
        %s818 = sand.u32 %s44, 1
        %s819 = scalar_lea.sflag [#allocation10], %s818
        %s820 = sand.u32 %s125, 1
        %s821 = smul.addr %s820, 3072
        %s822 = scalar_lea.vmem [#allocation9], %s821
        %p823 = pneg %p138
        %p824 = pneg %p135
        %s825 = sand.u32 %s44, 1
        %s826 = scalar_lea.sflag [#allocation10], %s825
        %s827 = sand.u32 %s151, 1
        %s828 = smul.addr %s827, 12
        %s829 = scalar_lea.vmem [#allocation11], %s828
        %p830 = pneg %p164
        %p831 = pneg %p161
        %s832 = sand.u32 %s44, 1
        %s833 = scalar_lea.sflag [#allocation13], %s832
        %s834 = sand.u32 %s177, 1
        %s835 = smul.addr %s834, 1024
        %s836 = scalar_lea.vmem [#allocation12], %s835
        %p837 = pneg %p190
        %p838 = pneg %p187
        %s839 = sand.u32 %s44, 1
        %s840 = scalar_lea.sflag [#allocation13], %s839
        %s841 = sand.u32 %s203, 1
        %s842 = smul.addr %s841, 4
        %s843 = scalar_lea.vmem [#allocation14], %s842
        %p844 = pneg %p216
        %p845 = pneg %p213
        %s846 = sand.u32 %s44, 1
        %s847 = scalar_lea.sflag [#allocation16], %s846
        %s848 = sand.u32 %s229, 1
        %s849 = smul.addr %s848, 4
        %s850 = scalar_lea.vmem [#allocation15], %s849
        %p851 = pneg %p242
        %p852 = pneg %p239
        %s853 = sand.u32 %s44, 1
        %s854 = scalar_lea.sflag [#allocation16], %s853
        %s855 = sand.u32 %s255, 1
        %s856 = smul.addr %s855, 4
        %s857 = scalar_lea.vmem [#allocation17], %s856
        %p858 = pneg %p268
        %p859 = pneg %p265
        %s860 = sand.u32 %s44, 1
        %s861 = scalar_lea.sflag [#allocation19], %s860
        %s862 = sand.u32 %s281, 1
        %s863 = smul.addr %s862, 256
        %s864 = scalar_lea.vmem [#allocation18], %s863
        %p865 = pneg %p294
        %p866 = pneg %p291
        %s867 = sand.u32 %s44, 1
        %s868 = scalar_lea.sflag [#allocation19], %s867
        %s869 = sand.u32 %s307, 1
        %s870 = smul.addr %s869, 4
        %s871 = scalar_lea.vmem [#allocation20], %s870
        %p872 = pneg %p320
        %p873 = pneg %p317
        %s874 = sand.u32 %s44, 1
        %s875 = scalar_lea.sflag [#allocation22], %s874
        %s876 = sand.u32 %s333, 1
        %s877 = smul.addr %s876, 256
        %s878 = scalar_lea.vmem [#allocation21], %s877
        %p879 = pneg %p346
        %p880 = pneg %p343
        %s881 = sand.u32 %s44, 1
        %s882 = scalar_lea.sflag [#allocation22], %s881
        %s883 = sand.u32 %s359, 1
        %s884 = smul.addr %s883, 4
        %s885 = scalar_lea.vmem [#allocation23], %s884
        %p886 = pneg %p372
        %p887 = pneg %p369
        %p888 = pneg %p393
        %p889 = pneg %p390
        %p891 = scmp.eq.s32.totalorder %s44, 0
        // Predicated region
        $region125: #{tpu_custom_call.1} parent=71 // pred_check
          %p892 = pneg %p891
        $region126: #{tpu_custom_call.1} parent=71 // pred_check_branch
          %894 = sbr.rel (%p892) target = $region128
        $region127: #{tpu_custom_call.1} parent=71 // pred_region
          %v895 = vld [vmem:[#allocation3] sm:$0xff]
          %v896 = vld [vmem:[#allocation3 + $0x8] sm:$0xff]
          %v897 = vld [vmem:[#allocation3 + $0x10] sm:$0xff]
          %v898 = vld [vmem:[#allocation3 + $0x18] sm:$0xff]
          %v899 = vld [vmem:[#allocation3 + $0x20] sm:$0xff]
          %v900 = vld [vmem:[#allocation3 + $0x28] sm:$0xff]
          %v901 = vld [vmem:[#allocation3 + $0x30] sm:$0xff]
          %v902 = vld [vmem:[#allocation3 + $0x38] sm:$0xff]
          %903 = vst [vmem:[#allocation24] sm:$0xff] %v895
          %904 = vst [vmem:[#allocation24 + $0x8] sm:$0xff] %v896
          %905 = vst [vmem:[#allocation24 + $0x10] sm:$0xff] %v897
          %906 = vst [vmem:[#allocation24 + $0x18] sm:$0xff] %v898
          %907 = vst [vmem:[#allocation24 + $0x20] sm:$0xff] %v899
          %908 = vst [vmem:[#allocation24 + $0x28] sm:$0xff] %v900
          %909 = vst [vmem:[#allocation24 + $0x30] sm:$0xff] %v901
          %910 = vst [vmem:[#allocation24 + $0x38] sm:$0xff] %v902
        $region128: #{tpu_custom_call.1} parent=71 // pred_fallthru
          _
        %v911 = vld [vmem:[#allocation24] sm:$0xff]
        %v912 = vld [vmem:[#allocation24 + $0x8] sm:$0xff]
        %v913 = vld [vmem:[#allocation24 + $0x10] sm:$0xff]
        %v914 = vld [vmem:[#allocation24 + $0x18] sm:$0xff]
        %v915 = vld [vmem:[#allocation24 + $0x20] sm:$0xff]
        %v916 = vld [vmem:[#allocation24 + $0x28] sm:$0xff]
        %v917 = vld [vmem:[#allocation24 + $0x30] sm:$0xff]
        %v918 = vld [vmem:[#allocation24 + $0x38] sm:$0xff]
        %v919 = vld [vmem:[%s686] sm:$0xf]
        %v920 = vld [vmem:[%s696] sm:$0xf]
        %v921 = vrot.slane %v913, 4
        %vm922 = vcmask 1047556
        %v923 = vsel %vm922, %v921, %v911
        %v924 = vrot.slane %v911, 4
        %v925 = vsel %vm922, %v913, %v924
        %v927 = vunpack.c.l.s4 1983009808
        %v928 = vunpack.c.0.s8 %v927
        %v929 = vperm.slane %v923, %v928
        %v931 = vunpack.c.l.s4 1983009808
        %v932 = vunpack.c.0.s8 %v931
        %v933 = vperm.slane %v925, %v932
        %v934 = vrot.slane %v914, 4
        %v935 = vsel %vm922, %v934, %v912
        %v936 = vrot.slane %v912, 4
        %v937 = vsel %vm922, %v914, %v936
        %v939 = vunpack.c.l.s4 1983009808
        %v940 = vunpack.c.0.s8 %v939
        %v941 = vperm.slane %v935, %v940
        %v943 = vunpack.c.l.s4 1983009808
        %v944 = vunpack.c.0.s8 %v943
        %v945 = vperm.slane %v937, %v944
        %v946 = vrot.slane %v941, 4
        %v947 = vsel %vm922, %v946, %v929
        %v948 = vrot.slane %v929, 4
        %v949 = vsel %vm922, %v941, %v948
        %v951 = vunpack.c.l.s4 1934713408
        %v952 = vunpack.c.0.s8 %v951
        %v953 = vperm.slane %v947, %v952
        %v955 = vunpack.c.l.s4 1934713408
        %v956 = vunpack.c.0.s8 %v955
        %v957 = vperm.slane %v949, %v956
        %v958 = vrot.slane %v945, 4
        %v959 = vsel %vm922, %v958, %v933
        %v960 = vrot.slane %v933, 4
        %v961 = vsel %vm922, %v945, %v960
        %v963 = vunpack.c.l.s4 1934713408
        %v964 = vunpack.c.0.s8 %v963
        %v965 = vperm.slane %v959, %v964
        %v967 = vunpack.c.l.s4 1934713408
        %v968 = vunpack.c.0.s8 %v967
        %v969 = vperm.slane %v961, %v968
        %v970 = vrot.slane %v953, 4
        %v971 = vsel %vm922, 0.0, %v970
        %v972 = vrot.slane %v957, 4
        %v973 = vsel %vm922, 0.0, %v972
        %v974 = vrot.slane %v965, 4
        %v975 = vsel %vm922, 0.0, %v974
        %v976 = vrot.slane %v969, 4
        %v977 = vsel %vm922, 0.0, %v976
        %v978 = vrot.slane %v917, 4
        %v979 = vsel %vm922, %v978, %v915
        %v980 = vrot.slane %v915, 4
        %v981 = vsel %vm922, %v917, %v980
        %v983 = vunpack.c.l.s4 1983009808
        %v984 = vunpack.c.0.s8 %v983
        %v985 = vperm.slane %v979, %v984
        %v987 = vunpack.c.l.s4 1983009808
        %v988 = vunpack.c.0.s8 %v987
        %v989 = vperm.slane %v981, %v988
        %v990 = vrot.slane %v918, 4
        %v991 = vsel %vm922, %v990, %v916
        %v992 = vrot.slane %v916, 4
        %v993 = vsel %vm922, %v918, %v992
        %v995 = vunpack.c.l.s4 1983009808
        %v996 = vunpack.c.0.s8 %v995
        %v997 = vperm.slane %v991, %v996
        %v999 = vunpack.c.l.s4 1983009808
        %v1000 = vunpack.c.0.s8 %v999
        %v1001 = vperm.slane %v993, %v1000
        %v1002 = vrot.slane %v997, 4
        %v1003 = vsel %vm922, %v1002, %v985
        %v1004 = vrot.slane %v985, 4
        %v1005 = vsel %vm922, %v997, %v1004
        %v1007 = vunpack.c.l.s4 1934713408
        %v1008 = vunpack.c.0.s8 %v1007
        %v1009 = vperm.slane %v1003, %v1008
        %v1011 = vunpack.c.l.s4 1934713408
        %v1012 = vunpack.c.0.s8 %v1011
        %v1013 = vperm.slane %v1005, %v1012
        %v1014 = vrot.slane %v1001, 4
        %v1015 = vsel %vm922, %v1014, %v989
        %v1016 = vrot.slane %v989, 4
        %v1017 = vsel %vm922, %v1001, %v1016
        %v1019 = vunpack.c.l.s4 1934713408
        %v1020 = vunpack.c.0.s8 %v1019
        %v1021 = vperm.slane %v1015, %v1020
        %v1023 = vunpack.c.l.s4 1934713408
        %v1024 = vunpack.c.0.s8 %v1023
        %v1025 = vperm.slane %v1017, %v1024
        %v1026 = vrot.slane %v1009, 4
        %v1027 = vsel %vm922, 0.0, %v1026
        %v1028 = vrot.slane %v1013, 4
        %v1029 = vsel %vm922, 0.0, %v1028
        %v1030 = vrot.slane %v1021, 4
        %v1031 = vsel %vm922, 0.0, %v1030
        %v1032 = vrot.slane %v1025, 4
        %v1033 = vsel %vm922, 0.0, %v1032
        %vm1034 = vcmask 1043456
        %v1035 = vsel %vm1034, %v953, 0.0
        %1036 = vadd.xlane.f32.xlu0 %v1035
        %v1037 = vpop.xlane.xlu0 %1036
        %v1038 = vsel %vm1034, %v971, 0.0
        %1039 = vadd.xlane.f32.xlu0 %v1038
        %v1040 = vpop.xlane.xlu0 %1039
        %v1041 = vsel %vm1034, %v957, 0.0
        %1042 = vadd.xlane.f32.xlu0 %v1041
        %v1043 = vpop.xlane.xlu0 %1042
        %v1044 = vsel %vm1034, %v973, 0.0
        %1045 = vadd.xlane.f32.xlu0 %v1044
        %v1046 = vpop.xlane.xlu0 %1045
        %v1047 = vsel %vm1034, %v965, 0.0
        %1048 = vadd.xlane.f32.xlu0 %v1047
        %v1049 = vpop.xlane.xlu0 %1048
        %v1050 = vsel %vm1034, %v975, 0.0
        %1051 = vadd.xlane.f32.xlu0 %v1050
        %v1052 = vpop.xlane.xlu0 %1051
        %v1053 = vsel %vm1034, %v969, 0.0
        %1054 = vadd.xlane.f32.xlu0 %v1053
        %v1055 = vpop.xlane.xlu0 %1054
        %v1056 = vsel %vm1034, %v977, 0.0
        %1057 = vadd.xlane.f32.xlu0 %v1056
        %v1058 = vpop.xlane.xlu0 %1057
        %v1059 = vsel %vm1034, %v1009, 0.0
        %1060 = vadd.xlane.f32.xlu0 %v1059
        %v1061 = vpop.xlane.xlu0 %1060
        %v1062 = vsel %vm1034, %v1027, 0.0
        %1063 = vadd.xlane.f32.xlu0 %v1062
        %v1064 = vpop.xlane.xlu0 %1063
        %v1065 = vsel %vm1034, %v1013, 0.0
        %1066 = vadd.xlane.f32.xlu0 %v1065
        %v1067 = vpop.xlane.xlu0 %1066
        %v1068 = vsel %vm1034, %v1029, 0.0
        %1069 = vadd.xlane.f32.xlu0 %v1068
        %v1070 = vpop.xlane.xlu0 %1069
        %v1071 = vsel %vm1034, %v1021, 0.0
        %1072 = vadd.xlane.f32.xlu0 %v1071
        %v1073 = vpop.xlane.xlu0 %1072
        %v1074 = vsel %vm1034, %v1031, 0.0
        %1075 = vadd.xlane.f32.xlu0 %v1074
        %v1076 = vpop.xlane.xlu0 %1075
        %v1077 = vsel %vm1034, %v1025, 0.0
        %1078 = vadd.xlane.f32.xlu0 %v1077
        %v1079 = vpop.xlane.xlu0 %1078
        %v1080 = vsel %vm1034, %v1033, 0.0
        %1081 = vadd.xlane.f32.xlu0 %v1080
        %v1082 = vpop.xlane.xlu0 %1081
        %v1083 = vrcp.pop 128.0
        %v1084 = vmul.f32 128.0, %v1083
        %v1085 = vsub.f32 1.0, %v1084
        %v1086 = vmul.f32 %v1083, %v1085
        %v1087 = vadd.f32 %v1083, %v1086
        %vm1088 = vweird.f32 %v1083
        %v1089 = vsel %vm1088, %v1083, %v1087
        %v1090 = vmul.f32 %v1037, %v1089
        %v1091 = vmul.f32 %v1040, %v1089
        %v1092 = vmul.f32 %v1043, %v1089
        %v1093 = vmul.f32 %v1046, %v1089
        %v1094 = vmul.f32 %v1049, %v1089
        %v1095 = vmul.f32 %v1052, %v1089
        %v1096 = vmul.f32 %v1055, %v1089
        %v1097 = vmul.f32 %v1058, %v1089
        %v1098 = vmul.f32 %v1061, %v1089
        %v1099 = vmul.f32 %v1064, %v1089
        %v1100 = vmul.f32 %v1067, %v1089
        %v1101 = vmul.f32 %v1070, %v1089
        %v1102 = vmul.f32 %v1073, %v1089
        %v1103 = vmul.f32 %v1076, %v1089
        %v1104 = vmul.f32 %v1079, %v1089
        %v1105 = vmul.f32 %v1082, %v1089
        %v1106 = vsub.f32 %v953, %v1090
        %v1107 = vsub.f32 %v971, %v1091
        %v1108 = vsub.f32 %v957, %v1092
        %v1109 = vsub.f32 %v973, %v1093
        %v1110 = vsub.f32 %v965, %v1094
        %v1111 = vsub.f32 %v975, %v1095
        %v1112 = vsub.f32 %v969, %v1096
        %v1113 = vsub.f32 %v977, %v1097
        %v1114 = vsub.f32 %v1009, %v1098
        %v1115 = vsub.f32 %v1027, %v1099
        %v1116 = vsub.f32 %v1013, %v1100
        %v1117 = vsub.f32 %v1029, %v1101
        %v1118 = vsub.f32 %v1021, %v1102
        %v1119 = vsub.f32 %v1031, %v1103
        %v1120 = vsub.f32 %v1025, %v1104
        %v1121 = vsub.f32 %v1033, %v1105
        %v1122 = vmul.f32 %v1106, %v1106
        %v1123 = vmul.f32 %v1107, %v1107
        %v1124 = vmul.f32 %v1108, %v1108
        %v1125 = vmul.f32 %v1109, %v1109
        %v1126 = vmul.f32 %v1110, %v1110
        %v1127 = vmul.f32 %v1111, %v1111
        %v1128 = vmul.f32 %v1112, %v1112
        %v1129 = vmul.f32 %v1113, %v1113
        %v1130 = vmul.f32 %v1114, %v1114
        %v1131 = vmul.f32 %v1115, %v1115
        %v1132 = vmul.f32 %v1116, %v1116
        %v1133 = vmul.f32 %v1117, %v1117
        %v1134 = vmul.f32 %v1118, %v1118
        %v1135 = vmul.f32 %v1119, %v1119
        %v1136 = vmul.f32 %v1120, %v1120
        %v1137 = vmul.f32 %v1121, %v1121
        %v1138 = vsel %vm1034, %v1122, 0.0
        %1139 = vadd.xlane.f32.xlu0 %v1138
        %v1140 = vpop.xlane.xlu0 %1139
        %v1141 = vsel %vm1034, %v1123, 0.0
        %1142 = vadd.xlane.f32.xlu0 %v1141
        %v1143 = vpop.xlane.xlu0 %1142
        %v1144 = vsel %vm1034, %v1124, 0.0
        %1145 = vadd.xlane.f32.xlu0 %v1144
        %v1146 = vpop.xlane.xlu0 %1145
        %v1147 = vsel %vm1034, %v1125, 0.0
        %1148 = vadd.xlane.f32.xlu0 %v1147
        %v1149 = vpop.xlane.xlu0 %1148
        %v1150 = vsel %vm1034, %v1126, 0.0
        %1151 = vadd.xlane.f32.xlu0 %v1150
        %v1152 = vpop.xlane.xlu0 %1151
        %v1153 = vsel %vm1034, %v1127, 0.0
        %1154 = vadd.xlane.f32.xlu0 %v1153
        %v1155 = vpop.xlane.xlu0 %1154
        %v1156 = vsel %vm1034, %v1128, 0.0
        %1157 = vadd.xlane.f32.xlu0 %v1156
        %v1158 = vpop.xlane.xlu0 %1157
        %v1159 = vsel %vm1034, %v1129, 0.0
        %1160 = vadd.xlane.f32.xlu0 %v1159
        %v1161 = vpop.xlane.xlu0 %1160
        %v1162 = vsel %vm1034, %v1130, 0.0
        %1163 = vadd.xlane.f32.xlu0 %v1162
        %v1164 = vpop.xlane.xlu0 %1163
        %v1165 = vsel %vm1034, %v1131, 0.0
        %1166 = vadd.xlane.f32.xlu0 %v1165
        %v1167 = vpop.xlane.xlu0 %1166
        %v1168 = vsel %vm1034, %v1132, 0.0
        %1169 = vadd.xlane.f32.xlu0 %v1168
        %v1170 = vpop.xlane.xlu0 %1169
        %v1171 = vsel %vm1034, %v1133, 0.0
        %1172 = vadd.xlane.f32.xlu0 %v1171
        %v1173 = vpop.xlane.xlu0 %1172
        %v1174 = vsel %vm1034, %v1134, 0.0
        %1175 = vadd.xlane.f32.xlu0 %v1174
        %v1176 = vpop.xlane.xlu0 %1175
        %v1177 = vsel %vm1034, %v1135, 0.0
        %1178 = vadd.xlane.f32.xlu0 %v1177
        %v1179 = vpop.xlane.xlu0 %1178
        %v1180 = vsel %vm1034, %v1136, 0.0
        %1181 = vadd.xlane.f32.xlu0 %v1180
        %v1182 = vpop.xlane.xlu0 %1181
        %v1183 = vsel %vm1034, %v1137, 0.0
        %1184 = vadd.xlane.f32.xlu0 %v1183
        %v1185 = vpop.xlane.xlu0 %1184
        %v1186 = vmul.f32 %v1140, %v1089
        %v1187 = vmul.f32 %v1143, %v1089
        %v1188 = vmul.f32 %v1146, %v1089
        %v1189 = vmul.f32 %v1149, %v1089
        %v1190 = vmul.f32 %v1152, %v1089
        %v1191 = vmul.f32 %v1155, %v1089
        %v1192 = vmul.f32 %v1158, %v1089
        %v1193 = vmul.f32 %v1161, %v1089
        %v1194 = vmul.f32 %v1164, %v1089
        %v1195 = vmul.f32 %v1167, %v1089
        %v1196 = vmul.f32 %v1170, %v1089
        %v1197 = vmul.f32 %v1173, %v1089
        %v1198 = vmul.f32 %v1176, %v1089
        %v1199 = vmul.f32 %v1179, %v1089
        %v1200 = vmul.f32 %v1182, %v1089
        %v1201 = vmul.f32 %v1185, %v1089
        %v1202 = vadd.f32 %v1186, 1e-05
        %v1203 = vadd.f32 %v1187, 1e-05
        %v1204 = vadd.f32 %v1188, 1e-05
        %v1205 = vadd.f32 %v1189, 1e-05
        %v1206 = vadd.f32 %v1190, 1e-05
        %v1207 = vadd.f32 %v1191, 1e-05
        %v1208 = vadd.f32 %v1192, 1e-05
        %v1209 = vadd.f32 %v1193, 1e-05
        %v1210 = vadd.f32 %v1194, 1e-05
        %v1211 = vadd.f32 %v1195, 1e-05
        %v1212 = vadd.f32 %v1196, 1e-05
        %v1213 = vadd.f32 %v1197, 1e-05
        %v1214 = vadd.f32 %v1198, 1e-05
        %v1215 = vadd.f32 %v1199, 1e-05
        %v1216 = vadd.f32 %v1200, 1e-05
        %v1217 = vadd.f32 %v1201, 1e-05
        %v1218 = vrsqrt.pop %v1202
        %v1219 = vmul.f32 %v1218, %v1202
        %v1220 = vmul.f32 %v1219, %v1218
        %v1221 = vmul.f32 0.5, %v1220
        %v1222 = vsub.f32 1.5, %v1221
        %v1223 = vmul.f32 %v1218, %v1222
        %vm1224 = vweird.f32 %v1202
        %vm1225 = vweird.f32 %v1218
        %vm1226 = vmor %vm1224, %vm1225
        %v1227 = vsel %vm1226, %v1218, %v1223
        %v1228 = vrsqrt.pop %v1203
        %v1229 = vmul.f32 %v1228, %v1203
        %v1230 = vmul.f32 %v1229, %v1228
        %v1231 = vmul.f32 0.5, %v1230
        %v1232 = vsub.f32 1.5, %v1231
        %v1233 = vmul.f32 %v1228, %v1232
        %vm1234 = vweird.f32 %v1203
        %vm1235 = vweird.f32 %v1228
        %vm1236 = vmor %vm1234, %vm1235
        %v1237 = vsel %vm1236, %v1228, %v1233
        %v1238 = vrsqrt.pop %v1204
        %v1239 = vmul.f32 %v1238, %v1204
        %v1240 = vmul.f32 %v1239, %v1238
        %v1241 = vmul.f32 0.5, %v1240
        %v1242 = vsub.f32 1.5, %v1241
        %v1243 = vmul.f32 %v1238, %v1242
        %vm1244 = vweird.f32 %v1204
        %vm1245 = vweird.f32 %v1238
        %vm1246 = vmor %vm1244, %vm1245
        %v1247 = vsel %vm1246, %v1238, %v1243
        %v1248 = vrsqrt.pop %v1205
        %v1249 = vmul.f32 %v1248, %v1205
        %v1250 = vmul.f32 %v1249, %v1248
        %v1251 = vmul.f32 0.5, %v1250
        %v1252 = vsub.f32 1.5, %v1251
        %v1253 = vmul.f32 %v1248, %v1252
        %vm1254 = vweird.f32 %v1205
        %vm1255 = vweird.f32 %v1248
        %vm1256 = vmor %vm1254, %vm1255
        %v1257 = vsel %vm1256, %v1248, %v1253
        %v1258 = vrsqrt.pop %v1206
        %v1259 = vmul.f32 %v1258, %v1206
        %v1260 = vmul.f32 %v1259, %v1258
        %v1261 = vmul.f32 0.5, %v1260
        %v1262 = vsub.f32 1.5, %v1261
        %v1263 = vmul.f32 %v1258, %v1262
        %vm1264 = vweird.f32 %v1206
        %vm1265 = vweird.f32 %v1258
        %vm1266 = vmor %vm1264, %vm1265
        %v1267 = vsel %vm1266, %v1258, %v1263
        %v1268 = vrsqrt.pop %v1207
        %v1269 = vmul.f32 %v1268, %v1207
        %v1270 = vmul.f32 %v1269, %v1268
        %v1271 = vmul.f32 0.5, %v1270
        %v1272 = vsub.f32 1.5, %v1271
        %v1273 = vmul.f32 %v1268, %v1272
        %vm1274 = vweird.f32 %v1207
        %vm1275 = vweird.f32 %v1268
        %vm1276 = vmor %vm1274, %vm1275
        %v1277 = vsel %vm1276, %v1268, %v1273
        %v1278 = vrsqrt.pop %v1208
        %v1279 = vmul.f32 %v1278, %v1208
        %v1280 = vmul.f32 %v1279, %v1278
        %v1281 = vmul.f32 0.5, %v1280
        %v1282 = vsub.f32 1.5, %v1281
        %v1283 = vmul.f32 %v1278, %v1282
        %vm1284 = vweird.f32 %v1208
        %vm1285 = vweird.f32 %v1278
        %vm1286 = vmor %vm1284, %vm1285
        %v1287 = vsel %vm1286, %v1278, %v1283
        %v1288 = vrsqrt.pop %v1209
        %v1289 = vmul.f32 %v1288, %v1209
        %v1290 = vmul.f32 %v1289, %v1288
        %v1291 = vmul.f32 0.5, %v1290
        %v1292 = vsub.f32 1.5, %v1291
        %v1293 = vmul.f32 %v1288, %v1292
        %vm1294 = vweird.f32 %v1209
        %vm1295 = vweird.f32 %v1288
        %vm1296 = vmor %vm1294, %vm1295
        %v1297 = vsel %vm1296, %v1288, %v1293
        %v1298 = vrsqrt.pop %v1210
        %v1299 = vmul.f32 %v1298, %v1210
        %v1300 = vmul.f32 %v1299, %v1298
        %v1301 = vmul.f32 0.5, %v1300
        %v1302 = vsub.f32 1.5, %v1301
        %v1303 = vmul.f32 %v1298, %v1302
        %vm1304 = vweird.f32 %v1210
        %vm1305 = vweird.f32 %v1298
        %vm1306 = vmor %vm1304, %vm1305
        %v1307 = vsel %vm1306, %v1298, %v1303
        %v1308 = vrsqrt.pop %v1211
        %v1309 = vmul.f32 %v1308, %v1211
        %v1310 = vmul.f32 %v1309, %v1308
        %v1311 = vmul.f32 0.5, %v1310
        %v1312 = vsub.f32 1.5, %v1311
        %v1313 = vmul.f32 %v1308, %v1312
        %vm1314 = vweird.f32 %v1211
        %vm1315 = vweird.f32 %v1308
        %vm1316 = vmor %vm1314, %vm1315
        %v1317 = vsel %vm1316, %v1308, %v1313
        %v1318 = vrsqrt.pop %v1212
        %v1319 = vmul.f32 %v1318, %v1212
        %v1320 = vmul.f32 %v1319, %v1318
        %v1321 = vmul.f32 0.5, %v1320
        %v1322 = vsub.f32 1.5, %v1321
        %v1323 = vmul.f32 %v1318, %v1322
        %vm1324 = vweird.f32 %v1212
        %vm1325 = vweird.f32 %v1318
        %vm1326 = vmor %vm1324, %vm1325
        %v1327 = vsel %vm1326, %v1318, %v1323
        %v1328 = vrsqrt.pop %v1213
        %v1329 = vmul.f32 %v1328, %v1213
        %v1330 = vmul.f32 %v1329, %v1328
        %v1331 = vmul.f32 0.5, %v1330
        %v1332 = vsub.f32 1.5, %v1331
        %v1333 = vmul.f32 %v1328, %v1332
        %vm1334 = vweird.f32 %v1213
        %vm1335 = vweird.f32 %v1328
        %vm1336 = vmor %vm1334, %vm1335
        %v1337 = vsel %vm1336, %v1328, %v1333
        %v1338 = vrsqrt.pop %v1214
        %v1339 = vmul.f32 %v1338, %v1214
        %v1340 = vmul.f32 %v1339, %v1338
        %v1341 = vmul.f32 0.5, %v1340
        %v1342 = vsub.f32 1.5, %v1341
        %v1343 = vmul.f32 %v1338, %v1342
        %vm1344 = vweird.f32 %v1214
        %vm1345 = vweird.f32 %v1338
        %vm1346 = vmor %vm1344, %vm1345
        %v1347 = vsel %vm1346, %v1338, %v1343
        %v1348 = vrsqrt.pop %v1215
        %v1349 = vmul.f32 %v1348, %v1215
        %v1350 = vmul.f32 %v1349, %v1348
        %v1351 = vmul.f32 0.5, %v1350
        %v1352 = vsub.f32 1.5, %v1351
        %v1353 = vmul.f32 %v1348, %v1352
        %vm1354 = vweird.f32 %v1215
        %vm1355 = vweird.f32 %v1348
        %vm1356 = vmor %vm1354, %vm1355
        %v1357 = vsel %vm1356, %v1348, %v1353
        %v1358 = vrsqrt.pop %v1216
        %v1359 = vmul.f32 %v1358, %v1216
        %v1360 = vmul.f32 %v1359, %v1358
        %v1361 = vmul.f32 0.5, %v1360
        %v1362 = vsub.f32 1.5, %v1361
        %v1363 = vmul.f32 %v1358, %v1362
        %vm1364 = vweird.f32 %v1216
        %vm1365 = vweird.f32 %v1358
        %vm1366 = vmor %vm1364, %vm1365
        %v1367 = vsel %vm1366, %v1358, %v1363
        %v1368 = vrsqrt.pop %v1217
        %v1369 = vmul.f32 %v1368, %v1217
        %v1370 = vmul.f32 %v1369, %v1368
        %v1371 = vmul.f32 0.5, %v1370
        %v1372 = vsub.f32 1.5, %v1371
        %v1373 = vmul.f32 %v1368, %v1372
        %vm1374 = vweird.f32 %v1217
        %vm1375 = vweird.f32 %v1368
        %vm1376 = vmor %vm1374, %vm1375
        %v1377 = vsel %vm1376, %v1368, %v1373
        %v1378 = vmul.f32 %v1106, %v1227
        %v1379 = vmul.f32 %v1107, %v1237
        %v1380 = vmul.f32 %v1108, %v1247
        %v1381 = vmul.f32 %v1109, %v1257
        %v1382 = vmul.f32 %v1110, %v1267
        %v1383 = vmul.f32 %v1111, %v1277
        %v1384 = vmul.f32 %v1112, %v1287
        %v1385 = vmul.f32 %v1113, %v1297
        %v1386 = vmul.f32 %v1114, %v1307
        %v1387 = vmul.f32 %v1115, %v1317
        %v1388 = vmul.f32 %v1116, %v1327
        %v1389 = vmul.f32 %v1117, %v1337
        %v1390 = vmul.f32 %v1118, %v1347
        %v1391 = vmul.f32 %v1119, %v1357
        %v1392 = vmul.f32 %v1120, %v1367
        %v1393 = vmul.f32 %v1121, %v1377
        %v1394 = vrot.slane %v1380, 4
        %v1395 = vsel %vm922, %v1394, %v1378
        %v1397 = vunpack.c.l.s4 1983009808
        %v1398 = vunpack.c.0.s8 %v1397
        %v1399 = vperm.slane %v1395, %v1398
        %v1400 = vrot.slane %v1381, 4
        %v1401 = vsel %vm922, %v1400, %v1379
        %v1403 = vunpack.c.l.s4 1983009808
        %v1404 = vunpack.c.0.s8 %v1403
        %v1405 = vperm.slane %v1401, %v1404
        %v1406 = vrot.slane %v1384, 4
        %v1407 = vsel %vm922, %v1406, %v1382
        %v1409 = vunpack.c.l.s4 1983009808
        %v1410 = vunpack.c.0.s8 %v1409
        %v1411 = vperm.slane %v1407, %v1410
        %v1412 = vrot.slane %v1385, 4
        %v1413 = vsel %vm922, %v1412, %v1383
        %v1415 = vunpack.c.l.s4 1983009808
        %v1416 = vunpack.c.0.s8 %v1415
        %v1417 = vperm.slane %v1413, %v1416
        %v1418 = vrot.slane %v1405, 4
        %v1419 = vsel %vm922, %v1418, %v1399
        %v1420 = vrot.slane %v1399, 4
        %v1421 = vsel %vm922, %v1405, %v1420
        %v1423 = vunpack.c.l.s4 1934713408
        %v1424 = vunpack.c.0.s8 %v1423
        %v1425 = vperm.slane %v1419, %v1424
        %v1427 = vunpack.c.l.s4 1934713408
        %v1428 = vunpack.c.0.s8 %v1427
        %v1429 = vperm.slane %v1421, %v1428
        %v1430 = vrot.slane %v1417, 4
        %v1431 = vsel %vm922, %v1430, %v1411
        %v1432 = vrot.slane %v1411, 4
        %v1433 = vsel %vm922, %v1417, %v1432
        %v1435 = vunpack.c.l.s4 1934713408
        %v1436 = vunpack.c.0.s8 %v1435
        %v1437 = vperm.slane %v1431, %v1436
        %v1439 = vunpack.c.l.s4 1934713408
        %v1440 = vunpack.c.0.s8 %v1439
        %v1441 = vperm.slane %v1433, %v1440
        %v1442 = vrot.slane %v1437, 4
        %v1443 = vsel %vm922, %v1442, %v1425
        %v1444 = vrot.slane %v1425, 4
        %v1445 = vsel %vm922, %v1437, %v1444
        %v1446 = vrot.slane %v1441, 4
        %v1447 = vsel %vm922, %v1446, %v1429
        %v1448 = vrot.slane %v1429, 4
        %v1449 = vsel %vm922, %v1441, %v1448
        %v1450 = vrot.slane %v1388, 4
        %v1451 = vsel %vm922, %v1450, %v1386
        %v1453 = vunpack.c.l.s4 1983009808
        %v1454 = vunpack.c.0.s8 %v1453
        %v1455 = vperm.slane %v1451, %v1454
        %v1456 = vrot.slane %v1389, 4
        %v1457 = vsel %vm922, %v1456, %v1387
        %v1459 = vunpack.c.l.s4 1983009808
        %v1460 = vunpack.c.0.s8 %v1459
        %v1461 = vperm.slane %v1457, %v1460
        %v1462 = vrot.slane %v1392, 4
        %v1463 = vsel %vm922, %v1462, %v1390
        %v1465 = vunpack.c.l.s4 1983009808
        %v1466 = vunpack.c.0.s8 %v1465
        %v1467 = vperm.slane %v1463, %v1466
        %v1468 = vrot.slane %v1393, 4
        %v1469 = vsel %vm922, %v1468, %v1391
        %v1471 = vunpack.c.l.s4 1983009808
        %v1472 = vunpack.c.0.s8 %v1471
        %v1473 = vperm.slane %v1469, %v1472
        %v1474 = vrot.slane %v1461, 4
        %v1475 = vsel %vm922, %v1474, %v1455
        %v1476 = vrot.slane %v1455, 4
        %v1477 = vsel %vm922, %v1461, %v1476
        %v1479 = vunpack.c.l.s4 1934713408
        %v1480 = vunpack.c.0.s8 %v1479
        %v1481 = vperm.slane %v1475, %v1480
        %v1483 = vunpack.c.l.s4 1934713408
        %v1484 = vunpack.c.0.s8 %v1483
        %v1485 = vperm.slane %v1477, %v1484
        %v1486 = vrot.slane %v1473, 4
        %v1487 = vsel %vm922, %v1486, %v1467
        %v1488 = vrot.slane %v1467, 4
        %v1489 = vsel %vm922, %v1473, %v1488
        %v1491 = vunpack.c.l.s4 1934713408
        %v1492 = vunpack.c.0.s8 %v1491
        %v1493 = vperm.slane %v1487, %v1492
        %v1495 = vunpack.c.l.s4 1934713408
        %v1496 = vunpack.c.0.s8 %v1495
        %v1497 = vperm.slane %v1489, %v1496
        %v1498 = vrot.slane %v1493, 4
        %v1499 = vsel %vm922, %v1498, %v1481
        %v1500 = vrot.slane %v1481, 4
        %v1501 = vsel %vm922, %v1493, %v1500
        %v1502 = vrot.slane %v1497, 4
        %v1503 = vsel %vm922, %v1502, %v1485
        %v1504 = vrot.slane %v1485, 4
        %v1505 = vsel %vm922, %v1497, %v1504
        %v1507 = vperm.slane %v919, 0
        %v1508 = vperm.slane %v919, 1
        %v1509 = vperm.slane %v919, 2
        %v1510 = vperm.slane %v919, 3
        %v1515 = vmul.f32 %v1443, %v1507
        %v1516 = vmul.f32 %v1445, %v1508
        %v1517 = vmul.f32 %v1447, %v1509
        %v1518 = vmul.f32 %v1449, %v1510
        %v1519 = vmul.f32 %v1499, %v1507
        %v1520 = vmul.f32 %v1501, %v1508
        %v1521 = vmul.f32 %v1503, %v1509
        %v1522 = vmul.f32 %v1505, %v1510
        %v1524 = vperm.slane %v920, 0
        %v1525 = vperm.slane %v920, 1
        %v1526 = vperm.slane %v920, 2
        %v1527 = vperm.slane %v920, 3
        %v1532 = vadd.f32 %v1515, %v1524
        %v1533 = vadd.f32 %v1516, %v1525
        %v1534 = vadd.f32 %v1517, %v1526
        %v1535 = vadd.f32 %v1518, %v1527
        %v1536 = vadd.f32 %v1519, %v1524
        %v1537 = vadd.f32 %v1520, %v1525
        %v1538 = vadd.f32 %v1521, %v1526
        %v1539 = vadd.f32 %v1522, %v1527
        %v1540 = vpack.c.bf16 %v1536, %v1532
        %v1541 = vpack.c.bf16 %v1537, %v1533
        %v1542 = vpack.c.bf16 %v1538, %v1534
        %v1543 = vpack.c.bf16 %v1539, %v1535
        %v1544 = vld [vmem:[%s706] sm:$0xff]
        %v1545 = vld [vmem:[%s706 + $0x8] sm:$0xff]
        %v1546 = vld [vmem:[%s706 + $0x10] sm:$0xff]
        %v1547 = vld [vmem:[%s706 + $0x18] sm:$0xff]
        %v1548 = vld [vmem:[%s706 + $0x20] sm:$0xff]
        %v1549 = vld [vmem:[%s706 + $0x28] sm:$0xff]
        %v1550 = vld [vmem:[%s706 + $0x30] sm:$0xff]
        %v1551 = vld [vmem:[%s706 + $0x38] sm:$0xff]
        %v1552 = vld [vmem:[%s706 + $0x40] sm:$0xff]
        %v1553 = vld [vmem:[%s706 + $0x48] sm:$0xff]
        %v1554 = vld [vmem:[%s706 + $0x50] sm:$0xff]
        %v1555 = vld [vmem:[%s706 + $0x58] sm:$0xff]
        %v1556 = vld [vmem:[%s706 + $0x60] sm:$0xff]
        %v1557 = vld [vmem:[%s706 + $0x68] sm:$0xff]
        %v1558 = vld [vmem:[%s706 + $0x70] sm:$0xff]
        %v1559 = vld [vmem:[%s706 + $0x78] sm:$0xff]
        %v1560 = vld [vmem:[%s706 + $0x80] sm:$0xff]
        %v1561 = vld [vmem:[%s706 + $0x88] sm:$0xff]
        %v1562 = vld [vmem:[%s706 + $0x90] sm:$0xff]
        %v1563 = vld [vmem:[%s706 + $0x98] sm:$0xff]
        %v1564 = vld [vmem:[%s706 + $0xa0] sm:$0xff]
        %v1565 = vld [vmem:[%s706 + $0xa8] sm:$0xff]
        %v1566 = vld [vmem:[%s706 + $0xb0] sm:$0xff]
        %v1567 = vld [vmem:[%s706 + $0xb8] sm:$0xff]
        %v1568 = vld [vmem:[%s706 + $0xc0] sm:$0xff]
        %v1569 = vld [vmem:[%s706 + $0xc8] sm:$0xff]
        %v1570 = vld [vmem:[%s706 + $0xd0] sm:$0xff]
        %v1571 = vld [vmem:[%s706 + $0xd8] sm:$0xff]
        %v1572 = vld [vmem:[%s706 + $0xe0] sm:$0xff]
        %v1573 = vld [vmem:[%s706 + $0xe8] sm:$0xff]
        %v1574 = vld [vmem:[%s706 + $0xf0] sm:$0xff]
        %v1575 = vld [vmem:[%s706 + $0xf8] sm:$0xff]
        %v1576 = vld [vmem:[%s706 + $0x100] sm:$0xff]
        %v1577 = vld [vmem:[%s706 + $0x108] sm:$0xff]
        %v1578 = vld [vmem:[%s706 + $0x110] sm:$0xff]
        %v1579 = vld [vmem:[%s706 + $0x118] sm:$0xff]
        %v1580 = vld [vmem:[%s706 + $0x120] sm:$0xff]
        %v1581 = vld [vmem:[%s706 + $0x128] sm:$0xff]
        %v1582 = vld [vmem:[%s706 + $0x130] sm:$0xff]
        %v1583 = vld [vmem:[%s706 + $0x138] sm:$0xff]
        %v1584 = vld [vmem:[%s706 + $0x140] sm:$0xff]
        %v1585 = vld [vmem:[%s706 + $0x148] sm:$0xff]
        %v1586 = vld [vmem:[%s706 + $0x150] sm:$0xff]
        %v1587 = vld [vmem:[%s706 + $0x158] sm:$0xff]
        %v1588 = vld [vmem:[%s706 + $0x160] sm:$0xff]
        %v1589 = vld [vmem:[%s706 + $0x168] sm:$0xff]
        %v1590 = vld [vmem:[%s706 + $0x170] sm:$0xff]
        %v1591 = vld [vmem:[%s706 + $0x178] sm:$0xff]
        %v1592 = vld [vmem:[%s706 + $0x180] sm:$0xff]
        %v1593 = vld [vmem:[%s706 + $0x188] sm:$0xff]
        %v1594 = vld [vmem:[%s706 + $0x190] sm:$0xff]
        %v1595 = vld [vmem:[%s706 + $0x198] sm:$0xff]
        %v1596 = vld [vmem:[%s706 + $0x1a0] sm:$0xff]
        %v1597 = vld [vmem:[%s706 + $0x1a8] sm:$0xff]
        %v1598 = vld [vmem:[%s706 + $0x1b0] sm:$0xff]
        %v1599 = vld [vmem:[%s706 + $0x1b8] sm:$0xff]
        %v1600 = vld [vmem:[%s706 + $0x1c0] sm:$0xff]
        %v1601 = vld [vmem:[%s706 + $0x1c8] sm:$0xff]
        %v1602 = vld [vmem:[%s706 + $0x1d0] sm:$0xff]
        %v1603 = vld [vmem:[%s706 + $0x1d8] sm:$0xff]
        %v1604 = vld [vmem:[%s706 + $0x1e0] sm:$0xff]
        %v1605 = vld [vmem:[%s706 + $0x1e8] sm:$0xff]
        %v1606 = vld [vmem:[%s706 + $0x1f0] sm:$0xff]
        %v1607 = vld [vmem:[%s706 + $0x1f8] sm:$0xff]
        %v1608 = vld [vmem:[%s706 + $0x200] sm:$0xff]
        %v1609 = vld [vmem:[%s706 + $0x208] sm:$0xff]
        %v1610 = vld [vmem:[%s706 + $0x210] sm:$0xff]
        %v1611 = vld [vmem:[%s706 + $0x218] sm:$0xff]
        %v1612 = vld [vmem:[%s706 + $0x220] sm:$0xff]
        %v1613 = vld [vmem:[%s706 + $0x228] sm:$0xff]
        %v1614 = vld [vmem:[%s706 + $0x230] sm:$0xff]
        %v1615 = vld [vmem:[%s706 + $0x238] sm:$0xff]
        %v1616 = vld [vmem:[%s706 + $0x240] sm:$0xff]
        %v1617 = vld [vmem:[%s706 + $0x248] sm:$0xff]
        %v1618 = vld [vmem:[%s706 + $0x250] sm:$0xff]
        %v1619 = vld [vmem:[%s706 + $0x258] sm:$0xff]
        %v1620 = vld [vmem:[%s706 + $0x260] sm:$0xff]
        %v1621 = vld [vmem:[%s706 + $0x268] sm:$0xff]
        %v1622 = vld [vmem:[%s706 + $0x270] sm:$0xff]
        %v1623 = vld [vmem:[%s706 + $0x278] sm:$0xff]
        %v1624 = vld [vmem:[%s706 + $0x280] sm:$0xff]
        %v1625 = vld [vmem:[%s706 + $0x288] sm:$0xff]
        %v1626 = vld [vmem:[%s706 + $0x290] sm:$0xff]
        %v1627 = vld [vmem:[%s706 + $0x298] sm:$0xff]
        %v1628 = vld [vmem:[%s706 + $0x2a0] sm:$0xff]
        %v1629 = vld [vmem:[%s706 + $0x2a8] sm:$0xff]
        %v1630 = vld [vmem:[%s706 + $0x2b0] sm:$0xff]
        %v1631 = vld [vmem:[%s706 + $0x2b8] sm:$0xff]
        %v1632 = vld [vmem:[%s706 + $0x2c0] sm:$0xff]
        %v1633 = vld [vmem:[%s706 + $0x2c8] sm:$0xff]
        %v1634 = vld [vmem:[%s706 + $0x2d0] sm:$0xff]
        %v1635 = vld [vmem:[%s706 + $0x2d8] sm:$0xff]
        %v1636 = vld [vmem:[%s706 + $0x2e0] sm:$0xff]
        %v1637 = vld [vmem:[%s706 + $0x2e8] sm:$0xff]
        %v1638 = vld [vmem:[%s706 + $0x2f0] sm:$0xff]
        %v1639 = vld [vmem:[%s706 + $0x2f8] sm:$0xff]
        %v1640 = vld [vmem:[%s706 + $0x300] sm:$0xff]
        %v1641 = vld [vmem:[%s706 + $0x308] sm:$0xff]
        %v1642 = vld [vmem:[%s706 + $0x310] sm:$0xff]
        %v1643 = vld [vmem:[%s706 + $0x318] sm:$0xff]
        %v1644 = vld [vmem:[%s706 + $0x320] sm:$0xff]
        %v1645 = vld [vmem:[%s706 + $0x328] sm:$0xff]
        %v1646 = vld [vmem:[%s706 + $0x330] sm:$0xff]
        %v1647 = vld [vmem:[%s706 + $0x338] sm:$0xff]
        %v1648 = vld [vmem:[%s706 + $0x340] sm:$0xff]
        %v1649 = vld [vmem:[%s706 + $0x348] sm:$0xff]
        %v1650 = vld [vmem:[%s706 + $0x350] sm:$0xff]
        %v1651 = vld [vmem:[%s706 + $0x358] sm:$0xff]
        %v1652 = vld [vmem:[%s706 + $0x360] sm:$0xff]
        %v1653 = vld [vmem:[%s706 + $0x368] sm:$0xff]
        %v1654 = vld [vmem:[%s706 + $0x370] sm:$0xff]
        %v1655 = vld [vmem:[%s706 + $0x378] sm:$0xff]
        %v1656 = vld [vmem:[%s706 + $0x380] sm:$0xff]
        %v1657 = vld [vmem:[%s706 + $0x388] sm:$0xff]
        %v1658 = vld [vmem:[%s706 + $0x390] sm:$0xff]
        %v1659 = vld [vmem:[%s706 + $0x398] sm:$0xff]
        %v1660 = vld [vmem:[%s706 + $0x3a0] sm:$0xff]
        %v1661 = vld [vmem:[%s706 + $0x3a8] sm:$0xff]
        %v1662 = vld [vmem:[%s706 + $0x3b0] sm:$0xff]
        %v1663 = vld [vmem:[%s706 + $0x3b8] sm:$0xff]
        %v1664 = vld [vmem:[%s706 + $0x3c0] sm:$0xff]
        %v1665 = vld [vmem:[%s706 + $0x3c8] sm:$0xff]
        %v1666 = vld [vmem:[%s706 + $0x3d0] sm:$0xff]
        %v1667 = vld [vmem:[%s706 + $0x3d8] sm:$0xff]
        %v1668 = vld [vmem:[%s706 + $0x3e0] sm:$0xff]
        %v1669 = vld [vmem:[%s706 + $0x3e8] sm:$0xff]
        %v1670 = vld [vmem:[%s706 + $0x3f0] sm:$0xff]
        %v1671 = vld [vmem:[%s706 + $0x3f8] sm:$0xff]
        %v1672 = vld [vmem:[%s706 + $0x400] sm:$0xff]
        %v1673 = vld [vmem:[%s706 + $0x408] sm:$0xff]
        %v1674 = vld [vmem:[%s706 + $0x410] sm:$0xff]
        %v1675 = vld [vmem:[%s706 + $0x418] sm:$0xff]
        %v1676 = vld [vmem:[%s706 + $0x420] sm:$0xff]
        %v1677 = vld [vmem:[%s706 + $0x428] sm:$0xff]
        %v1678 = vld [vmem:[%s706 + $0x430] sm:$0xff]
        %v1679 = vld [vmem:[%s706 + $0x438] sm:$0xff]
        %v1680 = vld [vmem:[%s706 + $0x440] sm:$0xff]
        %v1681 = vld [vmem:[%s706 + $0x448] sm:$0xff]
        %v1682 = vld [vmem:[%s706 + $0x450] sm:$0xff]
        %v1683 = vld [vmem:[%s706 + $0x458] sm:$0xff]
        %v1684 = vld [vmem:[%s706 + $0x460] sm:$0xff]
        %v1685 = vld [vmem:[%s706 + $0x468] sm:$0xff]
        %v1686 = vld [vmem:[%s706 + $0x470] sm:$0xff]
        %v1687 = vld [vmem:[%s706 + $0x478] sm:$0xff]
        %v1688 = vld [vmem:[%s706 + $0x480] sm:$0xff]
        %v1689 = vld [vmem:[%s706 + $0x488] sm:$0xff]
        %v1690 = vld [vmem:[%s706 + $0x490] sm:$0xff]
        %v1691 = vld [vmem:[%s706 + $0x498] sm:$0xff]
        %v1692 = vld [vmem:[%s706 + $0x4a0] sm:$0xff]
        %v1693 = vld [vmem:[%s706 + $0x4a8] sm:$0xff]
        %v1694 = vld [vmem:[%s706 + $0x4b0] sm:$0xff]
        %v1695 = vld [vmem:[%s706 + $0x4b8] sm:$0xff]
        %v1696 = vld [vmem:[%s706 + $0x4c0] sm:$0xff]
        %v1697 = vld [vmem:[%s706 + $0x4c8] sm:$0xff]
        %v1698 = vld [vmem:[%s706 + $0x4d0] sm:$0xff]
        %v1699 = vld [vmem:[%s706 + $0x4d8] sm:$0xff]
        %v1700 = vld [vmem:[%s706 + $0x4e0] sm:$0xff]
        %v1701 = vld [vmem:[%s706 + $0x4e8] sm:$0xff]
        %v1702 = vld [vmem:[%s706 + $0x4f0] sm:$0xff]
        %v1703 = vld [vmem:[%s706 + $0x4f8] sm:$0xff]
        %v1704 = vld [vmem:[%s706 + $0x500] sm:$0xff]
        %v1705 = vld [vmem:[%s706 + $0x508] sm:$0xff]
        %v1706 = vld [vmem:[%s706 + $0x510] sm:$0xff]
        %v1707 = vld [vmem:[%s706 + $0x518] sm:$0xff]
        %v1708 = vld [vmem:[%s706 + $0x520] sm:$0xff]
        %v1709 = vld [vmem:[%s706 + $0x528] sm:$0xff]
        %v1710 = vld [vmem:[%s706 + $0x530] sm:$0xff]
        %v1711 = vld [vmem:[%s706 + $0x538] sm:$0xff]
        %v1712 = vld [vmem:[%s706 + $0x540] sm:$0xff]
        %v1713 = vld [vmem:[%s706 + $0x548] sm:$0xff]
        %v1714 = vld [vmem:[%s706 + $0x550] sm:$0xff]
        %v1715 = vld [vmem:[%s706 + $0x558] sm:$0xff]
        %v1716 = vld [vmem:[%s706 + $0x560] sm:$0xff]
        %v1717 = vld [vmem:[%s706 + $0x568] sm:$0xff]
        %v1718 = vld [vmem:[%s706 + $0x570] sm:$0xff]
        %v1719 = vld [vmem:[%s706 + $0x578] sm:$0xff]
        %v1720 = vld [vmem:[%s706 + $0x580] sm:$0xff]
        %v1721 = vld [vmem:[%s706 + $0x588] sm:$0xff]
        %v1722 = vld [vmem:[%s706 + $0x590] sm:$0xff]
        %v1723 = vld [vmem:[%s706 + $0x598] sm:$0xff]
        %v1724 = vld [vmem:[%s706 + $0x5a0] sm:$0xff]
        %v1725 = vld [vmem:[%s706 + $0x5a8] sm:$0xff]
        %v1726 = vld [vmem:[%s706 + $0x5b0] sm:$0xff]
        %v1727 = vld [vmem:[%s706 + $0x5b8] sm:$0xff]
        %v1728 = vld [vmem:[%s706 + $0x5c0] sm:$0xff]
        %v1729 = vld [vmem:[%s706 + $0x5c8] sm:$0xff]
        %v1730 = vld [vmem:[%s706 + $0x5d0] sm:$0xff]
        %v1731 = vld [vmem:[%s706 + $0x5d8] sm:$0xff]
        %v1732 = vld [vmem:[%s706 + $0x5e0] sm:$0xff]
        %v1733 = vld [vmem:[%s706 + $0x5e8] sm:$0xff]
        %v1734 = vld [vmem:[%s706 + $0x5f0] sm:$0xff]
        %v1735 = vld [vmem:[%s706 + $0x5f8] sm:$0xff]
        %v1736 = vld [vmem:[%s706 + $0x600] sm:$0xff]
        %v1737 = vld [vmem:[%s706 + $0x608] sm:$0xff]
        %v1738 = vld [vmem:[%s706 + $0x610] sm:$0xff]
        %v1739 = vld [vmem:[%s706 + $0x618] sm:$0xff]
        %v1740 = vld [vmem:[%s706 + $0x620] sm:$0xff]
        %v1741 = vld [vmem:[%s706 + $0x628] sm:$0xff]
        %v1742 = vld [vmem:[%s706 + $0x630] sm:$0xff]
        %v1743 = vld [vmem:[%s706 + $0x638] sm:$0xff]
        %v1744 = vld [vmem:[%s706 + $0x640] sm:$0xff]
        %v1745 = vld [vmem:[%s706 + $0x648] sm:$0xff]
        %v1746 = vld [vmem:[%s706 + $0x650] sm:$0xff]
        %v1747 = vld [vmem:[%s706 + $0x658] sm:$0xff]
        %v1748 = vld [vmem:[%s706 + $0x660] sm:$0xff]
        %v1749 = vld [vmem:[%s706 + $0x668] sm:$0xff]
        %v1750 = vld [vmem:[%s706 + $0x670] sm:$0xff]
        %v1751 = vld [vmem:[%s706 + $0x678] sm:$0xff]
        %v1752 = vld [vmem:[%s706 + $0x680] sm:$0xff]
        %v1753 = vld [vmem:[%s706 + $0x688] sm:$0xff]
        %v1754 = vld [vmem:[%s706 + $0x690] sm:$0xff]
        %v1755 = vld [vmem:[%s706 + $0x698] sm:$0xff]
        %v1756 = vld [vmem:[%s706 + $0x6a0] sm:$0xff]
        %v1757 = vld [vmem:[%s706 + $0x6a8] sm:$0xff]
        %v1758 = vld [vmem:[%s706 + $0x6b0] sm:$0xff]
        %v1759 = vld [vmem:[%s706 + $0x6b8] sm:$0xff]
        %v1760 = vld [vmem:[%s706 + $0x6c0] sm:$0xff]
        %v1761 = vld [vmem:[%s706 + $0x6c8] sm:$0xff]
        %v1762 = vld [vmem:[%s706 + $0x6d0] sm:$0xff]
        %v1763 = vld [vmem:[%s706 + $0x6d8] sm:$0xff]
        %v1764 = vld [vmem:[%s706 + $0x6e0] sm:$0xff]
        %v1765 = vld [vmem:[%s706 + $0x6e8] sm:$0xff]
        %v1766 = vld [vmem:[%s706 + $0x6f0] sm:$0xff]
        %v1767 = vld [vmem:[%s706 + $0x6f8] sm:$0xff]
        %v1768 = vld [vmem:[%s706 + $0x700] sm:$0xff]
        %v1769 = vld [vmem:[%s706 + $0x708] sm:$0xff]
        %v1770 = vld [vmem:[%s706 + $0x710] sm:$0xff]
        %v1771 = vld [vmem:[%s706 + $0x718] sm:$0xff]
        %v1772 = vld [vmem:[%s706 + $0x720] sm:$0xff]
        %v1773 = vld [vmem:[%s706 + $0x728] sm:$0xff]
        %v1774 = vld [vmem:[%s706 + $0x730] sm:$0xff]
        %v1775 = vld [vmem:[%s706 + $0x738] sm:$0xff]
        %v1776 = vld [vmem:[%s706 + $0x740] sm:$0xff]
        %v1777 = vld [vmem:[%s706 + $0x748] sm:$0xff]
        %v1778 = vld [vmem:[%s706 + $0x750] sm:$0xff]
        %v1779 = vld [vmem:[%s706 + $0x758] sm:$0xff]
        %v1780 = vld [vmem:[%s706 + $0x760] sm:$0xff]
        %v1781 = vld [vmem:[%s706 + $0x768] sm:$0xff]
        %v1782 = vld [vmem:[%s706 + $0x770] sm:$0xff]
        %v1783 = vld [vmem:[%s706 + $0x778] sm:$0xff]
        %v1784 = vld [vmem:[%s706 + $0x780] sm:$0xff]
        %v1785 = vld [vmem:[%s706 + $0x788] sm:$0xff]
        %v1786 = vld [vmem:[%s706 + $0x790] sm:$0xff]
        %v1787 = vld [vmem:[%s706 + $0x798] sm:$0xff]
        %v1788 = vld [vmem:[%s706 + $0x7a0] sm:$0xff]
        %v1789 = vld [vmem:[%s706 + $0x7a8] sm:$0xff]
        %v1790 = vld [vmem:[%s706 + $0x7b0] sm:$0xff]
        %v1791 = vld [vmem:[%s706 + $0x7b8] sm:$0xff]
        %v1792 = vld [vmem:[%s706 + $0x7c0] sm:$0xff]
        %v1793 = vld [vmem:[%s706 + $0x7c8] sm:$0xff]
        %v1794 = vld [vmem:[%s706 + $0x7d0] sm:$0xff]
        %v1795 = vld [vmem:[%s706 + $0x7d8] sm:$0xff]
        %v1796 = vld [vmem:[%s706 + $0x7e0] sm:$0xff]
        %v1797 = vld [vmem:[%s706 + $0x7e8] sm:$0xff]
        %v1798 = vld [vmem:[%s706 + $0x7f0] sm:$0xff]
        %v1799 = vld [vmem:[%s706 + $0x7f8] sm:$0xff]
        %v1800 = vld [vmem:[%s706 + $0x800] sm:$0xff]
        %v1801 = vld [vmem:[%s706 + $0x808] sm:$0xff]
        %v1802 = vld [vmem:[%s706 + $0x810] sm:$0xff]
        %v1803 = vld [vmem:[%s706 + $0x818] sm:$0xff]
        %v1804 = vld [vmem:[%s706 + $0x820] sm:$0xff]
        %v1805 = vld [vmem:[%s706 + $0x828] sm:$0xff]
        %v1806 = vld [vmem:[%s706 + $0x830] sm:$0xff]
        %v1807 = vld [vmem:[%s706 + $0x838] sm:$0xff]
        %v1808 = vld [vmem:[%s706 + $0x840] sm:$0xff]
        %v1809 = vld [vmem:[%s706 + $0x848] sm:$0xff]
        %v1810 = vld [vmem:[%s706 + $0x850] sm:$0xff]
        %v1811 = vld [vmem:[%s706 + $0x858] sm:$0xff]
        %v1812 = vld [vmem:[%s706 + $0x860] sm:$0xff]
        %v1813 = vld [vmem:[%s706 + $0x868] sm:$0xff]
        %v1814 = vld [vmem:[%s706 + $0x870] sm:$0xff]
        %v1815 = vld [vmem:[%s706 + $0x878] sm:$0xff]
        %v1816 = vld [vmem:[%s706 + $0x880] sm:$0xff]
        %v1817 = vld [vmem:[%s706 + $0x888] sm:$0xff]
        %v1818 = vld [vmem:[%s706 + $0x890] sm:$0xff]
        %v1819 = vld [vmem:[%s706 + $0x898] sm:$0xff]
        %v1820 = vld [vmem:[%s706 + $0x8a0] sm:$0xff]
        %v1821 = vld [vmem:[%s706 + $0x8a8] sm:$0xff]
        %v1822 = vld [vmem:[%s706 + $0x8b0] sm:$0xff]
        %v1823 = vld [vmem:[%s706 + $0x8b8] sm:$0xff]
        %v1824 = vld [vmem:[%s706 + $0x8c0] sm:$0xff]
        %v1825 = vld [vmem:[%s706 + $0x8c8] sm:$0xff]
        %v1826 = vld [vmem:[%s706 + $0x8d0] sm:$0xff]
        %v1827 = vld [vmem:[%s706 + $0x8d8] sm:$0xff]
        %v1828 = vld [vmem:[%s706 + $0x8e0] sm:$0xff]
        %v1829 = vld [vmem:[%s706 + $0x8e8] sm:$0xff]
        %v1830 = vld [vmem:[%s706 + $0x8f0] sm:$0xff]
        %v1831 = vld [vmem:[%s706 + $0x8f8] sm:$0xff]
        %v1832 = vld [vmem:[%s706 + $0x900] sm:$0xff]
        %v1833 = vld [vmem:[%s706 + $0x908] sm:$0xff]
        %v1834 = vld [vmem:[%s706 + $0x910] sm:$0xff]
        %v1835 = vld [vmem:[%s706 + $0x918] sm:$0xff]
        %v1836 = vld [vmem:[%s706 + $0x920] sm:$0xff]
        %v1837 = vld [vmem:[%s706 + $0x928] sm:$0xff]
        %v1838 = vld [vmem:[%s706 + $0x930] sm:$0xff]
        %v1839 = vld [vmem:[%s706 + $0x938] sm:$0xff]
        %v1840 = vld [vmem:[%s706 + $0x940] sm:$0xff]
        %v1841 = vld [vmem:[%s706 + $0x948] sm:$0xff]
        %v1842 = vld [vmem:[%s706 + $0x950] sm:$0xff]
        %v1843 = vld [vmem:[%s706 + $0x958] sm:$0xff]
        %v1844 = vld [vmem:[%s706 + $0x960] sm:$0xff]
        %v1845 = vld [vmem:[%s706 + $0x968] sm:$0xff]
        %v1846 = vld [vmem:[%s706 + $0x970] sm:$0xff]
        %v1847 = vld [vmem:[%s706 + $0x978] sm:$0xff]
        %v1848 = vld [vmem:[%s706 + $0x980] sm:$0xff]
        %v1849 = vld [vmem:[%s706 + $0x988] sm:$0xff]
        %v1850 = vld [vmem:[%s706 + $0x990] sm:$0xff]
        %v1851 = vld [vmem:[%s706 + $0x998] sm:$0xff]
        %v1852 = vld [vmem:[%s706 + $0x9a0] sm:$0xff]
        %v1853 = vld [vmem:[%s706 + $0x9a8] sm:$0xff]
        %v1854 = vld [vmem:[%s706 + $0x9b0] sm:$0xff]
        %v1855 = vld [vmem:[%s706 + $0x9b8] sm:$0xff]
        %v1856 = vld [vmem:[%s706 + $0x9c0] sm:$0xff]
        %v1857 = vld [vmem:[%s706 + $0x9c8] sm:$0xff]
        %v1858 = vld [vmem:[%s706 + $0x9d0] sm:$0xff]
        %v1859 = vld [vmem:[%s706 + $0x9d8] sm:$0xff]
        %v1860 = vld [vmem:[%s706 + $0x9e0] sm:$0xff]
        %v1861 = vld [vmem:[%s706 + $0x9e8] sm:$0xff]
        %v1862 = vld [vmem:[%s706 + $0x9f0] sm:$0xff]
        %v1863 = vld [vmem:[%s706 + $0x9f8] sm:$0xff]
        %v1864 = vld [vmem:[%s706 + $0xa00] sm:$0xff]
        %v1865 = vld [vmem:[%s706 + $0xa08] sm:$0xff]
        %v1866 = vld [vmem:[%s706 + $0xa10] sm:$0xff]
        %v1867 = vld [vmem:[%s706 + $0xa18] sm:$0xff]
        %v1868 = vld [vmem:[%s706 + $0xa20] sm:$0xff]
        %v1869 = vld [vmem:[%s706 + $0xa28] sm:$0xff]
        %v1870 = vld [vmem:[%s706 + $0xa30] sm:$0xff]
        %v1871 = vld [vmem:[%s706 + $0xa38] sm:$0xff]
        %v1872 = vld [vmem:[%s706 + $0xa40] sm:$0xff]
        %v1873 = vld [vmem:[%s706 + $0xa48] sm:$0xff]
        %v1874 = vld [vmem:[%s706 + $0xa50] sm:$0xff]
        %v1875 = vld [vmem:[%s706 + $0xa58] sm:$0xff]
        %v1876 = vld [vmem:[%s706 + $0xa60] sm:$0xff]
        %v1877 = vld [vmem:[%s706 + $0xa68] sm:$0xff]
        %v1878 = vld [vmem:[%s706 + $0xa70] sm:$0xff]
        %v1879 = vld [vmem:[%s706 + $0xa78] sm:$0xff]
        %v1880 = vld [vmem:[%s706 + $0xa80] sm:$0xff]
        %v1881 = vld [vmem:[%s706 + $0xa88] sm:$0xff]
        %v1882 = vld [vmem:[%s706 + $0xa90] sm:$0xff]
        %v1883 = vld [vmem:[%s706 + $0xa98] sm:$0xff]
        %v1884 = vld [vmem:[%s706 + $0xaa0] sm:$0xff]
        %v1885 = vld [vmem:[%s706 + $0xaa8] sm:$0xff]
        %v1886 = vld [vmem:[%s706 + $0xab0] sm:$0xff]
        %v1887 = vld [vmem:[%s706 + $0xab8] sm:$0xff]
        %v1888 = vld [vmem:[%s706 + $0xac0] sm:$0xff]
        %v1889 = vld [vmem:[%s706 + $0xac8] sm:$0xff]
        %v1890 = vld [vmem:[%s706 + $0xad0] sm:$0xff]
        %v1891 = vld [vmem:[%s706 + $0xad8] sm:$0xff]
        %v1892 = vld [vmem:[%s706 + $0xae0] sm:$0xff]
        %v1893 = vld [vmem:[%s706 + $0xae8] sm:$0xff]
        %v1894 = vld [vmem:[%s706 + $0xaf0] sm:$0xff]
        %v1895 = vld [vmem:[%s706 + $0xaf8] sm:$0xff]
        %v1896 = vld [vmem:[%s706 + $0xb00] sm:$0xff]
        %v1897 = vld [vmem:[%s706 + $0xb08] sm:$0xff]
        %v1898 = vld [vmem:[%s706 + $0xb10] sm:$0xff]
        %v1899 = vld [vmem:[%s706 + $0xb18] sm:$0xff]
        %v1900 = vld [vmem:[%s706 + $0xb20] sm:$0xff]
        %v1901 = vld [vmem:[%s706 + $0xb28] sm:$0xff]
        %v1902 = vld [vmem:[%s706 + $0xb30] sm:$0xff]
        %v1903 = vld [vmem:[%s706 + $0xb38] sm:$0xff]
        %v1904 = vld [vmem:[%s706 + $0xb40] sm:$0xff]
        %v1905 = vld [vmem:[%s706 + $0xb48] sm:$0xff]
        %v1906 = vld [vmem:[%s706 + $0xb50] sm:$0xff]
        %v1907 = vld [vmem:[%s706 + $0xb58] sm:$0xff]
        %v1908 = vld [vmem:[%s706 + $0xb60] sm:$0xff]
        %v1909 = vld [vmem:[%s706 + $0xb68] sm:$0xff]
        %v1910 = vld [vmem:[%s706 + $0xb70] sm:$0xff]
        %v1911 = vld [vmem:[%s706 + $0xb78] sm:$0xff]
        %v1912 = vld [vmem:[%s706 + $0xb80] sm:$0xff]
        %v1913 = vld [vmem:[%s706 + $0xb88] sm:$0xff]
        %v1914 = vld [vmem:[%s706 + $0xb90] sm:$0xff]
        %v1915 = vld [vmem:[%s706 + $0xb98] sm:$0xff]
        %v1916 = vld [vmem:[%s706 + $0xba0] sm:$0xff]
        %v1917 = vld [vmem:[%s706 + $0xba8] sm:$0xff]
        %v1918 = vld [vmem:[%s706 + $0xbb0] sm:$0xff]
        %v1919 = vld [vmem:[%s706 + $0xbb8] sm:$0xff]
        %v1920 = vld [vmem:[%s706 + $0xbc0] sm:$0xff]
        %v1921 = vld [vmem:[%s706 + $0xbc8] sm:$0xff]
        %v1922 = vld [vmem:[%s706 + $0xbd0] sm:$0xff]
        %v1923 = vld [vmem:[%s706 + $0xbd8] sm:$0xff]
        %v1924 = vld [vmem:[%s706 + $0xbe0] sm:$0xff]
        %v1925 = vld [vmem:[%s706 + $0xbe8] sm:$0xff]
        %v1926 = vld [vmem:[%s706 + $0xbf0] sm:$0xff]
        %v1927 = vld [vmem:[%s706 + $0xbf8] sm:$0xff]
        %v1928 = vld [vmem:[%s716] sm:$0xff]
        %v1929 = vld [vmem:[%s716 + $0x8] sm:$0xf]
        %v1932 = vperm.slane %v1928, 0
        %v1933 = vperm.slane %v1928, 1
        %v1934 = vperm.slane %v1928, 2
        %v1935 = vperm.slane %v1928, 3
        %v1936 = vperm.slane %v1928, 4
        %v1937 = vperm.slane %v1928, 5
        %v1938 = vperm.slane %v1928, 6
        %v1939 = vperm.slane %v1928, 7
        %v1940 = vperm.slane %v1929, 0
        %v1941 = vperm.slane %v1929, 1
        %v1942 = vperm.slane %v1929, 2
        %v1943 = vperm.slane %v1929, 3
        %v2340 = vunpack.c.l.b16 %v1544
        %v2341 = vunpack.c.h.b16 %v1544
        %v2342 = vunpack.c.l.b16 %v1545
        %v2343 = vunpack.c.h.b16 %v1545
        %v2344 = vunpack.c.l.b16 %v1546
        %v2345 = vunpack.c.h.b16 %v1546
        %v2346 = vunpack.c.l.b16 %v1547
        %v2347 = vunpack.c.h.b16 %v1547
        %v2348 = vunpack.c.l.b16 %v1548
        %v2349 = vunpack.c.h.b16 %v1548
        %v2350 = vunpack.c.l.b16 %v1549
        %v2351 = vunpack.c.h.b16 %v1549
        %v2352 = vunpack.c.l.b16 %v1550
        %v2353 = vunpack.c.h.b16 %v1550
        %v2354 = vunpack.c.l.b16 %v1551
        %v2355 = vunpack.c.h.b16 %v1551
        %v2356 = vunpack.c.l.b16 %v1552
        %v2357 = vunpack.c.h.b16 %v1552
        %v2358 = vunpack.c.l.b16 %v1553
        %v2359 = vunpack.c.h.b16 %v1553
        %v2360 = vunpack.c.l.b16 %v1554
        %v2361 = vunpack.c.h.b16 %v1554
        %v2362 = vunpack.c.l.b16 %v1555
        %v2363 = vunpack.c.h.b16 %v1555
        %v2364 = vunpack.c.l.b16 %v1556
        %v2365 = vunpack.c.h.b16 %v1556
        %v2366 = vunpack.c.l.b16 %v1557
        %v2367 = vunpack.c.h.b16 %v1557
        %v2368 = vunpack.c.l.b16 %v1558
        %v2369 = vunpack.c.h.b16 %v1558
        %v2370 = vunpack.c.l.b16 %v1559
        %v2371 = vunpack.c.h.b16 %v1559
        %v2372 = vunpack.c.l.b16 %v1560
        %v2373 = vunpack.c.h.b16 %v1560
        %v2374 = vunpack.c.l.b16 %v1561
        %v2375 = vunpack.c.h.b16 %v1561
        %v2376 = vunpack.c.l.b16 %v1562
        %v2377 = vunpack.c.h.b16 %v1562
        %v2378 = vunpack.c.l.b16 %v1563
        %v2379 = vunpack.c.h.b16 %v1563
        %v2380 = vunpack.c.l.b16 %v1564
        %v2381 = vunpack.c.h.b16 %v1564
        %v2382 = vunpack.c.l.b16 %v1565
        %v2383 = vunpack.c.h.b16 %v1565
        %v2384 = vunpack.c.l.b16 %v1566
        %v2385 = vunpack.c.h.b16 %v1566
        %v2386 = vunpack.c.l.b16 %v1567
        %v2387 = vunpack.c.h.b16 %v1567
        %v2388 = vunpack.c.l.b16 %v1568
        %v2389 = vunpack.c.h.b16 %v1568
        %v2390 = vunpack.c.l.b16 %v1569
        %v2391 = vunpack.c.h.b16 %v1569
        %v2392 = vunpack.c.l.b16 %v1570
        %v2393 = vunpack.c.h.b16 %v1570
        %v2394 = vunpack.c.l.b16 %v1571
        %v2395 = vunpack.c.h.b16 %v1571
        %v2396 = vunpack.c.l.b16 %v1572
        %v2397 = vunpack.c.h.b16 %v1572
        %v2398 = vunpack.c.l.b16 %v1573
        %v2399 = vunpack.c.h.b16 %v1573
        %v2400 = vunpack.c.l.b16 %v1574
        %v2401 = vunpack.c.h.b16 %v1574
        %v2402 = vunpack.c.l.b16 %v1575
        %v2403 = vunpack.c.h.b16 %v1575
        %v2404 = vunpack.c.l.b16 %v1576
        %v2405 = vunpack.c.h.b16 %v1576
        %v2406 = vunpack.c.l.b16 %v1577
        %v2407 = vunpack.c.h.b16 %v1577
        %v2408 = vunpack.c.l.b16 %v1578
        %v2409 = vunpack.c.h.b16 %v1578
        %v2410 = vunpack.c.l.b16 %v1579
        %v2411 = vunpack.c.h.b16 %v1579
        %v2412 = vunpack.c.l.b16 %v1580
        %v2413 = vunpack.c.h.b16 %v1580
        %v2414 = vunpack.c.l.b16 %v1581
        %v2415 = vunpack.c.h.b16 %v1581
        %v2416 = vunpack.c.l.b16 %v1582
        %v2417 = vunpack.c.h.b16 %v1582
        %v2418 = vunpack.c.l.b16 %v1583
        %v2419 = vunpack.c.h.b16 %v1583
        %v2420 = vunpack.c.l.b16 %v1584
        %v2421 = vunpack.c.h.b16 %v1584
        %v2422 = vunpack.c.l.b16 %v1585
        %v2423 = vunpack.c.h.b16 %v1585
        %v2424 = vunpack.c.l.b16 %v1586
        %v2425 = vunpack.c.h.b16 %v1586
        %v2426 = vunpack.c.l.b16 %v1587
        %v2427 = vunpack.c.h.b16 %v1587
        %v2428 = vunpack.c.l.b16 %v1588
        %v2429 = vunpack.c.h.b16 %v1588
        %v2430 = vunpack.c.l.b16 %v1589
        %v2431 = vunpack.c.h.b16 %v1589
        %v2432 = vunpack.c.l.b16 %v1590
        %v2433 = vunpack.c.h.b16 %v1590
        %v2434 = vunpack.c.l.b16 %v1591
        %v2435 = vunpack.c.h.b16 %v1591
        %v2436 = vunpack.c.l.b16 %v1592
        %v2437 = vunpack.c.h.b16 %v1592
        %v2438 = vunpack.c.l.b16 %v1593
        %v2439 = vunpack.c.h.b16 %v1593
        %v2440 = vunpack.c.l.b16 %v1594
        %v2441 = vunpack.c.h.b16 %v1594
        %v2442 = vunpack.c.l.b16 %v1595
        %v2443 = vunpack.c.h.b16 %v1595
        %v2444 = vunpack.c.l.b16 %v1596
        %v2445 = vunpack.c.h.b16 %v1596
        %v2446 = vunpack.c.l.b16 %v1597
        %v2447 = vunpack.c.h.b16 %v1597
        %v2448 = vunpack.c.l.b16 %v1598
        %v2449 = vunpack.c.h.b16 %v1598
        %v2450 = vunpack.c.l.b16 %v1599
        %v2451 = vunpack.c.h.b16 %v1599
        %v2452 = vunpack.c.l.b16 %v1600
        %v2453 = vunpack.c.h.b16 %v1600
        %v2454 = vunpack.c.l.b16 %v1601
        %v2455 = vunpack.c.h.b16 %v1601
        %v2456 = vunpack.c.l.b16 %v1602
        %v2457 = vunpack.c.h.b16 %v1602
        %v2458 = vunpack.c.l.b16 %v1603
        %v2459 = vunpack.c.h.b16 %v1603
        %v2460 = vunpack.c.l.b16 %v1604
        %v2461 = vunpack.c.h.b16 %v1604
        %v2462 = vunpack.c.l.b16 %v1605
        %v2463 = vunpack.c.h.b16 %v1605
        %v2464 = vunpack.c.l.b16 %v1606
        %v2465 = vunpack.c.h.b16 %v1606
        %v2466 = vunpack.c.l.b16 %v1607
        %v2467 = vunpack.c.h.b16 %v1607
        %v2468 = vunpack.c.l.b16 %v1608
        %v2469 = vunpack.c.h.b16 %v1608
        %v2470 = vunpack.c.l.b16 %v1609
        %v2471 = vunpack.c.h.b16 %v1609
        %v2472 = vunpack.c.l.b16 %v1610
        %v2473 = vunpack.c.h.b16 %v1610
        %v2474 = vunpack.c.l.b16 %v1611
        %v2475 = vunpack.c.h.b16 %v1611
        %v2476 = vunpack.c.l.b16 %v1612
        %v2477 = vunpack.c.h.b16 %v1612
        %v2478 = vunpack.c.l.b16 %v1613
        %v2479 = vunpack.c.h.b16 %v1613
        %v2480 = vunpack.c.l.b16 %v1614
        %v2481 = vunpack.c.h.b16 %v1614
        %v2482 = vunpack.c.l.b16 %v1615
        %v2483 = vunpack.c.h.b16 %v1615
        %v2484 = vunpack.c.l.b16 %v1616
        %v2485 = vunpack.c.h.b16 %v1616
        %v2486 = vunpack.c.l.b16 %v1617
        %v2487 = vunpack.c.h.b16 %v1617
        %v2488 = vunpack.c.l.b16 %v1618
        %v2489 = vunpack.c.h.b16 %v1618
        %v2490 = vunpack.c.l.b16 %v1619
        %v2491 = vunpack.c.h.b16 %v1619
        %v2492 = vunpack.c.l.b16 %v1620
        %v2493 = vunpack.c.h.b16 %v1620
        %v2494 = vunpack.c.l.b16 %v1621
        %v2495 = vunpack.c.h.b16 %v1621
        %v2496 = vunpack.c.l.b16 %v1622
        %v2497 = vunpack.c.h.b16 %v1622
        %v2498 = vunpack.c.l.b16 %v1623
        %v2499 = vunpack.c.h.b16 %v1623
        %v2500 = vunpack.c.l.b16 %v1624
        %v2501 = vunpack.c.h.b16 %v1624
        %v2502 = vunpack.c.l.b16 %v1625
        %v2503 = vunpack.c.h.b16 %v1625
        %v2504 = vunpack.c.l.b16 %v1626
        %v2505 = vunpack.c.h.b16 %v1626
        %v2506 = vunpack.c.l.b16 %v1627
        %v2507 = vunpack.c.h.b16 %v1627
        %v2508 = vunpack.c.l.b16 %v1628
        %v2509 = vunpack.c.h.b16 %v1628
        %v2510 = vunpack.c.l.b16 %v1629
        %v2511 = vunpack.c.h.b16 %v1629
        %v2512 = vunpack.c.l.b16 %v1630
        %v2513 = vunpack.c.h.b16 %v1630
        %v2514 = vunpack.c.l.b16 %v1631
        %v2515 = vunpack.c.h.b16 %v1631
        %v2516 = vunpack.c.l.b16 %v1632
        %v2517 = vunpack.c.h.b16 %v1632
        %v2518 = vunpack.c.l.b16 %v1633
        %v2519 = vunpack.c.h.b16 %v1633
        %v2520 = vunpack.c.l.b16 %v1634
        %v2521 = vunpack.c.h.b16 %v1634
        %v2522 = vunpack.c.l.b16 %v1635
        %v2523 = vunpack.c.h.b16 %v1635
        %v2524 = vunpack.c.l.b16 %v1636
        %v2525 = vunpack.c.h.b16 %v1636
        %v2526 = vunpack.c.l.b16 %v1637
        %v2527 = vunpack.c.h.b16 %v1637
        %v2528 = vunpack.c.l.b16 %v1638
        %v2529 = vunpack.c.h.b16 %v1638
        %v2530 = vunpack.c.l.b16 %v1639
        %v2531 = vunpack.c.h.b16 %v1639
        %v2532 = vunpack.c.l.b16 %v1640
        %v2533 = vunpack.c.h.b16 %v1640
        %v2534 = vunpack.c.l.b16 %v1641
        %v2535 = vunpack.c.h.b16 %v1641
        %v2536 = vunpack.c.l.b16 %v1642
        %v2537 = vunpack.c.h.b16 %v1642
        %v2538 = vunpack.c.l.b16 %v1643
        %v2539 = vunpack.c.h.b16 %v1643
        %v2540 = vunpack.c.l.b16 %v1644
        %v2541 = vunpack.c.h.b16 %v1644
        %v2542 = vunpack.c.l.b16 %v1645
        %v2543 = vunpack.c.h.b16 %v1645
        %v2544 = vunpack.c.l.b16 %v1646
        %v2545 = vunpack.c.h.b16 %v1646
        %v2546 = vunpack.c.l.b16 %v1647
        %v2547 = vunpack.c.h.b16 %v1647
        %v2548 = vunpack.c.l.b16 %v1648
        %v2549 = vunpack.c.h.b16 %v1648
        %v2550 = vunpack.c.l.b16 %v1649
        %v2551 = vunpack.c.h.b16 %v1649
        %v2552 = vunpack.c.l.b16 %v1650
        %v2553 = vunpack.c.h.b16 %v1650
        %v2554 = vunpack.c.l.b16 %v1651
        %v2555 = vunpack.c.h.b16 %v1651
        %v2556 = vunpack.c.l.b16 %v1652
        %v2557 = vunpack.c.h.b16 %v1652
        %v2558 = vunpack.c.l.b16 %v1653
        %v2559 = vunpack.c.h.b16 %v1653
        %v2560 = vunpack.c.l.b16 %v1654
        %v2561 = vunpack.c.h.b16 %v1654
        %v2562 = vunpack.c.l.b16 %v1655
        %v2563 = vunpack.c.h.b16 %v1655
        %v2564 = vunpack.c.l.b16 %v1656
        %v2565 = vunpack.c.h.b16 %v1656
        %v2566 = vunpack.c.l.b16 %v1657
        %v2567 = vunpack.c.h.b16 %v1657
        %v2568 = vunpack.c.l.b16 %v1658
        %v2569 = vunpack.c.h.b16 %v1658
        %v2570 = vunpack.c.l.b16 %v1659
        %v2571 = vunpack.c.h.b16 %v1659
        %v2572 = vunpack.c.l.b16 %v1660
        %v2573 = vunpack.c.h.b16 %v1660
        %v2574 = vunpack.c.l.b16 %v1661
        %v2575 = vunpack.c.h.b16 %v1661
        %v2576 = vunpack.c.l.b16 %v1662
        %v2577 = vunpack.c.h.b16 %v1662
        %v2578 = vunpack.c.l.b16 %v1663
        %v2579 = vunpack.c.h.b16 %v1663
        %v2580 = vunpack.c.l.b16 %v1664
        %v2581 = vunpack.c.h.b16 %v1664
        %v2582 = vunpack.c.l.b16 %v1665
        %v2583 = vunpack.c.h.b16 %v1665
        %v2584 = vunpack.c.l.b16 %v1666
        %v2585 = vunpack.c.h.b16 %v1666
        %v2586 = vunpack.c.l.b16 %v1667
        %v2587 = vunpack.c.h.b16 %v1667
        %v2588 = vunpack.c.l.b16 %v1668
        %v2589 = vunpack.c.h.b16 %v1668
        %v2590 = vunpack.c.l.b16 %v1669
        %v2591 = vunpack.c.h.b16 %v1669
        %v2592 = vunpack.c.l.b16 %v1670
        %v2593 = vunpack.c.h.b16 %v1670
        %v2594 = vunpack.c.l.b16 %v1671
        %v2595 = vunpack.c.h.b16 %v1671
        %v2596 = vunpack.c.l.b16 %v1672
        %v2597 = vunpack.c.h.b16 %v1672
        %v2598 = vunpack.c.l.b16 %v1673
        %v2599 = vunpack.c.h.b16 %v1673
        %v2600 = vunpack.c.l.b16 %v1674
        %v2601 = vunpack.c.h.b16 %v1674
        %v2602 = vunpack.c.l.b16 %v1675
        %v2603 = vunpack.c.h.b16 %v1675
        %v2604 = vunpack.c.l.b16 %v1676
        %v2605 = vunpack.c.h.b16 %v1676
        %v2606 = vunpack.c.l.b16 %v1677
        %v2607 = vunpack.c.h.b16 %v1677
        %v2608 = vunpack.c.l.b16 %v1678
        %v2609 = vunpack.c.h.b16 %v1678
        %v2610 = vunpack.c.l.b16 %v1679
        %v2611 = vunpack.c.h.b16 %v1679
        %v2612 = vunpack.c.l.b16 %v1680
        %v2613 = vunpack.c.h.b16 %v1680
        %v2614 = vunpack.c.l.b16 %v1681
        %v2615 = vunpack.c.h.b16 %v1681
        %v2616 = vunpack.c.l.b16 %v1682
        %v2617 = vunpack.c.h.b16 %v1682
        %v2618 = vunpack.c.l.b16 %v1683
        %v2619 = vunpack.c.h.b16 %v1683
        %v2620 = vunpack.c.l.b16 %v1684
        %v2621 = vunpack.c.h.b16 %v1684
        %v2622 = vunpack.c.l.b16 %v1685
        %v2623 = vunpack.c.h.b16 %v1685
        %v2624 = vunpack.c.l.b16 %v1686
        %v2625 = vunpack.c.h.b16 %v1686
        %v2626 = vunpack.c.l.b16 %v1687
        %v2627 = vunpack.c.h.b16 %v1687
        %v2628 = vunpack.c.l.b16 %v1688
        %v2629 = vunpack.c.h.b16 %v1688
        %v2630 = vunpack.c.l.b16 %v1689
        %v2631 = vunpack.c.h.b16 %v1689
        %v2632 = vunpack.c.l.b16 %v1690
        %v2633 = vunpack.c.h.b16 %v1690
        %v2634 = vunpack.c.l.b16 %v1691
        %v2635 = vunpack.c.h.b16 %v1691
        %v2636 = vunpack.c.l.b16 %v1692
        %v2637 = vunpack.c.h.b16 %v1692
        %v2638 = vunpack.c.l.b16 %v1693
        %v2639 = vunpack.c.h.b16 %v1693
        %v2640 = vunpack.c.l.b16 %v1694
        %v2641 = vunpack.c.h.b16 %v1694
        %v2642 = vunpack.c.l.b16 %v1695
        %v2643 = vunpack.c.h.b16 %v1695
        %v2644 = vunpack.c.l.b16 %v1696
        %v2645 = vunpack.c.h.b16 %v1696
        %v2646 = vunpack.c.l.b16 %v1697
        %v2647 = vunpack.c.h.b16 %v1697
        %v2648 = vunpack.c.l.b16 %v1698
        %v2649 = vunpack.c.h.b16 %v1698
        %v2650 = vunpack.c.l.b16 %v1699
        %v2651 = vunpack.c.h.b16 %v1699
        %v2652 = vunpack.c.l.b16 %v1700
        %v2653 = vunpack.c.h.b16 %v1700
        %v2654 = vunpack.c.l.b16 %v1701
        %v2655 = vunpack.c.h.b16 %v1701
        %v2656 = vunpack.c.l.b16 %v1702
        %v2657 = vunpack.c.h.b16 %v1702
        %v2658 = vunpack.c.l.b16 %v1703
        %v2659 = vunpack.c.h.b16 %v1703
        %v2660 = vunpack.c.l.b16 %v1704
        %v2661 = vunpack.c.h.b16 %v1704
        %v2662 = vunpack.c.l.b16 %v1705
        %v2663 = vunpack.c.h.b16 %v1705
        %v2664 = vunpack.c.l.b16 %v1706
        %v2665 = vunpack.c.h.b16 %v1706
        %v2666 = vunpack.c.l.b16 %v1707
        %v2667 = vunpack.c.h.b16 %v1707
        %v2668 = vunpack.c.l.b16 %v1708
        %v2669 = vunpack.c.h.b16 %v1708
        %v2670 = vunpack.c.l.b16 %v1709
        %v2671 = vunpack.c.h.b16 %v1709
        %v2672 = vunpack.c.l.b16 %v1710
        %v2673 = vunpack.c.h.b16 %v1710
        %v2674 = vunpack.c.l.b16 %v1711
        %v2675 = vunpack.c.h.b16 %v1711
        %v2676 = vunpack.c.l.b16 %v1712
        %v2677 = vunpack.c.h.b16 %v1712
        %v2678 = vunpack.c.l.b16 %v1713
        %v2679 = vunpack.c.h.b16 %v1713
        %v2680 = vunpack.c.l.b16 %v1714
        %v2681 = vunpack.c.h.b16 %v1714
        %v2682 = vunpack.c.l.b16 %v1715
        %v2683 = vunpack.c.h.b16 %v1715
        %v2684 = vunpack.c.l.b16 %v1716
        %v2685 = vunpack.c.h.b16 %v1716
        %v2686 = vunpack.c.l.b16 %v1717
        %v2687 = vunpack.c.h.b16 %v1717
        %v2688 = vunpack.c.l.b16 %v1718
        %v2689 = vunpack.c.h.b16 %v1718
        %v2690 = vunpack.c.l.b16 %v1719
        %v2691 = vunpack.c.h.b16 %v1719
        %v2692 = vunpack.c.l.b16 %v1720
        %v2693 = vunpack.c.h.b16 %v1720
        %v2694 = vunpack.c.l.b16 %v1721
        %v2695 = vunpack.c.h.b16 %v1721
        %v2696 = vunpack.c.l.b16 %v1722
        %v2697 = vunpack.c.h.b16 %v1722
        %v2698 = vunpack.c.l.b16 %v1723
        %v2699 = vunpack.c.h.b16 %v1723
        %v2700 = vunpack.c.l.b16 %v1724
        %v2701 = vunpack.c.h.b16 %v1724
        %v2702 = vunpack.c.l.b16 %v1725
        %v2703 = vunpack.c.h.b16 %v1725
        %v2704 = vunpack.c.l.b16 %v1726
        %v2705 = vunpack.c.h.b16 %v1726
        %v2706 = vunpack.c.l.b16 %v1727
        %v2707 = vunpack.c.h.b16 %v1727
        %v2708 = vunpack.c.l.b16 %v1728
        %v2709 = vunpack.c.h.b16 %v1728
        %v2710 = vunpack.c.l.b16 %v1729
        %v2711 = vunpack.c.h.b16 %v1729
        %v2712 = vunpack.c.l.b16 %v1730
        %v2713 = vunpack.c.h.b16 %v1730
        %v2714 = vunpack.c.l.b16 %v1731
        %v2715 = vunpack.c.h.b16 %v1731
        %v2716 = vunpack.c.l.b16 %v1732
        %v2717 = vunpack.c.h.b16 %v1732
        %v2718 = vunpack.c.l.b16 %v1733
        %v2719 = vunpack.c.h.b16 %v1733
        %v2720 = vunpack.c.l.b16 %v1734
        %v2721 = vunpack.c.h.b16 %v1734
        %v2722 = vunpack.c.l.b16 %v1735
        %v2723 = vunpack.c.h.b16 %v1735
        %v2724 = vunpack.c.l.b16 %v1736
        %v2725 = vunpack.c.h.b16 %v1736
        %v2726 = vunpack.c.l.b16 %v1737
        %v2727 = vunpack.c.h.b16 %v1737
        %v2728 = vunpack.c.l.b16 %v1738
        %v2729 = vunpack.c.h.b16 %v1738
        %v2730 = vunpack.c.l.b16 %v1739
        %v2731 = vunpack.c.h.b16 %v1739
        %v2732 = vunpack.c.l.b16 %v1740
        %v2733 = vunpack.c.h.b16 %v1740
        %v2734 = vunpack.c.l.b16 %v1741
        %v2735 = vunpack.c.h.b16 %v1741
        %v2736 = vunpack.c.l.b16 %v1742
        %v2737 = vunpack.c.h.b16 %v1742
        %v2738 = vunpack.c.l.b16 %v1743
        %v2739 = vunpack.c.h.b16 %v1743
        %v2740 = vunpack.c.l.b16 %v1744
        %v2741 = vunpack.c.h.b16 %v1744
        %v2742 = vunpack.c.l.b16 %v1745
        %v2743 = vunpack.c.h.b16 %v1745
        %v2744 = vunpack.c.l.b16 %v1746
        %v2745 = vunpack.c.h.b16 %v1746
        %v2746 = vunpack.c.l.b16 %v1747
        %v2747 = vunpack.c.h.b16 %v1747
        %v2748 = vunpack.c.l.b16 %v1748
        %v2749 = vunpack.c.h.b16 %v1748
        %v2750 = vunpack.c.l.b16 %v1749
        %v2751 = vunpack.c.h.b16 %v1749
        %v2752 = vunpack.c.l.b16 %v1750
        %v2753 = vunpack.c.h.b16 %v1750
        %v2754 = vunpack.c.l.b16 %v1751
        %v2755 = vunpack.c.h.b16 %v1751
        %v2756 = vunpack.c.l.b16 %v1752
        %v2757 = vunpack.c.h.b16 %v1752
        %v2758 = vunpack.c.l.b16 %v1753
        %v2759 = vunpack.c.h.b16 %v1753
        %v2760 = vunpack.c.l.b16 %v1754
        %v2761 = vunpack.c.h.b16 %v1754
        %v2762 = vunpack.c.l.b16 %v1755
        %v2763 = vunpack.c.h.b16 %v1755
        %v2764 = vunpack.c.l.b16 %v1756
        %v2765 = vunpack.c.h.b16 %v1756
        %v2766 = vunpack.c.l.b16 %v1757
        %v2767 = vunpack.c.h.b16 %v1757
        %v2768 = vunpack.c.l.b16 %v1758
        %v2769 = vunpack.c.h.b16 %v1758
        %v2770 = vunpack.c.l.b16 %v1759
        %v2771 = vunpack.c.h.b16 %v1759
        %v2772 = vunpack.c.l.b16 %v1760
        %v2773 = vunpack.c.h.b16 %v1760
        %v2774 = vunpack.c.l.b16 %v1761
        %v2775 = vunpack.c.h.b16 %v1761
        %v2776 = vunpack.c.l.b16 %v1762
        %v2777 = vunpack.c.h.b16 %v1762
        %v2778 = vunpack.c.l.b16 %v1763
        %v2779 = vunpack.c.h.b16 %v1763
        %v2780 = vunpack.c.l.b16 %v1764
        %v2781 = vunpack.c.h.b16 %v1764
        %v2782 = vunpack.c.l.b16 %v1765
        %v2783 = vunpack.c.h.b16 %v1765
        %v2784 = vunpack.c.l.b16 %v1766
        %v2785 = vunpack.c.h.b16 %v1766
        %v2786 = vunpack.c.l.b16 %v1767
        %v2787 = vunpack.c.h.b16 %v1767
        %v2788 = vunpack.c.l.b16 %v1768
        %v2789 = vunpack.c.h.b16 %v1768
        %v2790 = vunpack.c.l.b16 %v1769
        %v2791 = vunpack.c.h.b16 %v1769
        %v2792 = vunpack.c.l.b16 %v1770
        %v2793 = vunpack.c.h.b16 %v1770
        %v2794 = vunpack.c.l.b16 %v1771
        %v2795 = vunpack.c.h.b16 %v1771
        %v2796 = vunpack.c.l.b16 %v1772
        %v2797 = vunpack.c.h.b16 %v1772
        %v2798 = vunpack.c.l.b16 %v1773
        %v2799 = vunpack.c.h.b16 %v1773
        %v2800 = vunpack.c.l.b16 %v1774
        %v2801 = vunpack.c.h.b16 %v1774
        %v2802 = vunpack.c.l.b16 %v1775
        %v2803 = vunpack.c.h.b16 %v1775
        %v2804 = vunpack.c.l.b16 %v1776
        %v2805 = vunpack.c.h.b16 %v1776
        %v2806 = vunpack.c.l.b16 %v1777
        %v2807 = vunpack.c.h.b16 %v1777
        %v2808 = vunpack.c.l.b16 %v1778
        %v2809 = vunpack.c.h.b16 %v1778
        %v2810 = vunpack.c.l.b16 %v1779
        %v2811 = vunpack.c.h.b16 %v1779
        %v2812 = vunpack.c.l.b16 %v1780
        %v2813 = vunpack.c.h.b16 %v1780
        %v2814 = vunpack.c.l.b16 %v1781
        %v2815 = vunpack.c.h.b16 %v1781
        %v2816 = vunpack.c.l.b16 %v1782
        %v2817 = vunpack.c.h.b16 %v1782
        %v2818 = vunpack.c.l.b16 %v1783
        %v2819 = vunpack.c.h.b16 %v1783
        %v2820 = vunpack.c.l.b16 %v1784
        %v2821 = vunpack.c.h.b16 %v1784
        %v2822 = vunpack.c.l.b16 %v1785
        %v2823 = vunpack.c.h.b16 %v1785
        %v2824 = vunpack.c.l.b16 %v1786
        %v2825 = vunpack.c.h.b16 %v1786
        %v2826 = vunpack.c.l.b16 %v1787
        %v2827 = vunpack.c.h.b16 %v1787
        %v2828 = vunpack.c.l.b16 %v1788
        %v2829 = vunpack.c.h.b16 %v1788
        %v2830 = vunpack.c.l.b16 %v1789
        %v2831 = vunpack.c.h.b16 %v1789
        %v2832 = vunpack.c.l.b16 %v1790
        %v2833 = vunpack.c.h.b16 %v1790
        %v2834 = vunpack.c.l.b16 %v1791
        %v2835 = vunpack.c.h.b16 %v1791
        %v2836 = vunpack.c.l.b16 %v1792
        %v2837 = vunpack.c.h.b16 %v1792
        %v2838 = vunpack.c.l.b16 %v1793
        %v2839 = vunpack.c.h.b16 %v1793
        %v2840 = vunpack.c.l.b16 %v1794
        %v2841 = vunpack.c.h.b16 %v1794
        %v2842 = vunpack.c.l.b16 %v1795
        %v2843 = vunpack.c.h.b16 %v1795
        %v2844 = vunpack.c.l.b16 %v1796
        %v2845 = vunpack.c.h.b16 %v1796
        %v2846 = vunpack.c.l.b16 %v1797
        %v2847 = vunpack.c.h.b16 %v1797
        %v2848 = vunpack.c.l.b16 %v1798
        %v2849 = vunpack.c.h.b16 %v1798
        %v2850 = vunpack.c.l.b16 %v1799
        %v2851 = vunpack.c.h.b16 %v1799
        %v2852 = vunpack.c.l.b16 %v1800
        %v2853 = vunpack.c.h.b16 %v1800
        %v2854 = vunpack.c.l.b16 %v1801
        %v2855 = vunpack.c.h.b16 %v1801
        %v2856 = vunpack.c.l.b16 %v1802
        %v2857 = vunpack.c.h.b16 %v1802
        %v2858 = vunpack.c.l.b16 %v1803
        %v2859 = vunpack.c.h.b16 %v1803
        %v2860 = vunpack.c.l.b16 %v1804
        %v2861 = vunpack.c.h.b16 %v1804
        %v2862 = vunpack.c.l.b16 %v1805
        %v2863 = vunpack.c.h.b16 %v1805
        %v2864 = vunpack.c.l.b16 %v1806
        %v2865 = vunpack.c.h.b16 %v1806
        %v2866 = vunpack.c.l.b16 %v1807
        %v2867 = vunpack.c.h.b16 %v1807
        %v2868 = vunpack.c.l.b16 %v1808
        %v2869 = vunpack.c.h.b16 %v1808
        %v2870 = vunpack.c.l.b16 %v1809
        %v2871 = vunpack.c.h.b16 %v1809
        %v2872 = vunpack.c.l.b16 %v1810
        %v2873 = vunpack.c.h.b16 %v1810
        %v2874 = vunpack.c.l.b16 %v1811
        %v2875 = vunpack.c.h.b16 %v1811
        %v2876 = vunpack.c.l.b16 %v1812
        %v2877 = vunpack.c.h.b16 %v1812
        %v2878 = vunpack.c.l.b16 %v1813
        %v2879 = vunpack.c.h.b16 %v1813
        %v2880 = vunpack.c.l.b16 %v1814
        %v2881 = vunpack.c.h.b16 %v1814
        %v2882 = vunpack.c.l.b16 %v1815
        %v2883 = vunpack.c.h.b16 %v1815
        %v2884 = vunpack.c.l.b16 %v1816
        %v2885 = vunpack.c.h.b16 %v1816
        %v2886 = vunpack.c.l.b16 %v1817
        %v2887 = vunpack.c.h.b16 %v1817
        %v2888 = vunpack.c.l.b16 %v1818
        %v2889 = vunpack.c.h.b16 %v1818
        %v2890 = vunpack.c.l.b16 %v1819
        %v2891 = vunpack.c.h.b16 %v1819
        %v2892 = vunpack.c.l.b16 %v1820
        %v2893 = vunpack.c.h.b16 %v1820
        %v2894 = vunpack.c.l.b16 %v1821
        %v2895 = vunpack.c.h.b16 %v1821
        %v2896 = vunpack.c.l.b16 %v1822
        %v2897 = vunpack.c.h.b16 %v1822
        %v2898 = vunpack.c.l.b16 %v1823
        %v2899 = vunpack.c.h.b16 %v1823
        %v2900 = vunpack.c.l.b16 %v1824
        %v2901 = vunpack.c.h.b16 %v1824
        %v2902 = vunpack.c.l.b16 %v1825
        %v2903 = vunpack.c.h.b16 %v1825
        %v2904 = vunpack.c.l.b16 %v1826
        %v2905 = vunpack.c.h.b16 %v1826
        %v2906 = vunpack.c.l.b16 %v1827
        %v2907 = vunpack.c.h.b16 %v1827
        %v2908 = vunpack.c.l.b16 %v1828
        %v2909 = vunpack.c.h.b16 %v1828
        %v2910 = vunpack.c.l.b16 %v1829
        %v2911 = vunpack.c.h.b16 %v1829
        %v2912 = vunpack.c.l.b16 %v1830
        %v2913 = vunpack.c.h.b16 %v1830
        %v2914 = vunpack.c.l.b16 %v1831
        %v2915 = vunpack.c.h.b16 %v1831
        %v2916 = vunpack.c.l.b16 %v1832
        %v2917 = vunpack.c.h.b16 %v1832
        %v2918 = vunpack.c.l.b16 %v1833
        %v2919 = vunpack.c.h.b16 %v1833
        %v2920 = vunpack.c.l.b16 %v1834
        %v2921 = vunpack.c.h.b16 %v1834
        %v2922 = vunpack.c.l.b16 %v1835
        %v2923 = vunpack.c.h.b16 %v1835
        %v2924 = vunpack.c.l.b16 %v1836
        %v2925 = vunpack.c.h.b16 %v1836
        %v2926 = vunpack.c.l.b16 %v1837
        %v2927 = vunpack.c.h.b16 %v1837
        %v2928 = vunpack.c.l.b16 %v1838
        %v2929 = vunpack.c.h.b16 %v1838
        %v2930 = vunpack.c.l.b16 %v1839
        %v2931 = vunpack.c.h.b16 %v1839
        %v2932 = vunpack.c.l.b16 %v1840
        %v2933 = vunpack.c.h.b16 %v1840
        %v2934 = vunpack.c.l.b16 %v1841
        %v2935 = vunpack.c.h.b16 %v1841
        %v2936 = vunpack.c.l.b16 %v1842
        %v2937 = vunpack.c.h.b16 %v1842
        %v2938 = vunpack.c.l.b16 %v1843
        %v2939 = vunpack.c.h.b16 %v1843
        %v2940 = vunpack.c.l.b16 %v1844
        %v2941 = vunpack.c.h.b16 %v1844
        %v2942 = vunpack.c.l.b16 %v1845
        %v2943 = vunpack.c.h.b16 %v1845
        %v2944 = vunpack.c.l.b16 %v1846
        %v2945 = vunpack.c.h.b16 %v1846
        %v2946 = vunpack.c.l.b16 %v1847
        %v2947 = vunpack.c.h.b16 %v1847
        %v2948 = vunpack.c.l.b16 %v1848
        %v2949 = vunpack.c.h.b16 %v1848
        %v2950 = vunpack.c.l.b16 %v1849
        %v2951 = vunpack.c.h.b16 %v1849
        %v2952 = vunpack.c.l.b16 %v1850
        %v2953 = vunpack.c.h.b16 %v1850
        %v2954 = vunpack.c.l.b16 %v1851
        %v2955 = vunpack.c.h.b16 %v1851
        %v2956 = vunpack.c.l.b16 %v1852
        %v2957 = vunpack.c.h.b16 %v1852
        %v2958 = vunpack.c.l.b16 %v1853
        %v2959 = vunpack.c.h.b16 %v1853
        %v2960 = vunpack.c.l.b16 %v1854
        %v2961 = vunpack.c.h.b16 %v1854
        %v2962 = vunpack.c.l.b16 %v1855
        %v2963 = vunpack.c.h.b16 %v1855
        %v2964 = vunpack.c.l.b16 %v1856
        %v2965 = vunpack.c.h.b16 %v1856
        %v2966 = vunpack.c.l.b16 %v1857
        %v2967 = vunpack.c.h.b16 %v1857
        %v2968 = vunpack.c.l.b16 %v1858
        %v2969 = vunpack.c.h.b16 %v1858
        %v2970 = vunpack.c.l.b16 %v1859
        %v2971 = vunpack.c.h.b16 %v1859
        %v2972 = vunpack.c.l.b16 %v1860
        %v2973 = vunpack.c.h.b16 %v1860
        %v2974 = vunpack.c.l.b16 %v1861
        %v2975 = vunpack.c.h.b16 %v1861
        %v2976 = vunpack.c.l.b16 %v1862
        %v2977 = vunpack.c.h.b16 %v1862
        %v2978 = vunpack.c.l.b16 %v1863
        %v2979 = vunpack.c.h.b16 %v1863
        %v2980 = vunpack.c.l.b16 %v1864
        %v2981 = vunpack.c.h.b16 %v1864
        %v2982 = vunpack.c.l.b16 %v1865
        %v2983 = vunpack.c.h.b16 %v1865
        %v2984 = vunpack.c.l.b16 %v1866
        %v2985 = vunpack.c.h.b16 %v1866
        %v2986 = vunpack.c.l.b16 %v1867
        %v2987 = vunpack.c.h.b16 %v1867
        %v2988 = vunpack.c.l.b16 %v1868
        %v2989 = vunpack.c.h.b16 %v1868
        %v2990 = vunpack.c.l.b16 %v1869
        %v2991 = vunpack.c.h.b16 %v1869
        %v2992 = vunpack.c.l.b16 %v1870
        %v2993 = vunpack.c.h.b16 %v1870
        %v2994 = vunpack.c.l.b16 %v1871
        %v2995 = vunpack.c.h.b16 %v1871
        %v2996 = vunpack.c.l.b16 %v1872
        %v2997 = vunpack.c.h.b16 %v1872
        %v2998 = vunpack.c.l.b16 %v1873
        %v2999 = vunpack.c.h.b16 %v1873
        %v3000 = vunpack.c.l.b16 %v1874
        %v3001 = vunpack.c.h.b16 %v1874
        %v3002 = vunpack.c.l.b16 %v1875
        %v3003 = vunpack.c.h.b16 %v1875
        %v3004 = vunpack.c.l.b16 %v1876
        %v3005 = vunpack.c.h.b16 %v1876
        %v3006 = vunpack.c.l.b16 %v1877
        %v3007 = vunpack.c.h.b16 %v1877
        %v3008 = vunpack.c.l.b16 %v1878
        %v3009 = vunpack.c.h.b16 %v1878
        %v3010 = vunpack.c.l.b16 %v1879
        %v3011 = vunpack.c.h.b16 %v1879
        %v3012 = vunpack.c.l.b16 %v1880
        %v3013 = vunpack.c.h.b16 %v1880
        %v3014 = vunpack.c.l.b16 %v1881
        %v3015 = vunpack.c.h.b16 %v1881
        %v3016 = vunpack.c.l.b16 %v1882
        %v3017 = vunpack.c.h.b16 %v1882
        %v3018 = vunpack.c.l.b16 %v1883
        %v3019 = vunpack.c.h.b16 %v1883
        %v3020 = vunpack.c.l.b16 %v1884
        %v3021 = vunpack.c.h.b16 %v1884
        %v3022 = vunpack.c.l.b16 %v1885
        %v3023 = vunpack.c.h.b16 %v1885
        %v3024 = vunpack.c.l.b16 %v1886
        %v3025 = vunpack.c.h.b16 %v1886
        %v3026 = vunpack.c.l.b16 %v1887
        %v3027 = vunpack.c.h.b16 %v1887
        %v3028 = vunpack.c.l.b16 %v1888
        %v3029 = vunpack.c.h.b16 %v1888
        %v3030 = vunpack.c.l.b16 %v1889
        %v3031 = vunpack.c.h.b16 %v1889
        %v3032 = vunpack.c.l.b16 %v1890
        %v3033 = vunpack.c.h.b16 %v1890
        %v3034 = vunpack.c.l.b16 %v1891
        %v3035 = vunpack.c.h.b16 %v1891
        %v3036 = vunpack.c.l.b16 %v1892
        %v3037 = vunpack.c.h.b16 %v1892
        %v3038 = vunpack.c.l.b16 %v1893
        %v3039 = vunpack.c.h.b16 %v1893
        %v3040 = vunpack.c.l.b16 %v1894
        %v3041 = vunpack.c.h.b16 %v1894
        %v3042 = vunpack.c.l.b16 %v1895
        %v3043 = vunpack.c.h.b16 %v1895
        %v3044 = vunpack.c.l.b16 %v1896
        %v3045 = vunpack.c.h.b16 %v1896
        %v3046 = vunpack.c.l.b16 %v1897
        %v3047 = vunpack.c.h.b16 %v1897
        %v3048 = vunpack.c.l.b16 %v1898
        %v3049 = vunpack.c.h.b16 %v1898
        %v3050 = vunpack.c.l.b16 %v1899
        %v3051 = vunpack.c.h.b16 %v1899
        %v3052 = vunpack.c.l.b16 %v1900
        %v3053 = vunpack.c.h.b16 %v1900
        %v3054 = vunpack.c.l.b16 %v1901
        %v3055 = vunpack.c.h.b16 %v1901
        %v3056 = vunpack.c.l.b16 %v1902
        %v3057 = vunpack.c.h.b16 %v1902
        %v3058 = vunpack.c.l.b16 %v1903
        %v3059 = vunpack.c.h.b16 %v1903
        %v3060 = vunpack.c.l.b16 %v1904
        %v3061 = vunpack.c.h.b16 %v1904
        %v3062 = vunpack.c.l.b16 %v1905
        %v3063 = vunpack.c.h.b16 %v1905
        %v3064 = vunpack.c.l.b16 %v1906
        %v3065 = vunpack.c.h.b16 %v1906
        %v3066 = vunpack.c.l.b16 %v1907
        %v3067 = vunpack.c.h.b16 %v1907
        %v3068 = vunpack.c.l.b16 %v1908
        %v3069 = vunpack.c.h.b16 %v1908
        %v3070 = vunpack.c.l.b16 %v1909
        %v3071 = vunpack.c.h.b16 %v1909
        %v3072 = vunpack.c.l.b16 %v1910
        %v3073 = vunpack.c.h.b16 %v1910
        %v3074 = vunpack.c.l.b16 %v1911
        %v3075 = vunpack.c.h.b16 %v1911
        %v3076 = vunpack.c.l.b16 %v1912
        %v3077 = vunpack.c.h.b16 %v1912
        %v3078 = vunpack.c.l.b16 %v1913
        %v3079 = vunpack.c.h.b16 %v1913
        %v3080 = vunpack.c.l.b16 %v1914
        %v3081 = vunpack.c.h.b16 %v1914
        %v3082 = vunpack.c.l.b16 %v1915
        %v3083 = vunpack.c.h.b16 %v1915
        %v3084 = vunpack.c.l.b16 %v1916
        %v3085 = vunpack.c.h.b16 %v1916
        %v3086 = vunpack.c.l.b16 %v1917
        %v3087 = vunpack.c.h.b16 %v1917
        %v3088 = vunpack.c.l.b16 %v1918
        %v3089 = vunpack.c.h.b16 %v1918
        %v3090 = vunpack.c.l.b16 %v1919
        %v3091 = vunpack.c.h.b16 %v1919
        %v3092 = vunpack.c.l.b16 %v1920
        %v3093 = vunpack.c.h.b16 %v1920
        %v3094 = vunpack.c.l.b16 %v1921
        %v3095 = vunpack.c.h.b16 %v1921
        %v3096 = vunpack.c.l.b16 %v1922
        %v3097 = vunpack.c.h.b16 %v1922
        %v3098 = vunpack.c.l.b16 %v1923
        %v3099 = vunpack.c.h.b16 %v1923
        %v3100 = vunpack.c.l.b16 %v1924
        %v3101 = vunpack.c.h.b16 %v1924
        %v3102 = vunpack.c.l.b16 %v1925
        %v3103 = vunpack.c.h.b16 %v1925
        %v3104 = vunpack.c.l.b16 %v1926
        %v3105 = vunpack.c.h.b16 %v1926
        %v3106 = vunpack.c.l.b16 %v1927
        %v3107 = vunpack.c.h.b16 %v1927
        %v3108 = vpack.c.b16 %v2352, %v2340
        %v3109 = vpack.c.b16 %v2353, %v2341
        %v3110 = vpack.c.b16 %v2354, %v2342
        %v3111 = vpack.c.b16 %v2355, %v2343
        %v3112 = vpack.c.b16 %v2356, %v2344
        %v3113 = vpack.c.b16 %v2357, %v2345
        %v3114 = vpack.c.b16 %v2358, %v2346
        %v3115 = vpack.c.b16 %v2359, %v2347
        %v3116 = vpack.c.b16 %v2360, %v2348
        %v3117 = vpack.c.b16 %v2361, %v2349
        %v3118 = vpack.c.b16 %v2362, %v2350
        %v3119 = vpack.c.b16 %v2363, %v2351
        %v3120 = vpack.c.b16 %v2376, %v2364
        %v3121 = vpack.c.b16 %v2377, %v2365
        %v3122 = vpack.c.b16 %v2378, %v2366
        %v3123 = vpack.c.b16 %v2379, %v2367
        %v3124 = vpack.c.b16 %v2380, %v2368
        %v3125 = vpack.c.b16 %v2381, %v2369
        %v3126 = vpack.c.b16 %v2382, %v2370
        %v3127 = vpack.c.b16 %v2383, %v2371
        %v3128 = vpack.c.b16 %v2384, %v2372
        %v3129 = vpack.c.b16 %v2385, %v2373
        %v3130 = vpack.c.b16 %v2386, %v2374
        %v3131 = vpack.c.b16 %v2387, %v2375
        %v3132 = vpack.c.b16 %v2400, %v2388
        %v3133 = vpack.c.b16 %v2401, %v2389
        %v3134 = vpack.c.b16 %v2402, %v2390
        %v3135 = vpack.c.b16 %v2403, %v2391
        %v3136 = vpack.c.b16 %v2404, %v2392
        %v3137 = vpack.c.b16 %v2405, %v2393
        %v3138 = vpack.c.b16 %v2406, %v2394
        %v3139 = vpack.c.b16 %v2407, %v2395
        %v3140 = vpack.c.b16 %v2408, %v2396
        %v3141 = vpack.c.b16 %v2409, %v2397
        %v3142 = vpack.c.b16 %v2410, %v2398
        %v3143 = vpack.c.b16 %v2411, %v2399
        %v3144 = vpack.c.b16 %v2424, %v2412
        %v3145 = vpack.c.b16 %v2425, %v2413
        %v3146 = vpack.c.b16 %v2426, %v2414
        %v3147 = vpack.c.b16 %v2427, %v2415
        %v3148 = vpack.c.b16 %v2428, %v2416
        %v3149 = vpack.c.b16 %v2429, %v2417
        %v3150 = vpack.c.b16 %v2430, %v2418
        %v3151 = vpack.c.b16 %v2431, %v2419
        %v3152 = vpack.c.b16 %v2432, %v2420
        %v3153 = vpack.c.b16 %v2433, %v2421
        %v3154 = vpack.c.b16 %v2434, %v2422
        %v3155 = vpack.c.b16 %v2435, %v2423
        %v3156 = vpack.c.b16 %v2448, %v2436
        %v3157 = vpack.c.b16 %v2449, %v2437
        %v3158 = vpack.c.b16 %v2450, %v2438
        %v3159 = vpack.c.b16 %v2451, %v2439
        %v3160 = vpack.c.b16 %v2452, %v2440
        %v3161 = vpack.c.b16 %v2453, %v2441
        %v3162 = vpack.c.b16 %v2454, %v2442
        %v3163 = vpack.c.b16 %v2455, %v2443
        %v3164 = vpack.c.b16 %v2456, %v2444
        %v3165 = vpack.c.b16 %v2457, %v2445
        %v3166 = vpack.c.b16 %v2458, %v2446
        %v3167 = vpack.c.b16 %v2459, %v2447
        %v3168 = vpack.c.b16 %v2472, %v2460
        %v3169 = vpack.c.b16 %v2473, %v2461
        %v3170 = vpack.c.b16 %v2474, %v2462
        %v3171 = vpack.c.b16 %v2475, %v2463
        %v3172 = vpack.c.b16 %v2476, %v2464
        %v3173 = vpack.c.b16 %v2477, %v2465
        %v3174 = vpack.c.b16 %v2478, %v2466
        %v3175 = vpack.c.b16 %v2479, %v2467
        %v3176 = vpack.c.b16 %v2480, %v2468
        %v3177 = vpack.c.b16 %v2481, %v2469
        %v3178 = vpack.c.b16 %v2482, %v2470
        %v3179 = vpack.c.b16 %v2483, %v2471
        %v3180 = vpack.c.b16 %v2496, %v2484
        %v3181 = vpack.c.b16 %v2497, %v2485
        %v3182 = vpack.c.b16 %v2498, %v2486
        %v3183 = vpack.c.b16 %v2499, %v2487
        %v3184 = vpack.c.b16 %v2500, %v2488
        %v3185 = vpack.c.b16 %v2501, %v2489
        %v3186 = vpack.c.b16 %v2502, %v2490
        %v3187 = vpack.c.b16 %v2503, %v2491
        %v3188 = vpack.c.b16 %v2504, %v2492
        %v3189 = vpack.c.b16 %v2505, %v2493
        %v3190 = vpack.c.b16 %v2506, %v2494
        %v3191 = vpack.c.b16 %v2507, %v2495
        %v3192 = vpack.c.b16 %v2520, %v2508
        %v3193 = vpack.c.b16 %v2521, %v2509
        %v3194 = vpack.c.b16 %v2522, %v2510
        %v3195 = vpack.c.b16 %v2523, %v2511
        %v3196 = vpack.c.b16 %v2524, %v2512
        %v3197 = vpack.c.b16 %v2525, %v2513
        %v3198 = vpack.c.b16 %v2526, %v2514
        %v3199 = vpack.c.b16 %v2527, %v2515
        %v3200 = vpack.c.b16 %v2528, %v2516
        %v3201 = vpack.c.b16 %v2529, %v2517
        %v3202 = vpack.c.b16 %v2530, %v2518
        %v3203 = vpack.c.b16 %v2531, %v2519
        %v3204 = vpack.c.b16 %v2544, %v2532
        %v3205 = vpack.c.b16 %v2545, %v2533
        %v3206 = vpack.c.b16 %v2546, %v2534
        %v3207 = vpack.c.b16 %v2547, %v2535
        %v3208 = vpack.c.b16 %v2548, %v2536
        %v3209 = vpack.c.b16 %v2549, %v2537
        %v3210 = vpack.c.b16 %v2550, %v2538
        %v3211 = vpack.c.b16 %v2551, %v2539
        %v3212 = vpack.c.b16 %v2552, %v2540
        %v3213 = vpack.c.b16 %v2553, %v2541
        %v3214 = vpack.c.b16 %v2554, %v2542
        %v3215 = vpack.c.b16 %v2555, %v2543
        %v3216 = vpack.c.b16 %v2568, %v2556
        %v3217 = vpack.c.b16 %v2569, %v2557
        %v3218 = vpack.c.b16 %v2570, %v2558
        %v3219 = vpack.c.b16 %v2571, %v2559
        %v3220 = vpack.c.b16 %v2572, %v2560
        %v3221 = vpack.c.b16 %v2573, %v2561
        %v3222 = vpack.c.b16 %v2574, %v2562
        %v3223 = vpack.c.b16 %v2575, %v2563
        %v3224 = vpack.c.b16 %v2576, %v2564
        %v3225 = vpack.c.b16 %v2577, %v2565
        %v3226 = vpack.c.b16 %v2578, %v2566
        %v3227 = vpack.c.b16 %v2579, %v2567
        %v3228 = vpack.c.b16 %v2592, %v2580
        %v3229 = vpack.c.b16 %v2593, %v2581
        %v3230 = vpack.c.b16 %v2594, %v2582
        %v3231 = vpack.c.b16 %v2595, %v2583
        %v3232 = vpack.c.b16 %v2596, %v2584
        %v3233 = vpack.c.b16 %v2597, %v2585
        %v3234 = vpack.c.b16 %v2598, %v2586
        %v3235 = vpack.c.b16 %v2599, %v2587
        %v3236 = vpack.c.b16 %v2600, %v2588
        %v3237 = vpack.c.b16 %v2601, %v2589
        %v3238 = vpack.c.b16 %v2602, %v2590
        %v3239 = vpack.c.b16 %v2603, %v2591
        %v3240 = vpack.c.b16 %v2616, %v2604
        %v3241 = vpack.c.b16 %v2617, %v2605
        %v3242 = vpack.c.b16 %v2618, %v2606
        %v3243 = vpack.c.b16 %v2619, %v2607
        %v3244 = vpack.c.b16 %v2620, %v2608
        %v3245 = vpack.c.b16 %v2621, %v2609
        %v3246 = vpack.c.b16 %v2622, %v2610
        %v3247 = vpack.c.b16 %v2623, %v2611
        %v3248 = vpack.c.b16 %v2624, %v2612
        %v3249 = vpack.c.b16 %v2625, %v2613
        %v3250 = vpack.c.b16 %v2626, %v2614
        %v3251 = vpack.c.b16 %v2627, %v2615
        %v3252 = vpack.c.b16 %v2640, %v2628
        %v3253 = vpack.c.b16 %v2641, %v2629
        %v3254 = vpack.c.b16 %v2642, %v2630
        %v3255 = vpack.c.b16 %v2643, %v2631
        %v3256 = vpack.c.b16 %v2644, %v2632
        %v3257 = vpack.c.b16 %v2645, %v2633
        %v3258 = vpack.c.b16 %v2646, %v2634
        %v3259 = vpack.c.b16 %v2647, %v2635
        %v3260 = vpack.c.b16 %v2648, %v2636
        %v3261 = vpack.c.b16 %v2649, %v2637
        %v3262 = vpack.c.b16 %v2650, %v2638
        %v3263 = vpack.c.b16 %v2651, %v2639
        %v3264 = vpack.c.b16 %v2664, %v2652
        %v3265 = vpack.c.b16 %v2665, %v2653
        %v3266 = vpack.c.b16 %v2666, %v2654
        %v3267 = vpack.c.b16 %v2667, %v2655
        %v3268 = vpack.c.b16 %v2668, %v2656
        %v3269 = vpack.c.b16 %v2669, %v2657
        %v3270 = vpack.c.b16 %v2670, %v2658
        %v3271 = vpack.c.b16 %v2671, %v2659
        %v3272 = vpack.c.b16 %v2672, %v2660
        %v3273 = vpack.c.b16 %v2673, %v2661
        %v3274 = vpack.c.b16 %v2674, %v2662
        %v3275 = vpack.c.b16 %v2675, %v2663
        %v3276 = vpack.c.b16 %v2688, %v2676
        %v3277 = vpack.c.b16 %v2689, %v2677
        %v3278 = vpack.c.b16 %v2690, %v2678
        %v3279 = vpack.c.b16 %v2691, %v2679
        %v3280 = vpack.c.b16 %v2692, %v2680
        %v3281 = vpack.c.b16 %v2693, %v2681
        %v3282 = vpack.c.b16 %v2694, %v2682
        %v3283 = vpack.c.b16 %v2695, %v2683
        %v3284 = vpack.c.b16 %v2696, %v2684
        %v3285 = vpack.c.b16 %v2697, %v2685
        %v3286 = vpack.c.b16 %v2698, %v2686
        %v3287 = vpack.c.b16 %v2699, %v2687
        %v3288 = vpack.c.b16 %v2712, %v2700
        %v3289 = vpack.c.b16 %v2713, %v2701
        %v3290 = vpack.c.b16 %v2714, %v2702
        %v3291 = vpack.c.b16 %v2715, %v2703
        %v3292 = vpack.c.b16 %v2716, %v2704
        %v3293 = vpack.c.b16 %v2717, %v2705
        %v3294 = vpack.c.b16 %v2718, %v2706
        %v3295 = vpack.c.b16 %v2719, %v2707
        %v3296 = vpack.c.b16 %v2720, %v2708
        %v3297 = vpack.c.b16 %v2721, %v2709
        %v3298 = vpack.c.b16 %v2722, %v2710
        %v3299 = vpack.c.b16 %v2723, %v2711
        %v3300 = vpack.c.b16 %v2736, %v2724
        %v3301 = vpack.c.b16 %v2737, %v2725
        %v3302 = vpack.c.b16 %v2738, %v2726
        %v3303 = vpack.c.b16 %v2739, %v2727
        %v3304 = vpack.c.b16 %v2740, %v2728
        %v3305 = vpack.c.b16 %v2741, %v2729
        %v3306 = vpack.c.b16 %v2742, %v2730
        %v3307 = vpack.c.b16 %v2743, %v2731
        %v3308 = vpack.c.b16 %v2744, %v2732
        %v3309 = vpack.c.b16 %v2745, %v2733
        %v3310 = vpack.c.b16 %v2746, %v2734
        %v3311 = vpack.c.b16 %v2747, %v2735
        %v3312 = vpack.c.b16 %v2760, %v2748
        %v3313 = vpack.c.b16 %v2761, %v2749
        %v3314 = vpack.c.b16 %v2762, %v2750
        %v3315 = vpack.c.b16 %v2763, %v2751
        %v3316 = vpack.c.b16 %v2764, %v2752
        %v3317 = vpack.c.b16 %v2765, %v2753
        %v3318 = vpack.c.b16 %v2766, %v2754
        %v3319 = vpack.c.b16 %v2767, %v2755
        %v3320 = vpack.c.b16 %v2768, %v2756
        %v3321 = vpack.c.b16 %v2769, %v2757
        %v3322 = vpack.c.b16 %v2770, %v2758
        %v3323 = vpack.c.b16 %v2771, %v2759
        %v3324 = vpack.c.b16 %v2784, %v2772
        %v3325 = vpack.c.b16 %v2785, %v2773
        %v3326 = vpack.c.b16 %v2786, %v2774
        %v3327 = vpack.c.b16 %v2787, %v2775
        %v3328 = vpack.c.b16 %v2788, %v2776
        %v3329 = vpack.c.b16 %v2789, %v2777
        %v3330 = vpack.c.b16 %v2790, %v2778
        %v3331 = vpack.c.b16 %v2791, %v2779
        %v3332 = vpack.c.b16 %v2792, %v2780
        %v3333 = vpack.c.b16 %v2793, %v2781
        %v3334 = vpack.c.b16 %v2794, %v2782
        %v3335 = vpack.c.b16 %v2795, %v2783
        %v3336 = vpack.c.b16 %v2808, %v2796
        %v3337 = vpack.c.b16 %v2809, %v2797
        %v3338 = vpack.c.b16 %v2810, %v2798
        %v3339 = vpack.c.b16 %v2811, %v2799
        %v3340 = vpack.c.b16 %v2812, %v2800
        %v3341 = vpack.c.b16 %v2813, %v2801
        %v3342 = vpack.c.b16 %v2814, %v2802
        %v3343 = vpack.c.b16 %v2815, %v2803
        %v3344 = vpack.c.b16 %v2816, %v2804
        %v3345 = vpack.c.b16 %v2817, %v2805
        %v3346 = vpack.c.b16 %v2818, %v2806
        %v3347 = vpack.c.b16 %v2819, %v2807
        %v3348 = vpack.c.b16 %v2832, %v2820
        %v3349 = vpack.c.b16 %v2833, %v2821
        %v3350 = vpack.c.b16 %v2834, %v2822
        %v3351 = vpack.c.b16 %v2835, %v2823
        %v3352 = vpack.c.b16 %v2836, %v2824
        %v3353 = vpack.c.b16 %v2837, %v2825
        %v3354 = vpack.c.b16 %v2838, %v2826
        %v3355 = vpack.c.b16 %v2839, %v2827
        %v3356 = vpack.c.b16 %v2840, %v2828
        %v3357 = vpack.c.b16 %v2841, %v2829
        %v3358 = vpack.c.b16 %v2842, %v2830
        %v3359 = vpack.c.b16 %v2843, %v2831
        %v3360 = vpack.c.b16 %v2856, %v2844
        %v3361 = vpack.c.b16 %v2857, %v2845
        %v3362 = vpack.c.b16 %v2858, %v2846
        %v3363 = vpack.c.b16 %v2859, %v2847
        %v3364 = vpack.c.b16 %v2860, %v2848
        %v3365 = vpack.c.b16 %v2861, %v2849
        %v3366 = vpack.c.b16 %v2862, %v2850
        %v3367 = vpack.c.b16 %v2863, %v2851
        %v3368 = vpack.c.b16 %v2864, %v2852
        %v3369 = vpack.c.b16 %v2865, %v2853
        %v3370 = vpack.c.b16 %v2866, %v2854
        %v3371 = vpack.c.b16 %v2867, %v2855
        %v3372 = vpack.c.b16 %v2880, %v2868
        %v3373 = vpack.c.b16 %v2881, %v2869
        %v3374 = vpack.c.b16 %v2882, %v2870
        %v3375 = vpack.c.b16 %v2883, %v2871
        %v3376 = vpack.c.b16 %v2884, %v2872
        %v3377 = vpack.c.b16 %v2885, %v2873
        %v3378 = vpack.c.b16 %v2886, %v2874
        %v3379 = vpack.c.b16 %v2887, %v2875
        %v3380 = vpack.c.b16 %v2888, %v2876
        %v3381 = vpack.c.b16 %v2889, %v2877
        %v3382 = vpack.c.b16 %v2890, %v2878
        %v3383 = vpack.c.b16 %v2891, %v2879
        %v3384 = vpack.c.b16 %v2904, %v2892
        %v3385 = vpack.c.b16 %v2905, %v2893
        %v3386 = vpack.c.b16 %v2906, %v2894
        %v3387 = vpack.c.b16 %v2907, %v2895
        %v3388 = vpack.c.b16 %v2908, %v2896
        %v3389 = vpack.c.b16 %v2909, %v2897
        %v3390 = vpack.c.b16 %v2910, %v2898
        %v3391 = vpack.c.b16 %v2911, %v2899
        %v3392 = vpack.c.b16 %v2912, %v2900
        %v3393 = vpack.c.b16 %v2913, %v2901
        %v3394 = vpack.c.b16 %v2914, %v2902
        %v3395 = vpack.c.b16 %v2915, %v2903
        %v3396 = vpack.c.b16 %v2928, %v2916
        %v3397 = vpack.c.b16 %v2929, %v2917
        %v3398 = vpack.c.b16 %v2930, %v2918
        %v3399 = vpack.c.b16 %v2931, %v2919
        %v3400 = vpack.c.b16 %v2932, %v2920
        %v3401 = vpack.c.b16 %v2933, %v2921
        %v3402 = vpack.c.b16 %v2934, %v2922
        %v3403 = vpack.c.b16 %v2935, %v2923
        %v3404 = vpack.c.b16 %v2936, %v2924
        %v3405 = vpack.c.b16 %v2937, %v2925
        %v3406 = vpack.c.b16 %v2938, %v2926
        %v3407 = vpack.c.b16 %v2939, %v2927
        %v3408 = vpack.c.b16 %v2952, %v2940
        %v3409 = vpack.c.b16 %v2953, %v2941
        %v3410 = vpack.c.b16 %v2954, %v2942
        %v3411 = vpack.c.b16 %v2955, %v2943
        %v3412 = vpack.c.b16 %v2956, %v2944
        %v3413 = vpack.c.b16 %v2957, %v2945
        %v3414 = vpack.c.b16 %v2958, %v2946
        %v3415 = vpack.c.b16 %v2959, %v2947
        %v3416 = vpack.c.b16 %v2960, %v2948
        %v3417 = vpack.c.b16 %v2961, %v2949
        %v3418 = vpack.c.b16 %v2962, %v2950
        %v3419 = vpack.c.b16 %v2963, %v2951
        %v3420 = vpack.c.b16 %v2976, %v2964
        %v3421 = vpack.c.b16 %v2977, %v2965
        %v3422 = vpack.c.b16 %v2978, %v2966
        %v3423 = vpack.c.b16 %v2979, %v2967
        %v3424 = vpack.c.b16 %v2980, %v2968
        %v3425 = vpack.c.b16 %v2981, %v2969
        %v3426 = vpack.c.b16 %v2982, %v2970
        %v3427 = vpack.c.b16 %v2983, %v2971
        %v3428 = vpack.c.b16 %v2984, %v2972
        %v3429 = vpack.c.b16 %v2985, %v2973
        %v3430 = vpack.c.b16 %v2986, %v2974
        %v3431 = vpack.c.b16 %v2987, %v2975
        %v3432 = vpack.c.b16 %v3000, %v2988
        %v3433 = vpack.c.b16 %v3001, %v2989
        %v3434 = vpack.c.b16 %v3002, %v2990
        %v3435 = vpack.c.b16 %v3003, %v2991
        %v3436 = vpack.c.b16 %v3004, %v2992
        %v3437 = vpack.c.b16 %v3005, %v2993
        %v3438 = vpack.c.b16 %v3006, %v2994
        %v3439 = vpack.c.b16 %v3007, %v2995
        %v3440 = vpack.c.b16 %v3008, %v2996
        %v3441 = vpack.c.b16 %v3009, %v2997
        %v3442 = vpack.c.b16 %v3010, %v2998
        %v3443 = vpack.c.b16 %v3011, %v2999
        %v3444 = vpack.c.b16 %v3024, %v3012
        %v3445 = vpack.c.b16 %v3025, %v3013
        %v3446 = vpack.c.b16 %v3026, %v3014
        %v3447 = vpack.c.b16 %v3027, %v3015
        %v3448 = vpack.c.b16 %v3028, %v3016
        %v3449 = vpack.c.b16 %v3029, %v3017
        %v3450 = vpack.c.b16 %v3030, %v3018
        %v3451 = vpack.c.b16 %v3031, %v3019
        %v3452 = vpack.c.b16 %v3032, %v3020
        %v3453 = vpack.c.b16 %v3033, %v3021
        %v3454 = vpack.c.b16 %v3034, %v3022
        %v3455 = vpack.c.b16 %v3035, %v3023
        %v3456 = vpack.c.b16 %v3048, %v3036
        %v3457 = vpack.c.b16 %v3049, %v3037
        %v3458 = vpack.c.b16 %v3050, %v3038
        %v3459 = vpack.c.b16 %v3051, %v3039
        %v3460 = vpack.c.b16 %v3052, %v3040
        %v3461 = vpack.c.b16 %v3053, %v3041
        %v3462 = vpack.c.b16 %v3054, %v3042
        %v3463 = vpack.c.b16 %v3055, %v3043
        %v3464 = vpack.c.b16 %v3056, %v3044
        %v3465 = vpack.c.b16 %v3057, %v3045
        %v3466 = vpack.c.b16 %v3058, %v3046
        %v3467 = vpack.c.b16 %v3059, %v3047
        %v3468 = vpack.c.b16 %v3072, %v3060
        %v3469 = vpack.c.b16 %v3073, %v3061
        %v3470 = vpack.c.b16 %v3074, %v3062
        %v3471 = vpack.c.b16 %v3075, %v3063
        %v3472 = vpack.c.b16 %v3076, %v3064
        %v3473 = vpack.c.b16 %v3077, %v3065
        %v3474 = vpack.c.b16 %v3078, %v3066
        %v3475 = vpack.c.b16 %v3079, %v3067
        %v3476 = vpack.c.b16 %v3080, %v3068
        %v3477 = vpack.c.b16 %v3081, %v3069
        %v3478 = vpack.c.b16 %v3082, %v3070
        %v3479 = vpack.c.b16 %v3083, %v3071
        %v3480 = vpack.c.b16 %v3096, %v3084
        %v3481 = vpack.c.b16 %v3097, %v3085
        %v3482 = vpack.c.b16 %v3098, %v3086
        %v3483 = vpack.c.b16 %v3099, %v3087
        %v3484 = vpack.c.b16 %v3100, %v3088
        %v3485 = vpack.c.b16 %v3101, %v3089
        %v3486 = vpack.c.b16 %v3102, %v3090
        %v3487 = vpack.c.b16 %v3103, %v3091
        %v3488 = vpack.c.b16 %v3104, %v3092
        %v3489 = vpack.c.b16 %v3105, %v3093
        %v3490 = vpack.c.b16 %v3106, %v3094
        %v3491 = vpack.c.b16 %v3107, %v3095
        %3876 = vmatpush.bf16.msra.mxu0 %v3192
        %3877 = vmatpush.bf16.msra.mxu0 %v3180
        %3878 = vmatpush.bf16.msra.mxu0 %v3168
        %3879 = vmatpush.bf16.msra.mxu0 %v3156
        %3880 = vmatpush.bf16.msra.mxu0 %v3144
        %3881 = vmatpush.bf16.msra.mxu0 %v3132
        %3882 = vmatpush.bf16.msra.mxu0 %v3120
        %3883 = vmatpush.bf16.msra.mxu0 %v3108
        %3884 = vmatmul.bf16.gmra.mxu0 %v1540
        %v3885 = vpop.f32.mrf.mxu0
        %v3886 = vadd.f32 %v1932, %v3885
        %v3887 = vpop.f32.mrf.mxu0
        %v3888 = vadd.f32 %v1932, %v3887
        %3889 = vdwg.mxu0
        %3890 = vmatpush.bf16.msra.mxu0 %v3288
        %3891 = vmatpush.bf16.msra.mxu0 %v3276
        %3892 = vmatpush.bf16.msra.mxu0 %v3264
        %3893 = vmatpush.bf16.msra.mxu0 %v3252
        %3894 = vmatpush.bf16.msra.mxu0 %v3240
        %3895 = vmatpush.bf16.msra.mxu0 %v3228
        %3896 = vmatpush.bf16.msra.mxu0 %v3216
        %3897 = vmatpush.bf16.msra.mxu0 %v3204
        %3898 = vmatmul.bf16.gmra.mxu0 %v1541
        %v3899 = vpop.f32.mrf.mxu0
        %v3900 = vadd.f32 %v3886, %v3899
        %v3901 = vpop.f32.mrf.mxu0
        %v3902 = vadd.f32 %v3888, %v3901
        %3903 = vdwg.mxu0
        %3904 = vmatpush.bf16.msra.mxu0 %v3384
        %3905 = vmatpush.bf16.msra.mxu0 %v3372
        %3906 = vmatpush.bf16.msra.mxu0 %v3360
        %3907 = vmatpush.bf16.msra.mxu0 %v3348
        %3908 = vmatpush.bf16.msra.mxu0 %v3336
        %3909 = vmatpush.bf16.msra.mxu0 %v3324
        %3910 = vmatpush.bf16.msra.mxu0 %v3312
        %3911 = vmatpush.bf16.msra.mxu0 %v3300
        %3912 = vmatmul.bf16.gmra.mxu0 %v1542
        %v3913 = vpop.f32.mrf.mxu0
        %v3914 = vadd.f32 %v3900, %v3913
        %v3915 = vpop.f32.mrf.mxu0
        %v3916 = vadd.f32 %v3902, %v3915
        %3917 = vdwg.mxu0
        %3918 = vmatpush.bf16.msra.mxu0 %v3480
        %3919 = vmatpush.bf16.msra.mxu0 %v3468
        %3920 = vmatpush.bf16.msra.mxu0 %v3456
        %3921 = vmatpush.bf16.msra.mxu0 %v3444
        %3922 = vmatpush.bf16.msra.mxu0 %v3432
        %3923 = vmatpush.bf16.msra.mxu0 %v3420
        %3924 = vmatpush.bf16.msra.mxu0 %v3408
        %3925 = vmatpush.bf16.msra.mxu0 %v3396
        %3926 = vmatmul.bf16.gmra.mxu0 %v1543
        %v3927 = vpop.f32.mrf.mxu0
        %v3928 = vadd.f32 %v3914, %v3927
        %v3929 = vpop.f32.mrf.mxu0
        %v3930 = vadd.f32 %v3916, %v3929
        %3931 = vdwg.mxu0
        %3932 = vmatpush.bf16.msra.mxu0 %v3193
        %3933 = vmatpush.bf16.msra.mxu0 %v3181
        %3934 = vmatpush.bf16.msra.mxu0 %v3169
        %3935 = vmatpush.bf16.msra.mxu0 %v3157
        %3936 = vmatpush.bf16.msra.mxu0 %v3145
        %3937 = vmatpush.bf16.msra.mxu0 %v3133
        %3938 = vmatpush.bf16.msra.mxu0 %v3121
        %3939 = vmatpush.bf16.msra.mxu0 %v3109
        %3940 = vmatmul.bf16.gmra.mxu0 %v1540
        %v3941 = vpop.f32.mrf.mxu0
        %v3942 = vadd.f32 %v1933, %v3941
        %v3943 = vpop.f32.mrf.mxu0
        %v3944 = vadd.f32 %v1933, %v3943
        %3945 = vdwg.mxu0
        %3946 = vmatpush.bf16.msra.mxu0 %v3289
        %3947 = vmatpush.bf16.msra.mxu0 %v3277
        %3948 = vmatpush.bf16.msra.mxu0 %v3265
        %3949 = vmatpush.bf16.msra.mxu0 %v3253
        %3950 = vmatpush.bf16.msra.mxu0 %v3241
        %3951 = vmatpush.bf16.msra.mxu0 %v3229
        %3952 = vmatpush.bf16.msra.mxu0 %v3217
        %3953 = vmatpush.bf16.msra.mxu0 %v3205
        %3954 = vmatmul.bf16.gmra.mxu0 %v1541
        %v3955 = vpop.f32.mrf.mxu0
        %v3956 = vadd.f32 %v3942, %v3955
        %v3957 = vpop.f32.mrf.mxu0
        %v3958 = vadd.f32 %v3944, %v3957
        %3959 = vdwg.mxu0
        %3960 = vmatpush.bf16.msra.mxu0 %v3385
        %3961 = vmatpush.bf16.msra.mxu0 %v3373
        %3962 = vmatpush.bf16.msra.mxu0 %v3361
        %3963 = vmatpush.bf16.msra.mxu0 %v3349
        %3964 = vmatpush.bf16.msra.mxu0 %v3337
        %3965 = vmatpush.bf16.msra.mxu0 %v3325
        %3966 = vmatpush.bf16.msra.mxu0 %v3313
        %3967 = vmatpush.bf16.msra.mxu0 %v3301
        %3968 = vmatmul.bf16.gmra.mxu0 %v1542
        %v3969 = vpop.f32.mrf.mxu0
        %v3970 = vadd.f32 %v3956, %v3969
        %v3971 = vpop.f32.mrf.mxu0
        %v3972 = vadd.f32 %v3958, %v3971
        %3973 = vdwg.mxu0
        %3974 = vmatpush.bf16.msra.mxu0 %v3481
        %3975 = vmatpush.bf16.msra.mxu0 %v3469
        %3976 = vmatpush.bf16.msra.mxu0 %v3457
        %3977 = vmatpush.bf16.msra.mxu0 %v3445
        %3978 = vmatpush.bf16.msra.mxu0 %v3433
        %3979 = vmatpush.bf16.msra.mxu0 %v3421
        %3980 = vmatpush.bf16.msra.mxu0 %v3409
        %3981 = vmatpush.bf16.msra.mxu0 %v3397
        %3982 = vmatmul.bf16.gmra.mxu0 %v1543
        %v3983 = vpop.f32.mrf.mxu0
        %v3984 = vadd.f32 %v3970, %v3983
        %v3985 = vpop.f32.mrf.mxu0
        %v3986 = vadd.f32 %v3972, %v3985
        %3987 = vdwg.mxu0
        %3988 = vmatpush.bf16.msra.mxu0 %v3194
        %3989 = vmatpush.bf16.msra.mxu0 %v3182
        %3990 = vmatpush.bf16.msra.mxu0 %v3170
        %3991 = vmatpush.bf16.msra.mxu0 %v3158
        %3992 = vmatpush.bf16.msra.mxu0 %v3146
        %3993 = vmatpush.bf16.msra.mxu0 %v3134
        %3994 = vmatpush.bf16.msra.mxu0 %v3122
        %3995 = vmatpush.bf16.msra.mxu0 %v3110
        %3996 = vmatmul.bf16.gmra.mxu0 %v1540
        %v3997 = vpop.f32.mrf.mxu0
        %v3998 = vadd.f32 %v1934, %v3997
        %v3999 = vpop.f32.mrf.mxu0
        %v4000 = vadd.f32 %v1934, %v3999
        %4001 = vdwg.mxu0
        %4002 = vmatpush.bf16.msra.mxu0 %v3290
        %4003 = vmatpush.bf16.msra.mxu0 %v3278
        %4004 = vmatpush.bf16.msra.mxu0 %v3266
        %4005 = vmatpush.bf16.msra.mxu0 %v3254
        %4006 = vmatpush.bf16.msra.mxu0 %v3242
        %4007 = vmatpush.bf16.msra.mxu0 %v3230
        %4008 = vmatpush.bf16.msra.mxu0 %v3218
        %4009 = vmatpush.bf16.msra.mxu0 %v3206
        %4010 = vmatmul.bf16.gmra.mxu0 %v1541
        %v4011 = vpop.f32.mrf.mxu0
        %v4012 = vadd.f32 %v3998, %v4011
        %v4013 = vpop.f32.mrf.mxu0
        %v4014 = vadd.f32 %v4000, %v4013
        %4015 = vdwg.mxu0
        %4016 = vmatpush.bf16.msra.mxu0 %v3386
        %4017 = vmatpush.bf16.msra.mxu0 %v3374
        %4018 = vmatpush.bf16.msra.mxu0 %v3362
        %4019 = vmatpush.bf16.msra.mxu0 %v3350
        %4020 = vmatpush.bf16.msra.mxu0 %v3338
        %4021 = vmatpush.bf16.msra.mxu0 %v3326
        %4022 = vmatpush.bf16.msra.mxu0 %v3314
        %4023 = vmatpush.bf16.msra.mxu0 %v3302
        %4024 = vmatmul.bf16.gmra.mxu0 %v1542
        %v4025 = vpop.f32.mrf.mxu0
        %v4026 = vadd.f32 %v4012, %v4025
        %v4027 = vpop.f32.mrf.mxu0
        %v4028 = vadd.f32 %v4014, %v4027
        %4029 = vdwg.mxu0
        %4030 = vmatpush.bf16.msra.mxu0 %v3482
        %4031 = vmatpush.bf16.msra.mxu0 %v3470
        %4032 = vmatpush.bf16.msra.mxu0 %v3458
        %4033 = vmatpush.bf16.msra.mxu0 %v3446
        %4034 = vmatpush.bf16.msra.mxu0 %v3434
        %4035 = vmatpush.bf16.msra.mxu0 %v3422
        %4036 = vmatpush.bf16.msra.mxu0 %v3410
        %4037 = vmatpush.bf16.msra.mxu0 %v3398
        %4038 = vmatmul.bf16.gmra.mxu0 %v1543
        %v4039 = vpop.f32.mrf.mxu0
        %v4040 = vadd.f32 %v4026, %v4039
        %v4041 = vpop.f32.mrf.mxu0
        %v4042 = vadd.f32 %v4028, %v4041
        %4043 = vdwg.mxu0
        %4044 = vmatpush.bf16.msra.mxu0 %v3195
        %4045 = vmatpush.bf16.msra.mxu0 %v3183
        %4046 = vmatpush.bf16.msra.mxu0 %v3171
        %4047 = vmatpush.bf16.msra.mxu0 %v3159
        %4048 = vmatpush.bf16.msra.mxu0 %v3147
        %4049 = vmatpush.bf16.msra.mxu0 %v3135
        %4050 = vmatpush.bf16.msra.mxu0 %v3123
        %4051 = vmatpush.bf16.msra.mxu0 %v3111
        %4052 = vmatmul.bf16.gmra.mxu0 %v1540
        %v4053 = vpop.f32.mrf.mxu0
        %v4054 = vadd.f32 %v1935, %v4053
        %v4055 = vpop.f32.mrf.mxu0
        %v4056 = vadd.f32 %v1935, %v4055
        %4057 = vdwg.mxu0
        %4058 = vmatpush.bf16.msra.mxu0 %v3291
        %4059 = vmatpush.bf16.msra.mxu0 %v3279
        %4060 = vmatpush.bf16.msra.mxu0 %v3267
        %4061 = vmatpush.bf16.msra.mxu0 %v3255
        %4062 = vmatpush.bf16.msra.mxu0 %v3243
        %4063 = vmatpush.bf16.msra.mxu0 %v3231
        %4064 = vmatpush.bf16.msra.mxu0 %v3219
        %4065 = vmatpush.bf16.msra.mxu0 %v3207
        %4066 = vmatmul.bf16.gmra.mxu0 %v1541
        %v4067 = vpop.f32.mrf.mxu0
        %v4068 = vadd.f32 %v4054, %v4067
        %v4069 = vpop.f32.mrf.mxu0
        %v4070 = vadd.f32 %v4056, %v4069
        %4071 = vdwg.mxu0
        %4072 = vmatpush.bf16.msra.mxu0 %v3387
        %4073 = vmatpush.bf16.msra.mxu0 %v3375
        %4074 = vmatpush.bf16.msra.mxu0 %v3363
        %4075 = vmatpush.bf16.msra.mxu0 %v3351
        %4076 = vmatpush.bf16.msra.mxu0 %v3339
        %4077 = vmatpush.bf16.msra.mxu0 %v3327
        %4078 = vmatpush.bf16.msra.mxu0 %v3315
        %4079 = vmatpush.bf16.msra.mxu0 %v3303
        %4080 = vmatmul.bf16.gmra.mxu0 %v1542
        %v4081 = vpop.f32.mrf.mxu0
        %v4082 = vadd.f32 %v4068, %v4081
        %v4083 = vpop.f32.mrf.mxu0
        %v4084 = vadd.f32 %v4070, %v4083
        %4085 = vdwg.mxu0
        %4086 = vmatpush.bf16.msra.mxu0 %v3483
        %4087 = vmatpush.bf16.msra.mxu0 %v3471
        %4088 = vmatpush.bf16.msra.mxu0 %v3459
        %4089 = vmatpush.bf16.msra.mxu0 %v3447
        %4090 = vmatpush.bf16.msra.mxu0 %v3435
        %4091 = vmatpush.bf16.msra.mxu0 %v3423
        %4092 = vmatpush.bf16.msra.mxu0 %v3411
        %4093 = vmatpush.bf16.msra.mxu0 %v3399
        %4094 = vmatmul.bf16.gmra.mxu0 %v1543
        %v4095 = vpop.f32.mrf.mxu0
        %v4096 = vadd.f32 %v4082, %v4095
        %v4097 = vpop.f32.mrf.mxu0
        %v4098 = vadd.f32 %v4084, %v4097
        %4099 = vdwg.mxu0
        %4100 = vmatpush.bf16.msra.mxu0 %v3196
        %4101 = vmatpush.bf16.msra.mxu0 %v3184
        %4102 = vmatpush.bf16.msra.mxu0 %v3172
        %4103 = vmatpush.bf16.msra.mxu0 %v3160
        %4104 = vmatpush.bf16.msra.mxu0 %v3148
        %4105 = vmatpush.bf16.msra.mxu0 %v3136
        %4106 = vmatpush.bf16.msra.mxu0 %v3124
        %4107 = vmatpush.bf16.msra.mxu0 %v3112
        %4108 = vmatmul.bf16.gmra.mxu0 %v1540
        %v4109 = vpop.f32.mrf.mxu0
        %v4110 = vadd.f32 %v1936, %v4109
        %v4111 = vpop.f32.mrf.mxu0
        %v4112 = vadd.f32 %v1936, %v4111
        %4113 = vdwg.mxu0
        %4114 = vmatpush.bf16.msra.mxu0 %v3292
        %4115 = vmatpush.bf16.msra.mxu0 %v3280
        %4116 = vmatpush.bf16.msra.mxu0 %v3268
        %4117 = vmatpush.bf16.msra.mxu0 %v3256
        %4118 = vmatpush.bf16.msra.mxu0 %v3244
        %4119 = vmatpush.bf16.msra.mxu0 %v3232
        %4120 = vmatpush.bf16.msra.mxu0 %v3220
        %4121 = vmatpush.bf16.msra.mxu0 %v3208
        %4122 = vmatmul.bf16.gmra.mxu0 %v1541
        %v4123 = vpop.f32.mrf.mxu0
        %v4124 = vadd.f32 %v4110, %v4123
        %v4125 = vpop.f32.mrf.mxu0
        %v4126 = vadd.f32 %v4112, %v4125
        %4127 = vdwg.mxu0
        %4128 = vmatpush.bf16.msra.mxu0 %v3388
        %4129 = vmatpush.bf16.msra.mxu0 %v3376
        %4130 = vmatpush.bf16.msra.mxu0 %v3364
        %4131 = vmatpush.bf16.msra.mxu0 %v3352
        %4132 = vmatpush.bf16.msra.mxu0 %v3340
        %4133 = vmatpush.bf16.msra.mxu0 %v3328
        %4134 = vmatpush.bf16.msra.mxu0 %v3316
        %4135 = vmatpush.bf16.msra.mxu0 %v3304
        %4136 = vmatmul.bf16.gmra.mxu0 %v1542
        %v4137 = vpop.f32.mrf.mxu0
        %v4138 = vadd.f32 %v4124, %v4137
        %v4139 = vpop.f32.mrf.mxu0
        %v4140 = vadd.f32 %v4126, %v4139
        %4141 = vdwg.mxu0
        %4142 = vmatpush.bf16.msra.mxu0 %v3484
        %4143 = vmatpush.bf16.msra.mxu0 %v3472
        %4144 = vmatpush.bf16.msra.mxu0 %v3460
        %4145 = vmatpush.bf16.msra.mxu0 %v3448
        %4146 = vmatpush.bf16.msra.mxu0 %v3436
        %4147 = vmatpush.bf16.msra.mxu0 %v3424
        %4148 = vmatpush.bf16.msra.mxu0 %v3412
        %4149 = vmatpush.bf16.msra.mxu0 %v3400
        %4150 = vmatmul.bf16.gmra.mxu0 %v1543
        %v4151 = vpop.f32.mrf.mxu0
        %v4152 = vadd.f32 %v4138, %v4151
        %v4153 = vpop.f32.mrf.mxu0
        %v4154 = vadd.f32 %v4140, %v4153
        %4155 = vdwg.mxu0
        %4156 = vmatpush.bf16.msra.mxu0 %v3197
        %4157 = vmatpush.bf16.msra.mxu0 %v3185
        %4158 = vmatpush.bf16.msra.mxu0 %v3173
        %4159 = vmatpush.bf16.msra.mxu0 %v3161
        %4160 = vmatpush.bf16.msra.mxu0 %v3149
        %4161 = vmatpush.bf16.msra.mxu0 %v3137
        %4162 = vmatpush.bf16.msra.mxu0 %v3125
        %4163 = vmatpush.bf16.msra.mxu0 %v3113
        %4164 = vmatmul.bf16.gmra.mxu0 %v1540
        %v4165 = vpop.f32.mrf.mxu0
        %v4166 = vadd.f32 %v1937, %v4165
        %v4167 = vpop.f32.mrf.mxu0
        %v4168 = vadd.f32 %v1937, %v4167
        %4169 = vdwg.mxu0
        %4170 = vmatpush.bf16.msra.mxu0 %v3293
        %4171 = vmatpush.bf16.msra.mxu0 %v3281
        %4172 = vmatpush.bf16.msra.mxu0 %v3269
        %4173 = vmatpush.bf16.msra.mxu0 %v3257
        %4174 = vmatpush.bf16.msra.mxu0 %v3245
        %4175 = vmatpush.bf16.msra.mxu0 %v3233
        %4176 = vmatpush.bf16.msra.mxu0 %v3221
        %4177 = vmatpush.bf16.msra.mxu0 %v3209
        %4178 = vmatmul.bf16.gmra.mxu0 %v1541
        %v4179 = vpop.f32.mrf.mxu0
        %v4180 = vadd.f32 %v4166, %v4179
        %v4181 = vpop.f32.mrf.mxu0
        %v4182 = vadd.f32 %v4168, %v4181
        %4183 = vdwg.mxu0
        %4184 = vmatpush.bf16.msra.mxu0 %v3389
        %4185 = vmatpush.bf16.msra.mxu0 %v3377
        %4186 = vmatpush.bf16.msra.mxu0 %v3365
        %4187 = vmatpush.bf16.msra.mxu0 %v3353
        %4188 = vmatpush.bf16.msra.mxu0 %v3341
        %4189 = vmatpush.bf16.msra.mxu0 %v3329
        %4190 = vmatpush.bf16.msra.mxu0 %v3317
        %4191 = vmatpush.bf16.msra.mxu0 %v3305
        %4192 = vmatmul.bf16.gmra.mxu0 %v1542
        %v4193 = vpop.f32.mrf.mxu0
        %v4194 = vadd.f32 %v4180, %v4193
        %v4195 = vpop.f32.mrf.mxu0
        %v4196 = vadd.f32 %v4182, %v4195
        %4197 = vdwg.mxu0
        %4198 = vmatpush.bf16.msra.mxu0 %v3485
        %4199 = vmatpush.bf16.msra.mxu0 %v3473
        %4200 = vmatpush.bf16.msra.mxu0 %v3461
        %4201 = vmatpush.bf16.msra.mxu0 %v3449
        %4202 = vmatpush.bf16.msra.mxu0 %v3437
        %4203 = vmatpush.bf16.msra.mxu0 %v3425
        %4204 = vmatpush.bf16.msra.mxu0 %v3413
        %4205 = vmatpush.bf16.msra.mxu0 %v3401
        %4206 = vmatmul.bf16.gmra.mxu0 %v1543
        %v4207 = vpop.f32.mrf.mxu0
        %v4208 = vadd.f32 %v4194, %v4207
        %v4209 = vpop.f32.mrf.mxu0
        %v4210 = vadd.f32 %v4196, %v4209
        %4211 = vdwg.mxu0
        %4212 = vmatpush.bf16.msra.mxu0 %v3198
        %4213 = vmatpush.bf16.msra.mxu0 %v3186
        %4214 = vmatpush.bf16.msra.mxu0 %v3174
        %4215 = vmatpush.bf16.msra.mxu0 %v3162
        %4216 = vmatpush.bf16.msra.mxu0 %v3150
        %4217 = vmatpush.bf16.msra.mxu0 %v3138
        %4218 = vmatpush.bf16.msra.mxu0 %v3126
        %4219 = vmatpush.bf16.msra.mxu0 %v3114
        %4220 = vmatmul.bf16.gmra.mxu0 %v1540
        %v4221 = vpop.f32.mrf.mxu0
        %v4222 = vadd.f32 %v1938, %v4221
        %v4223 = vpop.f32.mrf.mxu0
        %v4224 = vadd.f32 %v1938, %v4223
        %4225 = vdwg.mxu0
        %4226 = vmatpush.bf16.msra.mxu0 %v3294
        %4227 = vmatpush.bf16.msra.mxu0 %v3282
        %4228 = vmatpush.bf16.msra.mxu0 %v3270
        %4229 = vmatpush.bf16.msra.mxu0 %v3258
        %4230 = vmatpush.bf16.msra.mxu0 %v3246
        %4231 = vmatpush.bf16.msra.mxu0 %v3234
        %4232 = vmatpush.bf16.msra.mxu0 %v3222
        %4233 = vmatpush.bf16.msra.mxu0 %v3210
        %4234 = vmatmul.bf16.gmra.mxu0 %v1541
        %v4235 = vpop.f32.mrf.mxu0
        %v4236 = vadd.f32 %v4222, %v4235
        %v4237 = vpop.f32.mrf.mxu0
        %v4238 = vadd.f32 %v4224, %v4237
        %4239 = vdwg.mxu0
        %4240 = vmatpush.bf16.msra.mxu0 %v3390
        %4241 = vmatpush.bf16.msra.mxu0 %v3378
        %4242 = vmatpush.bf16.msra.mxu0 %v3366
        %4243 = vmatpush.bf16.msra.mxu0 %v3354
        %4244 = vmatpush.bf16.msra.mxu0 %v3342
        %4245 = vmatpush.bf16.msra.mxu0 %v3330
        %4246 = vmatpush.bf16.msra.mxu0 %v3318
        %4247 = vmatpush.bf16.msra.mxu0 %v3306
        %4248 = vmatmul.bf16.gmra.mxu0 %v1542
        %v4249 = vpop.f32.mrf.mxu0
        %v4250 = vadd.f32 %v4236, %v4249
        %v4251 = vpop.f32.mrf.mxu0
        %v4252 = vadd.f32 %v4238, %v4251
        %4253 = vdwg.mxu0
        %4254 = vmatpush.bf16.msra.mxu0 %v3486
        %4255 = vmatpush.bf16.msra.mxu0 %v3474
        %4256 = vmatpush.bf16.msra.mxu0 %v3462
        %4257 = vmatpush.bf16.msra.mxu0 %v3450
        %4258 = vmatpush.bf16.msra.mxu0 %v3438
        %4259 = vmatpush.bf16.msra.mxu0 %v3426
        %4260 = vmatpush.bf16.msra.mxu0 %v3414
        %4261 = vmatpush.bf16.msra.mxu0 %v3402
        %4262 = vmatmul.bf16.gmra.mxu0 %v1543
        %v4263 = vpop.f32.mrf.mxu0
        %v4264 = vadd.f32 %v4250, %v4263
        %v4265 = vpop.f32.mrf.mxu0
        %v4266 = vadd.f32 %v4252, %v4265
        %4267 = vdwg.mxu0
        %4268 = vmatpush.bf16.msra.mxu0 %v3199
        %4269 = vmatpush.bf16.msra.mxu0 %v3187
        %4270 = vmatpush.bf16.msra.mxu0 %v3175
        %4271 = vmatpush.bf16.msra.mxu0 %v3163
        %4272 = vmatpush.bf16.msra.mxu0 %v3151
        %4273 = vmatpush.bf16.msra.mxu0 %v3139
        %4274 = vmatpush.bf16.msra.mxu0 %v3127
        %4275 = vmatpush.bf16.msra.mxu0 %v3115
        %4276 = vmatmul.bf16.gmra.mxu0 %v1540
        %v4277 = vpop.f32.mrf.mxu0
        %v4278 = vadd.f32 %v1939, %v4277
        %v4279 = vpop.f32.mrf.mxu0
        %v4280 = vadd.f32 %v1939, %v4279
        %4281 = vdwg.mxu0
        %4282 = vmatpush.bf16.msra.mxu0 %v3295
        %4283 = vmatpush.bf16.msra.mxu0 %v3283
        %4284 = vmatpush.bf16.msra.mxu0 %v3271
        %4285 = vmatpush.bf16.msra.mxu0 %v3259
        %4286 = vmatpush.bf16.msra.mxu0 %v3247
        %4287 = vmatpush.bf16.msra.mxu0 %v3235
        %4288 = vmatpush.bf16.msra.mxu0 %v3223
        %4289 = vmatpush.bf16.msra.mxu0 %v3211
        %4290 = vmatmul.bf16.gmra.mxu0 %v1541
        %v4291 = vpop.f32.mrf.mxu0
        %v4292 = vadd.f32 %v4278, %v4291
        %v4293 = vpop.f32.mrf.mxu0
        %v4294 = vadd.f32 %v4280, %v4293
        %4295 = vdwg.mxu0
        %4296 = vmatpush.bf16.msra.mxu0 %v3391
        %4297 = vmatpush.bf16.msra.mxu0 %v3379
        %4298 = vmatpush.bf16.msra.mxu0 %v3367
        %4299 = vmatpush.bf16.msra.mxu0 %v3355
        %4300 = vmatpush.bf16.msra.mxu0 %v3343
        %4301 = vmatpush.bf16.msra.mxu0 %v3331
        %4302 = vmatpush.bf16.msra.mxu0 %v3319
        %4303 = vmatpush.bf16.msra.mxu0 %v3307
        %4304 = vmatmul.bf16.gmra.mxu0 %v1542
        %v4305 = vpop.f32.mrf.mxu0
        %v4306 = vadd.f32 %v4292, %v4305
        %v4307 = vpop.f32.mrf.mxu0
        %v4308 = vadd.f32 %v4294, %v4307
        %4309 = vdwg.mxu0
        %4310 = vmatpush.bf16.msra.mxu0 %v3487
        %4311 = vmatpush.bf16.msra.mxu0 %v3475
        %4312 = vmatpush.bf16.msra.mxu0 %v3463
        %4313 = vmatpush.bf16.msra.mxu0 %v3451
        %4314 = vmatpush.bf16.msra.mxu0 %v3439
        %4315 = vmatpush.bf16.msra.mxu0 %v3427
        %4316 = vmatpush.bf16.msra.mxu0 %v3415
        %4317 = vmatpush.bf16.msra.mxu0 %v3403
        %4318 = vmatmul.bf16.gmra.mxu0 %v1543
        %v4319 = vpop.f32.mrf.mxu0
        %v4320 = vadd.f32 %v4306, %v4319
        %v4321 = vpop.f32.mrf.mxu0
        %v4322 = vadd.f32 %v4308, %v4321
        %4323 = vdwg.mxu0
        %4324 = vmatpush.bf16.msra.mxu0 %v3200
        %4325 = vmatpush.bf16.msra.mxu0 %v3188
        %4326 = vmatpush.bf16.msra.mxu0 %v3176
        %4327 = vmatpush.bf16.msra.mxu0 %v3164
        %4328 = vmatpush.bf16.msra.mxu0 %v3152
        %4329 = vmatpush.bf16.msra.mxu0 %v3140
        %4330 = vmatpush.bf16.msra.mxu0 %v3128
        %4331 = vmatpush.bf16.msra.mxu0 %v3116
        %4332 = vmatmul.bf16.gmra.mxu0 %v1540
        %v4333 = vpop.f32.mrf.mxu0
        %v4334 = vadd.f32 %v1940, %v4333
        %v4335 = vpop.f32.mrf.mxu0
        %v4336 = vadd.f32 %v1940, %v4335
        %4337 = vdwg.mxu0
        %4338 = vmatpush.bf16.msra.mxu0 %v3296
        %4339 = vmatpush.bf16.msra.mxu0 %v3284
        %4340 = vmatpush.bf16.msra.mxu0 %v3272
        %4341 = vmatpush.bf16.msra.mxu0 %v3260
        %4342 = vmatpush.bf16.msra.mxu0 %v3248
        %4343 = vmatpush.bf16.msra.mxu0 %v3236
        %4344 = vmatpush.bf16.msra.mxu0 %v3224
        %4345 = vmatpush.bf16.msra.mxu0 %v3212
        %4346 = vmatmul.bf16.gmra.mxu0 %v1541
        %v4347 = vpop.f32.mrf.mxu0
        %v4348 = vadd.f32 %v4334, %v4347
        %v4349 = vpop.f32.mrf.mxu0
        %v4350 = vadd.f32 %v4336, %v4349
        %4351 = vdwg.mxu0
        %4352 = vmatpush.bf16.msra.mxu0 %v3392
        %4353 = vmatpush.bf16.msra.mxu0 %v3380
        %4354 = vmatpush.bf16.msra.mxu0 %v3368
        %4355 = vmatpush.bf16.msra.mxu0 %v3356
        %4356 = vmatpush.bf16.msra.mxu0 %v3344
        %4357 = vmatpush.bf16.msra.mxu0 %v3332
        %4358 = vmatpush.bf16.msra.mxu0 %v3320
        %4359 = vmatpush.bf16.msra.mxu0 %v3308
        %4360 = vmatmul.bf16.gmra.mxu0 %v1542
        %v4361 = vpop.f32.mrf.mxu0
        %v4362 = vadd.f32 %v4348, %v4361
        %v4363 = vpop.f32.mrf.mxu0
        %v4364 = vadd.f32 %v4350, %v4363
        %4365 = vdwg.mxu0
        %4366 = vmatpush.bf16.msra.mxu0 %v3488
        %4367 = vmatpush.bf16.msra.mxu0 %v3476
        %4368 = vmatpush.bf16.msra.mxu0 %v3464
        %4369 = vmatpush.bf16.msra.mxu0 %v3452
        %4370 = vmatpush.bf16.msra.mxu0 %v3440
        %4371 = vmatpush.bf16.msra.mxu0 %v3428
        %4372 = vmatpush.bf16.msra.mxu0 %v3416
        %4373 = vmatpush.bf16.msra.mxu0 %v3404
        %4374 = vmatmul.bf16.gmra.mxu0 %v1543
        %v4375 = vpop.f32.mrf.mxu0
        %v4376 = vadd.f32 %v4362, %v4375
        %v4377 = vpop.f32.mrf.mxu0
        %v4378 = vadd.f32 %v4364, %v4377
        %4379 = vdwg.mxu0
        %4380 = vmatpush.bf16.msra.mxu0 %v3201
        %4381 = vmatpush.bf16.msra.mxu0 %v3189
        %4382 = vmatpush.bf16.msra.mxu0 %v3177
        %4383 = vmatpush.bf16.msra.mxu0 %v3165
        %4384 = vmatpush.bf16.msra.mxu0 %v3153
        %4385 = vmatpush.bf16.msra.mxu0 %v3141
        %4386 = vmatpush.bf16.msra.mxu0 %v3129
        %4387 = vmatpush.bf16.msra.mxu0 %v3117
        %4388 = vmatmul.bf16.gmra.mxu0 %v1540
        %v4389 = vpop.f32.mrf.mxu0
        %v4390 = vadd.f32 %v1941, %v4389
        %v4391 = vpop.f32.mrf.mxu0
        %v4392 = vadd.f32 %v1941, %v4391
        %4393 = vdwg.mxu0
        %4394 = vmatpush.bf16.msra.mxu0 %v3297
        %4395 = vmatpush.bf16.msra.mxu0 %v3285
        %4396 = vmatpush.bf16.msra.mxu0 %v3273
        %4397 = vmatpush.bf16.msra.mxu0 %v3261
        %4398 = vmatpush.bf16.msra.mxu0 %v3249
        %4399 = vmatpush.bf16.msra.mxu0 %v3237
        %4400 = vmatpush.bf16.msra.mxu0 %v3225
        %4401 = vmatpush.bf16.msra.mxu0 %v3213
        %4402 = vmatmul.bf16.gmra.mxu0 %v1541
        %v4403 = vpop.f32.mrf.mxu0
        %v4404 = vadd.f32 %v4390, %v4403
        %v4405 = vpop.f32.mrf.mxu0
        %v4406 = vadd.f32 %v4392, %v4405
        %4407 = vdwg.mxu0
        %4408 = vmatpush.bf16.msra.mxu0 %v3393
        %4409 = vmatpush.bf16.msra.mxu0 %v3381
        %4410 = vmatpush.bf16.msra.mxu0 %v3369
        %4411 = vmatpush.bf16.msra.mxu0 %v3357
        %4412 = vmatpush.bf16.msra.mxu0 %v3345
        %4413 = vmatpush.bf16.msra.mxu0 %v3333
        %4414 = vmatpush.bf16.msra.mxu0 %v3321
        %4415 = vmatpush.bf16.msra.mxu0 %v3309
        %4416 = vmatmul.bf16.gmra.mxu0 %v1542
        %v4417 = vpop.f32.mrf.mxu0
        %v4418 = vadd.f32 %v4404, %v4417
        %v4419 = vpop.f32.mrf.mxu0
        %v4420 = vadd.f32 %v4406, %v4419
        %4421 = vdwg.mxu0
        %4422 = vmatpush.bf16.msra.mxu0 %v3489
        %4423 = vmatpush.bf16.msra.mxu0 %v3477
        %4424 = vmatpush.bf16.msra.mxu0 %v3465
        %4425 = vmatpush.bf16.msra.mxu0 %v3453
        %4426 = vmatpush.bf16.msra.mxu0 %v3441
        %4427 = vmatpush.bf16.msra.mxu0 %v3429
        %4428 = vmatpush.bf16.msra.mxu0 %v3417
        %4429 = vmatpush.bf16.msra.mxu0 %v3405
        %4430 = vmatmul.bf16.gmra.mxu0 %v1543
        %v4431 = vpop.f32.mrf.mxu0
        %v4432 = vadd.f32 %v4418, %v4431
        %v4433 = vpop.f32.mrf.mxu0
        %v4434 = vadd.f32 %v4420, %v4433
        %4435 = vdwg.mxu0
        %4436 = vmatpush.bf16.msra.mxu0 %v3202
        %4437 = vmatpush.bf16.msra.mxu0 %v3190
        %4438 = vmatpush.bf16.msra.mxu0 %v3178
        %4439 = vmatpush.bf16.msra.mxu0 %v3166
        %4440 = vmatpush.bf16.msra.mxu0 %v3154
        %4441 = vmatpush.bf16.msra.mxu0 %v3142
        %4442 = vmatpush.bf16.msra.mxu0 %v3130
        %4443 = vmatpush.bf16.msra.mxu0 %v3118
        %4444 = vmatmul.bf16.gmra.mxu0 %v1540
        %v4445 = vpop.f32.mrf.mxu0
        %v4446 = vadd.f32 %v1942, %v4445
        %v4447 = vpop.f32.mrf.mxu0
        %v4448 = vadd.f32 %v1942, %v4447
        %4449 = vdwg.mxu0
        %4450 = vmatpush.bf16.msra.mxu0 %v3298
        %4451 = vmatpush.bf16.msra.mxu0 %v3286
        %4452 = vmatpush.bf16.msra.mxu0 %v3274
        %4453 = vmatpush.bf16.msra.mxu0 %v3262
        %4454 = vmatpush.bf16.msra.mxu0 %v3250
        %4455 = vmatpush.bf16.msra.mxu0 %v3238
        %4456 = vmatpush.bf16.msra.mxu0 %v3226
        %4457 = vmatpush.bf16.msra.mxu0 %v3214
        %4458 = vmatmul.bf16.gmra.mxu0 %v1541
        %v4459 = vpop.f32.mrf.mxu0
        %v4460 = vadd.f32 %v4446, %v4459
        %v4461 = vpop.f32.mrf.mxu0
        %v4462 = vadd.f32 %v4448, %v4461
        %4463 = vdwg.mxu0
        %4464 = vmatpush.bf16.msra.mxu0 %v3394
        %4465 = vmatpush.bf16.msra.mxu0 %v3382
        %4466 = vmatpush.bf16.msra.mxu0 %v3370
        %4467 = vmatpush.bf16.msra.mxu0 %v3358
        %4468 = vmatpush.bf16.msra.mxu0 %v3346
        %4469 = vmatpush.bf16.msra.mxu0 %v3334
        %4470 = vmatpush.bf16.msra.mxu0 %v3322
        %4471 = vmatpush.bf16.msra.mxu0 %v3310
        %4472 = vmatmul.bf16.gmra.mxu0 %v1542
        %v4473 = vpop.f32.mrf.mxu0
        %v4474 = vadd.f32 %v4460, %v4473
        %v4475 = vpop.f32.mrf.mxu0
        %v4476 = vadd.f32 %v4462, %v4475
        %4477 = vdwg.mxu0
        %4478 = vmatpush.bf16.msra.mxu0 %v3490
        %4479 = vmatpush.bf16.msra.mxu0 %v3478
        %4480 = vmatpush.bf16.msra.mxu0 %v3466
        %4481 = vmatpush.bf16.msra.mxu0 %v3454
        %4482 = vmatpush.bf16.msra.mxu0 %v3442
        %4483 = vmatpush.bf16.msra.mxu0 %v3430
        %4484 = vmatpush.bf16.msra.mxu0 %v3418
        %4485 = vmatpush.bf16.msra.mxu0 %v3406
        %4486 = vmatmul.bf16.gmra.mxu0 %v1543
        %v4487 = vpop.f32.mrf.mxu0
        %v4488 = vadd.f32 %v4474, %v4487
        %v4489 = vpop.f32.mrf.mxu0
        %v4490 = vadd.f32 %v4476, %v4489
        %4491 = vdwg.mxu0
        %4492 = vmatpush.bf16.msra.mxu0 %v3203
        %4493 = vmatpush.bf16.msra.mxu0 %v3191
        %4494 = vmatpush.bf16.msra.mxu0 %v3179
        %4495 = vmatpush.bf16.msra.mxu0 %v3167
        %4496 = vmatpush.bf16.msra.mxu0 %v3155
        %4497 = vmatpush.bf16.msra.mxu0 %v3143
        %4498 = vmatpush.bf16.msra.mxu0 %v3131
        %4499 = vmatpush.bf16.msra.mxu0 %v3119
        %4500 = vmatmul.bf16.gmra.mxu0 %v1540
        %v4501 = vpop.f32.mrf.mxu0
        %v4502 = vadd.f32 %v1943, %v4501
        %v4503 = vpop.f32.mrf.mxu0
        %v4504 = vadd.f32 %v1943, %v4503
        %4505 = vdwg.mxu0
        %4506 = vmatpush.bf16.msra.mxu0 %v3299
        %4507 = vmatpush.bf16.msra.mxu0 %v3287
        %4508 = vmatpush.bf16.msra.mxu0 %v3275
        %4509 = vmatpush.bf16.msra.mxu0 %v3263
        %4510 = vmatpush.bf16.msra.mxu0 %v3251
        %4511 = vmatpush.bf16.msra.mxu0 %v3239
        %4512 = vmatpush.bf16.msra.mxu0 %v3227
        %4513 = vmatpush.bf16.msra.mxu0 %v3215
        %4514 = vmatmul.bf16.gmra.mxu0 %v1541
        %v4515 = vpop.f32.mrf.mxu0
        %v4516 = vadd.f32 %v4502, %v4515
        %v4517 = vpop.f32.mrf.mxu0
        %v4518 = vadd.f32 %v4504, %v4517
        %4519 = vdwg.mxu0
        %4520 = vmatpush.bf16.msra.mxu0 %v3395
        %4521 = vmatpush.bf16.msra.mxu0 %v3383
        %4522 = vmatpush.bf16.msra.mxu0 %v3371
        %4523 = vmatpush.bf16.msra.mxu0 %v3359
        %4524 = vmatpush.bf16.msra.mxu0 %v3347
        %4525 = vmatpush.bf16.msra.mxu0 %v3335
        %4526 = vmatpush.bf16.msra.mxu0 %v3323
        %4527 = vmatpush.bf16.msra.mxu0 %v3311
        %4528 = vmatmul.bf16.gmra.mxu0 %v1542
        %v4529 = vpop.f32.mrf.mxu0
        %v4530 = vadd.f32 %v4516, %v4529
        %v4531 = vpop.f32.mrf.mxu0
        %v4532 = vadd.f32 %v4518, %v4531
        %4533 = vdwg.mxu0
        %4534 = vmatpush.bf16.msra.mxu0 %v3491
        %4535 = vmatpush.bf16.msra.mxu0 %v3479
        %4536 = vmatpush.bf16.msra.mxu0 %v3467
        %4537 = vmatpush.bf16.msra.mxu0 %v3455
        %4538 = vmatpush.bf16.msra.mxu0 %v3443
        %4539 = vmatpush.bf16.msra.mxu0 %v3431
        %4540 = vmatpush.bf16.msra.mxu0 %v3419
        %4541 = vmatpush.bf16.msra.mxu0 %v3407
        %4542 = vmatmul.bf16.gmra.mxu0 %v1543
        %v4543 = vpop.f32.mrf.mxu0
        %v4544 = vadd.f32 %v4530, %v4543
        %v4545 = vpop.f32.mrf.mxu0
        %v4546 = vadd.f32 %v4532, %v4545
        %4547 = vdwg.mxu0
        %v4548 = vmul.f32 %v3928, 0.088388346
        %v4549 = vmul.f32 %v3984, 0.088388346
        %v4550 = vmul.f32 %v4040, 0.088388346
        %v4551 = vmul.f32 %v4096, 0.088388346
        %v4552 = vmul.f32 %v3930, 0.088388346
        %v4553 = vmul.f32 %v3986, 0.088388346
        %v4554 = vmul.f32 %v4042, 0.088388346
        %v4555 = vmul.f32 %v4098, 0.088388346
        %v4556 = vpack.c.bf16 %v4548, %v4548
        %v4557 = vpack.c.bf16 %v4552, %v4552
        %v4558 = vpack.c.bf16 %v4152, %v4152
        %v4559 = vpack.c.bf16 %v4154, %v4154
        %v4560 = vpack.c.bf16 %v4376, %v4376
        %v4561 = vpack.c.bf16 %v4378, %v4378
        %4562 = vmatpush.bf16.xpose.msra.mxu0 0
        %4563 = vmatpush.bf16.xpose.msra.mxu0 0
        %4564 = vmatpush.bf16.xpose.msra.mxu0 0
        %4565 = vmatpush.bf16.xpose.msra.mxu0 0
        %4566 = vmatpush.bf16.xpose.msra.mxu0 0
        %4567 = vmatpush.bf16.xpose.msra.mxu0 0
        %4568 = vmatpush.bf16.xpose.msra.mxu0 0
        %4569 = vmatpush.bf16.xpose.msra.mxu0 %v4558
        %4570 = vmatmul.bf16.gmra.mxu0 %v4556
        %v4571 = vpop.f32.mrf.mxu0
        %v4572 = vadd.f32 0.0, %v4571
        %v4573 = vpop.f32.mrf.mxu0
        %4574 = vdwg.mxu0
        %4575 = vmatpush.bf16.xpose.msra.mxu0 0
        %4576 = vmatpush.bf16.xpose.msra.mxu0 0
        %4577 = vmatpush.bf16.xpose.msra.mxu0 0
        %4578 = vmatpush.bf16.xpose.msra.mxu0 0
        %4579 = vmatpush.bf16.xpose.msra.mxu0 0
        %4580 = vmatpush.bf16.xpose.msra.mxu0 0
        %4581 = vmatpush.bf16.xpose.msra.mxu0 0
        %4582 = vmatpush.bf16.xpose.msra.mxu0 %v4559
        %4583 = vmatmul.bf16.gmra.mxu0 %v4557
        %v4584 = vpop.f32.mrf.mxu0
        %v4585 = vadd.f32 0.0, %v4584
        %v4586 = vpop.f32.mrf.mxu0
        %4587 = vdwg.mxu0
        %vm4588 = vcmask 64512
        %v4589 = vsel %vm4588, %v4572, -inf
        %4590 = vmax.xlane.f32.xlu0 %v4589
        %v4591 = vpop.xlane.xlu0 %4590
        %v4592 = vsel %vm4588, %v4585, -inf
        %4593 = vmax.xlane.f32.xlu0 %v4592
        %v4594 = vpop.xlane.xlu0 %4593
        %v4595 = vsub.f32 %v4572, %v4591
        %v4596 = vsub.f32 %v4585, %v4594
        %v4597 = vmul.f32 %v4595, 1.442695
        %v4598 = vpow.pop %v4597
        %v4599 = vmul.f32 %v4596, 1.442695
        %v4600 = vpow.pop %v4599
        %v4601 = vsel %vm4588, %v4598, 0.0
        %4602 = vadd.xlane.f32.xlu0 %v4601
        %v4603 = vpop.xlane.xlu0 %4602
        %v4604 = vsel %vm4588, %v4600, 0.0
        %4605 = vadd.xlane.f32.xlu0 %v4604
        %v4606 = vpop.xlane.xlu0 %4605
        %v4607 = vrcp.pop %v4603
        %v4608 = vrcp.pop %v4606
        %v4609 = vmul.f32 %v4598, %v4607
        %v4610 = vmul.f32 %v4600, %v4608
        %v4611 = vpack.c.bf16 %v4609, %v4609
        %v4612 = vpack.c.bf16 %v4610, %v4610
        %v4614 = vsel %vm4588, %v4611, 0
        %v4617 = vsel %vm1034, %v4560, 0
        %4619 = vmatpush.bf16.msra.mxu0 0
        %4620 = vmatpush.bf16.msra.mxu0 0
        %4621 = vmatpush.bf16.msra.mxu0 0
        %4622 = vmatpush.bf16.msra.mxu0 0
        %4623 = vmatpush.bf16.msra.mxu0 0
        %4624 = vmatpush.bf16.msra.mxu0 0
        %4625 = vmatpush.bf16.msra.mxu0 0
        %4626 = vmatpush.bf16.msra.mxu0 %v4617
        %4627 = vmatmul.bf16.gmra.mxu0 %v4614
        %v4628 = vpop.f32.mrf.mxu0
        %v4629 = vadd.f32 0.0, %v4628
        %v4630 = vpop.f32.mrf.mxu0
        %4631 = vdwg.mxu0
        %v4633 = vsel %vm4588, %v4612, 0
        %v4636 = vsel %vm1034, %v4561, 0
        %4638 = vmatpush.bf16.msra.mxu0 0
        %4639 = vmatpush.bf16.msra.mxu0 0
        %4640 = vmatpush.bf16.msra.mxu0 0
        %4641 = vmatpush.bf16.msra.mxu0 0
        %4642 = vmatpush.bf16.msra.mxu0 0
        %4643 = vmatpush.bf16.msra.mxu0 0
        %4644 = vmatpush.bf16.msra.mxu0 0
        %4645 = vmatpush.bf16.msra.mxu0 %v4636
        %4646 = vmatmul.bf16.gmra.mxu0 %v4633
        %v4647 = vpop.f32.mrf.mxu0
        %v4648 = vadd.f32 0.0, %v4647
        %v4649 = vpop.f32.mrf.mxu0
        %4650 = vdwg.mxu0
        %4651 = vst [vmem:[#allocation2] sm:$0xff] %v4629
        %4652 = vst [vmem:[#allocation2 + $0x20] sm:$0xff] %v4648
        %v4653 = vpack.c.bf16 %v4549, %v4549
        %v4654 = vpack.c.bf16 %v4553, %v4553
        %v4655 = vpack.c.bf16 %v4208, %v4208
        %v4656 = vpack.c.bf16 %v4210, %v4210
        %v4657 = vpack.c.bf16 %v4432, %v4432
        %v4658 = vpack.c.bf16 %v4434, %v4434
        %4659 = vmatpush.bf16.xpose.msra.mxu0 0
        %4660 = vmatpush.bf16.xpose.msra.mxu0 0
        %4661 = vmatpush.bf16.xpose.msra.mxu0 0
        %4662 = vmatpush.bf16.xpose.msra.mxu0 0
        %4663 = vmatpush.bf16.xpose.msra.mxu0 0
        %4664 = vmatpush.bf16.xpose.msra.mxu0 0
        %4665 = vmatpush.bf16.xpose.msra.mxu0 0
        %4666 = vmatpush.bf16.xpose.msra.mxu0 %v4655
        %4667 = vmatmul.bf16.gmra.mxu0 %v4653
        %v4668 = vpop.f32.mrf.mxu0
        %v4669 = vadd.f32 0.0, %v4668
        %v4670 = vpop.f32.mrf.mxu0
        %4671 = vdwg.mxu0
        %4672 = vmatpush.bf16.xpose.msra.mxu0 0
        %4673 = vmatpush.bf16.xpose.msra.mxu0 0
        %4674 = vmatpush.bf16.xpose.msra.mxu0 0
        %4675 = vmatpush.bf16.xpose.msra.mxu0 0
        %4676 = vmatpush.bf16.xpose.msra.mxu0 0
        %4677 = vmatpush.bf16.xpose.msra.mxu0 0
        %4678 = vmatpush.bf16.xpose.msra.mxu0 0
        %4679 = vmatpush.bf16.xpose.msra.mxu0 %v4656
        %4680 = vmatmul.bf16.gmra.mxu0 %v4654
        %v4681 = vpop.f32.mrf.mxu0
        %v4682 = vadd.f32 0.0, %v4681
        %v4683 = vpop.f32.mrf.mxu0
        %4684 = vdwg.mxu0
        %v4685 = vsel %vm4588, %v4669, -inf
        %4686 = vmax.xlane.f32.xlu0 %v4685
        %v4687 = vpop.xlane.xlu0 %4686
        %v4688 = vsel %vm4588, %v4682, -inf
        %4689 = vmax.xlane.f32.xlu0 %v4688
        %v4690 = vpop.xlane.xlu0 %4689
        %v4691 = vsub.f32 %v4669, %v4687
        %v4692 = vsub.f32 %v4682, %v4690
        %v4693 = vmul.f32 %v4691, 1.442695
        %v4694 = vpow.pop %v4693
        %v4695 = vmul.f32 %v4692, 1.442695
        %v4696 = vpow.pop %v4695
        %v4697 = vsel %vm4588, %v4694, 0.0
        %4698 = vadd.xlane.f32.xlu0 %v4697
        %v4699 = vpop.xlane.xlu0 %4698
        %v4700 = vsel %vm4588, %v4696, 0.0
        %4701 = vadd.xlane.f32.xlu0 %v4700
        %v4702 = vpop.xlane.xlu0 %4701
        %v4703 = vrcp.pop %v4699
        %v4704 = vrcp.pop %v4702
        %v4705 = vmul.f32 %v4694, %v4703
        %v4706 = vmul.f32 %v4696, %v4704
        %v4707 = vpack.c.bf16 %v4705, %v4705
        %v4708 = vpack.c.bf16 %v4706, %v4706
        %v4710 = vsel %vm4588, %v4707, 0
        %v4713 = vsel %vm1034, %v4657, 0
        %4715 = vmatpush.bf16.msra.mxu0 0
        %4716 = vmatpush.bf16.msra.mxu0 0
        %4717 = vmatpush.bf16.msra.mxu0 0
        %4718 = vmatpush.bf16.msra.mxu0 0
        %4719 = vmatpush.bf16.msra.mxu0 0
        %4720 = vmatpush.bf16.msra.mxu0 0
        %4721 = vmatpush.bf16.msra.mxu0 0
        %4722 = vmatpush.bf16.msra.mxu0 %v4713
        %4723 = vmatmul.bf16.gmra.mxu0 %v4710
        %v4724 = vpop.f32.mrf.mxu0
        %v4725 = vadd.f32 0.0, %v4724
        %v4726 = vpop.f32.mrf.mxu0
        %4727 = vdwg.mxu0
        %v4729 = vsel %vm4588, %v4708, 0
        %v4732 = vsel %vm1034, %v4658, 0
        %4734 = vmatpush.bf16.msra.mxu0 0
        %4735 = vmatpush.bf16.msra.mxu0 0
        %4736 = vmatpush.bf16.msra.mxu0 0
        %4737 = vmatpush.bf16.msra.mxu0 0
        %4738 = vmatpush.bf16.msra.mxu0 0
        %4739 = vmatpush.bf16.msra.mxu0 0
        %4740 = vmatpush.bf16.msra.mxu0 0
        %4741 = vmatpush.bf16.msra.mxu0 %v4732
        %4742 = vmatmul.bf16.gmra.mxu0 %v4729
        %v4743 = vpop.f32.mrf.mxu0
        %v4744 = vadd.f32 0.0, %v4743
        %v4745 = vpop.f32.mrf.mxu0
        %4746 = vdwg.mxu0
        %4747 = vst [vmem:[#allocation2 + $0x8] sm:$0xff] %v4725
        %4748 = vst [vmem:[#allocation2 + $0x28] sm:$0xff] %v4744
        %v4749 = vpack.c.bf16 %v4550, %v4550
        %v4750 = vpack.c.bf16 %v4554, %v4554
        %v4751 = vpack.c.bf16 %v4264, %v4264
        %v4752 = vpack.c.bf16 %v4266, %v4266
        %v4753 = vpack.c.bf16 %v4488, %v4488
        %v4754 = vpack.c.bf16 %v4490, %v4490
        %4755 = vmatpush.bf16.xpose.msra.mxu0 0
        %4756 = vmatpush.bf16.xpose.msra.mxu0 0
        %4757 = vmatpush.bf16.xpose.msra.mxu0 0
        %4758 = vmatpush.bf16.xpose.msra.mxu0 0
        %4759 = vmatpush.bf16.xpose.msra.mxu0 0
        %4760 = vmatpush.bf16.xpose.msra.mxu0 0
        %4761 = vmatpush.bf16.xpose.msra.mxu0 0
        %4762 = vmatpush.bf16.xpose.msra.mxu0 %v4751
        %4763 = vmatmul.bf16.gmra.mxu0 %v4749
        %v4764 = vpop.f32.mrf.mxu0
        %v4765 = vadd.f32 0.0, %v4764
        %v4766 = vpop.f32.mrf.mxu0
        %4767 = vdwg.mxu0
        %4768 = vmatpush.bf16.xpose.msra.mxu0 0
        %4769 = vmatpush.bf16.xpose.msra.mxu0 0
        %4770 = vmatpush.bf16.xpose.msra.mxu0 0
        %4771 = vmatpush.bf16.xpose.msra.mxu0 0
        %4772 = vmatpush.bf16.xpose.msra.mxu0 0
        %4773 = vmatpush.bf16.xpose.msra.mxu0 0
        %4774 = vmatpush.bf16.xpose.msra.mxu0 0
        %4775 = vmatpush.bf16.xpose.msra.mxu0 %v4752
        %4776 = vmatmul.bf16.gmra.mxu0 %v4750
        %v4777 = vpop.f32.mrf.mxu0
        %v4778 = vadd.f32 0.0, %v4777
        %v4779 = vpop.f32.mrf.mxu0
        %4780 = vdwg.mxu0
        %v4781 = vsel %vm4588, %v4765, -inf
        %4782 = vmax.xlane.f32.xlu0 %v4781
        %v4783 = vpop.xlane.xlu0 %4782
        %v4784 = vsel %vm4588, %v4778, -inf
        %4785 = vmax.xlane.f32.xlu0 %v4784
        %v4786 = vpop.xlane.xlu0 %4785
        %v4787 = vsub.f32 %v4765, %v4783
        %v4788 = vsub.f32 %v4778, %v4786
        %v4789 = vmul.f32 %v4787, 1.442695
        %v4790 = vpow.pop %v4789
        %v4791 = vmul.f32 %v4788, 1.442695
        %v4792 = vpow.pop %v4791
        %v4793 = vsel %vm4588, %v4790, 0.0
        %4794 = vadd.xlane.f32.xlu0 %v4793
        %v4795 = vpop.xlane.xlu0 %4794
        %v4796 = vsel %vm4588, %v4792, 0.0
        %4797 = vadd.xlane.f32.xlu0 %v4796
        %v4798 = vpop.xlane.xlu0 %4797
        %v4799 = vrcp.pop %v4795
        %v4800 = vrcp.pop %v4798
        %v4801 = vmul.f32 %v4790, %v4799
        %v4802 = vmul.f32 %v4792, %v4800
        %v4803 = vpack.c.bf16 %v4801, %v4801
        %v4804 = vpack.c.bf16 %v4802, %v4802
        %v4806 = vsel %vm4588, %v4803, 0
        %v4809 = vsel %vm1034, %v4753, 0
        %4811 = vmatpush.bf16.msra.mxu0 0
        %4812 = vmatpush.bf16.msra.mxu0 0
        %4813 = vmatpush.bf16.msra.mxu0 0
        %4814 = vmatpush.bf16.msra.mxu0 0
        %4815 = vmatpush.bf16.msra.mxu0 0
        %4816 = vmatpush.bf16.msra.mxu0 0
        %4817 = vmatpush.bf16.msra.mxu0 0
        %4818 = vmatpush.bf16.msra.mxu0 %v4809
        %4819 = vmatmul.bf16.gmra.mxu0 %v4806
        %v4820 = vpop.f32.mrf.mxu0
        %v4821 = vadd.f32 0.0, %v4820
        %v4822 = vpop.f32.mrf.mxu0
        %4823 = vdwg.mxu0
        %v4825 = vsel %vm4588, %v4804, 0
        %v4828 = vsel %vm1034, %v4754, 0
        %4830 = vmatpush.bf16.msra.mxu0 0
        %4831 = vmatpush.bf16.msra.mxu0 0
        %4832 = vmatpush.bf16.msra.mxu0 0
        %4833 = vmatpush.bf16.msra.mxu0 0
        %4834 = vmatpush.bf16.msra.mxu0 0
        %4835 = vmatpush.bf16.msra.mxu0 0
        %4836 = vmatpush.bf16.msra.mxu0 0
        %4837 = vmatpush.bf16.msra.mxu0 %v4828
        %4838 = vmatmul.bf16.gmra.mxu0 %v4825
        %v4839 = vpop.f32.mrf.mxu0
        %v4840 = vadd.f32 0.0, %v4839
        %v4841 = vpop.f32.mrf.mxu0
        %4842 = vdwg.mxu0
        %4843 = vst [vmem:[#allocation2 + $0x10] sm:$0xff] %v4821
        %4844 = vst [vmem:[#allocation2 + $0x30] sm:$0xff] %v4840
        %v4845 = vpack.c.bf16 %v4551, %v4551
        %v4846 = vpack.c.bf16 %v4555, %v4555
        %v4847 = vpack.c.bf16 %v4320, %v4320
        %v4848 = vpack.c.bf16 %v4322, %v4322
        %v4849 = vpack.c.bf16 %v4544, %v4544
        %v4850 = vpack.c.bf16 %v4546, %v4546
        %4851 = vmatpush.bf16.xpose.msra.mxu0 0
        %4852 = vmatpush.bf16.xpose.msra.mxu0 0
        %4853 = vmatpush.bf16.xpose.msra.mxu0 0
        %4854 = vmatpush.bf16.xpose.msra.mxu0 0
        %4855 = vmatpush.bf16.xpose.msra.mxu0 0
        %4856 = vmatpush.bf16.xpose.msra.mxu0 0
        %4857 = vmatpush.bf16.xpose.msra.mxu0 0
        %4858 = vmatpush.bf16.xpose.msra.mxu0 %v4847
        %4859 = vmatmul.bf16.gmra.mxu0 %v4845
        %v4860 = vpop.f32.mrf.mxu0
        %v4861 = vadd.f32 0.0, %v4860
        %v4862 = vpop.f32.mrf.mxu0
        %4863 = vdwg.mxu0
        %4864 = vmatpush.bf16.xpose.msra.mxu0 0
        %4865 = vmatpush.bf16.xpose.msra.mxu0 0
        %4866 = vmatpush.bf16.xpose.msra.mxu0 0
        %4867 = vmatpush.bf16.xpose.msra.mxu0 0
        %4868 = vmatpush.bf16.xpose.msra.mxu0 0
        %4869 = vmatpush.bf16.xpose.msra.mxu0 0
        %4870 = vmatpush.bf16.xpose.msra.mxu0 0
        %4871 = vmatpush.bf16.xpose.msra.mxu0 %v4848
        %4872 = vmatmul.bf16.gmra.mxu0 %v4846
        %v4873 = vpop.f32.mrf.mxu0
        %v4874 = vadd.f32 0.0, %v4873
        %v4875 = vpop.f32.mrf.mxu0
        %4876 = vdwg.mxu0
        %v4877 = vsel %vm4588, %v4861, -inf
        %4878 = vmax.xlane.f32.xlu0 %v4877
        %v4879 = vpop.xlane.xlu0 %4878
        %v4880 = vsel %vm4588, %v4874, -inf
        %4881 = vmax.xlane.f32.xlu0 %v4880
        %v4882 = vpop.xlane.xlu0 %4881
        %v4883 = vsub.f32 %v4861, %v4879
        %v4884 = vsub.f32 %v4874, %v4882
        %v4885 = vmul.f32 %v4883, 1.442695
        %v4886 = vpow.pop %v4885
        %v4887 = vmul.f32 %v4884, 1.442695
        %v4888 = vpow.pop %v4887
        %v4889 = vsel %vm4588, %v4886, 0.0
        %4890 = vadd.xlane.f32.xlu0 %v4889
        %v4891 = vpop.xlane.xlu0 %4890
        %v4892 = vsel %vm4588, %v4888, 0.0
        %4893 = vadd.xlane.f32.xlu0 %v4892
        %v4894 = vpop.xlane.xlu0 %4893
        %v4895 = vrcp.pop %v4891
        %v4896 = vrcp.pop %v4894
        %v4897 = vmul.f32 %v4886, %v4895
        %v4898 = vmul.f32 %v4888, %v4896
        %v4899 = vpack.c.bf16 %v4897, %v4897
        %v4900 = vpack.c.bf16 %v4898, %v4898
        %v4902 = vsel %vm4588, %v4899, 0
        %v4905 = vsel %vm1034, %v4849, 0
        %4907 = vmatpush.bf16.msra.mxu0 0
        %4908 = vmatpush.bf16.msra.mxu0 0
        %4909 = vmatpush.bf16.msra.mxu0 0
        %4910 = vmatpush.bf16.msra.mxu0 0
        %4911 = vmatpush.bf16.msra.mxu0 0
        %4912 = vmatpush.bf16.msra.mxu0 0
        %4913 = vmatpush.bf16.msra.mxu0 0
        %4914 = vmatpush.bf16.msra.mxu0 %v4905
        %4915 = vmatmul.bf16.gmra.mxu0 %v4902
        %v4916 = vpop.f32.mrf.mxu0
        %v4917 = vadd.f32 0.0, %v4916
        %v4918 = vpop.f32.mrf.mxu0
        %4919 = vdwg.mxu0
        %v4921 = vsel %vm4588, %v4900, 0
        %v4924 = vsel %vm1034, %v4850, 0
        %4926 = vmatpush.bf16.msra.mxu0 0
        %4927 = vmatpush.bf16.msra.mxu0 0
        %4928 = vmatpush.bf16.msra.mxu0 0
        %4929 = vmatpush.bf16.msra.mxu0 0
        %4930 = vmatpush.bf16.msra.mxu0 0
        %4931 = vmatpush.bf16.msra.mxu0 0
        %4932 = vmatpush.bf16.msra.mxu0 0
        %4933 = vmatpush.bf16.msra.mxu0 %v4924
        %4934 = vmatmul.bf16.gmra.mxu0 %v4921
        %v4935 = vpop.f32.mrf.mxu0
        %v4936 = vadd.f32 0.0, %v4935
        %v4937 = vpop.f32.mrf.mxu0
        %4938 = vdwg.mxu0
        %4939 = vst [vmem:[#allocation2 + $0x18] sm:$0xff] %v4917
        %4940 = vst [vmem:[#allocation2 + $0x38] sm:$0xff] %v4936
        %v4941 = vld [vmem:[#allocation2] sm:$0xff]
        %v4942 = vld [vmem:[#allocation2 + $0x8] sm:$0xff]
        %v4943 = vld [vmem:[#allocation2 + $0x10] sm:$0xff]
        %v4944 = vld [vmem:[#allocation2 + $0x18] sm:$0xff]
        %v4945 = vld [vmem:[#allocation2 + $0x20] sm:$0xff]
        %v4946 = vld [vmem:[#allocation2 + $0x28] sm:$0xff]
        %v4947 = vld [vmem:[#allocation2 + $0x30] sm:$0xff]
        %v4948 = vld [vmem:[#allocation2 + $0x38] sm:$0xff]
        %v4949 = vpack.c.bf16 %v4945, %v4941
        %v4950 = vpack.c.bf16 %v4946, %v4942
        %v4951 = vpack.c.bf16 %v4947, %v4943
        %v4952 = vpack.c.bf16 %v4948, %v4944
        %v4953 = vld [vmem:[%s726] sm:$0xff]
        %v4954 = vld [vmem:[%s726 + $0x8] sm:$0xff]
        %v4955 = vld [vmem:[%s726 + $0x10] sm:$0xff]
        %v4956 = vld [vmem:[%s726 + $0x18] sm:$0xff]
        %v4957 = vld [vmem:[%s726 + $0x20] sm:$0xff]
        %v4958 = vld [vmem:[%s726 + $0x28] sm:$0xff]
        %v4959 = vld [vmem:[%s726 + $0x30] sm:$0xff]
        %v4960 = vld [vmem:[%s726 + $0x38] sm:$0xff]
        %v4961 = vld [vmem:[%s726 + $0x40] sm:$0xff]
        %v4962 = vld [vmem:[%s726 + $0x48] sm:$0xff]
        %v4963 = vld [vmem:[%s726 + $0x50] sm:$0xff]
        %v4964 = vld [vmem:[%s726 + $0x58] sm:$0xff]
        %v4965 = vld [vmem:[%s726 + $0x60] sm:$0xff]
        %v4966 = vld [vmem:[%s726 + $0x68] sm:$0xff]
        %v4967 = vld [vmem:[%s726 + $0x70] sm:$0xff]
        %v4968 = vld [vmem:[%s726 + $0x78] sm:$0xff]
        %v4969 = vld [vmem:[%s726 + $0x80] sm:$0xff]
        %v4970 = vld [vmem:[%s726 + $0x88] sm:$0xff]
        %v4971 = vld [vmem:[%s726 + $0x90] sm:$0xff]
        %v4972 = vld [vmem:[%s726 + $0x98] sm:$0xff]
        %v4973 = vld [vmem:[%s726 + $0xa0] sm:$0xff]
        %v4974 = vld [vmem:[%s726 + $0xa8] sm:$0xff]
        %v4975 = vld [vmem:[%s726 + $0xb0] sm:$0xff]
        %v4976 = vld [vmem:[%s726 + $0xb8] sm:$0xff]
        %v4977 = vld [vmem:[%s726 + $0xc0] sm:$0xff]
        %v4978 = vld [vmem:[%s726 + $0xc8] sm:$0xff]
        %v4979 = vld [vmem:[%s726 + $0xd0] sm:$0xff]
        %v4980 = vld [vmem:[%s726 + $0xd8] sm:$0xff]
        %v4981 = vld [vmem:[%s726 + $0xe0] sm:$0xff]
        %v4982 = vld [vmem:[%s726 + $0xe8] sm:$0xff]
        %v4983 = vld [vmem:[%s726 + $0xf0] sm:$0xff]
        %v4984 = vld [vmem:[%s726 + $0xf8] sm:$0xff]
        %v4985 = vld [vmem:[%s726 + $0x100] sm:$0xff]
        %v4986 = vld [vmem:[%s726 + $0x108] sm:$0xff]
        %v4987 = vld [vmem:[%s726 + $0x110] sm:$0xff]
        %v4988 = vld [vmem:[%s726 + $0x118] sm:$0xff]
        %v4989 = vld [vmem:[%s726 + $0x120] sm:$0xff]
        %v4990 = vld [vmem:[%s726 + $0x128] sm:$0xff]
        %v4991 = vld [vmem:[%s726 + $0x130] sm:$0xff]
        %v4992 = vld [vmem:[%s726 + $0x138] sm:$0xff]
        %v4993 = vld [vmem:[%s726 + $0x140] sm:$0xff]
        %v4994 = vld [vmem:[%s726 + $0x148] sm:$0xff]
        %v4995 = vld [vmem:[%s726 + $0x150] sm:$0xff]
        %v4996 = vld [vmem:[%s726 + $0x158] sm:$0xff]
        %v4997 = vld [vmem:[%s726 + $0x160] sm:$0xff]
        %v4998 = vld [vmem:[%s726 + $0x168] sm:$0xff]
        %v4999 = vld [vmem:[%s726 + $0x170] sm:$0xff]
        %v5000 = vld [vmem:[%s726 + $0x178] sm:$0xff]
        %v5001 = vld [vmem:[%s726 + $0x180] sm:$0xff]
        %v5002 = vld [vmem:[%s726 + $0x188] sm:$0xff]
        %v5003 = vld [vmem:[%s726 + $0x190] sm:$0xff]
        %v5004 = vld [vmem:[%s726 + $0x198] sm:$0xff]
        %v5005 = vld [vmem:[%s726 + $0x1a0] sm:$0xff]
        %v5006 = vld [vmem:[%s726 + $0x1a8] sm:$0xff]
        %v5007 = vld [vmem:[%s726 + $0x1b0] sm:$0xff]
        %v5008 = vld [vmem:[%s726 + $0x1b8] sm:$0xff]
        %v5009 = vld [vmem:[%s726 + $0x1c0] sm:$0xff]
        %v5010 = vld [vmem:[%s726 + $0x1c8] sm:$0xff]
        %v5011 = vld [vmem:[%s726 + $0x1d0] sm:$0xff]
        %v5012 = vld [vmem:[%s726 + $0x1d8] sm:$0xff]
        %v5013 = vld [vmem:[%s726 + $0x1e0] sm:$0xff]
        %v5014 = vld [vmem:[%s726 + $0x1e8] sm:$0xff]
        %v5015 = vld [vmem:[%s726 + $0x1f0] sm:$0xff]
        %v5016 = vld [vmem:[%s726 + $0x1f8] sm:$0xff]
        %v5017 = vld [vmem:[%s726 + $0x200] sm:$0xff]
        %v5018 = vld [vmem:[%s726 + $0x208] sm:$0xff]
        %v5019 = vld [vmem:[%s726 + $0x210] sm:$0xff]
        %v5020 = vld [vmem:[%s726 + $0x218] sm:$0xff]
        %v5021 = vld [vmem:[%s726 + $0x220] sm:$0xff]
        %v5022 = vld [vmem:[%s726 + $0x228] sm:$0xff]
        %v5023 = vld [vmem:[%s726 + $0x230] sm:$0xff]
        %v5024 = vld [vmem:[%s726 + $0x238] sm:$0xff]
        %v5025 = vld [vmem:[%s726 + $0x240] sm:$0xff]
        %v5026 = vld [vmem:[%s726 + $0x248] sm:$0xff]
        %v5027 = vld [vmem:[%s726 + $0x250] sm:$0xff]
        %v5028 = vld [vmem:[%s726 + $0x258] sm:$0xff]
        %v5029 = vld [vmem:[%s726 + $0x260] sm:$0xff]
        %v5030 = vld [vmem:[%s726 + $0x268] sm:$0xff]
        %v5031 = vld [vmem:[%s726 + $0x270] sm:$0xff]
        %v5032 = vld [vmem:[%s726 + $0x278] sm:$0xff]
        %v5033 = vld [vmem:[%s726 + $0x280] sm:$0xff]
        %v5034 = vld [vmem:[%s726 + $0x288] sm:$0xff]
        %v5035 = vld [vmem:[%s726 + $0x290] sm:$0xff]
        %v5036 = vld [vmem:[%s726 + $0x298] sm:$0xff]
        %v5037 = vld [vmem:[%s726 + $0x2a0] sm:$0xff]
        %v5038 = vld [vmem:[%s726 + $0x2a8] sm:$0xff]
        %v5039 = vld [vmem:[%s726 + $0x2b0] sm:$0xff]
        %v5040 = vld [vmem:[%s726 + $0x2b8] sm:$0xff]
        %v5041 = vld [vmem:[%s726 + $0x2c0] sm:$0xff]
        %v5042 = vld [vmem:[%s726 + $0x2c8] sm:$0xff]
        %v5043 = vld [vmem:[%s726 + $0x2d0] sm:$0xff]
        %v5044 = vld [vmem:[%s726 + $0x2d8] sm:$0xff]
        %v5045 = vld [vmem:[%s726 + $0x2e0] sm:$0xff]
        %v5046 = vld [vmem:[%s726 + $0x2e8] sm:$0xff]
        %v5047 = vld [vmem:[%s726 + $0x2f0] sm:$0xff]
        %v5048 = vld [vmem:[%s726 + $0x2f8] sm:$0xff]
        %v5049 = vld [vmem:[%s726 + $0x300] sm:$0xff]
        %v5050 = vld [vmem:[%s726 + $0x308] sm:$0xff]
        %v5051 = vld [vmem:[%s726 + $0x310] sm:$0xff]
        %v5052 = vld [vmem:[%s726 + $0x318] sm:$0xff]
        %v5053 = vld [vmem:[%s726 + $0x320] sm:$0xff]
        %v5054 = vld [vmem:[%s726 + $0x328] sm:$0xff]
        %v5055 = vld [vmem:[%s726 + $0x330] sm:$0xff]
        %v5056 = vld [vmem:[%s726 + $0x338] sm:$0xff]
        %v5057 = vld [vmem:[%s726 + $0x340] sm:$0xff]
        %v5058 = vld [vmem:[%s726 + $0x348] sm:$0xff]
        %v5059 = vld [vmem:[%s726 + $0x350] sm:$0xff]
        %v5060 = vld [vmem:[%s726 + $0x358] sm:$0xff]
        %v5061 = vld [vmem:[%s726 + $0x360] sm:$0xff]
        %v5062 = vld [vmem:[%s726 + $0x368] sm:$0xff]
        %v5063 = vld [vmem:[%s726 + $0x370] sm:$0xff]
        %v5064 = vld [vmem:[%s726 + $0x378] sm:$0xff]
        %v5065 = vld [vmem:[%s726 + $0x380] sm:$0xff]
        %v5066 = vld [vmem:[%s726 + $0x388] sm:$0xff]
        %v5067 = vld [vmem:[%s726 + $0x390] sm:$0xff]
        %v5068 = vld [vmem:[%s726 + $0x398] sm:$0xff]
        %v5069 = vld [vmem:[%s726 + $0x3a0] sm:$0xff]
        %v5070 = vld [vmem:[%s726 + $0x3a8] sm:$0xff]
        %v5071 = vld [vmem:[%s726 + $0x3b0] sm:$0xff]
        %v5072 = vld [vmem:[%s726 + $0x3b8] sm:$0xff]
        %v5073 = vld [vmem:[%s726 + $0x3c0] sm:$0xff]
        %v5074 = vld [vmem:[%s726 + $0x3c8] sm:$0xff]
        %v5075 = vld [vmem:[%s726 + $0x3d0] sm:$0xff]
        %v5076 = vld [vmem:[%s726 + $0x3d8] sm:$0xff]
        %v5077 = vld [vmem:[%s726 + $0x3e0] sm:$0xff]
        %v5078 = vld [vmem:[%s726 + $0x3e8] sm:$0xff]
        %v5079 = vld [vmem:[%s726 + $0x3f0] sm:$0xff]
        %v5080 = vld [vmem:[%s726 + $0x3f8] sm:$0xff]
        %v5081 = vld [vmem:[%s736] sm:$0xf]
        %v5083 = vperm.slane %v5081, 0
        %v5084 = vperm.slane %v5081, 1
        %v5085 = vperm.slane %v5081, 2
        %v5086 = vperm.slane %v5081, 3
        %v5219 = vunpack.c.l.b16 %v4953
        %v5220 = vunpack.c.h.b16 %v4953
        %v5221 = vunpack.c.l.b16 %v4954
        %v5222 = vunpack.c.h.b16 %v4954
        %v5223 = vunpack.c.l.b16 %v4955
        %v5224 = vunpack.c.h.b16 %v4955
        %v5225 = vunpack.c.l.b16 %v4956
        %v5226 = vunpack.c.h.b16 %v4956
        %v5227 = vunpack.c.l.b16 %v4957
        %v5228 = vunpack.c.h.b16 %v4957
        %v5229 = vunpack.c.l.b16 %v4958
        %v5230 = vunpack.c.h.b16 %v4958
        %v5231 = vunpack.c.l.b16 %v4959
        %v5232 = vunpack.c.h.b16 %v4959
        %v5233 = vunpack.c.l.b16 %v4960
        %v5234 = vunpack.c.h.b16 %v4960
        %v5235 = vunpack.c.l.b16 %v4961
        %v5236 = vunpack.c.h.b16 %v4961
        %v5237 = vunpack.c.l.b16 %v4962
        %v5238 = vunpack.c.h.b16 %v4962
        %v5239 = vunpack.c.l.b16 %v4963
        %v5240 = vunpack.c.h.b16 %v4963
        %v5241 = vunpack.c.l.b16 %v4964
        %v5242 = vunpack.c.h.b16 %v4964
        %v5243 = vunpack.c.l.b16 %v4965
        %v5244 = vunpack.c.h.b16 %v4965
        %v5245 = vunpack.c.l.b16 %v4966
        %v5246 = vunpack.c.h.b16 %v4966
        %v5247 = vunpack.c.l.b16 %v4967
        %v5248 = vunpack.c.h.b16 %v4967
        %v5249 = vunpack.c.l.b16 %v4968
        %v5250 = vunpack.c.h.b16 %v4968
        %v5251 = vunpack.c.l.b16 %v4969
        %v5252 = vunpack.c.h.b16 %v4969
        %v5253 = vunpack.c.l.b16 %v4970
        %v5254 = vunpack.c.h.b16 %v4970
        %v5255 = vunpack.c.l.b16 %v4971
        %v5256 = vunpack.c.h.b16 %v4971
        %v5257 = vunpack.c.l.b16 %v4972
        %v5258 = vunpack.c.h.b16 %v4972
        %v5259 = vunpack.c.l.b16 %v4973
        %v5260 = vunpack.c.h.b16 %v4973
        %v5261 = vunpack.c.l.b16 %v4974
        %v5262 = vunpack.c.h.b16 %v4974
        %v5263 = vunpack.c.l.b16 %v4975
        %v5264 = vunpack.c.h.b16 %v4975
        %v5265 = vunpack.c.l.b16 %v4976
        %v5266 = vunpack.c.h.b16 %v4976
        %v5267 = vunpack.c.l.b16 %v4977
        %v5268 = vunpack.c.h.b16 %v4977
        %v5269 = vunpack.c.l.b16 %v4978
        %v5270 = vunpack.c.h.b16 %v4978
        %v5271 = vunpack.c.l.b16 %v4979
        %v5272 = vunpack.c.h.b16 %v4979
        %v5273 = vunpack.c.l.b16 %v4980
        %v5274 = vunpack.c.h.b16 %v4980
        %v5275 = vunpack.c.l.b16 %v4981
        %v5276 = vunpack.c.h.b16 %v4981
        %v5277 = vunpack.c.l.b16 %v4982
        %v5278 = vunpack.c.h.b16 %v4982
        %v5279 = vunpack.c.l.b16 %v4983
        %v5280 = vunpack.c.h.b16 %v4983
        %v5281 = vunpack.c.l.b16 %v4984
        %v5282 = vunpack.c.h.b16 %v4984
        %v5283 = vunpack.c.l.b16 %v4985
        %v5284 = vunpack.c.h.b16 %v4985
        %v5285 = vunpack.c.l.b16 %v4986
        %v5286 = vunpack.c.h.b16 %v4986
        %v5287 = vunpack.c.l.b16 %v4987
        %v5288 = vunpack.c.h.b16 %v4987
        %v5289 = vunpack.c.l.b16 %v4988
        %v5290 = vunpack.c.h.b16 %v4988
        %v5291 = vunpack.c.l.b16 %v4989
        %v5292 = vunpack.c.h.b16 %v4989
        %v5293 = vunpack.c.l.b16 %v4990
        %v5294 = vunpack.c.h.b16 %v4990
        %v5295 = vunpack.c.l.b16 %v4991
        %v5296 = vunpack.c.h.b16 %v4991
        %v5297 = vunpack.c.l.b16 %v4992
        %v5298 = vunpack.c.h.b16 %v4992
        %v5299 = vunpack.c.l.b16 %v4993
        %v5300 = vunpack.c.h.b16 %v4993
        %v5301 = vunpack.c.l.b16 %v4994
        %v5302 = vunpack.c.h.b16 %v4994
        %v5303 = vunpack.c.l.b16 %v4995
        %v5304 = vunpack.c.h.b16 %v4995
        %v5305 = vunpack.c.l.b16 %v4996
        %v5306 = vunpack.c.h.b16 %v4996
        %v5307 = vunpack.c.l.b16 %v4997
        %v5308 = vunpack.c.h.b16 %v4997
        %v5309 = vunpack.c.l.b16 %v4998
        %v5310 = vunpack.c.h.b16 %v4998
        %v5311 = vunpack.c.l.b16 %v4999
        %v5312 = vunpack.c.h.b16 %v4999
        %v5313 = vunpack.c.l.b16 %v5000
        %v5314 = vunpack.c.h.b16 %v5000
        %v5315 = vunpack.c.l.b16 %v5001
        %v5316 = vunpack.c.h.b16 %v5001
        %v5317 = vunpack.c.l.b16 %v5002
        %v5318 = vunpack.c.h.b16 %v5002
        %v5319 = vunpack.c.l.b16 %v5003
        %v5320 = vunpack.c.h.b16 %v5003
        %v5321 = vunpack.c.l.b16 %v5004
        %v5322 = vunpack.c.h.b16 %v5004
        %v5323 = vunpack.c.l.b16 %v5005
        %v5324 = vunpack.c.h.b16 %v5005
        %v5325 = vunpack.c.l.b16 %v5006
        %v5326 = vunpack.c.h.b16 %v5006
        %v5327 = vunpack.c.l.b16 %v5007
        %v5328 = vunpack.c.h.b16 %v5007
        %v5329 = vunpack.c.l.b16 %v5008
        %v5330 = vunpack.c.h.b16 %v5008
        %v5331 = vunpack.c.l.b16 %v5009
        %v5332 = vunpack.c.h.b16 %v5009
        %v5333 = vunpack.c.l.b16 %v5010
        %v5334 = vunpack.c.h.b16 %v5010
        %v5335 = vunpack.c.l.b16 %v5011
        %v5336 = vunpack.c.h.b16 %v5011
        %v5337 = vunpack.c.l.b16 %v5012
        %v5338 = vunpack.c.h.b16 %v5012
        %v5339 = vunpack.c.l.b16 %v5013
        %v5340 = vunpack.c.h.b16 %v5013
        %v5341 = vunpack.c.l.b16 %v5014
        %v5342 = vunpack.c.h.b16 %v5014
        %v5343 = vunpack.c.l.b16 %v5015
        %v5344 = vunpack.c.h.b16 %v5015
        %v5345 = vunpack.c.l.b16 %v5016
        %v5346 = vunpack.c.h.b16 %v5016
        %v5347 = vunpack.c.l.b16 %v5017
        %v5348 = vunpack.c.h.b16 %v5017
        %v5349 = vunpack.c.l.b16 %v5018
        %v5350 = vunpack.c.h.b16 %v5018
        %v5351 = vunpack.c.l.b16 %v5019
        %v5352 = vunpack.c.h.b16 %v5019
        %v5353 = vunpack.c.l.b16 %v5020
        %v5354 = vunpack.c.h.b16 %v5020
        %v5355 = vunpack.c.l.b16 %v5021
        %v5356 = vunpack.c.h.b16 %v5021
        %v5357 = vunpack.c.l.b16 %v5022
        %v5358 = vunpack.c.h.b16 %v5022
        %v5359 = vunpack.c.l.b16 %v5023
        %v5360 = vunpack.c.h.b16 %v5023
        %v5361 = vunpack.c.l.b16 %v5024
        %v5362 = vunpack.c.h.b16 %v5024
        %v5363 = vunpack.c.l.b16 %v5025
        %v5364 = vunpack.c.h.b16 %v5025
        %v5365 = vunpack.c.l.b16 %v5026
        %v5366 = vunpack.c.h.b16 %v5026
        %v5367 = vunpack.c.l.b16 %v5027
        %v5368 = vunpack.c.h.b16 %v5027
        %v5369 = vunpack.c.l.b16 %v5028
        %v5370 = vunpack.c.h.b16 %v5028
        %v5371 = vunpack.c.l.b16 %v5029
        %v5372 = vunpack.c.h.b16 %v5029
        %v5373 = vunpack.c.l.b16 %v5030
        %v5374 = vunpack.c.h.b16 %v5030
        %v5375 = vunpack.c.l.b16 %v5031
        %v5376 = vunpack.c.h.b16 %v5031
        %v5377 = vunpack.c.l.b16 %v5032
        %v5378 = vunpack.c.h.b16 %v5032
        %v5379 = vunpack.c.l.b16 %v5033
        %v5380 = vunpack.c.h.b16 %v5033
        %v5381 = vunpack.c.l.b16 %v5034
        %v5382 = vunpack.c.h.b16 %v5034
        %v5383 = vunpack.c.l.b16 %v5035
        %v5384 = vunpack.c.h.b16 %v5035
        %v5385 = vunpack.c.l.b16 %v5036
        %v5386 = vunpack.c.h.b16 %v5036
        %v5387 = vunpack.c.l.b16 %v5037
        %v5388 = vunpack.c.h.b16 %v5037
        %v5389 = vunpack.c.l.b16 %v5038
        %v5390 = vunpack.c.h.b16 %v5038
        %v5391 = vunpack.c.l.b16 %v5039
        %v5392 = vunpack.c.h.b16 %v5039
        %v5393 = vunpack.c.l.b16 %v5040
        %v5394 = vunpack.c.h.b16 %v5040
        %v5395 = vunpack.c.l.b16 %v5041
        %v5396 = vunpack.c.h.b16 %v5041
        %v5397 = vunpack.c.l.b16 %v5042
        %v5398 = vunpack.c.h.b16 %v5042
        %v5399 = vunpack.c.l.b16 %v5043
        %v5400 = vunpack.c.h.b16 %v5043
        %v5401 = vunpack.c.l.b16 %v5044
        %v5402 = vunpack.c.h.b16 %v5044
        %v5403 = vunpack.c.l.b16 %v5045
        %v5404 = vunpack.c.h.b16 %v5045
        %v5405 = vunpack.c.l.b16 %v5046
        %v5406 = vunpack.c.h.b16 %v5046
        %v5407 = vunpack.c.l.b16 %v5047
        %v5408 = vunpack.c.h.b16 %v5047
        %v5409 = vunpack.c.l.b16 %v5048
        %v5410 = vunpack.c.h.b16 %v5048
        %v5411 = vunpack.c.l.b16 %v5049
        %v5412 = vunpack.c.h.b16 %v5049
        %v5413 = vunpack.c.l.b16 %v5050
        %v5414 = vunpack.c.h.b16 %v5050
        %v5415 = vunpack.c.l.b16 %v5051
        %v5416 = vunpack.c.h.b16 %v5051
        %v5417 = vunpack.c.l.b16 %v5052
        %v5418 = vunpack.c.h.b16 %v5052
        %v5419 = vunpack.c.l.b16 %v5053
        %v5420 = vunpack.c.h.b16 %v5053
        %v5421 = vunpack.c.l.b16 %v5054
        %v5422 = vunpack.c.h.b16 %v5054
        %v5423 = vunpack.c.l.b16 %v5055
        %v5424 = vunpack.c.h.b16 %v5055
        %v5425 = vunpack.c.l.b16 %v5056
        %v5426 = vunpack.c.h.b16 %v5056
        %v5427 = vunpack.c.l.b16 %v5057
        %v5428 = vunpack.c.h.b16 %v5057
        %v5429 = vunpack.c.l.b16 %v5058
        %v5430 = vunpack.c.h.b16 %v5058
        %v5431 = vunpack.c.l.b16 %v5059
        %v5432 = vunpack.c.h.b16 %v5059
        %v5433 = vunpack.c.l.b16 %v5060
        %v5434 = vunpack.c.h.b16 %v5060
        %v5435 = vunpack.c.l.b16 %v5061
        %v5436 = vunpack.c.h.b16 %v5061
        %v5437 = vunpack.c.l.b16 %v5062
        %v5438 = vunpack.c.h.b16 %v5062
        %v5439 = vunpack.c.l.b16 %v5063
        %v5440 = vunpack.c.h.b16 %v5063
        %v5441 = vunpack.c.l.b16 %v5064
        %v5442 = vunpack.c.h.b16 %v5064
        %v5443 = vunpack.c.l.b16 %v5065
        %v5444 = vunpack.c.h.b16 %v5065
        %v5445 = vunpack.c.l.b16 %v5066
        %v5446 = vunpack.c.h.b16 %v5066
        %v5447 = vunpack.c.l.b16 %v5067
        %v5448 = vunpack.c.h.b16 %v5067
        %v5449 = vunpack.c.l.b16 %v5068
        %v5450 = vunpack.c.h.b16 %v5068
        %v5451 = vunpack.c.l.b16 %v5069
        %v5452 = vunpack.c.h.b16 %v5069
        %v5453 = vunpack.c.l.b16 %v5070
        %v5454 = vunpack.c.h.b16 %v5070
        %v5455 = vunpack.c.l.b16 %v5071
        %v5456 = vunpack.c.h.b16 %v5071
        %v5457 = vunpack.c.l.b16 %v5072
        %v5458 = vunpack.c.h.b16 %v5072
        %v5459 = vunpack.c.l.b16 %v5073
        %v5460 = vunpack.c.h.b16 %v5073
        %v5461 = vunpack.c.l.b16 %v5074
        %v5462 = vunpack.c.h.b16 %v5074
        %v5463 = vunpack.c.l.b16 %v5075
        %v5464 = vunpack.c.h.b16 %v5075
        %v5465 = vunpack.c.l.b16 %v5076
        %v5466 = vunpack.c.h.b16 %v5076
        %v5467 = vunpack.c.l.b16 %v5077
        %v5468 = vunpack.c.h.b16 %v5077
        %v5469 = vunpack.c.l.b16 %v5078
        %v5470 = vunpack.c.h.b16 %v5078
        %v5471 = vunpack.c.l.b16 %v5079
        %v5472 = vunpack.c.h.b16 %v5079
        %v5473 = vunpack.c.l.b16 %v5080
        %v5474 = vunpack.c.h.b16 %v5080
        %v5475 = vpack.c.b16 %v5223, %v5219
        %v5476 = vpack.c.b16 %v5224, %v5220
        %v5477 = vpack.c.b16 %v5225, %v5221
        %v5478 = vpack.c.b16 %v5226, %v5222
        %v5479 = vpack.c.b16 %v5231, %v5227
        %v5480 = vpack.c.b16 %v5232, %v5228
        %v5481 = vpack.c.b16 %v5233, %v5229
        %v5482 = vpack.c.b16 %v5234, %v5230
        %v5483 = vpack.c.b16 %v5239, %v5235
        %v5484 = vpack.c.b16 %v5240, %v5236
        %v5485 = vpack.c.b16 %v5241, %v5237
        %v5486 = vpack.c.b16 %v5242, %v5238
        %v5487 = vpack.c.b16 %v5247, %v5243
        %v5488 = vpack.c.b16 %v5248, %v5244
        %v5489 = vpack.c.b16 %v5249, %v5245
        %v5490 = vpack.c.b16 %v5250, %v5246
        %v5491 = vpack.c.b16 %v5255, %v5251
        %v5492 = vpack.c.b16 %v5256, %v5252
        %v5493 = vpack.c.b16 %v5257, %v5253
        %v5494 = vpack.c.b16 %v5258, %v5254
        %v5495 = vpack.c.b16 %v5263, %v5259
        %v5496 = vpack.c.b16 %v5264, %v5260
        %v5497 = vpack.c.b16 %v5265, %v5261
        %v5498 = vpack.c.b16 %v5266, %v5262
        %v5499 = vpack.c.b16 %v5271, %v5267
        %v5500 = vpack.c.b16 %v5272, %v5268
        %v5501 = vpack.c.b16 %v5273, %v5269
        %v5502 = vpack.c.b16 %v5274, %v5270
        %v5503 = vpack.c.b16 %v5279, %v5275
        %v5504 = vpack.c.b16 %v5280, %v5276
        %v5505 = vpack.c.b16 %v5281, %v5277
        %v5506 = vpack.c.b16 %v5282, %v5278
        %v5507 = vpack.c.b16 %v5287, %v5283
        %v5508 = vpack.c.b16 %v5288, %v5284
        %v5509 = vpack.c.b16 %v5289, %v5285
        %v5510 = vpack.c.b16 %v5290, %v5286
        %v5511 = vpack.c.b16 %v5295, %v5291
        %v5512 = vpack.c.b16 %v5296, %v5292
        %v5513 = vpack.c.b16 %v5297, %v5293
        %v5514 = vpack.c.b16 %v5298, %v5294
        %v5515 = vpack.c.b16 %v5303, %v5299
        %v5516 = vpack.c.b16 %v5304, %v5300
        %v5517 = vpack.c.b16 %v5305, %v5301
        %v5518 = vpack.c.b16 %v5306, %v5302
        %v5519 = vpack.c.b16 %v5311, %v5307
        %v5520 = vpack.c.b16 %v5312, %v5308
        %v5521 = vpack.c.b16 %v5313, %v5309
        %v5522 = vpack.c.b16 %v5314, %v5310
        %v5523 = vpack.c.b16 %v5319, %v5315
        %v5524 = vpack.c.b16 %v5320, %v5316
        %v5525 = vpack.c.b16 %v5321, %v5317
        %v5526 = vpack.c.b16 %v5322, %v5318
        %v5527 = vpack.c.b16 %v5327, %v5323
        %v5528 = vpack.c.b16 %v5328, %v5324
        %v5529 = vpack.c.b16 %v5329, %v5325
        %v5530 = vpack.c.b16 %v5330, %v5326
        %v5531 = vpack.c.b16 %v5335, %v5331
        %v5532 = vpack.c.b16 %v5336, %v5332
        %v5533 = vpack.c.b16 %v5337, %v5333
        %v5534 = vpack.c.b16 %v5338, %v5334
        %v5535 = vpack.c.b16 %v5343, %v5339
        %v5536 = vpack.c.b16 %v5344, %v5340
        %v5537 = vpack.c.b16 %v5345, %v5341
        %v5538 = vpack.c.b16 %v5346, %v5342
        %v5539 = vpack.c.b16 %v5351, %v5347
        %v5540 = vpack.c.b16 %v5352, %v5348
        %v5541 = vpack.c.b16 %v5353, %v5349
        %v5542 = vpack.c.b16 %v5354, %v5350
        %v5543 = vpack.c.b16 %v5359, %v5355
        %v5544 = vpack.c.b16 %v5360, %v5356
        %v5545 = vpack.c.b16 %v5361, %v5357
        %v5546 = vpack.c.b16 %v5362, %v5358
        %v5547 = vpack.c.b16 %v5367, %v5363
        %v5548 = vpack.c.b16 %v5368, %v5364
        %v5549 = vpack.c.b16 %v5369, %v5365
        %v5550 = vpack.c.b16 %v5370, %v5366
        %v5551 = vpack.c.b16 %v5375, %v5371
        %v5552 = vpack.c.b16 %v5376, %v5372
        %v5553 = vpack.c.b16 %v5377, %v5373
        %v5554 = vpack.c.b16 %v5378, %v5374
        %v5555 = vpack.c.b16 %v5383, %v5379
        %v5556 = vpack.c.b16 %v5384, %v5380
        %v5557 = vpack.c.b16 %v5385, %v5381
        %v5558 = vpack.c.b16 %v5386, %v5382
        %v5559 = vpack.c.b16 %v5391, %v5387
        %v5560 = vpack.c.b16 %v5392, %v5388
        %v5561 = vpack.c.b16 %v5393, %v5389
        %v5562 = vpack.c.b16 %v5394, %v5390
        %v5563 = vpack.c.b16 %v5399, %v5395
        %v5564 = vpack.c.b16 %v5400, %v5396
        %v5565 = vpack.c.b16 %v5401, %v5397
        %v5566 = vpack.c.b16 %v5402, %v5398
        %v5567 = vpack.c.b16 %v5407, %v5403
        %v5568 = vpack.c.b16 %v5408, %v5404
        %v5569 = vpack.c.b16 %v5409, %v5405
        %v5570 = vpack.c.b16 %v5410, %v5406
        %v5571 = vpack.c.b16 %v5415, %v5411
        %v5572 = vpack.c.b16 %v5416, %v5412
        %v5573 = vpack.c.b16 %v5417, %v5413
        %v5574 = vpack.c.b16 %v5418, %v5414
        %v5575 = vpack.c.b16 %v5423, %v5419
        %v5576 = vpack.c.b16 %v5424, %v5420
        %v5577 = vpack.c.b16 %v5425, %v5421
        %v5578 = vpack.c.b16 %v5426, %v5422
        %v5579 = vpack.c.b16 %v5431, %v5427
        %v5580 = vpack.c.b16 %v5432, %v5428
        %v5581 = vpack.c.b16 %v5433, %v5429
        %v5582 = vpack.c.b16 %v5434, %v5430
        %v5583 = vpack.c.b16 %v5439, %v5435
        %v5584 = vpack.c.b16 %v5440, %v5436
        %v5585 = vpack.c.b16 %v5441, %v5437
        %v5586 = vpack.c.b16 %v5442, %v5438
        %v5587 = vpack.c.b16 %v5447, %v5443
        %v5588 = vpack.c.b16 %v5448, %v5444
        %v5589 = vpack.c.b16 %v5449, %v5445
        %v5590 = vpack.c.b16 %v5450, %v5446
        %v5591 = vpack.c.b16 %v5455, %v5451
        %v5592 = vpack.c.b16 %v5456, %v5452
        %v5593 = vpack.c.b16 %v5457, %v5453
        %v5594 = vpack.c.b16 %v5458, %v5454
        %v5595 = vpack.c.b16 %v5463, %v5459
        %v5596 = vpack.c.b16 %v5464, %v5460
        %v5597 = vpack.c.b16 %v5465, %v5461
        %v5598 = vpack.c.b16 %v5466, %v5462
        %v5599 = vpack.c.b16 %v5471, %v5467
        %v5600 = vpack.c.b16 %v5472, %v5468
        %v5601 = vpack.c.b16 %v5473, %v5469
        %v5602 = vpack.c.b16 %v5474, %v5470
        %5731 = vmatpush.bf16.msra.mxu0 %v5503
        %5732 = vmatpush.bf16.msra.mxu0 %v5499
        %5733 = vmatpush.bf16.msra.mxu0 %v5495
        %5734 = vmatpush.bf16.msra.mxu0 %v5491
        %5735 = vmatpush.bf16.msra.mxu0 %v5487
        %5736 = vmatpush.bf16.msra.mxu0 %v5483
        %5737 = vmatpush.bf16.msra.mxu0 %v5479
        %5738 = vmatpush.bf16.msra.mxu0 %v5475
        %5739 = vmatmul.bf16.gmra.mxu0 %v4949
        %v5740 = vpop.f32.mrf.mxu0
        %v5741 = vadd.f32 %v5083, %v5740
        %v5742 = vpop.f32.mrf.mxu0
        %v5743 = vadd.f32 %v5083, %v5742
        %5744 = vdwg.mxu0
        %5745 = vmatpush.bf16.msra.mxu0 %v5535
        %5746 = vmatpush.bf16.msra.mxu0 %v5531
        %5747 = vmatpush.bf16.msra.mxu0 %v5527
        %5748 = vmatpush.bf16.msra.mxu0 %v5523
        %5749 = vmatpush.bf16.msra.mxu0 %v5519
        %5750 = vmatpush.bf16.msra.mxu0 %v5515
        %5751 = vmatpush.bf16.msra.mxu0 %v5511
        %5752 = vmatpush.bf16.msra.mxu0 %v5507
        %5753 = vmatmul.bf16.gmra.mxu0 %v4950
        %v5754 = vpop.f32.mrf.mxu0
        %v5755 = vadd.f32 %v5741, %v5754
        %v5756 = vpop.f32.mrf.mxu0
        %v5757 = vadd.f32 %v5743, %v5756
        %5758 = vdwg.mxu0
        %5759 = vmatpush.bf16.msra.mxu0 %v5567
        %5760 = vmatpush.bf16.msra.mxu0 %v5563
        %5761 = vmatpush.bf16.msra.mxu0 %v5559
        %5762 = vmatpush.bf16.msra.mxu0 %v5555
        %5763 = vmatpush.bf16.msra.mxu0 %v5551
        %5764 = vmatpush.bf16.msra.mxu0 %v5547
        %5765 = vmatpush.bf16.msra.mxu0 %v5543
        %5766 = vmatpush.bf16.msra.mxu0 %v5539
        %5767 = vmatmul.bf16.gmra.mxu0 %v4951
        %v5768 = vpop.f32.mrf.mxu0
        %v5769 = vadd.f32 %v5755, %v5768
        %v5770 = vpop.f32.mrf.mxu0
        %v5771 = vadd.f32 %v5757, %v5770
        %5772 = vdwg.mxu0
        %5773 = vmatpush.bf16.msra.mxu0 %v5599
        %5774 = vmatpush.bf16.msra.mxu0 %v5595
        %5775 = vmatpush.bf16.msra.mxu0 %v5591
        %5776 = vmatpush.bf16.msra.mxu0 %v5587
        %5777 = vmatpush.bf16.msra.mxu0 %v5583
        %5778 = vmatpush.bf16.msra.mxu0 %v5579
        %5779 = vmatpush.bf16.msra.mxu0 %v5575
        %5780 = vmatpush.bf16.msra.mxu0 %v5571
        %5781 = vmatmul.bf16.gmra.mxu0 %v4952
        %v5782 = vpop.f32.mrf.mxu0
        %v5783 = vadd.f32 %v5769, %v5782
        %v5784 = vpop.f32.mrf.mxu0
        %v5785 = vadd.f32 %v5771, %v5784
        %5786 = vdwg.mxu0
        %5787 = vmatpush.bf16.msra.mxu0 %v5504
        %5788 = vmatpush.bf16.msra.mxu0 %v5500
        %5789 = vmatpush.bf16.msra.mxu0 %v5496
        %5790 = vmatpush.bf16.msra.mxu0 %v5492
        %5791 = vmatpush.bf16.msra.mxu0 %v5488
        %5792 = vmatpush.bf16.msra.mxu0 %v5484
        %5793 = vmatpush.bf16.msra.mxu0 %v5480
        %5794 = vmatpush.bf16.msra.mxu0 %v5476
        %5795 = vmatmul.bf16.gmra.mxu0 %v4949
        %v5796 = vpop.f32.mrf.mxu0
        %v5797 = vadd.f32 %v5084, %v5796
        %v5798 = vpop.f32.mrf.mxu0
        %v5799 = vadd.f32 %v5084, %v5798
        %5800 = vdwg.mxu0
        %5801 = vmatpush.bf16.msra.mxu0 %v5536
        %5802 = vmatpush.bf16.msra.mxu0 %v5532
        %5803 = vmatpush.bf16.msra.mxu0 %v5528
        %5804 = vmatpush.bf16.msra.mxu0 %v5524
        %5805 = vmatpush.bf16.msra.mxu0 %v5520
        %5806 = vmatpush.bf16.msra.mxu0 %v5516
        %5807 = vmatpush.bf16.msra.mxu0 %v5512
        %5808 = vmatpush.bf16.msra.mxu0 %v5508
        %5809 = vmatmul.bf16.gmra.mxu0 %v4950
        %v5810 = vpop.f32.mrf.mxu0
        %v5811 = vadd.f32 %v5797, %v5810
        %v5812 = vpop.f32.mrf.mxu0
        %v5813 = vadd.f32 %v5799, %v5812
        %5814 = vdwg.mxu0
        %5815 = vmatpush.bf16.msra.mxu0 %v5568
        %5816 = vmatpush.bf16.msra.mxu0 %v5564
        %5817 = vmatpush.bf16.msra.mxu0 %v5560
        %5818 = vmatpush.bf16.msra.mxu0 %v5556
        %5819 = vmatpush.bf16.msra.mxu0 %v5552
        %5820 = vmatpush.bf16.msra.mxu0 %v5548
        %5821 = vmatpush.bf16.msra.mxu0 %v5544
        %5822 = vmatpush.bf16.msra.mxu0 %v5540
        %5823 = vmatmul.bf16.gmra.mxu0 %v4951
        %v5824 = vpop.f32.mrf.mxu0
        %v5825 = vadd.f32 %v5811, %v5824
        %v5826 = vpop.f32.mrf.mxu0
        %v5827 = vadd.f32 %v5813, %v5826
        %5828 = vdwg.mxu0
        %5829 = vmatpush.bf16.msra.mxu0 %v5600
        %5830 = vmatpush.bf16.msra.mxu0 %v5596
        %5831 = vmatpush.bf16.msra.mxu0 %v5592
        %5832 = vmatpush.bf16.msra.mxu0 %v5588
        %5833 = vmatpush.bf16.msra.mxu0 %v5584
        %5834 = vmatpush.bf16.msra.mxu0 %v5580
        %5835 = vmatpush.bf16.msra.mxu0 %v5576
        %5836 = vmatpush.bf16.msra.mxu0 %v5572
        %5837 = vmatmul.bf16.gmra.mxu0 %v4952
        %v5838 = vpop.f32.mrf.mxu0
        %v5839 = vadd.f32 %v5825, %v5838
        %v5840 = vpop.f32.mrf.mxu0
        %v5841 = vadd.f32 %v5827, %v5840
        %5842 = vdwg.mxu0
        %5843 = vmatpush.bf16.msra.mxu0 %v5505
        %5844 = vmatpush.bf16.msra.mxu0 %v5501
        %5845 = vmatpush.bf16.msra.mxu0 %v5497
        %5846 = vmatpush.bf16.msra.mxu0 %v5493
        %5847 = vmatpush.bf16.msra.mxu0 %v5489
        %5848 = vmatpush.bf16.msra.mxu0 %v5485
        %5849 = vmatpush.bf16.msra.mxu0 %v5481
        %5850 = vmatpush.bf16.msra.mxu0 %v5477
        %5851 = vmatmul.bf16.gmra.mxu0 %v4949
        %v5852 = vpop.f32.mrf.mxu0
        %v5853 = vadd.f32 %v5085, %v5852
        %v5854 = vpop.f32.mrf.mxu0
        %v5855 = vadd.f32 %v5085, %v5854
        %5856 = vdwg.mxu0
        %5857 = vmatpush.bf16.msra.mxu0 %v5537
        %5858 = vmatpush.bf16.msra.mxu0 %v5533
        %5859 = vmatpush.bf16.msra.mxu0 %v5529
        %5860 = vmatpush.bf16.msra.mxu0 %v5525
        %5861 = vmatpush.bf16.msra.mxu0 %v5521
        %5862 = vmatpush.bf16.msra.mxu0 %v5517
        %5863 = vmatpush.bf16.msra.mxu0 %v5513
        %5864 = vmatpush.bf16.msra.mxu0 %v5509
        %5865 = vmatmul.bf16.gmra.mxu0 %v4950
        %v5866 = vpop.f32.mrf.mxu0
        %v5867 = vadd.f32 %v5853, %v5866
        %v5868 = vpop.f32.mrf.mxu0
        %v5869 = vadd.f32 %v5855, %v5868
        %5870 = vdwg.mxu0
        %5871 = vmatpush.bf16.msra.mxu0 %v5569
        %5872 = vmatpush.bf16.msra.mxu0 %v5565
        %5873 = vmatpush.bf16.msra.mxu0 %v5561
        %5874 = vmatpush.bf16.msra.mxu0 %v5557
        %5875 = vmatpush.bf16.msra.mxu0 %v5553
        %5876 = vmatpush.bf16.msra.mxu0 %v5549
        %5877 = vmatpush.bf16.msra.mxu0 %v5545
        %5878 = vmatpush.bf16.msra.mxu0 %v5541
        %5879 = vmatmul.bf16.gmra.mxu0 %v4951
        %v5880 = vpop.f32.mrf.mxu0
        %v5881 = vadd.f32 %v5867, %v5880
        %v5882 = vpop.f32.mrf.mxu0
        %v5883 = vadd.f32 %v5869, %v5882
        %5884 = vdwg.mxu0
        %5885 = vmatpush.bf16.msra.mxu0 %v5601
        %5886 = vmatpush.bf16.msra.mxu0 %v5597
        %5887 = vmatpush.bf16.msra.mxu0 %v5593
        %5888 = vmatpush.bf16.msra.mxu0 %v5589
        %5889 = vmatpush.bf16.msra.mxu0 %v5585
        %5890 = vmatpush.bf16.msra.mxu0 %v5581
        %5891 = vmatpush.bf16.msra.mxu0 %v5577
        %5892 = vmatpush.bf16.msra.mxu0 %v5573
        %5893 = vmatmul.bf16.gmra.mxu0 %v4952
        %v5894 = vpop.f32.mrf.mxu0
        %v5895 = vadd.f32 %v5881, %v5894
        %v5896 = vpop.f32.mrf.mxu0
        %v5897 = vadd.f32 %v5883, %v5896
        %5898 = vdwg.mxu0
        %5899 = vmatpush.bf16.msra.mxu0 %v5506
        %5900 = vmatpush.bf16.msra.mxu0 %v5502
        %5901 = vmatpush.bf16.msra.mxu0 %v5498
        %5902 = vmatpush.bf16.msra.mxu0 %v5494
        %5903 = vmatpush.bf16.msra.mxu0 %v5490
        %5904 = vmatpush.bf16.msra.mxu0 %v5486
        %5905 = vmatpush.bf16.msra.mxu0 %v5482
        %5906 = vmatpush.bf16.msra.mxu0 %v5478
        %5907 = vmatmul.bf16.gmra.mxu0 %v4949
        %v5908 = vpop.f32.mrf.mxu0
        %v5909 = vadd.f32 %v5086, %v5908
        %v5910 = vpop.f32.mrf.mxu0
        %v5911 = vadd.f32 %v5086, %v5910
        %5912 = vdwg.mxu0
        %5913 = vmatpush.bf16.msra.mxu0 %v5538
        %5914 = vmatpush.bf16.msra.mxu0 %v5534
        %5915 = vmatpush.bf16.msra.mxu0 %v5530
        %5916 = vmatpush.bf16.msra.mxu0 %v5526
        %5917 = vmatpush.bf16.msra.mxu0 %v5522
        %5918 = vmatpush.bf16.msra.mxu0 %v5518
        %5919 = vmatpush.bf16.msra.mxu0 %v5514
        %5920 = vmatpush.bf16.msra.mxu0 %v5510
        %5921 = vmatmul.bf16.gmra.mxu0 %v4950
        %v5922 = vpop.f32.mrf.mxu0
        %v5923 = vadd.f32 %v5909, %v5922
        %v5924 = vpop.f32.mrf.mxu0
        %v5925 = vadd.f32 %v5911, %v5924
        %5926 = vdwg.mxu0
        %5927 = vmatpush.bf16.msra.mxu0 %v5570
        %5928 = vmatpush.bf16.msra.mxu0 %v5566
        %5929 = vmatpush.bf16.msra.mxu0 %v5562
        %5930 = vmatpush.bf16.msra.mxu0 %v5558
        %5931 = vmatpush.bf16.msra.mxu0 %v5554
        %5932 = vmatpush.bf16.msra.mxu0 %v5550
        %5933 = vmatpush.bf16.msra.mxu0 %v5546
        %5934 = vmatpush.bf16.msra.mxu0 %v5542
        %5935 = vmatmul.bf16.gmra.mxu0 %v4951
        %v5936 = vpop.f32.mrf.mxu0
        %v5937 = vadd.f32 %v5923, %v5936
        %v5938 = vpop.f32.mrf.mxu0
        %v5939 = vadd.f32 %v5925, %v5938
        %5940 = vdwg.mxu0
        %5941 = vmatpush.bf16.msra.mxu0 %v5602
        %5942 = vmatpush.bf16.msra.mxu0 %v5598
        %5943 = vmatpush.bf16.msra.mxu0 %v5594
        %5944 = vmatpush.bf16.msra.mxu0 %v5590
        %5945 = vmatpush.bf16.msra.mxu0 %v5586
        %5946 = vmatpush.bf16.msra.mxu0 %v5582
        %5947 = vmatpush.bf16.msra.mxu0 %v5578
        %5948 = vmatpush.bf16.msra.mxu0 %v5574
        %5949 = vmatmul.bf16.gmra.mxu0 %v4952
        %v5950 = vpop.f32.mrf.mxu0
        %v5951 = vadd.f32 %v5937, %v5950
        %v5952 = vpop.f32.mrf.mxu0
        %v5953 = vadd.f32 %v5939, %v5952
        %5954 = vdwg.mxu0
        %v5955 = vadd.f32 %v5783, %v911
        %v5956 = vadd.f32 %v5839, %v912
        %v5957 = vadd.f32 %v5895, %v913
        %v5958 = vadd.f32 %v5951, %v914
        %v5959 = vadd.f32 %v5785, %v915
        %v5960 = vadd.f32 %v5841, %v916
        %v5961 = vadd.f32 %v5897, %v917
        %v5962 = vadd.f32 %v5953, %v918
        %v5963 = vld [vmem:[%s746] sm:$0xf]
        %v5964 = vld [vmem:[%s756] sm:$0xf]
        %v5965 = vrot.slane %v5957, 4
        %v5966 = vsel %vm922, %v5965, %v5955
        %v5967 = vrot.slane %v5955, 4
        %v5968 = vsel %vm922, %v5957, %v5967
        %v5970 = vunpack.c.l.s4 1983009808
        %v5971 = vunpack.c.0.s8 %v5970
        %v5972 = vperm.slane %v5966, %v5971
        %v5974 = vunpack.c.l.s4 1983009808
        %v5975 = vunpack.c.0.s8 %v5974
        %v5976 = vperm.slane %v5968, %v5975
        %v5977 = vrot.slane %v5958, 4
        %v5978 = vsel %vm922, %v5977, %v5956
        %v5979 = vrot.slane %v5956, 4
        %v5980 = vsel %vm922, %v5958, %v5979
        %v5982 = vunpack.c.l.s4 1983009808
        %v5983 = vunpack.c.0.s8 %v5982
        %v5984 = vperm.slane %v5978, %v5983
        %v5986 = vunpack.c.l.s4 1983009808
        %v5987 = vunpack.c.0.s8 %v5986
        %v5988 = vperm.slane %v5980, %v5987
        %v5989 = vrot.slane %v5984, 4
        %v5990 = vsel %vm922, %v5989, %v5972
        %v5991 = vrot.slane %v5972, 4
        %v5992 = vsel %vm922, %v5984, %v5991
        %v5994 = vunpack.c.l.s4 1934713408
        %v5995 = vunpack.c.0.s8 %v5994
        %v5996 = vperm.slane %v5990, %v5995
        %v5998 = vunpack.c.l.s4 1934713408
        %v5999 = vunpack.c.0.s8 %v5998
        %v6000 = vperm.slane %v5992, %v5999
        %v6001 = vrot.slane %v5988, 4
        %v6002 = vsel %vm922, %v6001, %v5976
        %v6003 = vrot.slane %v5976, 4
        %v6004 = vsel %vm922, %v5988, %v6003
        %v6006 = vunpack.c.l.s4 1934713408
        %v6007 = vunpack.c.0.s8 %v6006
        %v6008 = vperm.slane %v6002, %v6007
        %v6010 = vunpack.c.l.s4 1934713408
        %v6011 = vunpack.c.0.s8 %v6010
        %v6012 = vperm.slane %v6004, %v6011
        %v6013 = vrot.slane %v5996, 4
        %v6014 = vsel %vm922, 0.0, %v6013
        %v6015 = vrot.slane %v6000, 4
        %v6016 = vsel %vm922, 0.0, %v6015
        %v6017 = vrot.slane %v6008, 4
        %v6018 = vsel %vm922, 0.0, %v6017
        %v6019 = vrot.slane %v6012, 4
        %v6020 = vsel %vm922, 0.0, %v6019
        %v6021 = vrot.slane %v5961, 4
        %v6022 = vsel %vm922, %v6021, %v5959
        %v6023 = vrot.slane %v5959, 4
        %v6024 = vsel %vm922, %v5961, %v6023
        %v6026 = vunpack.c.l.s4 1983009808
        %v6027 = vunpack.c.0.s8 %v6026
        %v6028 = vperm.slane %v6022, %v6027
        %v6030 = vunpack.c.l.s4 1983009808
        %v6031 = vunpack.c.0.s8 %v6030
        %v6032 = vperm.slane %v6024, %v6031
        %v6033 = vrot.slane %v5962, 4
        %v6034 = vsel %vm922, %v6033, %v5960
        %v6035 = vrot.slane %v5960, 4
        %v6036 = vsel %vm922, %v5962, %v6035
        %v6038 = vunpack.c.l.s4 1983009808
        %v6039 = vunpack.c.0.s8 %v6038
        %v6040 = vperm.slane %v6034, %v6039
        %v6042 = vunpack.c.l.s4 1983009808
        %v6043 = vunpack.c.0.s8 %v6042
        %v6044 = vperm.slane %v6036, %v6043
        %v6045 = vrot.slane %v6040, 4
        %v6046 = vsel %vm922, %v6045, %v6028
        %v6047 = vrot.slane %v6028, 4
        %v6048 = vsel %vm922, %v6040, %v6047
        %v6050 = vunpack.c.l.s4 1934713408
        %v6051 = vunpack.c.0.s8 %v6050
        %v6052 = vperm.slane %v6046, %v6051
        %v6054 = vunpack.c.l.s4 1934713408
        %v6055 = vunpack.c.0.s8 %v6054
        %v6056 = vperm.slane %v6048, %v6055
        %v6057 = vrot.slane %v6044, 4
        %v6058 = vsel %vm922, %v6057, %v6032
        %v6059 = vrot.slane %v6032, 4
        %v6060 = vsel %vm922, %v6044, %v6059
        %v6062 = vunpack.c.l.s4 1934713408
        %v6063 = vunpack.c.0.s8 %v6062
        %v6064 = vperm.slane %v6058, %v6063
        %v6066 = vunpack.c.l.s4 1934713408
        %v6067 = vunpack.c.0.s8 %v6066
        %v6068 = vperm.slane %v6060, %v6067
        %v6069 = vrot.slane %v6052, 4
        %v6070 = vsel %vm922, 0.0, %v6069
        %v6071 = vrot.slane %v6056, 4
        %v6072 = vsel %vm922, 0.0, %v6071
        %v6073 = vrot.slane %v6064, 4
        %v6074 = vsel %vm922, 0.0, %v6073
        %v6075 = vrot.slane %v6068, 4
        %v6076 = vsel %vm922, 0.0, %v6075
        %v6077 = vsel %vm1034, %v5996, 0.0
        %6078 = vadd.xlane.f32.xlu0 %v6077
        %v6079 = vpop.xlane.xlu0 %6078
        %v6080 = vsel %vm1034, %v6014, 0.0
        %6081 = vadd.xlane.f32.xlu0 %v6080
        %v6082 = vpop.xlane.xlu0 %6081
        %v6083 = vsel %vm1034, %v6000, 0.0
        %6084 = vadd.xlane.f32.xlu0 %v6083
        %v6085 = vpop.xlane.xlu0 %6084
        %v6086 = vsel %vm1034, %v6016, 0.0
        %6087 = vadd.xlane.f32.xlu0 %v6086
        %v6088 = vpop.xlane.xlu0 %6087
        %v6089 = vsel %vm1034, %v6008, 0.0
        %6090 = vadd.xlane.f32.xlu0 %v6089
        %v6091 = vpop.xlane.xlu0 %6090
        %v6092 = vsel %vm1034, %v6018, 0.0
        %6093 = vadd.xlane.f32.xlu0 %v6092
        %v6094 = vpop.xlane.xlu0 %6093
        %v6095 = vsel %vm1034, %v6012, 0.0
        %6096 = vadd.xlane.f32.xlu0 %v6095
        %v6097 = vpop.xlane.xlu0 %6096
        %v6098 = vsel %vm1034, %v6020, 0.0
        %6099 = vadd.xlane.f32.xlu0 %v6098
        %v6100 = vpop.xlane.xlu0 %6099
        %v6101 = vsel %vm1034, %v6052, 0.0
        %6102 = vadd.xlane.f32.xlu0 %v6101
        %v6103 = vpop.xlane.xlu0 %6102
        %v6104 = vsel %vm1034, %v6070, 0.0
        %6105 = vadd.xlane.f32.xlu0 %v6104
        %v6106 = vpop.xlane.xlu0 %6105
        %v6107 = vsel %vm1034, %v6056, 0.0
        %6108 = vadd.xlane.f32.xlu0 %v6107
        %v6109 = vpop.xlane.xlu0 %6108
        %v6110 = vsel %vm1034, %v6072, 0.0
        %6111 = vadd.xlane.f32.xlu0 %v6110
        %v6112 = vpop.xlane.xlu0 %6111
        %v6113 = vsel %vm1034, %v6064, 0.0
        %6114 = vadd.xlane.f32.xlu0 %v6113
        %v6115 = vpop.xlane.xlu0 %6114
        %v6116 = vsel %vm1034, %v6074, 0.0
        %6117 = vadd.xlane.f32.xlu0 %v6116
        %v6118 = vpop.xlane.xlu0 %6117
        %v6119 = vsel %vm1034, %v6068, 0.0
        %6120 = vadd.xlane.f32.xlu0 %v6119
        %v6121 = vpop.xlane.xlu0 %6120
        %v6122 = vsel %vm1034, %v6076, 0.0
        %6123 = vadd.xlane.f32.xlu0 %v6122
        %v6124 = vpop.xlane.xlu0 %6123
        %v6125 = vmul.f32 %v6079, %v1089
        %v6126 = vmul.f32 %v6082, %v1089
        %v6127 = vmul.f32 %v6085, %v1089
        %v6128 = vmul.f32 %v6088, %v1089
        %v6129 = vmul.f32 %v6091, %v1089
        %v6130 = vmul.f32 %v6094, %v1089
        %v6131 = vmul.f32 %v6097, %v1089
        %v6132 = vmul.f32 %v6100, %v1089
        %v6133 = vmul.f32 %v6103, %v1089
        %v6134 = vmul.f32 %v6106, %v1089
        %v6135 = vmul.f32 %v6109, %v1089
        %v6136 = vmul.f32 %v6112, %v1089
        %v6137 = vmul.f32 %v6115, %v1089
        %v6138 = vmul.f32 %v6118, %v1089
        %v6139 = vmul.f32 %v6121, %v1089
        %v6140 = vmul.f32 %v6124, %v1089
        %v6141 = vsub.f32 %v5996, %v6125
        %v6142 = vsub.f32 %v6014, %v6126
        %v6143 = vsub.f32 %v6000, %v6127
        %v6144 = vsub.f32 %v6016, %v6128
        %v6145 = vsub.f32 %v6008, %v6129
        %v6146 = vsub.f32 %v6018, %v6130
        %v6147 = vsub.f32 %v6012, %v6131
        %v6148 = vsub.f32 %v6020, %v6132
        %v6149 = vsub.f32 %v6052, %v6133
        %v6150 = vsub.f32 %v6070, %v6134
        %v6151 = vsub.f32 %v6056, %v6135
        %v6152 = vsub.f32 %v6072, %v6136
        %v6153 = vsub.f32 %v6064, %v6137
        %v6154 = vsub.f32 %v6074, %v6138
        %v6155 = vsub.f32 %v6068, %v6139
        %v6156 = vsub.f32 %v6076, %v6140
        %v6157 = vmul.f32 %v6141, %v6141
        %v6158 = vmul.f32 %v6142, %v6142
        %v6159 = vmul.f32 %v6143, %v6143
        %v6160 = vmul.f32 %v6144, %v6144
        %v6161 = vmul.f32 %v6145, %v6145
        %v6162 = vmul.f32 %v6146, %v6146
        %v6163 = vmul.f32 %v6147, %v6147
        %v6164 = vmul.f32 %v6148, %v6148
        %v6165 = vmul.f32 %v6149, %v6149
        %v6166 = vmul.f32 %v6150, %v6150
        %v6167 = vmul.f32 %v6151, %v6151
        %v6168 = vmul.f32 %v6152, %v6152
        %v6169 = vmul.f32 %v6153, %v6153
        %v6170 = vmul.f32 %v6154, %v6154
        %v6171 = vmul.f32 %v6155, %v6155
        %v6172 = vmul.f32 %v6156, %v6156
        %v6173 = vsel %vm1034, %v6157, 0.0
        %6174 = vadd.xlane.f32.xlu0 %v6173
        %v6175 = vpop.xlane.xlu0 %6174
        %v6176 = vsel %vm1034, %v6158, 0.0
        %6177 = vadd.xlane.f32.xlu0 %v6176
        %v6178 = vpop.xlane.xlu0 %6177
        %v6179 = vsel %vm1034, %v6159, 0.0
        %6180 = vadd.xlane.f32.xlu0 %v6179
        %v6181 = vpop.xlane.xlu0 %6180
        %v6182 = vsel %vm1034, %v6160, 0.0
        %6183 = vadd.xlane.f32.xlu0 %v6182
        %v6184 = vpop.xlane.xlu0 %6183
        %v6185 = vsel %vm1034, %v6161, 0.0
        %6186 = vadd.xlane.f32.xlu0 %v6185
        %v6187 = vpop.xlane.xlu0 %6186
        %v6188 = vsel %vm1034, %v6162, 0.0
        %6189 = vadd.xlane.f32.xlu0 %v6188
        %v6190 = vpop.xlane.xlu0 %6189
        %v6191 = vsel %vm1034, %v6163, 0.0
        %6192 = vadd.xlane.f32.xlu0 %v6191
        %v6193 = vpop.xlane.xlu0 %6192
        %v6194 = vsel %vm1034, %v6164, 0.0
        %6195 = vadd.xlane.f32.xlu0 %v6194
        %v6196 = vpop.xlane.xlu0 %6195
        %v6197 = vsel %vm1034, %v6165, 0.0
        %6198 = vadd.xlane.f32.xlu0 %v6197
        %v6199 = vpop.xlane.xlu0 %6198
        %v6200 = vsel %vm1034, %v6166, 0.0
        %6201 = vadd.xlane.f32.xlu0 %v6200
        %v6202 = vpop.xlane.xlu0 %6201
        %v6203 = vsel %vm1034, %v6167, 0.0
        %6204 = vadd.xlane.f32.xlu0 %v6203
        %v6205 = vpop.xlane.xlu0 %6204
        %v6206 = vsel %vm1034, %v6168, 0.0
        %6207 = vadd.xlane.f32.xlu0 %v6206
        %v6208 = vpop.xlane.xlu0 %6207
        %v6209 = vsel %vm1034, %v6169, 0.0
        %6210 = vadd.xlane.f32.xlu0 %v6209
        %v6211 = vpop.xlane.xlu0 %6210
        %v6212 = vsel %vm1034, %v6170, 0.0
        %6213 = vadd.xlane.f32.xlu0 %v6212
        %v6214 = vpop.xlane.xlu0 %6213
        %v6215 = vsel %vm1034, %v6171, 0.0
        %6216 = vadd.xlane.f32.xlu0 %v6215
        %v6217 = vpop.xlane.xlu0 %6216
        %v6218 = vsel %vm1034, %v6172, 0.0
        %6219 = vadd.xlane.f32.xlu0 %v6218
        %v6220 = vpop.xlane.xlu0 %6219
        %v6221 = vmul.f32 %v6175, %v1089
        %v6222 = vmul.f32 %v6178, %v1089
        %v6223 = vmul.f32 %v6181, %v1089
        %v6224 = vmul.f32 %v6184, %v1089
        %v6225 = vmul.f32 %v6187, %v1089
        %v6226 = vmul.f32 %v6190, %v1089
        %v6227 = vmul.f32 %v6193, %v1089
        %v6228 = vmul.f32 %v6196, %v1089
        %v6229 = vmul.f32 %v6199, %v1089
        %v6230 = vmul.f32 %v6202, %v1089
        %v6231 = vmul.f32 %v6205, %v1089
        %v6232 = vmul.f32 %v6208, %v1089
        %v6233 = vmul.f32 %v6211, %v1089
        %v6234 = vmul.f32 %v6214, %v1089
        %v6235 = vmul.f32 %v6217, %v1089
        %v6236 = vmul.f32 %v6220, %v1089
        %v6237 = vadd.f32 %v6221, 1e-05
        %v6238 = vadd.f32 %v6222, 1e-05
        %v6239 = vadd.f32 %v6223, 1e-05
        %v6240 = vadd.f32 %v6224, 1e-05
        %v6241 = vadd.f32 %v6225, 1e-05
        %v6242 = vadd.f32 %v6226, 1e-05
        %v6243 = vadd.f32 %v6227, 1e-05
        %v6244 = vadd.f32 %v6228, 1e-05
        %v6245 = vadd.f32 %v6229, 1e-05
        %v6246 = vadd.f32 %v6230, 1e-05
        %v6247 = vadd.f32 %v6231, 1e-05
        %v6248 = vadd.f32 %v6232, 1e-05
        %v6249 = vadd.f32 %v6233, 1e-05
        %v6250 = vadd.f32 %v6234, 1e-05
        %v6251 = vadd.f32 %v6235, 1e-05
        %v6252 = vadd.f32 %v6236, 1e-05
        %v6253 = vrsqrt.pop %v6237
        %v6254 = vmul.f32 %v6253, %v6237
        %v6255 = vmul.f32 %v6254, %v6253
        %v6256 = vmul.f32 0.5, %v6255
        %v6257 = vsub.f32 1.5, %v6256
        %v6258 = vmul.f32 %v6253, %v6257
        %vm6259 = vweird.f32 %v6237
        %vm6260 = vweird.f32 %v6253
        %vm6261 = vmor %vm6259, %vm6260
        %v6262 = vsel %vm6261, %v6253, %v6258
        %v6263 = vrsqrt.pop %v6238
        %v6264 = vmul.f32 %v6263, %v6238
        %v6265 = vmul.f32 %v6264, %v6263
        %v6266 = vmul.f32 0.5, %v6265
        %v6267 = vsub.f32 1.5, %v6266
        %v6268 = vmul.f32 %v6263, %v6267
        %vm6269 = vweird.f32 %v6238
        %vm6270 = vweird.f32 %v6263
        %vm6271 = vmor %vm6269, %vm6270
        %v6272 = vsel %vm6271, %v6263, %v6268
        %v6273 = vrsqrt.pop %v6239
        %v6274 = vmul.f32 %v6273, %v6239
        %v6275 = vmul.f32 %v6274, %v6273
        %v6276 = vmul.f32 0.5, %v6275
        %v6277 = vsub.f32 1.5, %v6276
        %v6278 = vmul.f32 %v6273, %v6277
        %vm6279 = vweird.f32 %v6239
        %vm6280 = vweird.f32 %v6273
        %vm6281 = vmor %vm6279, %vm6280
        %v6282 = vsel %vm6281, %v6273, %v6278
        %v6283 = vrsqrt.pop %v6240
        %v6284 = vmul.f32 %v6283, %v6240
        %v6285 = vmul.f32 %v6284, %v6283
        %v6286 = vmul.f32 0.5, %v6285
        %v6287 = vsub.f32 1.5, %v6286
        %v6288 = vmul.f32 %v6283, %v6287
        %vm6289 = vweird.f32 %v6240
        %vm6290 = vweird.f32 %v6283
        %vm6291 = vmor %vm6289, %vm6290
        %v6292 = vsel %vm6291, %v6283, %v6288
        %v6293 = vrsqrt.pop %v6241
        %v6294 = vmul.f32 %v6293, %v6241
        %v6295 = vmul.f32 %v6294, %v6293
        %v6296 = vmul.f32 0.5, %v6295
        %v6297 = vsub.f32 1.5, %v6296
        %v6298 = vmul.f32 %v6293, %v6297
        %vm6299 = vweird.f32 %v6241
        %vm6300 = vweird.f32 %v6293
        %vm6301 = vmor %vm6299, %vm6300
        %v6302 = vsel %vm6301, %v6293, %v6298
        %v6303 = vrsqrt.pop %v6242
        %v6304 = vmul.f32 %v6303, %v6242
        %v6305 = vmul.f32 %v6304, %v6303
        %v6306 = vmul.f32 0.5, %v6305
        %v6307 = vsub.f32 1.5, %v6306
        %v6308 = vmul.f32 %v6303, %v6307
        %vm6309 = vweird.f32 %v6242
        %vm6310 = vweird.f32 %v6303
        %vm6311 = vmor %vm6309, %vm6310
        %v6312 = vsel %vm6311, %v6303, %v6308
        %v6313 = vrsqrt.pop %v6243
        %v6314 = vmul.f32 %v6313, %v6243
        %v6315 = vmul.f32 %v6314, %v6313
        %v6316 = vmul.f32 0.5, %v6315
        %v6317 = vsub.f32 1.5, %v6316
        %v6318 = vmul.f32 %v6313, %v6317
        %vm6319 = vweird.f32 %v6243
        %vm6320 = vweird.f32 %v6313
        %vm6321 = vmor %vm6319, %vm6320
        %v6322 = vsel %vm6321, %v6313, %v6318
        %v6323 = vrsqrt.pop %v6244
        %v6324 = vmul.f32 %v6323, %v6244
        %v6325 = vmul.f32 %v6324, %v6323
        %v6326 = vmul.f32 0.5, %v6325
        %v6327 = vsub.f32 1.5, %v6326
        %v6328 = vmul.f32 %v6323, %v6327
        %vm6329 = vweird.f32 %v6244
        %vm6330 = vweird.f32 %v6323
        %vm6331 = vmor %vm6329, %vm6330
        %v6332 = vsel %vm6331, %v6323, %v6328
        %v6333 = vrsqrt.pop %v6245
        %v6334 = vmul.f32 %v6333, %v6245
        %v6335 = vmul.f32 %v6334, %v6333
        %v6336 = vmul.f32 0.5, %v6335
        %v6337 = vsub.f32 1.5, %v6336
        %v6338 = vmul.f32 %v6333, %v6337
        %vm6339 = vweird.f32 %v6245
        %vm6340 = vweird.f32 %v6333
        %vm6341 = vmor %vm6339, %vm6340
        %v6342 = vsel %vm6341, %v6333, %v6338
        %v6343 = vrsqrt.pop %v6246
        %v6344 = vmul.f32 %v6343, %v6246
        %v6345 = vmul.f32 %v6344, %v6343
        %v6346 = vmul.f32 0.5, %v6345
        %v6347 = vsub.f32 1.5, %v6346
        %v6348 = vmul.f32 %v6343, %v6347
        %vm6349 = vweird.f32 %v6246
        %vm6350 = vweird.f32 %v6343
        %vm6351 = vmor %vm6349, %vm6350
        %v6352 = vsel %vm6351, %v6343, %v6348
        %v6353 = vrsqrt.pop %v6247
        %v6354 = vmul.f32 %v6353, %v6247
        %v6355 = vmul.f32 %v6354, %v6353
        %v6356 = vmul.f32 0.5, %v6355
        %v6357 = vsub.f32 1.5, %v6356
        %v6358 = vmul.f32 %v6353, %v6357
        %vm6359 = vweird.f32 %v6247
        %vm6360 = vweird.f32 %v6353
        %vm6361 = vmor %vm6359, %vm6360
        %v6362 = vsel %vm6361, %v6353, %v6358
        %v6363 = vrsqrt.pop %v6248
        %v6364 = vmul.f32 %v6363, %v6248
        %v6365 = vmul.f32 %v6364, %v6363
        %v6366 = vmul.f32 0.5, %v6365
        %v6367 = vsub.f32 1.5, %v6366
        %v6368 = vmul.f32 %v6363, %v6367
        %vm6369 = vweird.f32 %v6248
        %vm6370 = vweird.f32 %v6363
        %vm6371 = vmor %vm6369, %vm6370
        %v6372 = vsel %vm6371, %v6363, %v6368
        %v6373 = vrsqrt.pop %v6249
        %v6374 = vmul.f32 %v6373, %v6249
        %v6375 = vmul.f32 %v6374, %v6373
        %v6376 = vmul.f32 0.5, %v6375
        %v6377 = vsub.f32 1.5, %v6376
        %v6378 = vmul.f32 %v6373, %v6377
        %vm6379 = vweird.f32 %v6249
        %vm6380 = vweird.f32 %v6373
        %vm6381 = vmor %vm6379, %vm6380
        %v6382 = vsel %vm6381, %v6373, %v6378
        %v6383 = vrsqrt.pop %v6250
        %v6384 = vmul.f32 %v6383, %v6250
        %v6385 = vmul.f32 %v6384, %v6383
        %v6386 = vmul.f32 0.5, %v6385
        %v6387 = vsub.f32 1.5, %v6386
        %v6388 = vmul.f32 %v6383, %v6387
        %vm6389 = vweird.f32 %v6250
        %vm6390 = vweird.f32 %v6383
        %vm6391 = vmor %vm6389, %vm6390
        %v6392 = vsel %vm6391, %v6383, %v6388
        %v6393 = vrsqrt.pop %v6251
        %v6394 = vmul.f32 %v6393, %v6251
        %v6395 = vmul.f32 %v6394, %v6393
        %v6396 = vmul.f32 0.5, %v6395
        %v6397 = vsub.f32 1.5, %v6396
        %v6398 = vmul.f32 %v6393, %v6397
        %vm6399 = vweird.f32 %v6251
        %vm6400 = vweird.f32 %v6393
        %vm6401 = vmor %vm6399, %vm6400
        %v6402 = vsel %vm6401, %v6393, %v6398
        %v6403 = vrsqrt.pop %v6252
        %v6404 = vmul.f32 %v6403, %v6252
        %v6405 = vmul.f32 %v6404, %v6403
        %v6406 = vmul.f32 0.5, %v6405
        %v6407 = vsub.f32 1.5, %v6406
        %v6408 = vmul.f32 %v6403, %v6407
        %vm6409 = vweird.f32 %v6252
        %vm6410 = vweird.f32 %v6403
        %vm6411 = vmor %vm6409, %vm6410
        %v6412 = vsel %vm6411, %v6403, %v6408
        %v6413 = vmul.f32 %v6141, %v6262
        %v6414 = vmul.f32 %v6142, %v6272
        %v6415 = vmul.f32 %v6143, %v6282
        %v6416 = vmul.f32 %v6144, %v6292
        %v6417 = vmul.f32 %v6145, %v6302
        %v6418 = vmul.f32 %v6146, %v6312
        %v6419 = vmul.f32 %v6147, %v6322
        %v6420 = vmul.f32 %v6148, %v6332
        %v6421 = vmul.f32 %v6149, %v6342
        %v6422 = vmul.f32 %v6150, %v6352
        %v6423 = vmul.f32 %v6151, %v6362
        %v6424 = vmul.f32 %v6152, %v6372
        %v6425 = vmul.f32 %v6153, %v6382
        %v6426 = vmul.f32 %v6154, %v6392
        %v6427 = vmul.f32 %v6155, %v6402
        %v6428 = vmul.f32 %v6156, %v6412
        %v6429 = vrot.slane %v6415, 4
        %v6430 = vsel %vm922, %v6429, %v6413
        %v6432 = vunpack.c.l.s4 1983009808
        %v6433 = vunpack.c.0.s8 %v6432
        %v6434 = vperm.slane %v6430, %v6433
        %v6435 = vrot.slane %v6416, 4
        %v6436 = vsel %vm922, %v6435, %v6414
        %v6438 = vunpack.c.l.s4 1983009808
        %v6439 = vunpack.c.0.s8 %v6438
        %v6440 = vperm.slane %v6436, %v6439
        %v6441 = vrot.slane %v6419, 4
        %v6442 = vsel %vm922, %v6441, %v6417
        %v6444 = vunpack.c.l.s4 1983009808
        %v6445 = vunpack.c.0.s8 %v6444
        %v6446 = vperm.slane %v6442, %v6445
        %v6447 = vrot.slane %v6420, 4
        %v6448 = vsel %vm922, %v6447, %v6418
        %v6450 = vunpack.c.l.s4 1983009808
        %v6451 = vunpack.c.0.s8 %v6450
        %v6452 = vperm.slane %v6448, %v6451
        %v6453 = vrot.slane %v6440, 4
        %v6454 = vsel %vm922, %v6453, %v6434
        %v6455 = vrot.slane %v6434, 4
        %v6456 = vsel %vm922, %v6440, %v6455
        %v6458 = vunpack.c.l.s4 1934713408
        %v6459 = vunpack.c.0.s8 %v6458
        %v6460 = vperm.slane %v6454, %v6459
        %v6462 = vunpack.c.l.s4 1934713408
        %v6463 = vunpack.c.0.s8 %v6462
        %v6464 = vperm.slane %v6456, %v6463
        %v6465 = vrot.slane %v6452, 4
        %v6466 = vsel %vm922, %v6465, %v6446
        %v6467 = vrot.slane %v6446, 4
        %v6468 = vsel %vm922, %v6452, %v6467
        %v6470 = vunpack.c.l.s4 1934713408
        %v6471 = vunpack.c.0.s8 %v6470
        %v6472 = vperm.slane %v6466, %v6471
        %v6474 = vunpack.c.l.s4 1934713408
        %v6475 = vunpack.c.0.s8 %v6474
        %v6476 = vperm.slane %v6468, %v6475
        %v6477 = vrot.slane %v6472, 4
        %v6478 = vsel %vm922, %v6477, %v6460
        %v6479 = vrot.slane %v6460, 4
        %v6480 = vsel %vm922, %v6472, %v6479
        %v6481 = vrot.slane %v6476, 4
        %v6482 = vsel %vm922, %v6481, %v6464
        %v6483 = vrot.slane %v6464, 4
        %v6484 = vsel %vm922, %v6476, %v6483
        %v6485 = vrot.slane %v6423, 4
        %v6486 = vsel %vm922, %v6485, %v6421
        %v6488 = vunpack.c.l.s4 1983009808
        %v6489 = vunpack.c.0.s8 %v6488
        %v6490 = vperm.slane %v6486, %v6489
        %v6491 = vrot.slane %v6424, 4
        %v6492 = vsel %vm922, %v6491, %v6422
        %v6494 = vunpack.c.l.s4 1983009808
        %v6495 = vunpack.c.0.s8 %v6494
        %v6496 = vperm.slane %v6492, %v6495
        %v6497 = vrot.slane %v6427, 4
        %v6498 = vsel %vm922, %v6497, %v6425
        %v6500 = vunpack.c.l.s4 1983009808
        %v6501 = vunpack.c.0.s8 %v6500
        %v6502 = vperm.slane %v6498, %v6501
        %v6503 = vrot.slane %v6428, 4
        %v6504 = vsel %vm922, %v6503, %v6426
        %v6506 = vunpack.c.l.s4 1983009808
        %v6507 = vunpack.c.0.s8 %v6506
        %v6508 = vperm.slane %v6504, %v6507
        %v6509 = vrot.slane %v6496, 4
        %v6510 = vsel %vm922, %v6509, %v6490
        %v6511 = vrot.slane %v6490, 4
        %v6512 = vsel %vm922, %v6496, %v6511
        %v6514 = vunpack.c.l.s4 1934713408
        %v6515 = vunpack.c.0.s8 %v6514
        %v6516 = vperm.slane %v6510, %v6515
        %v6518 = vunpack.c.l.s4 1934713408
        %v6519 = vunpack.c.0.s8 %v6518
        %v6520 = vperm.slane %v6512, %v6519
        %v6521 = vrot.slane %v6508, 4
        %v6522 = vsel %vm922, %v6521, %v6502
        %v6523 = vrot.slane %v6502, 4
        %v6524 = vsel %vm922, %v6508, %v6523
        %v6526 = vunpack.c.l.s4 1934713408
        %v6527 = vunpack.c.0.s8 %v6526
        %v6528 = vperm.slane %v6522, %v6527
        %v6530 = vunpack.c.l.s4 1934713408
        %v6531 = vunpack.c.0.s8 %v6530
        %v6532 = vperm.slane %v6524, %v6531
        %v6533 = vrot.slane %v6528, 4
        %v6534 = vsel %vm922, %v6533, %v6516
        %v6535 = vrot.slane %v6516, 4
        %v6536 = vsel %vm922, %v6528, %v6535
        %v6537 = vrot.slane %v6532, 4
        %v6538 = vsel %vm922, %v6537, %v6520
        %v6539 = vrot.slane %v6520, 4
        %v6540 = vsel %vm922, %v6532, %v6539
        %v6542 = vperm.slane %v5963, 0
        %v6543 = vperm.slane %v5963, 1
        %v6544 = vperm.slane %v5963, 2
        %v6545 = vperm.slane %v5963, 3
        %v6550 = vmul.f32 %v6478, %v6542
        %v6551 = vmul.f32 %v6480, %v6543
        %v6552 = vmul.f32 %v6482, %v6544
        %v6553 = vmul.f32 %v6484, %v6545
        %v6554 = vmul.f32 %v6534, %v6542
        %v6555 = vmul.f32 %v6536, %v6543
        %v6556 = vmul.f32 %v6538, %v6544
        %v6557 = vmul.f32 %v6540, %v6545
        %v6559 = vperm.slane %v5964, 0
        %v6560 = vperm.slane %v5964, 1
        %v6561 = vperm.slane %v5964, 2
        %v6562 = vperm.slane %v5964, 3
        %v6567 = vadd.f32 %v6550, %v6559
        %v6568 = vadd.f32 %v6551, %v6560
        %v6569 = vadd.f32 %v6552, %v6561
        %v6570 = vadd.f32 %v6553, %v6562
        %v6571 = vadd.f32 %v6554, %v6559
        %v6572 = vadd.f32 %v6555, %v6560
        %v6573 = vadd.f32 %v6556, %v6561
        %v6574 = vadd.f32 %v6557, %v6562
        %v6575 = vpack.c.bf16 %v6571, %v6567
        %v6576 = vld [vmem:[%s766] sm:$0xf]
        %v6577 = vld [vmem:[%s766 + $0x4] sm:$0xf]
        %v6578 = vld [vmem:[%s766 + $0x8] sm:$0xf]
        %v6579 = vld [vmem:[%s766 + $0xc] sm:$0xf]
        %v6580 = vld [vmem:[%s766 + $0x10] sm:$0xf]
        %v6581 = vld [vmem:[%s766 + $0x14] sm:$0xf]
        %v6582 = vld [vmem:[%s766 + $0x18] sm:$0xf]
        %v6583 = vld [vmem:[%s766 + $0x1c] sm:$0xf]
        %v6584 = vld [vmem:[%s766 + $0x20] sm:$0xf]
        %v6585 = vld [vmem:[%s766 + $0x24] sm:$0xf]
        %v6586 = vld [vmem:[%s766 + $0x28] sm:$0xf]
        %v6587 = vld [vmem:[%s766 + $0x2c] sm:$0xf]
        %v6588 = vld [vmem:[%s766 + $0x30] sm:$0xf]
        %v6589 = vld [vmem:[%s766 + $0x34] sm:$0xf]
        %v6590 = vld [vmem:[%s766 + $0x38] sm:$0xf]
        %v6591 = vld [vmem:[%s766 + $0x3c] sm:$0xf]
        %v6592 = vld [vmem:[%s776] sm:$0x1]
        %v6594 = vperm.slane %v6592, 0
        %v6612 = vunpack.c.l.b16 %v6576
        %v6613 = vunpack.c.l.b16 %v6577
        %v6614 = vunpack.c.l.b16 %v6578
        %v6615 = vunpack.c.l.b16 %v6579
        %v6616 = vunpack.c.l.b16 %v6580
        %v6617 = vunpack.c.l.b16 %v6581
        %v6618 = vunpack.c.l.b16 %v6582
        %v6619 = vunpack.c.l.b16 %v6583
        %v6620 = vunpack.c.l.b16 %v6584
        %v6621 = vunpack.c.l.b16 %v6585
        %v6622 = vunpack.c.l.b16 %v6586
        %v6623 = vunpack.c.l.b16 %v6587
        %v6624 = vunpack.c.l.b16 %v6588
        %v6625 = vunpack.c.l.b16 %v6589
        %v6626 = vunpack.c.l.b16 %v6590
        %v6627 = vunpack.c.l.b16 %v6591
        %v6628 = vpack.c.b16 %v6613, %v6612
        %v6629 = vpack.c.b16 %v6615, %v6614
        %v6630 = vpack.c.b16 %v6617, %v6616
        %v6631 = vpack.c.b16 %v6619, %v6618
        %v6632 = vpack.c.b16 %v6621, %v6620
        %v6633 = vpack.c.b16 %v6623, %v6622
        %v6634 = vpack.c.b16 %v6625, %v6624
        %v6635 = vpack.c.b16 %v6627, %v6626
        %6644 = vmatpush.bf16.msra.mxu0 %v6635
        %6645 = vmatpush.bf16.msra.mxu0 %v6634
        %6646 = vmatpush.bf16.msra.mxu0 %v6633
        %6647 = vmatpush.bf16.msra.mxu0 %v6632
        %6648 = vmatpush.bf16.msra.mxu0 %v6631
        %6649 = vmatpush.bf16.msra.mxu0 %v6630
        %6650 = vmatpush.bf16.msra.mxu0 %v6629
        %6651 = vmatpush.bf16.msra.mxu0 %v6628
        %6652 = vmatmul.bf16.gmra.mxu0 %v6575
        %v6653 = vpop.f32.mrf.mxu0
        %v6654 = vadd.f32 %v6594, %v6653
        %v6655 = vpop.f32.mrf.mxu0
        %v6656 = vadd.f32 %v6594, %v6655
        %6657 = vdwg.mxu0
        %v6658 = vmul.f32 %v6654, %v6654
        %v6659 = vmul.f32 %v6656, %v6656
        %v6660 = vmul.f32 %v6654, %v6658
        %v6661 = vmul.f32 %v6656, %v6659
        %v6662 = vmul.f32 %v6660, 0.044715
        %v6663 = vmul.f32 %v6661, 0.044715
        %v6664 = vadd.f32 %v6654, %v6662
        %v6665 = vadd.f32 %v6656, %v6663
        %v6666 = vmul.f32 %v6664, 0.7978846
        %v6667 = vmul.f32 %v6665, 0.7978846
        %v6668 = vtanh.pop %v6666
        %v6669 = vtanh.pop %v6667
        %v6670 = vadd.f32 %v6668, 1.0
        %v6671 = vadd.f32 %v6669, 1.0
        %v6672 = vmul.f32 %v6670, 0.5
        %v6673 = vmul.f32 %v6671, 0.5
        %v6674 = vmul.f32 %v6654, %v6672
        %v6675 = vmul.f32 %v6656, %v6673
        %v6676 = vpack.c.bf16 %v6675, %v6674
        %v6677 = vld [vmem:[%s786] sm:$0xf]
        %v6678 = vld [vmem:[%s786 + $0x4] sm:$0xf]
        %v6679 = vld [vmem:[%s786 + $0x8] sm:$0xf]
        %v6680 = vld [vmem:[%s786 + $0xc] sm:$0xf]
        %v6681 = vld [vmem:[%s786 + $0x10] sm:$0xf]
        %v6682 = vld [vmem:[%s786 + $0x14] sm:$0xf]
        %v6683 = vld [vmem:[%s786 + $0x18] sm:$0xf]
        %v6684 = vld [vmem:[%s786 + $0x1c] sm:$0xf]
        %v6685 = vld [vmem:[%s786 + $0x20] sm:$0xf]
        %v6686 = vld [vmem:[%s786 + $0x24] sm:$0xf]
        %v6687 = vld [vmem:[%s786 + $0x28] sm:$0xf]
        %v6688 = vld [vmem:[%s786 + $0x2c] sm:$0xf]
        %v6689 = vld [vmem:[%s786 + $0x30] sm:$0xf]
        %v6690 = vld [vmem:[%s786 + $0x34] sm:$0xf]
        %v6691 = vld [vmem:[%s786 + $0x38] sm:$0xf]
        %v6692 = vld [vmem:[%s786 + $0x3c] sm:$0xf]
        %v6693 = vld [vmem:[%s796] sm:$0x1]
        %v6695 = vperm.slane %v6693, 0
        %v6713 = vunpack.c.l.b16 %v6677
        %v6714 = vunpack.c.l.b16 %v6678
        %v6715 = vunpack.c.l.b16 %v6679
        %v6716 = vunpack.c.l.b16 %v6680
        %v6717 = vunpack.c.l.b16 %v6681
        %v6718 = vunpack.c.l.b16 %v6682
        %v6719 = vunpack.c.l.b16 %v6683
        %v6720 = vunpack.c.l.b16 %v6684
        %v6721 = vunpack.c.l.b16 %v6685
        %v6722 = vunpack.c.l.b16 %v6686
        %v6723 = vunpack.c.l.b16 %v6687
        %v6724 = vunpack.c.l.b16 %v6688
        %v6725 = vunpack.c.l.b16 %v6689
        %v6726 = vunpack.c.l.b16 %v6690
        %v6727 = vunpack.c.l.b16 %v6691
        %v6728 = vunpack.c.l.b16 %v6692
        %v6729 = vpack.c.b16 %v6714, %v6713
        %v6730 = vpack.c.b16 %v6716, %v6715
        %v6731 = vpack.c.b16 %v6718, %v6717
        %v6732 = vpack.c.b16 %v6720, %v6719
        %v6733 = vpack.c.b16 %v6722, %v6721
        %v6734 = vpack.c.b16 %v6724, %v6723
        %v6735 = vpack.c.b16 %v6726, %v6725
        %v6736 = vpack.c.b16 %v6728, %v6727
        %6745 = vmatpush.bf16.msra.mxu0 %v6736
        %6746 = vmatpush.bf16.msra.mxu0 %v6735
        %6747 = vmatpush.bf16.msra.mxu0 %v6734
        %6748 = vmatpush.bf16.msra.mxu0 %v6733
        %6749 = vmatpush.bf16.msra.mxu0 %v6732
        %6750 = vmatpush.bf16.msra.mxu0 %v6731
        %6751 = vmatpush.bf16.msra.mxu0 %v6730
        %6752 = vmatpush.bf16.msra.mxu0 %v6729
        %6753 = vmatmul.bf16.gmra.mxu0 %v6676
        %v6754 = vpop.f32.mrf.mxu0
        %v6755 = vadd.f32 %v6695, %v6754
        %v6756 = vpop.f32.mrf.mxu0
        %v6757 = vadd.f32 %v6695, %v6756
        %6758 = vdwg.mxu0
        %6759 = vst [vmem:[#allocation2] sm:$0xff] %v6755
        %6760 = vst [vmem:[#allocation2 + $0x20] sm:$0xff] %v6757
        %v6761 = vpack.c.bf16 %v6572, %v6568
        %s6762 = scalar_lea.vmem %s766, 64 [#allocation18]
        %v6763 = vld [vmem:[%s6762] sm:$0xf]
        %v6764 = vld [vmem:[%s6762 + $0x4] sm:$0xf]
        %v6765 = vld [vmem:[%s6762 + $0x8] sm:$0xf]
        %v6766 = vld [vmem:[%s6762 + $0xc] sm:$0xf]
        %v6767 = vld [vmem:[%s6762 + $0x10] sm:$0xf]
        %v6768 = vld [vmem:[%s6762 + $0x14] sm:$0xf]
        %v6769 = vld [vmem:[%s6762 + $0x18] sm:$0xf]
        %v6770 = vld [vmem:[%s6762 + $0x1c] sm:$0xf]
        %v6771 = vld [vmem:[%s6762 + $0x20] sm:$0xf]
        %v6772 = vld [vmem:[%s6762 + $0x24] sm:$0xf]
        %v6773 = vld [vmem:[%s6762 + $0x28] sm:$0xf]
        %v6774 = vld [vmem:[%s6762 + $0x2c] sm:$0xf]
        %v6775 = vld [vmem:[%s6762 + $0x30] sm:$0xf]
        %v6776 = vld [vmem:[%s6762 + $0x34] sm:$0xf]
        %v6777 = vld [vmem:[%s6762 + $0x38] sm:$0xf]
        %v6778 = vld [vmem:[%s6762 + $0x3c] sm:$0xf]
        %s6779 = scalar_lea.vmem %s776, 1 [#allocation20]
        %v6780 = vld [vmem:[%s6779] sm:$0x1]
        %v6782 = vperm.slane %v6780, 0
        %v6800 = vunpack.c.l.b16 %v6763
        %v6801 = vunpack.c.l.b16 %v6764
        %v6802 = vunpack.c.l.b16 %v6765
        %v6803 = vunpack.c.l.b16 %v6766
        %v6804 = vunpack.c.l.b16 %v6767
        %v6805 = vunpack.c.l.b16 %v6768
        %v6806 = vunpack.c.l.b16 %v6769
        %v6807 = vunpack.c.l.b16 %v6770
        %v6808 = vunpack.c.l.b16 %v6771
        %v6809 = vunpack.c.l.b16 %v6772
        %v6810 = vunpack.c.l.b16 %v6773
        %v6811 = vunpack.c.l.b16 %v6774
        %v6812 = vunpack.c.l.b16 %v6775
        %v6813 = vunpack.c.l.b16 %v6776
        %v6814 = vunpack.c.l.b16 %v6777
        %v6815 = vunpack.c.l.b16 %v6778
        %v6816 = vpack.c.b16 %v6801, %v6800
        %v6817 = vpack.c.b16 %v6803, %v6802
        %v6818 = vpack.c.b16 %v6805, %v6804
        %v6819 = vpack.c.b16 %v6807, %v6806
        %v6820 = vpack.c.b16 %v6809, %v6808
        %v6821 = vpack.c.b16 %v6811, %v6810
        %v6822 = vpack.c.b16 %v6813, %v6812
        %v6823 = vpack.c.b16 %v6815, %v6814
        %6832 = vmatpush.bf16.msra.mxu0 %v6823
        %6833 = vmatpush.bf16.msra.mxu0 %v6822
        %6834 = vmatpush.bf16.msra.mxu0 %v6821
        %6835 = vmatpush.bf16.msra.mxu0 %v6820
        %6836 = vmatpush.bf16.msra.mxu0 %v6819
        %6837 = vmatpush.bf16.msra.mxu0 %v6818
        %6838 = vmatpush.bf16.msra.mxu0 %v6817
        %6839 = vmatpush.bf16.msra.mxu0 %v6816
        %6840 = vmatmul.bf16.gmra.mxu0 %v6761
        %v6841 = vpop.f32.mrf.mxu0
        %v6842 = vadd.f32 %v6782, %v6841
        %v6843 = vpop.f32.mrf.mxu0
        %v6844 = vadd.f32 %v6782, %v6843
        %6845 = vdwg.mxu0
        %v6846 = vmul.f32 %v6842, %v6842
        %v6847 = vmul.f32 %v6844, %v6844
        %v6848 = vmul.f32 %v6842, %v6846
        %v6849 = vmul.f32 %v6844, %v6847
        %v6850 = vmul.f32 %v6848, 0.044715
        %v6851 = vmul.f32 %v6849, 0.044715
        %v6852 = vadd.f32 %v6842, %v6850
        %v6853 = vadd.f32 %v6844, %v6851
        %v6854 = vmul.f32 %v6852, 0.7978846
        %v6855 = vmul.f32 %v6853, 0.7978846
        %v6856 = vtanh.pop %v6854
        %v6857 = vtanh.pop %v6855
        %v6858 = vadd.f32 %v6856, 1.0
        %v6859 = vadd.f32 %v6857, 1.0
        %v6860 = vmul.f32 %v6858, 0.5
        %v6861 = vmul.f32 %v6859, 0.5
        %v6862 = vmul.f32 %v6842, %v6860
        %v6863 = vmul.f32 %v6844, %v6861
        %v6864 = vpack.c.bf16 %v6863, %v6862
        %s6865 = scalar_lea.vmem %s786, 64 [#allocation21]
        %v6866 = vld [vmem:[%s6865] sm:$0xf]
        %v6867 = vld [vmem:[%s6865 + $0x4] sm:$0xf]
        %v6868 = vld [vmem:[%s6865 + $0x8] sm:$0xf]
        %v6869 = vld [vmem:[%s6865 + $0xc] sm:$0xf]
        %v6870 = vld [vmem:[%s6865 + $0x10] sm:$0xf]
        %v6871 = vld [vmem:[%s6865 + $0x14] sm:$0xf]
        %v6872 = vld [vmem:[%s6865 + $0x18] sm:$0xf]
        %v6873 = vld [vmem:[%s6865 + $0x1c] sm:$0xf]
        %v6874 = vld [vmem:[%s6865 + $0x20] sm:$0xf]
        %v6875 = vld [vmem:[%s6865 + $0x24] sm:$0xf]
        %v6876 = vld [vmem:[%s6865 + $0x28] sm:$0xf]
        %v6877 = vld [vmem:[%s6865 + $0x2c] sm:$0xf]
        %v6878 = vld [vmem:[%s6865 + $0x30] sm:$0xf]
        %v6879 = vld [vmem:[%s6865 + $0x34] sm:$0xf]
        %v6880 = vld [vmem:[%s6865 + $0x38] sm:$0xf]
        %v6881 = vld [vmem:[%s6865 + $0x3c] sm:$0xf]
        %s6882 = scalar_lea.vmem %s796, 1 [#allocation23]
        %v6883 = vld [vmem:[%s6882] sm:$0x1]
        %v6885 = vperm.slane %v6883, 0
        %v6903 = vunpack.c.l.b16 %v6866
        %v6904 = vunpack.c.l.b16 %v6867
        %v6905 = vunpack.c.l.b16 %v6868
        %v6906 = vunpack.c.l.b16 %v6869
        %v6907 = vunpack.c.l.b16 %v6870
        %v6908 = vunpack.c.l.b16 %v6871
        %v6909 = vunpack.c.l.b16 %v6872
        %v6910 = vunpack.c.l.b16 %v6873
        %v6911 = vunpack.c.l.b16 %v6874
        %v6912 = vunpack.c.l.b16 %v6875
        %v6913 = vunpack.c.l.b16 %v6876
        %v6914 = vunpack.c.l.b16 %v6877
        %v6915 = vunpack.c.l.b16 %v6878
        %v6916 = vunpack.c.l.b16 %v6879
        %v6917 = vunpack.c.l.b16 %v6880
        %v6918 = vunpack.c.l.b16 %v6881
        %v6919 = vpack.c.b16 %v6904, %v6903
        %v6920 = vpack.c.b16 %v6906, %v6905
        %v6921 = vpack.c.b16 %v6908, %v6907
        %v6922 = vpack.c.b16 %v6910, %v6909
        %v6923 = vpack.c.b16 %v6912, %v6911
        %v6924 = vpack.c.b16 %v6914, %v6913
        %v6925 = vpack.c.b16 %v6916, %v6915
        %v6926 = vpack.c.b16 %v6918, %v6917
        %6935 = vmatpush.bf16.msra.mxu0 %v6926
        %6936 = vmatpush.bf16.msra.mxu0 %v6925
        %6937 = vmatpush.bf16.msra.mxu0 %v6924
        %6938 = vmatpush.bf16.msra.mxu0 %v6923
        %6939 = vmatpush.bf16.msra.mxu0 %v6922
        %6940 = vmatpush.bf16.msra.mxu0 %v6921
        %6941 = vmatpush.bf16.msra.mxu0 %v6920
        %6942 = vmatpush.bf16.msra.mxu0 %v6919
        %6943 = vmatmul.bf16.gmra.mxu0 %v6864
        %v6944 = vpop.f32.mrf.mxu0
        %v6945 = vadd.f32 %v6885, %v6944
        %v6946 = vpop.f32.mrf.mxu0
        %v6947 = vadd.f32 %v6885, %v6946
        %6948 = vdwg.mxu0
        %6949 = vst [vmem:[#allocation2 + $0x8] sm:$0xff] %v6945
        %6950 = vst [vmem:[#allocation2 + $0x28] sm:$0xff] %v6947
        %v6951 = vpack.c.bf16 %v6573, %v6569
        %s6952 = scalar_lea.vmem %s766, 128 [#allocation18]
        %v6953 = vld [vmem:[%s6952] sm:$0xf]
        %v6954 = vld [vmem:[%s6952 + $0x4] sm:$0xf]
        %v6955 = vld [vmem:[%s6952 + $0x8] sm:$0xf]
        %v6956 = vld [vmem:[%s6952 + $0xc] sm:$0xf]
        %v6957 = vld [vmem:[%s6952 + $0x10] sm:$0xf]
        %v6958 = vld [vmem:[%s6952 + $0x14] sm:$0xf]
        %v6959 = vld [vmem:[%s6952 + $0x18] sm:$0xf]
        %v6960 = vld [vmem:[%s6952 + $0x1c] sm:$0xf]
        %v6961 = vld [vmem:[%s6952 + $0x20] sm:$0xf]
        %v6962 = vld [vmem:[%s6952 + $0x24] sm:$0xf]
        %v6963 = vld [vmem:[%s6952 + $0x28] sm:$0xf]
        %v6964 = vld [vmem:[%s6952 + $0x2c] sm:$0xf]
        %v6965 = vld [vmem:[%s6952 + $0x30] sm:$0xf]
        %v6966 = vld [vmem:[%s6952 + $0x34] sm:$0xf]
        %v6967 = vld [vmem:[%s6952 + $0x38] sm:$0xf]
        %v6968 = vld [vmem:[%s6952 + $0x3c] sm:$0xf]
        %s6969 = scalar_lea.vmem %s776, 2 [#allocation20]
        %v6970 = vld [vmem:[%s6969] sm:$0x1]
        %v6972 = vperm.slane %v6970, 0
        %v6990 = vunpack.c.l.b16 %v6953
        %v6991 = vunpack.c.l.b16 %v6954
        %v6992 = vunpack.c.l.b16 %v6955
        %v6993 = vunpack.c.l.b16 %v6956
        %v6994 = vunpack.c.l.b16 %v6957
        %v6995 = vunpack.c.l.b16 %v6958
        %v6996 = vunpack.c.l.b16 %v6959
        %v6997 = vunpack.c.l.b16 %v6960
        %v6998 = vunpack.c.l.b16 %v6961
        %v6999 = vunpack.c.l.b16 %v6962
        %v7000 = vunpack.c.l.b16 %v6963
        %v7001 = vunpack.c.l.b16 %v6964
        %v7002 = vunpack.c.l.b16 %v6965
        %v7003 = vunpack.c.l.b16 %v6966
        %v7004 = vunpack.c.l.b16 %v6967
        %v7005 = vunpack.c.l.b16 %v6968
        %v7006 = vpack.c.b16 %v6991, %v6990
        %v7007 = vpack.c.b16 %v6993, %v6992
        %v7008 = vpack.c.b16 %v6995, %v6994
        %v7009 = vpack.c.b16 %v6997, %v6996
        %v7010 = vpack.c.b16 %v6999, %v6998
        %v7011 = vpack.c.b16 %v7001, %v7000
        %v7012 = vpack.c.b16 %v7003, %v7002
        %v7013 = vpack.c.b16 %v7005, %v7004
        %7022 = vmatpush.bf16.msra.mxu0 %v7013
        %7023 = vmatpush.bf16.msra.mxu0 %v7012
        %7024 = vmatpush.bf16.msra.mxu0 %v7011
        %7025 = vmatpush.bf16.msra.mxu0 %v7010
        %7026 = vmatpush.bf16.msra.mxu0 %v7009
        %7027 = vmatpush.bf16.msra.mxu0 %v7008
        %7028 = vmatpush.bf16.msra.mxu0 %v7007
        %7029 = vmatpush.bf16.msra.mxu0 %v7006
        %7030 = vmatmul.bf16.gmra.mxu0 %v6951
        %v7031 = vpop.f32.mrf.mxu0
        %v7032 = vadd.f32 %v6972, %v7031
        %v7033 = vpop.f32.mrf.mxu0
        %v7034 = vadd.f32 %v6972, %v7033
        %7035 = vdwg.mxu0
        %v7036 = vmul.f32 %v7032, %v7032
        %v7037 = vmul.f32 %v7034, %v7034
        %v7038 = vmul.f32 %v7032, %v7036
        %v7039 = vmul.f32 %v7034, %v7037
        %v7040 = vmul.f32 %v7038, 0.044715
        %v7041 = vmul.f32 %v7039, 0.044715
        %v7042 = vadd.f32 %v7032, %v7040
        %v7043 = vadd.f32 %v7034, %v7041
        %v7044 = vmul.f32 %v7042, 0.7978846
        %v7045 = vmul.f32 %v7043, 0.7978846
        %v7046 = vtanh.pop %v7044
        %v7047 = vtanh.pop %v7045
        %v7048 = vadd.f32 %v7046, 1.0
        %v7049 = vadd.f32 %v7047, 1.0
        %v7050 = vmul.f32 %v7048, 0.5
        %v7051 = vmul.f32 %v7049, 0.5
        %v7052 = vmul.f32 %v7032, %v7050
        %v7053 = vmul.f32 %v7034, %v7051
        %v7054 = vpack.c.bf16 %v7053, %v7052
        %s7055 = scalar_lea.vmem %s786, 128 [#allocation21]
        %v7056 = vld [vmem:[%s7055] sm:$0xf]
        %v7057 = vld [vmem:[%s7055 + $0x4] sm:$0xf]
        %v7058 = vld [vmem:[%s7055 + $0x8] sm:$0xf]
        %v7059 = vld [vmem:[%s7055 + $0xc] sm:$0xf]
        %v7060 = vld [vmem:[%s7055 + $0x10] sm:$0xf]
        %v7061 = vld [vmem:[%s7055 + $0x14] sm:$0xf]
        %v7062 = vld [vmem:[%s7055 + $0x18] sm:$0xf]
        %v7063 = vld [vmem:[%s7055 + $0x1c] sm:$0xf]
        %v7064 = vld [vmem:[%s7055 + $0x20] sm:$0xf]
        %v7065 = vld [vmem:[%s7055 + $0x24] sm:$0xf]
        %v7066 = vld [vmem:[%s7055 + $0x28] sm:$0xf]
        %v7067 = vld [vmem:[%s7055 + $0x2c] sm:$0xf]
        %v7068 = vld [vmem:[%s7055 + $0x30] sm:$0xf]
        %v7069 = vld [vmem:[%s7055 + $0x34] sm:$0xf]
        %v7070 = vld [vmem:[%s7055 + $0x38] sm:$0xf]
        %v7071 = vld [vmem:[%s7055 + $0x3c] sm:$0xf]
        %s7072 = scalar_lea.vmem %s796, 2 [#allocation23]
        %v7073 = vld [vmem:[%s7072] sm:$0x1]
        %v7075 = vperm.slane %v7073, 0
        %v7093 = vunpack.c.l.b16 %v7056
        %v7094 = vunpack.c.l.b16 %v7057
        %v7095 = vunpack.c.l.b16 %v7058
        %v7096 = vunpack.c.l.b16 %v7059
        %v7097 = vunpack.c.l.b16 %v7060
        %v7098 = vunpack.c.l.b16 %v7061
        %v7099 = vunpack.c.l.b16 %v7062
        %v7100 = vunpack.c.l.b16 %v7063
        %v7101 = vunpack.c.l.b16 %v7064
        %v7102 = vunpack.c.l.b16 %v7065
        %v7103 = vunpack.c.l.b16 %v7066
        %v7104 = vunpack.c.l.b16 %v7067
        %v7105 = vunpack.c.l.b16 %v7068
        %v7106 = vunpack.c.l.b16 %v7069
        %v7107 = vunpack.c.l.b16 %v7070
        %v7108 = vunpack.c.l.b16 %v7071
        %v7109 = vpack.c.b16 %v7094, %v7093
        %v7110 = vpack.c.b16 %v7096, %v7095
        %v7111 = vpack.c.b16 %v7098, %v7097
        %v7112 = vpack.c.b16 %v7100, %v7099
        %v7113 = vpack.c.b16 %v7102, %v7101
        %v7114 = vpack.c.b16 %v7104, %v7103
        %v7115 = vpack.c.b16 %v7106, %v7105
        %v7116 = vpack.c.b16 %v7108, %v7107
        %7125 = vmatpush.bf16.msra.mxu0 %v7116
        %7126 = vmatpush.bf16.msra.mxu0 %v7115
        %7127 = vmatpush.bf16.msra.mxu0 %v7114
        %7128 = vmatpush.bf16.msra.mxu0 %v7113
        %7129 = vmatpush.bf16.msra.mxu0 %v7112
        %7130 = vmatpush.bf16.msra.mxu0 %v7111
        %7131 = vmatpush.bf16.msra.mxu0 %v7110
        %7132 = vmatpush.bf16.msra.mxu0 %v7109
        %7133 = vmatmul.bf16.gmra.mxu0 %v7054
        %v7134 = vpop.f32.mrf.mxu0
        %v7135 = vadd.f32 %v7075, %v7134
        %v7136 = vpop.f32.mrf.mxu0
        %v7137 = vadd.f32 %v7075, %v7136
        %7138 = vdwg.mxu0
        %7139 = vst [vmem:[#allocation2 + $0x10] sm:$0xff] %v7135
        %7140 = vst [vmem:[#allocation2 + $0x30] sm:$0xff] %v7137
        %v7141 = vpack.c.bf16 %v6574, %v6570
        %s7142 = scalar_lea.vmem %s766, 192 [#allocation18]
        %v7143 = vld [vmem:[%s7142] sm:$0xf]
        %v7144 = vld [vmem:[%s7142 + $0x4] sm:$0xf]
        %v7145 = vld [vmem:[%s7142 + $0x8] sm:$0xf]
        %v7146 = vld [vmem:[%s7142 + $0xc] sm:$0xf]
        %v7147 = vld [vmem:[%s7142 + $0x10] sm:$0xf]
        %v7148 = vld [vmem:[%s7142 + $0x14] sm:$0xf]
        %v7149 = vld [vmem:[%s7142 + $0x18] sm:$0xf]
        %v7150 = vld [vmem:[%s7142 + $0x1c] sm:$0xf]
        %v7151 = vld [vmem:[%s7142 + $0x20] sm:$0xf]
        %v7152 = vld [vmem:[%s7142 + $0x24] sm:$0xf]
        %v7153 = vld [vmem:[%s7142 + $0x28] sm:$0xf]
        %v7154 = vld [vmem:[%s7142 + $0x2c] sm:$0xf]
        %v7155 = vld [vmem:[%s7142 + $0x30] sm:$0xf]
        %v7156 = vld [vmem:[%s7142 + $0x34] sm:$0xf]
        %v7157 = vld [vmem:[%s7142 + $0x38] sm:$0xf]
        %v7158 = vld [vmem:[%s7142 + $0x3c] sm:$0xf]
        %s7159 = scalar_lea.vmem %s776, 3 [#allocation20]
        %v7160 = vld [vmem:[%s7159] sm:$0x1]
        %v7162 = vperm.slane %v7160, 0
        %v7180 = vunpack.c.l.b16 %v7143
        %v7181 = vunpack.c.l.b16 %v7144
        %v7182 = vunpack.c.l.b16 %v7145
        %v7183 = vunpack.c.l.b16 %v7146
        %v7184 = vunpack.c.l.b16 %v7147
        %v7185 = vunpack.c.l.b16 %v7148
        %v7186 = vunpack.c.l.b16 %v7149
        %v7187 = vunpack.c.l.b16 %v7150
        %v7188 = vunpack.c.l.b16 %v7151
        %v7189 = vunpack.c.l.b16 %v7152
        %v7190 = vunpack.c.l.b16 %v7153
        %v7191 = vunpack.c.l.b16 %v7154
        %v7192 = vunpack.c.l.b16 %v7155
        %v7193 = vunpack.c.l.b16 %v7156
        %v7194 = vunpack.c.l.b16 %v7157
        %v7195 = vunpack.c.l.b16 %v7158
        %v7196 = vpack.c.b16 %v7181, %v7180
        %v7197 = vpack.c.b16 %v7183, %v7182
        %v7198 = vpack.c.b16 %v7185, %v7184
        %v7199 = vpack.c.b16 %v7187, %v7186
        %v7200 = vpack.c.b16 %v7189, %v7188
        %v7201 = vpack.c.b16 %v7191, %v7190
        %v7202 = vpack.c.b16 %v7193, %v7192
        %v7203 = vpack.c.b16 %v7195, %v7194
        %7212 = vmatpush.bf16.msra.mxu0 %v7203
        %7213 = vmatpush.bf16.msra.mxu0 %v7202
        %7214 = vmatpush.bf16.msra.mxu0 %v7201
        %7215 = vmatpush.bf16.msra.mxu0 %v7200
        %7216 = vmatpush.bf16.msra.mxu0 %v7199
        %7217 = vmatpush.bf16.msra.mxu0 %v7198
        %7218 = vmatpush.bf16.msra.mxu0 %v7197
        %7219 = vmatpush.bf16.msra.mxu0 %v7196
        %7220 = vmatmul.bf16.gmra.mxu0 %v7141
        %v7221 = vpop.f32.mrf.mxu0
        %v7222 = vadd.f32 %v7162, %v7221
        %v7223 = vpop.f32.mrf.mxu0
        %v7224 = vadd.f32 %v7162, %v7223
        %7225 = vdwg.mxu0
        %v7226 = vmul.f32 %v7222, %v7222
        %v7227 = vmul.f32 %v7224, %v7224
        %v7228 = vmul.f32 %v7222, %v7226
        %v7229 = vmul.f32 %v7224, %v7227
        %v7230 = vmul.f32 %v7228, 0.044715
        %v7231 = vmul.f32 %v7229, 0.044715
        %v7232 = vadd.f32 %v7222, %v7230
        %v7233 = vadd.f32 %v7224, %v7231
        %v7234 = vmul.f32 %v7232, 0.7978846
        %v7235 = vmul.f32 %v7233, 0.7978846
        %v7236 = vtanh.pop %v7234
        %v7237 = vtanh.pop %v7235
        %v7238 = vadd.f32 %v7236, 1.0
        %v7239 = vadd.f32 %v7237, 1.0
        %v7240 = vmul.f32 %v7238, 0.5
        %v7241 = vmul.f32 %v7239, 0.5
        %v7242 = vmul.f32 %v7222, %v7240
        %v7243 = vmul.f32 %v7224, %v7241
        %v7244 = vpack.c.bf16 %v7243, %v7242
        %s7245 = scalar_lea.vmem %s786, 192 [#allocation21]
        %v7246 = vld [vmem:[%s7245] sm:$0xf]
        %v7247 = vld [vmem:[%s7245 + $0x4] sm:$0xf]
        %v7248 = vld [vmem:[%s7245 + $0x8] sm:$0xf]
        %v7249 = vld [vmem:[%s7245 + $0xc] sm:$0xf]
        %v7250 = vld [vmem:[%s7245 + $0x10] sm:$0xf]
        %v7251 = vld [vmem:[%s7245 + $0x14] sm:$0xf]
        %v7252 = vld [vmem:[%s7245 + $0x18] sm:$0xf]
        %v7253 = vld [vmem:[%s7245 + $0x1c] sm:$0xf]
        %v7254 = vld [vmem:[%s7245 + $0x20] sm:$0xf]
        %v7255 = vld [vmem:[%s7245 + $0x24] sm:$0xf]
        %v7256 = vld [vmem:[%s7245 + $0x28] sm:$0xf]
        %v7257 = vld [vmem:[%s7245 + $0x2c] sm:$0xf]
        %v7258 = vld [vmem:[%s7245 + $0x30] sm:$0xf]
        %v7259 = vld [vmem:[%s7245 + $0x34] sm:$0xf]
        %v7260 = vld [vmem:[%s7245 + $0x38] sm:$0xf]
        %v7261 = vld [vmem:[%s7245 + $0x3c] sm:$0xf]
        %s7262 = scalar_lea.vmem %s796, 3 [#allocation23]
        %v7263 = vld [vmem:[%s7262] sm:$0x1]
        %v7265 = vperm.slane %v7263, 0
        %v7283 = vunpack.c.l.b16 %v7246
        %v7284 = vunpack.c.l.b16 %v7247
        %v7285 = vunpack.c.l.b16 %v7248
        %v7286 = vunpack.c.l.b16 %v7249
        %v7287 = vunpack.c.l.b16 %v7250
        %v7288 = vunpack.c.l.b16 %v7251
        %v7289 = vunpack.c.l.b16 %v7252
        %v7290 = vunpack.c.l.b16 %v7253
        %v7291 = vunpack.c.l.b16 %v7254
        %v7292 = vunpack.c.l.b16 %v7255
        %v7293 = vunpack.c.l.b16 %v7256
        %v7294 = vunpack.c.l.b16 %v7257
        %v7295 = vunpack.c.l.b16 %v7258
        %v7296 = vunpack.c.l.b16 %v7259
        %v7297 = vunpack.c.l.b16 %v7260
        %v7298 = vunpack.c.l.b16 %v7261
        %v7299 = vpack.c.b16 %v7284, %v7283
        %v7300 = vpack.c.b16 %v7286, %v7285
        %v7301 = vpack.c.b16 %v7288, %v7287
        %v7302 = vpack.c.b16 %v7290, %v7289
        %v7303 = vpack.c.b16 %v7292, %v7291
        %v7304 = vpack.c.b16 %v7294, %v7293
        %v7305 = vpack.c.b16 %v7296, %v7295
        %v7306 = vpack.c.b16 %v7298, %v7297
        %7315 = vmatpush.bf16.msra.mxu0 %v7306
        %7316 = vmatpush.bf16.msra.mxu0 %v7305
        %7317 = vmatpush.bf16.msra.mxu0 %v7304
        %7318 = vmatpush.bf16.msra.mxu0 %v7303
        %7319 = vmatpush.bf16.msra.mxu0 %v7302
        %7320 = vmatpush.bf16.msra.mxu0 %v7301
        %7321 = vmatpush.bf16.msra.mxu0 %v7300
        %7322 = vmatpush.bf16.msra.mxu0 %v7299
        %7323 = vmatmul.bf16.gmra.mxu0 %v7244
        %v7324 = vpop.f32.mrf.mxu0
        %v7325 = vadd.f32 %v7265, %v7324
        %v7326 = vpop.f32.mrf.mxu0
        %v7327 = vadd.f32 %v7265, %v7326
        %7328 = vdwg.mxu0
        %7329 = vst [vmem:[#allocation2 + $0x18] sm:$0xff] %v7325
        %7330 = vst [vmem:[#allocation2 + $0x38] sm:$0xff] %v7327
        %v7331 = vld [vmem:[#allocation2] sm:$0xff]
        %v7332 = vld [vmem:[#allocation2 + $0x8] sm:$0xff]
        %v7333 = vld [vmem:[#allocation2 + $0x10] sm:$0xff]
        %v7334 = vld [vmem:[#allocation2 + $0x18] sm:$0xff]
        %v7335 = vld [vmem:[#allocation2 + $0x20] sm:$0xff]
        %v7336 = vld [vmem:[#allocation2 + $0x28] sm:$0xff]
        %v7337 = vld [vmem:[#allocation2 + $0x30] sm:$0xff]
        %v7338 = vld [vmem:[#allocation2 + $0x38] sm:$0xff]
        %v7339 = vadd.f32 %v7331, %v5955
        %v7340 = vadd.f32 %v7332, %v5956
        %v7341 = vadd.f32 %v7333, %v5957
        %v7342 = vadd.f32 %v7334, %v5958
        %v7343 = vadd.f32 %v7335, %v5959
        %v7344 = vadd.f32 %v7336, %v5960
        %v7345 = vadd.f32 %v7337, %v5961
        %v7346 = vadd.f32 %v7338, %v5962
        %7347 = vst [vmem:[#allocation24] sm:$0xff] %v7339
        %7348 = vst [vmem:[#allocation24 + $0x8] sm:$0xff] %v7340
        %7349 = vst [vmem:[#allocation24 + $0x10] sm:$0xff] %v7341
        %7350 = vst [vmem:[#allocation24 + $0x18] sm:$0xff] %v7342
        %7351 = vst [vmem:[#allocation24 + $0x20] sm:$0xff] %v7343
        %7352 = vst [vmem:[#allocation24 + $0x28] sm:$0xff] %v7344
        %7353 = vst [vmem:[#allocation24 + $0x30] sm:$0xff] %v7345
        %7354 = vst [vmem:[#allocation24 + $0x38] sm:$0xff] %v7346
        // Predicated region
        $region129: #{tpu_custom_call.1} parent=71 // pred_check
          %p7355 = pneg %p390
        $region130: #{tpu_custom_call.1} parent=71 // pred_check_branch
          %7357 = sbr.rel (%p7355) target = $region132
        $region131: #{tpu_custom_call.1} parent=71 // pred_region
          %7359 = vsyncadd [#allocation5], 0
          %s7360 = sshll.u32 [#allocation24], 4
          %s7361 = int_to_ptr.vmem [resolvable:$true] %s7360
          %s7362 = sshll.u32 %s13, 4
          %s7363 = int_to_ptr.hbm [resolvable:$true] %s7362
          %7368 = dma.vmem_to_hbm [thread:$0]  %s7361, 1024, %s7363, [#allocation5], 512, 512, 32
        $region132: #{tpu_custom_call.1} parent=71 // pred_fallthru
          _
        // Predicated region
        $region133: #{tpu_custom_call.1} parent=71 // pred_check
          %p7369 = pneg %p390
        $region134: #{tpu_custom_call.1} parent=71 // pred_check_branch
          %7371 = sbr.rel (%p7369) target = $region136
        $region135: #{tpu_custom_call.1} parent=71 // pred_region
          %7373 = dma.done [#allocation5], 1024
        $region136: #{tpu_custom_call.1} parent=71 // pred_fallthru
          _
      $region72: #{tpu_custom_call.1} parent=5 // pred_fallthru
        _
      %p7374 = scmp.le.s32.totalorder 2, %s39
      // Predicated region
      $region137: #{tpu_custom_call.1} parent=5 // pred_check
        %p7375 = pneg %p7374
      $region138: #{tpu_custom_call.1} parent=5 // pred_check_branch
        %7377 = sbr.rel (%p7375) target = $region140
      $region139: #{tpu_custom_call.1} parent=5 // pred_region
        %s7378 = ssub.s32 %s39, 2
      $region140: #{tpu_custom_call.1} parent=5 // pred_fallthru
        _
    $region6: #{tpu_custom_call.1} parent=1 // loop_footer
      %s43 = sadd.s32 1, %s39
    $region7: #{tpu_custom_call.1} parent=1 // loop_footer_branch
      %38 = sbr.rel target = $region3
    $region8: #{tpu_custom_call.1} parent=1 // loop_exit
      _
    %7379 = vsyncpa [#allocation4], 1
    %s7380 = scalar_lea.sflag [#allocation4], 1
    %7381 = vsyncpa %s7380, 1
    %7382 = vsyncpa [#allocation7], 1
    %s7383 = scalar_lea.sflag [#allocation7], 1
    %7384 = vsyncpa %s7383, 1
    %7385 = vsyncpa [#allocation10], 1
    %s7386 = scalar_lea.sflag [#allocation10], 1
    %7387 = vsyncpa %s7386, 1
    %7388 = vsyncpa [#allocation13], 1
    %s7389 = scalar_lea.sflag [#allocation13], 1
    %7390 = vsyncpa %s7389, 1
    %7391 = vsyncpa [#allocation16], 1
    %s7392 = scalar_lea.sflag [#allocation16], 1
    %7393 = vsyncpa %s7392, 1
    %7394 = vsyncpa [#allocation19], 1
    %s7395 = scalar_lea.sflag [#allocation19], 1
    %7396 = vsyncpa %s7395, 1
    %7397 = vsyncpa [#allocation22], 1
    %s7398 = scalar_lea.sflag [#allocation22], 1
    %7399 = vsyncpa %s7398, 1
    %7400 = vsyncpa [#allocation5], 1
    %s7401 = scalar_lea.sflag [#allocation5], 1
    %7402 = vsyncpa %s7401, 1

</llo_original>
